<compile_context>
chip_gen: v7x
topology: tpu7x:2x2x1
jax: 0.10.0
libtpu: 0.0.40
codegen_flags: <defaults>
</compile_context>

<pallas_src>
import functools

import jax
import jax.numpy as jnp
from jax import lax
from jax.experimental import pallas as pl
from jax.experimental.pallas import tpu as pltpu


def _inception_kernel(x_ref, wf_ref, bf_ref, o_ref, patches_ref,
                      *, H, W, Cin, Cf):
    # x_ref      : (1, H+4, W+4, Cin)  zero-padded (pad=2) input block, f32
    # wf_ref     : (25*Cin, Cf)        fused im2col conv weights, bf16
    # bf_ref     : (1, Cf)             fused conv bias, f32
    # o_ref      : (1, H*W, Cf+Cin)    output block (channels minor), f32
    # patches_ref: (H*W, 25*Cin)       im2col scratch, f32

    # ---- conv branches: pack 25 shifted taps, then ONE MXU matmul ----------
    for kh in range(5):
        for kw in range(5):
            t = kh * 5 + kw
            sl = x_ref[0, kh:kh + H, kw:kw + W, :]            # (H, W, Cin) f32
            patches_ref[:, t * Cin:(t + 1) * Cin] = sl.reshape(H * W, Cin)

    patches = patches_ref[...].astype(jnp.bfloat16)           # single hoisted cast
    acc = jnp.dot(patches, wf_ref[...],
                  preferred_element_type=jnp.float32)         # (H*W, Cf) f32
    o_ref[0, :, 0:Cf] = jnp.maximum(acc + bf_ref[...], 0.0)   # bias + ReLU

    # ---- 3x3 / stride 1 / pad 1 max-pool branch (exact f32) ----------------
    neg_inf = jnp.float32(-jnp.inf)
    ri = lax.broadcasted_iota(jnp.int32, (H, W, 1), 0)        # output row index
    ci = lax.broadcasted_iota(jnp.int32, (H, W, 1), 1)        # output col index

    pooled = x_ref[0, 2:2 + H, 2:2 + W, :]                    # center tap (never masked)
    for kh in range(1, 4):
        for kw in range(1, 4):
            if kh == 2 and kw == 2:
                continue
            dh, dw = kh - 2, kw - 2
            sl = x_ref[0, kh:kh + H, kw:kw + W, :]            # (H, W, Cin) f32
            # Slices come from the ZERO-padded input, so border taps must be
            # masked to -inf to reproduce PyTorch's implicit -inf pool padding.
            valid = None
            if dh < 0:
                valid = ri >= -dh
            elif dh > 0:
                valid = ri < H - dh
            if dw < 0:
                c = ci >= -dw
                valid = c if valid is None else valid & c
            elif dw > 0:
                c = ci < W - dw
                valid = c if valid is None else valid & c
            pooled = jnp.maximum(pooled, jnp.where(valid, sl, neg_inf))

    o_ref[0, :, Cf:] = pooled.reshape(H * W, Cin)


def inception_naive_pallas(x_nchw, params):
    """x_nchw: (N, Cin, H, W) f32 -> (N, C1+C3+C5+Cin, H, W) f32."""
    w1, b1, w3, b3, w5, b5 = (params["w1"], params["b1"], params["w3"],
                              params["b3"], params["w5"], params["b5"])
    N, Cin, H, W = x_nchw.shape
    C1, C3, C5 = w1.shape[1], w3.shape[3], w5.shape[3]
    Cf = C1 + C3 + C5
    Ctot = Cf + Cin

    # Fuse the three conv weights into one zero-embedded 5x5 HWIO tensor, then
    # flatten to the im2col layout (25*Cin, Cf); row order (kh, kw, cin)
    # matches the tap-packing order inside the kernel.
    wf = jnp.zeros((5, 5, Cin, Cf), jnp.float32)
    wf = wf.at[2, 2, :, 0:C1].set(w1)                 # 1x1 -> center tap
    wf = wf.at[1:4, 1:4, :, C1:C1 + C3].set(w3)       # 3x3 -> inner 3x3 taps
    wf = wf.at[:, :, :, C1 + C3:].set(w5)             # 5x5 as-is
    wf = wf.reshape(25 * Cin, Cf).astype(jnp.bfloat16)       # MXU-native dtype
    bf = jnp.concatenate([b1, b3, b5], axis=-1).astype(jnp.float32)  # (1, Cf)

    # NCHW -> NHWC and a single zero pad (halo=2) shared by convs and pool.
    x_nhwc = jnp.transpose(x_nchw, (0, 2, 3, 1)).astype(jnp.float32)
    xz = jnp.pad(x_nhwc, ((0, 0), (2, 2), (2, 2), (0, 0)))

    kernel = functools.partial(_inception_kernel, H=H, W=W, Cin=Cin, Cf=Cf)

    out_flat = pl.pallas_call(
        kernel,
        out_shape=jax.ShapeDtypeStruct((N, H * W, Ctot), jnp.float32),
        grid_spec=pltpu.PrefetchScalarGridSpec(
            num_scalar_prefetch=0,
            grid=(N,),
            in_specs=[
                pl.BlockSpec((1, H + 4, W + 4, Cin), lambda n: (n, 0, 0, 0)),
                pl.BlockSpec((25 * Cin, Cf), lambda n: (0, 0)),
                pl.BlockSpec((1, Cf), lambda n: (0, 0)),
            ],
            out_specs=pl.BlockSpec((1, H * W, Ctot), lambda n: (n, 0, 0)),
            scratch_shapes=[pltpu.VMEM((H * W, 25 * Cin), jnp.float32)],
        ),
        compiler_params=pltpu.CompilerParams(
            dimension_semantics=("parallel",)),
    )(xz, wf, bf)

    # (N, H*W, Ctot) -> NHWC -> NCHW to match the PyTorch output convention.
    out_nhwc = out_flat.reshape(N, H, W, Ctot)
    return jnp.transpose(out_nhwc, (0, 3, 1, 2))


def init_params(key, in_channels, ch1x1, ch3x3, ch5x5):
    """Deterministic synthetic parameters (HWIO weight layout)."""
    ks = jax.random.split(key, 6)
    scale = 0.1
    return {
        "w1": scale * jax.random.normal(ks[0], (in_channels, ch1x1), jnp.float32),
        "b1": scale * jax.random.normal(ks[1], (1, ch1x1), jnp.float32),
        "w3": scale * jax.random.normal(ks[2], (3, 3, in_channels, ch3x3), jnp.float32),
        "b3": scale * jax.random.normal(ks[3], (1, ch3x3), jnp.float32),
        "w5": scale * jax.random.normal(ks[4], (5, 5, in_channels, ch5x5), jnp.float32),
        "b5": scale * jax.random.normal(ks[5], (1, ch5x5), jnp.float32),
    }


def _reference(x_nchw, params):
    """Pure-JAX f32 reference (lax.conv + reduce_window) for validation."""
    def conv(x, w_hwio, b, pad):
        w = jnp.transpose(w_hwio, (3, 2, 0, 1))   # HWIO -> OIHW
        y = lax.conv_general_dilated(
            x, w, window_strides=(1, 1), padding=[(pad, pad), (pad, pad)],
            dimension_numbers=("NCHW", "OIHW", "NCHW"))
        return jnp.maximum(y + b.reshape(1, -1, 1, 1), 0.0)

    b1 = conv(x_nchw, params["w1"].reshape(1, 1, *params["w1"].shape),
              params["b1"], 0)
    b2 = conv(x_nchw, params["w3"], params["b3"], 1)
    b3 = conv(x_nchw, params["w5"], params["b5"], 2)
    b4 = lax.reduce_window(x_nchw, -jnp.inf, lax.max,
                           window_dimensions=(1, 1, 3, 3),
                           window_strides=(1, 1, 1, 1),
                           padding=((0, 0), (0, 0), (1, 1), (1, 1)))
    return jnp.concatenate([b1, b2, b3, b4], axis=1)


if __name__ == "__main__":
    key = jax.random.PRNGKey(0)
    k_x, k_p = jax.random.split(key)

    # Small shapes: batch=2, in_channels=4, spatial=16, branches (8, 8, 4).
    N, Cin, H, W = 2, 4, 16, 16
    ch1x1, ch3x3, ch5x5 = 8, 8, 4

    x = jax.random.normal(k_x, (N, Cin, H, W), jnp.float32)
    params = init_params(k_p, Cin, ch1x1, ch3x3, ch5x5)

    out = inception_naive_pallas(x, params)
    out = jax.block_until_ready(out)

    ref = _reference(x, params)
    assert out.shape == (N, ch1x1 + ch3x3 + ch5x5 + Cin, H, W), out.shape
    # Tolerance loosened vs. the f32 reference because matmul operands are
    # bf16 (accumulation stays f32); the pool branch is exact f32.
    assert jnp.allclose(out, ref, atol=3e-2, rtol=3e-2), \
        float(jnp.max(jnp.abs(out - ref)))

    print("KERNEL_OK")
</pallas_src>

<mosaic_0001>
module attributes {stable_mosaic.version = 11 : i64} {
  func.func @_inception_kernel(%arg0: i32, %arg1: memref<1x20x20x4xf32, #tpu.memory_space<vmem>>, %arg2: memref<100x20xbf16, #tpu.memory_space<vmem>>, %arg3: memref<1x20xf32, #tpu.memory_space<vmem>>, %arg4: memref<1x256x24xf32, #tpu.memory_space<vmem>>, %arg5: memref<256x100xf32, #tpu.memory_space<vmem>>) attributes {dimension_semantics = [#tpu.dimension_semantics<parallel>], iteration_bounds = array<i64: 2>, scalar_prefetch = 0 : i64, scratch_operands = 1 : i64, tpu.core_type = #tpu.core_type<tc>, window_params = [{transform_indices = @transform_0, window_bounds = array<i64: 1, 20, 20, 4>}, {pipeline_mode = #tpu.pipeline_mode<synchronous>, transform_indices = @transform_1, window_bounds = array<i64: 100, 20>}, {pipeline_mode = #tpu.pipeline_mode<synchronous>, transform_indices = @transform_2, window_bounds = array<i64: 1, 20>}, {transform_indices = @transform_3, window_bounds = array<i64: 1, 256, 24>}]} {
    %c0 = arith.constant 0 : index
    %c0_0 = arith.constant 0 : index
    %c0_1 = arith.constant 0 : index
    %c0_2 = arith.constant 0 : index
    %0 = vector.load %arg1[%c0, %c0_0, %c0_1, %c0_2] : memref<1x20x20x4xf32, #tpu.memory_space<vmem>>, vector<1x16x16x4xf32>
    %1 = vector.shape_cast %0 : vector<1x16x16x4xf32> to vector<16x16x4xf32>
    %2 = vector.shape_cast %1 : vector<16x16x4xf32> to vector<256x4xf32>
    %c0_3 = arith.constant 0 : index
    %c0_4 = arith.constant 0 : index
    %3 = vector.load %arg5[%c0_3, %c0_4] : memref<256x100xf32, #tpu.memory_space<vmem>>, vector<256x4xf32>
    tpu.vector_store %arg5[%c0_3, %c0_4], %2 {strides = array<i32>} : memref<256x100xf32, #tpu.memory_space<vmem>>, vector<256x4xf32>,
    %c0_5 = arith.constant 0 : index
    %c0_6 = arith.constant 0 : index
    %c1 = arith.constant 1 : index
    %c0_7 = arith.constant 0 : index
    %4 = vector.load %arg1[%c0_5, %c0_6, %c1, %c0_7] : memref<1x20x20x4xf32, #tpu.memory_space<vmem>>, vector<1x16x16x4xf32>
    %5 = vector.shape_cast %4 : vector<1x16x16x4xf32> to vector<16x16x4xf32>
    %6 = vector.shape_cast %5 : vector<16x16x4xf32> to vector<256x4xf32>
    %c0_8 = arith.constant 0 : index
    %c4 = arith.constant 4 : index
    %7 = vector.load %arg5[%c0_8, %c4] : memref<256x100xf32, #tpu.memory_space<vmem>>, vector<256x4xf32>
    tpu.vector_store %arg5[%c0_8, %c4], %6 {strides = array<i32>} : memref<256x100xf32, #tpu.memory_space<vmem>>, vector<256x4xf32>,
    %c0_9 = arith.constant 0 : index
    %c0_10 = arith.constant 0 : index
    %c2 = arith.constant 2 : index
    %c0_11 = arith.constant 0 : index
    %8 = vector.load %arg1[%c0_9, %c0_10, %c2, %c0_11] : memref<1x20x20x4xf32, #tpu.memory_space<vmem>>, vector<1x16x16x4xf32>
    %9 = vector.shape_cast %8 : vector<1x16x16x4xf32> to vector<16x16x4xf32>
    %10 = vector.shape_cast %9 : vector<16x16x4xf32> to vector<256x4xf32>
    %c0_12 = arith.constant 0 : index
    %c8 = arith.constant 8 : index
    %11 = vector.load %arg5[%c0_12, %c8] : memref<256x100xf32, #tpu.memory_space<vmem>>, vector<256x4xf32>
    tpu.vector_store %arg5[%c0_12, %c8], %10 {strides = array<i32>} : memref<256x100xf32, #tpu.memory_space<vmem>>, vector<256x4xf32>,
    %c0_13 = arith.constant 0 : index
    %c0_14 = arith.constant 0 : index
    %c3 = arith.constant 3 : index
    %c0_15 = arith.constant 0 : index
    %12 = vector.load %arg1[%c0_13, %c0_14, %c3, %c0_15] : memref<1x20x20x4xf32, #tpu.memory_space<vmem>>, vector<1x16x16x4xf32>
    %13 = vector.shape_cast %12 : vector<1x16x16x4xf32> to vector<16x16x4xf32>
    %14 = vector.shape_cast %13 : vector<16x16x4xf32> to vector<256x4xf32>
    %c0_16 = arith.constant 0 : index
    %c12 = arith.constant 12 : index
    %15 = vector.load %arg5[%c0_16, %c12] : memref<256x100xf32, #tpu.memory_space<vmem>>, vector<256x4xf32>
    tpu.vector_store %arg5[%c0_16, %c12], %14 {strides = array<i32>} : memref<256x100xf32, #tpu.memory_space<vmem>>, vector<256x4xf32>,
    %c0_17 = arith.constant 0 : index
    %c0_18 = arith.constant 0 : index
    %c4_19 = arith.constant 4 : index
    %c0_20 = arith.constant 0 : index
    %16 = vector.load %arg1[%c0_17, %c0_18, %c4_19, %c0_20] : memref<1x20x20x4xf32, #tpu.memory_space<vmem>>, vector<1x16x16x4xf32>
    %17 = vector.shape_cast %16 : vector<1x16x16x4xf32> to vector<16x16x4xf32>
    %18 = vector.shape_cast %17 : vector<16x16x4xf32> to vector<256x4xf32>
    %c0_21 = arith.constant 0 : index
    %c16 = arith.constant 16 : index
    %19 = vector.load %arg5[%c0_21, %c16] : memref<256x100xf32, #tpu.memory_space<vmem>>, vector<256x4xf32>
    tpu.vector_store %arg5[%c0_21, %c16], %18 {strides = array<i32>} : memref<256x100xf32, #tpu.memory_space<vmem>>, vector<256x4xf32>,
    %c0_22 = arith.constant 0 : index
    %c1_23 = arith.constant 1 : index
    %c0_24 = arith.constant 0 : index
    %c0_25 = arith.constant 0 : index
    %20 = vector.load %arg1[%c0_22, %c1_23, %c0_24, %c0_25] : memref<1x20x20x4xf32, #tpu.memory_space<vmem>>, vector<1x16x16x4xf32>
    %21 = vector.shape_cast %20 : vector<1x16x16x4xf32> to vector<16x16x4xf32>
    %22 = vector.shape_cast %21 : vector<16x16x4xf32> to vector<256x4xf32>
    %c0_26 = arith.constant 0 : index
    %c20 = arith.constant 20 : index
    %23 = vector.load %arg5[%c0_26, %c20] : memref<256x100xf32, #tpu.memory_space<vmem>>, vector<256x4xf32>
    tpu.vector_store %arg5[%c0_26, %c20], %22 {strides = array<i32>} : memref<256x100xf32, #tpu.memory_space<vmem>>, vector<256x4xf32>,
    %c0_27 = arith.constant 0 : index
    %c1_28 = arith.constant 1 : index
    %c1_29 = arith.constant 1 : index
    %c0_30 = arith.constant 0 : index
    %24 = vector.load %arg1[%c0_27, %c1_28, %c1_29, %c0_30] : memref<1x20x20x4xf32, #tpu.memory_space<vmem>>, vector<1x16x16x4xf32>
    %25 = vector.shape_cast %24 : vector<1x16x16x4xf32> to vector<16x16x4xf32>
    %26 = vector.shape_cast %25 : vector<16x16x4xf32> to vector<256x4xf32>
    %c0_31 = arith.constant 0 : index
    %c24 = arith.constant 24 : index
    %27 = vector.load %arg5[%c0_31, %c24] : memref<256x100xf32, #tpu.memory_space<vmem>>, vector<256x4xf32>
    tpu.vector_store %arg5[%c0_31, %c24], %26 {strides = array<i32>} : memref<256x100xf32, #tpu.memory_space<vmem>>, vector<256x4xf32>,
    %c0_32 = arith.constant 0 : index
    %c1_33 = arith.constant 1 : index
    %c2_34 = arith.constant 2 : index
    %c0_35 = arith.constant 0 : index
    %28 = vector.load %arg1[%c0_32, %c1_33, %c2_34, %c0_35] : memref<1x20x20x4xf32, #tpu.memory_space<vmem>>, vector<1x16x16x4xf32>
    %29 = vector.shape_cast %28 : vector<1x16x16x4xf32> to vector<16x16x4xf32>
    %30 = vector.shape_cast %29 : vector<16x16x4xf32> to vector<256x4xf32>
    %c0_36 = arith.constant 0 : index
    %c28 = arith.constant 28 : index
    %31 = vector.load %arg5[%c0_36, %c28] : memref<256x100xf32, #tpu.memory_space<vmem>>, vector<256x4xf32>
    tpu.vector_store %arg5[%c0_36, %c28], %30 {strides = array<i32>} : memref<256x100xf32, #tpu.memory_space<vmem>>, vector<256x4xf32>,
    %c0_37 = arith.constant 0 : index
    %c1_38 = arith.constant 1 : index
    %c3_39 = arith.constant 3 : index
    %c0_40 = arith.constant 0 : index
    %32 = vector.load %arg1[%c0_37, %c1_38, %c3_39, %c0_40] : memref<1x20x20x4xf32, #tpu.memory_space<vmem>>, vector<1x16x16x4xf32>
    %33 = vector.shape_cast %32 : vector<1x16x16x4xf32> to vector<16x16x4xf32>
    %34 = vector.shape_cast %33 : vector<16x16x4xf32> to vector<256x4xf32>
    %c0_41 = arith.constant 0 : index
    %c32 = arith.constant 32 : index
    %35 = vector.load %arg5[%c0_41, %c32] : memref<256x100xf32, #tpu.memory_space<vmem>>, vector<256x4xf32>
    tpu.vector_store %arg5[%c0_41, %c32], %34 {strides = array<i32>} : memref<256x100xf32, #tpu.memory_space<vmem>>, vector<256x4xf32>,
    %c0_42 = arith.constant 0 : index
    %c1_43 = arith.constant 1 : index
    %c4_44 = arith.constant 4 : index
    %c0_45 = arith.constant 0 : index
    %36 = vector.load %arg1[%c0_42, %c1_43, %c4_44, %c0_45] : memref<1x20x20x4xf32, #tpu.memory_space<vmem>>, vector<1x16x16x4xf32>
    %37 = vector.shape_cast %36 : vector<1x16x16x4xf32> to vector<16x16x4xf32>
    %38 = vector.shape_cast %37 : vector<16x16x4xf32> to vector<256x4xf32>
    %c0_46 = arith.constant 0 : index
    %c36 = arith.constant 36 : index
    %39 = vector.load %arg5[%c0_46, %c36] : memref<256x100xf32, #tpu.memory_space<vmem>>, vector<256x4xf32>
    tpu.vector_store %arg5[%c0_46, %c36], %38 {strides = array<i32>} : memref<256x100xf32, #tpu.memory_space<vmem>>, vector<256x4xf32>,
    %c0_47 = arith.constant 0 : index
    %c2_48 = arith.constant 2 : index
    %c0_49 = arith.constant 0 : index
    %c0_50 = arith.constant 0 : index
    %40 = vector.load %arg1[%c0_47, %c2_48, %c0_49, %c0_50] : memref<1x20x20x4xf32, #tpu.memory_space<vmem>>, vector<1x16x16x4xf32>
    %41 = vector.shape_cast %40 : vector<1x16x16x4xf32> to vector<16x16x4xf32>
    %42 = vector.shape_cast %41 : vector<16x16x4xf32> to vector<256x4xf32>
    %c0_51 = arith.constant 0 : index
    %c40 = arith.constant 40 : index
    %43 = vector.load %arg5[%c0_51, %c40] : memref<256x100xf32, #tpu.memory_space<vmem>>, vector<256x4xf32>
    tpu.vector_store %arg5[%c0_51, %c40], %42 {strides = array<i32>} : memref<256x100xf32, #tpu.memory_space<vmem>>, vector<256x4xf32>,
    %c0_52 = arith.constant 0 : index
    %c2_53 = arith.constant 2 : index
    %c1_54 = arith.constant 1 : index
    %c0_55 = arith.constant 0 : index
    %44 = vector.load %arg1[%c0_52, %c2_53, %c1_54, %c0_55] : memref<1x20x20x4xf32, #tpu.memory_space<vmem>>, vector<1x16x16x4xf32>
    %45 = vector.shape_cast %44 : vector<1x16x16x4xf32> to vector<16x16x4xf32>
    %46 = vector.shape_cast %45 : vector<16x16x4xf32> to vector<256x4xf32>
    %c0_56 = arith.constant 0 : index
    %c44 = arith.constant 44 : index
    %47 = vector.load %arg5[%c0_56, %c44] : memref<256x100xf32, #tpu.memory_space<vmem>>, vector<256x4xf32>
    tpu.vector_store %arg5[%c0_56, %c44], %46 {strides = array<i32>} : memref<256x100xf32, #tpu.memory_space<vmem>>, vector<256x4xf32>,
    %c0_57 = arith.constant 0 : index
    %c2_58 = arith.constant 2 : index
    %c2_59 = arith.constant 2 : index
    %c0_60 = arith.constant 0 : index
    %48 = vector.load %arg1[%c0_57, %c2_58, %c2_59, %c0_60] : memref<1x20x20x4xf32, #tpu.memory_space<vmem>>, vector<1x16x16x4xf32>
    %49 = vector.shape_cast %48 : vector<1x16x16x4xf32> to vector<16x16x4xf32>
    %50 = vector.shape_cast %49 : vector<16x16x4xf32> to vector<256x4xf32>
    %c0_61 = arith.constant 0 : index
    %c48 = arith.constant 48 : index
    %51 = vector.load %arg5[%c0_61, %c48] : memref<256x100xf32, #tpu.memory_space<vmem>>, vector<256x4xf32>
    tpu.vector_store %arg5[%c0_61, %c48], %50 {strides = array<i32>} : memref<256x100xf32, #tpu.memory_space<vmem>>, vector<256x4xf32>,
    %c0_62 = arith.constant 0 : index
    %c2_63 = arith.constant 2 : index
    %c3_64 = arith.constant 3 : index
    %c0_65 = arith.constant 0 : index
    %52 = vector.load %arg1[%c0_62, %c2_63, %c3_64, %c0_65] : memref<1x20x20x4xf32, #tpu.memory_space<vmem>>, vector<1x16x16x4xf32>
    %53 = vector.shape_cast %52 : vector<1x16x16x4xf32> to vector<16x16x4xf32>
    %54 = vector.shape_cast %53 : vector<16x16x4xf32> to vector<256x4xf32>
    %c0_66 = arith.constant 0 : index
    %c52 = arith.constant 52 : index
    %55 = vector.load %arg5[%c0_66, %c52] : memref<256x100xf32, #tpu.memory_space<vmem>>, vector<256x4xf32>
    tpu.vector_store %arg5[%c0_66, %c52], %54 {strides = array<i32>} : memref<256x100xf32, #tpu.memory_space<vmem>>, vector<256x4xf32>,
    %c0_67 = arith.constant 0 : index
    %c2_68 = arith.constant 2 : index
    %c4_69 = arith.constant 4 : index
    %c0_70 = arith.constant 0 : index
    %56 = vector.load %arg1[%c0_67, %c2_68, %c4_69, %c0_70] : memref<1x20x20x4xf32, #tpu.memory_space<vmem>>, vector<1x16x16x4xf32>
    %57 = vector.shape_cast %56 : vector<1x16x16x4xf32> to vector<16x16x4xf32>
    %58 = vector.shape_cast %57 : vector<16x16x4xf32> to vector<256x4xf32>
    %c0_71 = arith.constant 0 : index
    %c56 = arith.constant 56 : index
    %59 = vector.load %arg5[%c0_71, %c56] : memref<256x100xf32, #tpu.memory_space<vmem>>, vector<256x4xf32>
    tpu.vector_store %arg5[%c0_71, %c56], %58 {strides = array<i32>} : memref<256x100xf32, #tpu.memory_space<vmem>>, vector<256x4xf32>,
    %c0_72 = arith.constant 0 : index
    %c3_73 = arith.constant 3 : index
    %c0_74 = arith.constant 0 : index
    %c0_75 = arith.constant 0 : index
    %60 = vector.load %arg1[%c0_72, %c3_73, %c0_74, %c0_75] : memref<1x20x20x4xf32, #tpu.memory_space<vmem>>, vector<1x16x16x4xf32>
    %61 = vector.shape_cast %60 : vector<1x16x16x4xf32> to vector<16x16x4xf32>
    %62 = vector.shape_cast %61 : vector<16x16x4xf32> to vector<256x4xf32>
    %c0_76 = arith.constant 0 : index
    %c60 = arith.constant 60 : index
    %63 = vector.load %arg5[%c0_76, %c60] : memref<256x100xf32, #tpu.memory_space<vmem>>, vector<256x4xf32>
    tpu.vector_store %arg5[%c0_76, %c60], %62 {strides = array<i32>} : memref<256x100xf32, #tpu.memory_space<vmem>>, vector<256x4xf32>,
    %c0_77 = arith.constant 0 : index
    %c3_78 = arith.constant 3 : index
    %c1_79 = arith.constant 1 : index
    %c0_80 = arith.constant 0 : index
    %64 = vector.load %arg1[%c0_77, %c3_78, %c1_79, %c0_80] : memref<1x20x20x4xf32, #tpu.memory_space<vmem>>, vector<1x16x16x4xf32>
    %65 = vector.shape_cast %64 : vector<1x16x16x4xf32> to vector<16x16x4xf32>
    %66 = vector.shape_cast %65 : vector<16x16x4xf32> to vector<256x4xf32>
    %c0_81 = arith.constant 0 : index
    %c64 = arith.constant 64 : index
    %67 = vector.load %arg5[%c0_81, %c64] : memref<256x100xf32, #tpu.memory_space<vmem>>, vector<256x4xf32>
    tpu.vector_store %arg5[%c0_81, %c64], %66 {strides = array<i32>} : memref<256x100xf32, #tpu.memory_space<vmem>>, vector<256x4xf32>,
    %c0_82 = arith.constant 0 : index
    %c3_83 = arith.constant 3 : index
    %c2_84 = arith.constant 2 : index
    %c0_85 = arith.constant 0 : index
    %68 = vector.load %arg1[%c0_82, %c3_83, %c2_84, %c0_85] : memref<1x20x20x4xf32, #tpu.memory_space<vmem>>, vector<1x16x16x4xf32>
    %69 = vector.shape_cast %68 : vector<1x16x16x4xf32> to vector<16x16x4xf32>
    %70 = vector.shape_cast %69 : vector<16x16x4xf32> to vector<256x4xf32>
    %c0_86 = arith.constant 0 : index
    %c68 = arith.constant 68 : index
    %71 = vector.load %arg5[%c0_86, %c68] : memref<256x100xf32, #tpu.memory_space<vmem>>, vector<256x4xf32>
    tpu.vector_store %arg5[%c0_86, %c68], %70 {strides = array<i32>} : memref<256x100xf32, #tpu.memory_space<vmem>>, vector<256x4xf32>,
    %c0_87 = arith.constant 0 : index
    %c3_88 = arith.constant 3 : index
    %c3_89 = arith.constant 3 : index
    %c0_90 = arith.constant 0 : index
    %72 = vector.load %arg1[%c0_87, %c3_88, %c3_89, %c0_90] : memref<1x20x20x4xf32, #tpu.memory_space<vmem>>, vector<1x16x16x4xf32>
    %73 = vector.shape_cast %72 : vector<1x16x16x4xf32> to vector<16x16x4xf32>
    %74 = vector.shape_cast %73 : vector<16x16x4xf32> to vector<256x4xf32>
    %c0_91 = arith.constant 0 : index
    %c72 = arith.constant 72 : index
    %75 = vector.load %arg5[%c0_91, %c72] : memref<256x100xf32, #tpu.memory_space<vmem>>, vector<256x4xf32>
    tpu.vector_store %arg5[%c0_91, %c72], %74 {strides = array<i32>} : memref<256x100xf32, #tpu.memory_space<vmem>>, vector<256x4xf32>,
    %c0_92 = arith.constant 0 : index
    %c3_93 = arith.constant 3 : index
    %c4_94 = arith.constant 4 : index
    %c0_95 = arith.constant 0 : index
    %76 = vector.load %arg1[%c0_92, %c3_93, %c4_94, %c0_95] : memref<1x20x20x4xf32, #tpu.memory_space<vmem>>, vector<1x16x16x4xf32>
    %77 = vector.shape_cast %76 : vector<1x16x16x4xf32> to vector<16x16x4xf32>
    %78 = vector.shape_cast %77 : vector<16x16x4xf32> to vector<256x4xf32>
    %c0_96 = arith.constant 0 : index
    %c76 = arith.constant 76 : index
    %79 = vector.load %arg5[%c0_96, %c76] : memref<256x100xf32, #tpu.memory_space<vmem>>, vector<256x4xf32>
    tpu.vector_store %arg5[%c0_96, %c76], %78 {strides = array<i32>} : memref<256x100xf32, #tpu.memory_space<vmem>>, vector<256x4xf32>,
    %c0_97 = arith.constant 0 : index
    %c4_98 = arith.constant 4 : index
    %c0_99 = arith.constant 0 : index
    %c0_100 = arith.constant 0 : index
    %80 = vector.load %arg1[%c0_97, %c4_98, %c0_99, %c0_100] : memref<1x20x20x4xf32, #tpu.memory_space<vmem>>, vector<1x16x16x4xf32>
    %81 = vector.shape_cast %80 : vector<1x16x16x4xf32> to vector<16x16x4xf32>
    %82 = vector.shape_cast %81 : vector<16x16x4xf32> to vector<256x4xf32>
    %c0_101 = arith.constant 0 : index
    %c80 = arith.constant 80 : index
    %83 = vector.load %arg5[%c0_101, %c80] : memref<256x100xf32, #tpu.memory_space<vmem>>, vector<256x4xf32>
    tpu.vector_store %arg5[%c0_101, %c80], %82 {strides = array<i32>} : memref<256x100xf32, #tpu.memory_space<vmem>>, vector<256x4xf32>,
    %c0_102 = arith.constant 0 : index
    %c4_103 = arith.constant 4 : index
    %c1_104 = arith.constant 1 : index
    %c0_105 = arith.constant 0 : index
    %84 = vector.load %arg1[%c0_102, %c4_103, %c1_104, %c0_105] : memref<1x20x20x4xf32, #tpu.memory_space<vmem>>, vector<1x16x16x4xf32>
    %85 = vector.shape_cast %84 : vector<1x16x16x4xf32> to vector<16x16x4xf32>
    %86 = vector.shape_cast %85 : vector<16x16x4xf32> to vector<256x4xf32>
    %c0_106 = arith.constant 0 : index
    %c84 = arith.constant 84 : index
    %87 = vector.load %arg5[%c0_106, %c84] : memref<256x100xf32, #tpu.memory_space<vmem>>, vector<256x4xf32>
    tpu.vector_store %arg5[%c0_106, %c84], %86 {strides = array<i32>} : memref<256x100xf32, #tpu.memory_space<vmem>>, vector<256x4xf32>,
    %c0_107 = arith.constant 0 : index
    %c4_108 = arith.constant 4 : index
    %c2_109 = arith.constant 2 : index
    %c0_110 = arith.constant 0 : index
    %88 = vector.load %arg1[%c0_107, %c4_108, %c2_109, %c0_110] : memref<1x20x20x4xf32, #tpu.memory_space<vmem>>, vector<1x16x16x4xf32>
    %89 = vector.shape_cast %88 : vector<1x16x16x4xf32> to vector<16x16x4xf32>
    %90 = vector.shape_cast %89 : vector<16x16x4xf32> to vector<256x4xf32>
    %c0_111 = arith.constant 0 : index
    %c88 = arith.constant 88 : index
    %91 = vector.load %arg5[%c0_111, %c88] : memref<256x100xf32, #tpu.memory_space<vmem>>, vector<256x4xf32>
    tpu.vector_store %arg5[%c0_111, %c88], %90 {strides = array<i32>} : memref<256x100xf32, #tpu.memory_space<vmem>>, vector<256x4xf32>,
    %c0_112 = arith.constant 0 : index
    %c4_113 = arith.constant 4 : index
    %c3_114 = arith.constant 3 : index
    %c0_115 = arith.constant 0 : index
    %92 = vector.load %arg1[%c0_112, %c4_113, %c3_114, %c0_115] : memref<1x20x20x4xf32, #tpu.memory_space<vmem>>, vector<1x16x16x4xf32>
    %93 = vector.shape_cast %92 : vector<1x16x16x4xf32> to vector<16x16x4xf32>
    %94 = vector.shape_cast %93 : vector<16x16x4xf32> to vector<256x4xf32>
    %c0_116 = arith.constant 0 : index
    %c92 = arith.constant 92 : index
    %95 = vector.load %arg5[%c0_116, %c92] : memref<256x100xf32, #tpu.memory_space<vmem>>, vector<256x4xf32>
    tpu.vector_store %arg5[%c0_116, %c92], %94 {strides = array<i32>} : memref<256x100xf32, #tpu.memory_space<vmem>>, vector<256x4xf32>,
    %c0_117 = arith.constant 0 : index
    %c4_118 = arith.constant 4 : index
    %c4_119 = arith.constant 4 : index
    %c0_120 = arith.constant 0 : index
    %96 = vector.load %arg1[%c0_117, %c4_118, %c4_119, %c0_120] : memref<1x20x20x4xf32, #tpu.memory_space<vmem>>, vector<1x16x16x4xf32>
    %97 = vector.shape_cast %96 : vector<1x16x16x4xf32> to vector<16x16x4xf32>
    %98 = vector.shape_cast %97 : vector<16x16x4xf32> to vector<256x4xf32>
    %c0_121 = arith.constant 0 : index
    %c96 = arith.constant 96 : index
    %99 = vector.load %arg5[%c0_121, %c96] : memref<256x100xf32, #tpu.memory_space<vmem>>, vector<256x4xf32>
    tpu.vector_store %arg5[%c0_121, %c96], %98 {strides = array<i32>} : memref<256x100xf32, #tpu.memory_space<vmem>>, vector<256x4xf32>,
    %c0_122 = arith.constant 0 : index
    %c0_123 = arith.constant 0 : index
    %100 = vector.load %arg5[%c0_122, %c0_123] : memref<256x100xf32, #tpu.memory_space<vmem>>, vector<256x100xf32>
    %101 = arith.truncf %100 : vector<256x100xf32> to vector<256x100xbf16>
    %c0_124 = arith.constant 0 : index
    %c0_125 = arith.constant 0 : index
    %102 = vector.load %arg2[%c0_124, %c0_125] : memref<100x20xbf16, #tpu.memory_space<vmem>>, vector<100x20xbf16>
    %cst = arith.constant dense<0.000000e+00> : vector<256x20xf32>
    %103 = tpu.matmul %101, %102, %cst {dimension_numbers = #tpu.dot_dimension_numbers<[1], [0], [0], [1], [0, 0, 1, 1], [], []>} : vector<256x100xbf16>, vector<100x20xbf16>, vector<256x20xf32> -> vector<256x20xf32>
    %c0_126 = arith.constant 0 : index
    %c0_127 = arith.constant 0 : index
    %104 = vector.load %arg3[%c0_126, %c0_127] : memref<1x20xf32, #tpu.memory_space<vmem>>, vector<1x20xf32>
    %105 = vector.broadcast %104 : vector<1x20xf32> to vector<256x20xf32>
    %106 = arith.addf %103, %105 : vector<256x20xf32>
    %cst_128 = arith.constant 0.000000e+00 : f32
    %107 = vector.broadcast %cst_128 : f32 to vector<256x20xf32>
    %108 = arith.maximumf %106, %107 : vector<256x20xf32>
    %c0_129 = arith.constant 0 : index
    %c0_130 = arith.constant 0 : index
    %c0_131 = arith.constant 0 : index
    %109 = vector.load %arg4[%c0_129, %c0_130, %c0_131] : memref<1x256x24xf32, #tpu.memory_space<vmem>>, vector<1x256x20xf32>
    %110 = vector.shape_cast %109 : vector<1x256x20xf32> to vector<256x20xf32>
    %111 = vector.shape_cast %108 : vector<256x20xf32> to vector<1x256x20xf32>
    tpu.vector_store %arg4[%c0_129, %c0_130, %c0_131], %111 {strides = array<i32>} : memref<1x256x24xf32, #tpu.memory_space<vmem>>, vector<1x256x20xf32>,
    %112 = tpu.iota {dimensions = array<i32: 0>} : vector<16x16x1xi32>
    %113 = tpu.iota {dimensions = array<i32: 1>} : vector<16x16x1xi32>
    %c0_132 = arith.constant 0 : index
    %c2_133 = arith.constant 2 : index
    %c2_134 = arith.constant 2 : index
    %c0_135 = arith.constant 0 : index
    %114 = vector.load %arg1[%c0_132, %c2_133, %c2_134, %c0_135] : memref<1x20x20x4xf32, #tpu.memory_space<vmem>>, vector<1x16x16x4xf32>
    %115 = vector.shape_cast %114 : vector<1x16x16x4xf32> to vector<16x16x4xf32>
    %c0_136 = arith.constant 0 : index
    %c1_137 = arith.constant 1 : index
    %c1_138 = arith.constant 1 : index
    %c0_139 = arith.constant 0 : index
    %116 = vector.load %arg1[%c0_136, %c1_137, %c1_138, %c0_139] : memref<1x20x20x4xf32, #tpu.memory_space<vmem>>, vector<1x16x16x4xf32>
    %117 = vector.shape_cast %116 : vector<1x16x16x4xf32> to vector<16x16x4xf32>
    %c1_i32 = arith.constant 1 : i32
    %118 = vector.broadcast %c1_i32 : i32 to vector<16x16x1xi32>
    %119 = arith.cmpi sge, %112, %118 : vector<16x16x1xi32>
    %c1_i32_140 = arith.constant 1 : i32
    %120 = vector.broadcast %c1_i32_140 : i32 to vector<16x16x1xi32>
    %121 = arith.cmpi sge, %113, %120 : vector<16x16x1xi32>
    %122 = arith.andi %119, %121 : vector<16x16x1xi1>
    %cst_141 = arith.constant 0xFF800000 : f32
    %123 = vector.shape_cast %122 : vector<16x16x1xi1> to vector<16x16x1xi1>
    %124 = vector.broadcast %123 : vector<16x16x1xi1> to vector<16x16x4xi1>
    %125 = vector.broadcast %cst_141 : f32 to vector<16x16x4xf32>
    %126 = arith.select %124, %117, %125 : vector<16x16x4xi1>, vector<16x16x4xf32>
    %127 = arith.maximumf %115, %126 : vector<16x16x4xf32>
    %c0_142 = arith.constant 0 : index
    %c1_143 = arith.constant 1 : index
    %c2_144 = arith.constant 2 : index
    %c0_145 = arith.constant 0 : index
    %128 = vector.load %arg1[%c0_142, %c1_143, %c2_144, %c0_145] : memref<1x20x20x4xf32, #tpu.memory_space<vmem>>, vector<1x16x16x4xf32>
    %129 = vector.shape_cast %128 : vector<1x16x16x4xf32> to vector<16x16x4xf32>
    %c1_i32_146 = arith.constant 1 : i32
    %130 = vector.broadcast %c1_i32_146 : i32 to vector<16x16x1xi32>
    %131 = arith.cmpi sge, %112, %130 : vector<16x16x1xi32>
    %cst_147 = arith.constant 0xFF800000 : f32
    %132 = vector.shape_cast %131 : vector<16x16x1xi1> to vector<16x16x1xi1>
    %133 = vector.broadcast %132 : vector<16x16x1xi1> to vector<16x16x4xi1>
    %134 = vector.broadcast %cst_147 : f32 to vector<16x16x4xf32>
    %135 = arith.select %133, %129, %134 : vector<16x16x4xi1>, vector<16x16x4xf32>
    %136 = arith.maximumf %127, %135 : vector<16x16x4xf32>
    %c0_148 = arith.constant 0 : index
    %c1_149 = arith.constant 1 : index
    %c3_150 = arith.constant 3 : index
    %c0_151 = arith.constant 0 : index
    %137 = vector.load %arg1[%c0_148, %c1_149, %c3_150, %c0_151] : memref<1x20x20x4xf32, #tpu.memory_space<vmem>>, vector<1x16x16x4xf32>
    %138 = vector.shape_cast %137 : vector<1x16x16x4xf32> to vector<16x16x4xf32>
    %c1_i32_152 = arith.constant 1 : i32
    %139 = vector.broadcast %c1_i32_152 : i32 to vector<16x16x1xi32>
    %140 = arith.cmpi sge, %112, %139 : vector<16x16x1xi32>
    %c15_i32 = arith.constant 15 : i32
    %141 = vector.broadcast %c15_i32 : i32 to vector<16x16x1xi32>
    %142 = arith.cmpi slt, %113, %141 : vector<16x16x1xi32>
    %143 = arith.andi %140, %142 : vector<16x16x1xi1>
    %cst_153 = arith.constant 0xFF800000 : f32
    %144 = vector.shape_cast %143 : vector<16x16x1xi1> to vector<16x16x1xi1>
    %145 = vector.broadcast %144 : vector<16x16x1xi1> to vector<16x16x4xi1>
    %146 = vector.broadcast %cst_153 : f32 to vector<16x16x4xf32>
    %147 = arith.select %145, %138, %146 : vector<16x16x4xi1>, vector<16x16x4xf32>
    %148 = arith.maximumf %136, %147 : vector<16x16x4xf32>
    %c0_154 = arith.constant 0 : index
    %c2_155 = arith.constant 2 : index
    %c1_156 = arith.constant 1 : index
    %c0_157 = arith.constant 0 : index
    %149 = vector.load %arg1[%c0_154, %c2_155, %c1_156, %c0_157] : memref<1x20x20x4xf32, #tpu.memory_space<vmem>>, vector<1x16x16x4xf32>
    %150 = vector.shape_cast %149 : vector<1x16x16x4xf32> to vector<16x16x4xf32>
    %c1_i32_158 = arith.constant 1 : i32
    %151 = vector.broadcast %c1_i32_158 : i32 to vector<16x16x1xi32>
    %152 = arith.cmpi sge, %113, %151 : vector<16x16x1xi32>
    %cst_159 = arith.constant 0xFF800000 : f32
    %153 = vector.shape_cast %152 : vector<16x16x1xi1> to vector<16x16x1xi1>
    %154 = vector.broadcast %153 : vector<16x16x1xi1> to vector<16x16x4xi1>
    %155 = vector.broadcast %cst_159 : f32 to vector<16x16x4xf32>
    %156 = arith.select %154, %150, %155 : vector<16x16x4xi1>, vector<16x16x4xf32>
    %157 = arith.maximumf %148, %156 : vector<16x16x4xf32>
    %c0_160 = arith.constant 0 : index
    %c2_161 = arith.constant 2 : index
    %c3_162 = arith.constant 3 : index
    %c0_163 = arith.constant 0 : index
    %158 = vector.load %arg1[%c0_160, %c2_161, %c3_162, %c0_163] : memref<1x20x20x4xf32, #tpu.memory_space<vmem>>, vector<1x16x16x4xf32>
    %159 = vector.shape_cast %158 : vector<1x16x16x4xf32> to vector<16x16x4xf32>
    %c15_i32_164 = arith.constant 15 : i32
    %160 = vector.broadcast %c15_i32_164 : i32 to vector<16x16x1xi32>
    %161 = arith.cmpi slt, %113, %160 : vector<16x16x1xi32>
    %cst_165 = arith.constant 0xFF800000 : f32
    %162 = vector.shape_cast %161 : vector<16x16x1xi1> to vector<16x16x1xi1>
    %163 = vector.broadcast %162 : vector<16x16x1xi1> to vector<16x16x4xi1>
    %164 = vector.broadcast %cst_165 : f32 to vector<16x16x4xf32>
    %165 = arith.select %163, %159, %164 : vector<16x16x4xi1>, vector<16x16x4xf32>
    %166 = arith.maximumf %157, %165 : vector<16x16x4xf32>
    %c0_166 = arith.constant 0 : index
    %c3_167 = arith.constant 3 : index
    %c1_168 = arith.constant 1 : index
    %c0_169 = arith.constant 0 : index
    %167 = vector.load %arg1[%c0_166, %c3_167, %c1_168, %c0_169] : memref<1x20x20x4xf32, #tpu.memory_space<vmem>>, vector<1x16x16x4xf32>
    %168 = vector.shape_cast %167 : vector<1x16x16x4xf32> to vector<16x16x4xf32>
    %c15_i32_170 = arith.constant 15 : i32
    %169 = vector.broadcast %c15_i32_170 : i32 to vector<16x16x1xi32>
    %170 = arith.cmpi slt, %112, %169 : vector<16x16x1xi32>
    %c1_i32_171 = arith.constant 1 : i32
    %171 = vector.broadcast %c1_i32_171 : i32 to vector<16x16x1xi32>
    %172 = arith.cmpi sge, %113, %171 : vector<16x16x1xi32>
    %173 = arith.andi %170, %172 : vector<16x16x1xi1>
    %cst_172 = arith.constant 0xFF800000 : f32
    %174 = vector.shape_cast %173 : vector<16x16x1xi1> to vector<16x16x1xi1>
    %175 = vector.broadcast %174 : vector<16x16x1xi1> to vector<16x16x4xi1>
    %176 = vector.broadcast %cst_172 : f32 to vector<16x16x4xf32>
    %177 = arith.select %175, %168, %176 : vector<16x16x4xi1>, vector<16x16x4xf32>
    %178 = arith.maximumf %166, %177 : vector<16x16x4xf32>
    %c0_173 = arith.constant 0 : index
    %c3_174 = arith.constant 3 : index
    %c2_175 = arith.constant 2 : index
    %c0_176 = arith.constant 0 : index
    %179 = vector.load %arg1[%c0_173, %c3_174, %c2_175, %c0_176] : memref<1x20x20x4xf32, #tpu.memory_space<vmem>>, vector<1x16x16x4xf32>
    %180 = vector.shape_cast %179 : vector<1x16x16x4xf32> to vector<16x16x4xf32>
    %c15_i32_177 = arith.constant 15 : i32
    %181 = vector.broadcast %c15_i32_177 : i32 to vector<16x16x1xi32>
    %182 = arith.cmpi slt, %112, %181 : vector<16x16x1xi32>
    %cst_178 = arith.constant 0xFF800000 : f32
    %183 = vector.shape_cast %182 : vector<16x16x1xi1> to vector<16x16x1xi1>
    %184 = vector.broadcast %183 : vector<16x16x1xi1> to vector<16x16x4xi1>
    %185 = vector.broadcast %cst_178 : f32 to vector<16x16x4xf32>
    %186 = arith.select %184, %180, %185 : vector<16x16x4xi1>, vector<16x16x4xf32>
    %187 = arith.maximumf %178, %186 : vector<16x16x4xf32>
    %c0_179 = arith.constant 0 : index
    %c3_180 = arith.constant 3 : index
    %c3_181 = arith.constant 3 : index
    %c0_182 = arith.constant 0 : index
    %188 = vector.load %arg1[%c0_179, %c3_180, %c3_181, %c0_182] : memref<1x20x20x4xf32, #tpu.memory_space<vmem>>, vector<1x16x16x4xf32>
    %189 = vector.shape_cast %188 : vector<1x16x16x4xf32> to vector<16x16x4xf32>
    %c15_i32_183 = arith.constant 15 : i32
    %190 = vector.broadcast %c15_i32_183 : i32 to vector<16x16x1xi32>
    %191 = arith.cmpi slt, %112, %190 : vector<16x16x1xi32>
    %c15_i32_184 = arith.constant 15 : i32
    %192 = vector.broadcast %c15_i32_184 : i32 to vector<16x16x1xi32>
    %193 = arith.cmpi slt, %113, %192 : vector<16x16x1xi32>
    %194 = arith.andi %191, %193 : vector<16x16x1xi1>
    %cst_185 = arith.constant 0xFF800000 : f32
    %195 = vector.shape_cast %194 : vector<16x16x1xi1> to vector<16x16x1xi1>
    %196 = vector.broadcast %195 : vector<16x16x1xi1> to vector<16x16x4xi1>
    %197 = vector.broadcast %cst_185 : f32 to vector<16x16x4xf32>
    %198 = arith.select %196, %189, %197 : vector<16x16x4xi1>, vector<16x16x4xf32>
    %199 = arith.maximumf %187, %198 : vector<16x16x4xf32>
    %200 = vector.shape_cast %199 : vector<16x16x4xf32> to vector<256x4xf32>
    %c0_186 = arith.constant 0 : index
    %c0_187 = arith.constant 0 : index
    %c20_188 = arith.constant 20 : index
    %201 = vector.load %arg4[%c0_186, %c0_187, %c20_188] : memref<1x256x24xf32, #tpu.memory_space<vmem>>, vector<1x256x4xf32>
    %202 = vector.shape_cast %201 : vector<1x256x4xf32> to vector<256x4xf32>
    %203 = vector.shape_cast %200 : vector<256x4xf32> to vector<1x256x4xf32>
    tpu.vector_store %arg4[%c0_186, %c0_187, %c20_188], %203 {strides = array<i32>} : memref<1x256x24xf32, #tpu.memory_space<vmem>>, vector<1x256x4xf32>,
    return
  }
  func.func @transform_0(%arg0: i32) -> (i32, i32, i32, i32) {
    %c0_i32 = arith.constant 0 : i32
    %c0_i32_0 = arith.constant 0 : i32
    %c0_i32_1 = arith.constant 0 : i32
    %c0_i32_2 = arith.constant 0 : i32
    return %arg0, %c0_i32, %c0_i32_0, %c0_i32_1 : i32, i32, i32, i32
  }
  func.func @transform_1(%arg0: i32) -> (i32, i32) {
    %c0_i32 = arith.constant 0 : i32
    %c0_i32_0 = arith.constant 0 : i32
    %c0_i32_1 = arith.constant 0 : i32
    return %c0_i32, %c0_i32_0 : i32, i32
  }
  func.func @transform_2(%arg0: i32) -> (i32, i32) {
    %c0_i32 = arith.constant 0 : i32
    %c0_i32_0 = arith.constant 0 : i32
    %c0_i32_1 = arith.constant 0 : i32
    return %c0_i32, %c0_i32_0 : i32, i32
  }
  func.func @transform_3(%arg0: i32) -> (i32, i32, i32) {
    %c0_i32 = arith.constant 0 : i32
    %c0_i32_0 = arith.constant 0 : i32
    %c0_i32_1 = arith.constant 0 : i32
    return %arg0, %c0_i32, %c0_i32_0 : i32, i32, i32
  }
}

</mosaic_0001>

<llo_original>
// kernel: tpu_custom_call.1
$region0: #{tpu_custom_call.1}
  #allocation0 [shape = 'u32[]', space=smem, size = 0x4, offset = 0x4, fixed_abs, tag = 'smem constant byte address 0x4 - core index']
  #allocation1 [shape = 'u32[144,128]{1,0:T(1,128)}', space=vmem, size = 0x12000, scoped, tag = 'internal scratch']
  #allocation2 [shape = 'f32[256,100]{1,0:T(8,128)}', space=vmem, size = 0x20000, scoped, tag = 'scratch operand']
  %s0 = inlined_call_operand.vmem [shape: f32[2,20,20,4], index: 0, kind: input, shape index: {}]
  %s1 = inlined_call_operand.vmem [shape: bf16[100,20], index: 1, kind: input, shape index: {}]
  %s2 = inlined_call_operand.vmem [shape: f32[1,20], index: 2, kind: input, shape index: {}]
  %s3 = inlined_call_operand.vmem [shape: f32[2,256,24], index: 3, kind: output, shape index: {}]
  %s4 = sld [smem:[#allocation0]]
  $region45: #{tpu_custom_call.1} parent=0
    _
  %s6 = ssub.s32 1, %s4
  %s7 = scalar_select 0, %s6, %s4
  loop: start=0, step=1, limit=4
  $region2: #{tpu_custom_call.1} parent=0 // loop_pre_header
    _
  $region3: #{tpu_custom_call.1} parent=0 // loop_header
    %s9 = sphi 0, %s13
    %p10 = scmp.ge.s32.totalorder %s9, 4
    %s19 = sphi 0, %s21
    %s22 = sphi 0, %s19
    %s23 = sphi 0, %s22
    %s39 = sphi 0, %s23
    %s43 = sphi 0, %s43
    %s45 = sphi 0, %s43
    %s46 = sphi 0, %s45
    %s60 = sphi 0, %s46
    %s64 = sphi 0, %s64
    %s66 = sphi 0, %s64
    %s67 = sphi 0, %s66
    %s81 = sphi 0, %s67
    %s87 = sphi 0, %s89
    %s90 = sphi 0, %s87
    %s91 = sphi 0, %s90
    %s107 = sphi 0, %s91
  $region4: #{tpu_custom_call.1} parent=0 // loop_header_branch
    %12 = sbr.rel (%p10) target = $region8
  $region5: #{tpu_custom_call.1} parent=0 // loop_body
    %s14 = ssub.s32 %s9, 1
    %s15 = ssub.s32 %s9, 2
    %s16 = sadd.s32 %s9, 1
    %s17 = ssub.s32 %s9, %s16
    %p18 = scmp.eq.s32.totalorder %s17, 0
    %s20 = sadd.s32 %s19, 1
    %s21 = scalar_select %p18, %s19, %s20
    %p24 = pneg %p18
    %p25 = scmp.eq.s32.totalorder %s9, 1
    %p26 = por %p24, %p25
    %p27 = scmp.ne.s32.totalorder %s19, %s22
    %p28 = scmp.eq.s32.totalorder %s9, 0
    %p29 = por %p27, %p28
    %p30 = scmp.ne.s32.totalorder %s19, %s22
    %p31 = scmp.eq.s32.totalorder %s14, 1
    %p32 = por %p30, %p31
    %p33 = scmp.ne.s32.totalorder %s22, %s23
    %p34 = scmp.eq.s32.totalorder %s14, 0
    %p35 = por %p33, %p34
    %p36 = scmp.ne.s32.totalorder %s22, %s23
    %p37 = scmp.eq.s32.totalorder %s15, 1
    %p38 = por %p36, %p37
    %p40 = scmp.ne.s32.totalorder %s23, %s39
    %p41 = scmp.eq.s32.totalorder %s15, 0
    %p42 = por %p40, %p41
    %s44 = sadd.s32 %s43, 1
    %p47 = scmp.eq.s32.totalorder %s9, 1
    %p48 = scmp.ne.s32.totalorder %s43, %s45
    %p49 = scmp.eq.s32.totalorder %s9, 0
    %p50 = por %p48, %p49
    %p51 = scmp.ne.s32.totalorder %s43, %s45
    %p52 = scmp.eq.s32.totalorder %s14, 1
    %p53 = por %p51, %p52
    %p54 = scmp.ne.s32.totalorder %s45, %s46
    %p55 = scmp.eq.s32.totalorder %s14, 0
    %p56 = por %p54, %p55
    %p57 = scmp.ne.s32.totalorder %s45, %s46
    %p58 = scmp.eq.s32.totalorder %s15, 1
    %p59 = por %p57, %p58
    %p61 = scmp.ne.s32.totalorder %s46, %s60
    %p62 = scmp.eq.s32.totalorder %s15, 0
    %p63 = por %p61, %p62
    %s65 = sadd.s32 %s64, 1
    %p68 = scmp.eq.s32.totalorder %s9, 1
    %p69 = scmp.ne.s32.totalorder %s64, %s66
    %p70 = scmp.eq.s32.totalorder %s9, 0
    %p71 = por %p69, %p70
    %p72 = scmp.ne.s32.totalorder %s64, %s66
    %p73 = scmp.eq.s32.totalorder %s14, 1
    %p74 = por %p72, %p73
    %p75 = scmp.ne.s32.totalorder %s66, %s67
    %p76 = scmp.eq.s32.totalorder %s14, 0
    %p77 = por %p75, %p76
    %p78 = scmp.ne.s32.totalorder %s66, %s67
    %p79 = scmp.eq.s32.totalorder %s15, 1
    %p80 = por %p78, %p79
    %p82 = scmp.ne.s32.totalorder %s67, %s81
    %p83 = scmp.eq.s32.totalorder %s15, 0
    %p84 = por %p82, %p83
    %s85 = ssub.s32 %s9, %s16
    %p86 = scmp.eq.s32.totalorder %s85, 0
    %s88 = sadd.s32 %s87, 1
    %s89 = scalar_select %p86, %s87, %s88
    %p92 = pneg %p86
    %p93 = scmp.eq.s32.totalorder %s9, 1
    %p94 = por %p92, %p93
    %p95 = scmp.ne.s32.totalorder %s87, %s90
    %p96 = scmp.eq.s32.totalorder %s9, 0
    %p97 = por %p95, %p96
    %p98 = scmp.ne.s32.totalorder %s87, %s90
    %p99 = scmp.eq.s32.totalorder %s14, 1
    %p100 = por %p98, %p99
    %p101 = scmp.ne.s32.totalorder %s90, %s91
    %p102 = scmp.eq.s32.totalorder %s14, 0
    %p103 = por %p101, %p102
    %p104 = scmp.ne.s32.totalorder %s90, %s91
    %p105 = scmp.eq.s32.totalorder %s15, 1
    %p106 = por %p104, %p105
    %p108 = scmp.ne.s32.totalorder %s91, %s107
    %p109 = scmp.eq.s32.totalorder %s15, 0
    %p110 = por %p108, %p109
    %p111 = scmp.le.s32.totalorder 1, %s9
    %p112 = scmp.lt.s32.totalorder %s9, 3
    %p113 = pnand %p111, %p112
    %p114 = pneg %p113
    // Predicated region
    $region9: #{tpu_custom_call.1} parent=5 // pred_check
      _
    $region10: #{tpu_custom_call.1} parent=5 // pred_check_branch
      %116 = sbr.rel (%p113) target = $region12
    $region11: #{tpu_custom_call.1} parent=5 // pred_region
      %s117 = ssub.s32 %s9, 1
      // Predicated region
      $region13: #{tpu_custom_call.1} parent=11 // pred_check
        %p118 = pneg %p56
      $region14: #{tpu_custom_call.1} parent=11 // pred_check_branch
        %120 = sbr.rel (%p118) target = $region16
      $region15: #{tpu_custom_call.1} parent=11 // pred_region
        _
      $region16: #{tpu_custom_call.1} parent=11 // pred_fallthru
        _
      // Predicated region
      $region17: #{tpu_custom_call.1} parent=11 // pred_check
        %p121 = pneg %p77
      $region18: #{tpu_custom_call.1} parent=11 // pred_check_branch
        %123 = sbr.rel (%p121) target = $region20
      $region19: #{tpu_custom_call.1} parent=11 // pred_region
        _
      $region20: #{tpu_custom_call.1} parent=11 // pred_fallthru
        _
    $region12: #{tpu_custom_call.1} parent=5 // pred_fallthru
      _
    %p124 = scmp.lt.s32.totalorder %s9, 2
    // Predicated region
    $region21: #{tpu_custom_call.1} parent=5 // pred_check
      %p125 = pneg %p124
    $region22: #{tpu_custom_call.1} parent=5 // pred_check_branch
      %127 = sbr.rel (%p125) target = $region24
    $region23: #{tpu_custom_call.1} parent=5 // pred_region
      // Predicated region
      $region25: #{tpu_custom_call.1} parent=23 // pred_check
        %p128 = pneg %p29
      $region26: #{tpu_custom_call.1} parent=23 // pred_check_branch
        %130 = sbr.rel (%p128) target = $region28
      $region27: #{tpu_custom_call.1} parent=23 // pred_region
        %p131 = scmp.lt.s32.totalorder %s9, 1
        %s132 = scalar_select %p131, %s9, 1
        %s133 = smul.addr %s132, 60
        %s134 = smul.addr %s133, 8
        %s135 = scalar_lea.vmem %s0, %s134
      $region28: #{tpu_custom_call.1} parent=23 // pred_fallthru
        _
    $region24: #{tpu_custom_call.1} parent=5 // pred_fallthru
      _
    %p136 = scmp.le.s32.totalorder 1, %s9
    %p137 = scmp.lt.s32.totalorder %s9, 3
    %p138 = pnand %p136, %p137
    %p139 = pneg %p138
    // Predicated region
    $region29: #{tpu_custom_call.1} parent=5 // pred_check
      _
    $region30: #{tpu_custom_call.1} parent=5 // pred_check_branch
      %141 = sbr.rel (%p138) target = $region32
    $region31: #{tpu_custom_call.1} parent=5 // pred_region
      %s142 = ssub.s32 %s9, 1
      %p143 = scmp.lt.s32.totalorder %s14, 1
      %s144 = scalar_select %p143, %s14, 1
      %s145 = smul.addr %s144, 60
      %s146 = smul.addr %s145, 8
      %s147 = scalar_lea.vmem %s0, %s146
      %p148 = pneg %p35
      %p149 = pneg %p32
      %p150 = pneg %p56
      %p151 = pneg %p53
      %p152 = pneg %p77
      %p153 = pneg %p74
      %p154 = pneg %p103
      %p155 = pneg %p100
      %p156 = scmp.lt.s32.totalorder %s14, 1
      %s157 = scalar_select %p156, %s14, 1
      %s158 = smul.addr %s157, 32
      %s159 = smul.addr %s158, 8
      %s160 = scalar_lea.vmem %s3, %s159
      %p161 = scmp.lt.s32.totalorder %s14, 1
      %s162 = scalar_select %p161, %s14, 1
      %s163 = smul.addr %s162, 60
      %s164 = smul.addr %s163, 8
      %s165 = scalar_lea.vmem %s0, %s164
      %p166 = scmp.lt.s32.totalorder %s14, 1
      %s167 = scalar_select %p166, %s14, 1
      %s168 = smul.addr %s167, 32
      %s169 = smul.addr %s168, 8
      %s170 = scalar_lea.vmem %s3, %s169
      %v172 = vld [vmem:[%s165] sm:$0xff]
      %v173 = vld [vmem:[%s165 + $0x8] sm:$0xff]
      %v174 = vld [vmem:[%s165 + $0x18] sm:$0xff]
      %v175 = vld [vmem:[%s165 + $0x20] sm:$0xff]
      %v176 = vld [vmem:[%s165 + $0x30] sm:$0xff]
      %v177 = vld [vmem:[%s165 + $0x38] sm:$0xff]
      %v178 = vld [vmem:[%s165 + $0x48] sm:$0xff]
      %v179 = vld [vmem:[%s165 + $0x50] sm:$0xff]
      %v180 = vld [vmem:[%s165 + $0x60] sm:$0xff]
      %v181 = vld [vmem:[%s165 + $0x68] sm:$0xff]
      %v182 = vld [vmem:[%s165 + $0x78] sm:$0xff]
      %v183 = vld [vmem:[%s165 + $0x80] sm:$0xff]
      %v184 = vld [vmem:[%s165 + $0x90] sm:$0xff]
      %v185 = vld [vmem:[%s165 + $0x98] sm:$0xff]
      %v186 = vld [vmem:[%s165 + $0xa8] sm:$0xff]
      %v187 = vld [vmem:[%s165 + $0xb0] sm:$0xff]
      %v188 = vld [vmem:[%s165 + $0xc0] sm:$0xff]
      %v189 = vld [vmem:[%s165 + $0xc8] sm:$0xff]
      %v190 = vld [vmem:[%s165 + $0xd8] sm:$0xff]
      %v191 = vld [vmem:[%s165 + $0xe0] sm:$0xff]
      %v192 = vld [vmem:[%s165 + $0xf0] sm:$0xff]
      %v193 = vld [vmem:[%s165 + $0xf8] sm:$0xff]
      %v194 = vld [vmem:[%s165 + $0x108] sm:$0xff]
      %v195 = vld [vmem:[%s165 + $0x110] sm:$0xff]
      %v196 = vld [vmem:[%s165 + $0x120] sm:$0xff]
      %v197 = vld [vmem:[%s165 + $0x128] sm:$0xff]
      %v198 = vld [vmem:[%s165 + $0x138] sm:$0xff]
      %v199 = vld [vmem:[%s165 + $0x140] sm:$0xff]
      %v200 = vld [vmem:[%s165 + $0x150] sm:$0xff]
      %v201 = vld [vmem:[%s165 + $0x158] sm:$0xff]
      %v202 = vld [vmem:[%s165 + $0x168] sm:$0xff]
      %v203 = vld [vmem:[%s165 + $0x170] sm:$0xff]
      %vm204 = vcmask 31744
      %205 = vst.msk [vmem:[#allocation2] sm:$0xff] %vm204, %v172
      %206 = vst.msk [vmem:[#allocation2 + $0x8] sm:$0xff] %vm204, %v173
      %207 = vst.msk [vmem:[#allocation2 + $0x10] sm:$0xff] %vm204, %v174
      %208 = vst.msk [vmem:[#allocation2 + $0x18] sm:$0xff] %vm204, %v175
      %209 = vst.msk [vmem:[#allocation2 + $0x20] sm:$0xff] %vm204, %v176
      %210 = vst.msk [vmem:[#allocation2 + $0x28] sm:$0xff] %vm204, %v177
      %211 = vst.msk [vmem:[#allocation2 + $0x30] sm:$0xff] %vm204, %v178
      %212 = vst.msk [vmem:[#allocation2 + $0x38] sm:$0xff] %vm204, %v179
      %213 = vst.msk [vmem:[#allocation2 + $0x40] sm:$0xff] %vm204, %v180
      %214 = vst.msk [vmem:[#allocation2 + $0x48] sm:$0xff] %vm204, %v181
      %215 = vst.msk [vmem:[#allocation2 + $0x50] sm:$0xff] %vm204, %v182
      %216 = vst.msk [vmem:[#allocation2 + $0x58] sm:$0xff] %vm204, %v183
      %217 = vst.msk [vmem:[#allocation2 + $0x60] sm:$0xff] %vm204, %v184
      %218 = vst.msk [vmem:[#allocation2 + $0x68] sm:$0xff] %vm204, %v185
      %219 = vst.msk [vmem:[#allocation2 + $0x70] sm:$0xff] %vm204, %v186
      %220 = vst.msk [vmem:[#allocation2 + $0x78] sm:$0xff] %vm204, %v187
      %221 = vst.msk [vmem:[#allocation2 + $0x80] sm:$0xff] %vm204, %v188
      %222 = vst.msk [vmem:[#allocation2 + $0x88] sm:$0xff] %vm204, %v189
      %223 = vst.msk [vmem:[#allocation2 + $0x90] sm:$0xff] %vm204, %v190
      %224 = vst.msk [vmem:[#allocation2 + $0x98] sm:$0xff] %vm204, %v191
      %225 = vst.msk [vmem:[#allocation2 + $0xa0] sm:$0xff] %vm204, %v192
      %226 = vst.msk [vmem:[#allocation2 + $0xa8] sm:$0xff] %vm204, %v193
      %227 = vst.msk [vmem:[#allocation2 + $0xb0] sm:$0xff] %vm204, %v194
      %228 = vst.msk [vmem:[#allocation2 + $0xb8] sm:$0xff] %vm204, %v195
      %229 = vst.msk [vmem:[#allocation2 + $0xc0] sm:$0xff] %vm204, %v196
      %230 = vst.msk [vmem:[#allocation2 + $0xc8] sm:$0xff] %vm204, %v197
      %231 = vst.msk [vmem:[#allocation2 + $0xd0] sm:$0xff] %vm204, %v198
      %232 = vst.msk [vmem:[#allocation2 + $0xd8] sm:$0xff] %vm204, %v199
      %233 = vst.msk [vmem:[#allocation2 + $0xe0] sm:$0xff] %vm204, %v200
      %234 = vst.msk [vmem:[#allocation2 + $0xe8] sm:$0xff] %vm204, %v201
      %235 = vst.msk [vmem:[#allocation2 + $0xf0] sm:$0xff] %vm204, %v202
      %236 = vst.msk [vmem:[#allocation2 + $0xf8] sm:$0xff] %vm204, %v203
      %v237 = vld [vmem:[%s165 + $0x1] sm:$0xff]
      %v238 = vld [vmem:[%s165 + $0x9] sm:$0xff]
      %v239 = vld [vmem:[%s165 + $0x19] sm:$0xff]
      %v240 = vld [vmem:[%s165 + $0x21] sm:$0xff]
      %v241 = vld [vmem:[%s165 + $0x31] sm:$0xff]
      %v242 = vld [vmem:[%s165 + $0x39] sm:$0xff]
      %v243 = vld [vmem:[%s165 + $0x49] sm:$0xff]
      %v244 = vld [vmem:[%s165 + $0x51] sm:$0xff]
      %v245 = vld [vmem:[%s165 + $0x61] sm:$0xff]
      %v246 = vld [vmem:[%s165 + $0x69] sm:$0xff]
      %v247 = vld [vmem:[%s165 + $0x79] sm:$0xff]
      %v248 = vld [vmem:[%s165 + $0x81] sm:$0xff]
      %v249 = vld [vmem:[%s165 + $0x91] sm:$0xff]
      %v250 = vld [vmem:[%s165 + $0x99] sm:$0xff]
      %v251 = vld [vmem:[%s165 + $0xa9] sm:$0xff]
      %v252 = vld [vmem:[%s165 + $0xb1] sm:$0xff]
      %v253 = vld [vmem:[%s165 + $0xc1] sm:$0xff]
      %v254 = vld [vmem:[%s165 + $0xc9] sm:$0xff]
      %v255 = vld [vmem:[%s165 + $0xd9] sm:$0xff]
      %v256 = vld [vmem:[%s165 + $0xe1] sm:$0xff]
      %v257 = vld [vmem:[%s165 + $0xf1] sm:$0xff]
      %v258 = vld [vmem:[%s165 + $0xf9] sm:$0xff]
      %v259 = vld [vmem:[%s165 + $0x109] sm:$0xff]
      %v260 = vld [vmem:[%s165 + $0x111] sm:$0xff]
      %v261 = vld [vmem:[%s165 + $0x121] sm:$0xff]
      %v262 = vld [vmem:[%s165 + $0x129] sm:$0xff]
      %v263 = vld [vmem:[%s165 + $0x139] sm:$0xff]
      %v264 = vld [vmem:[%s165 + $0x141] sm:$0xff]
      %v265 = vld [vmem:[%s165 + $0x151] sm:$0xff]
      %v266 = vld [vmem:[%s165 + $0x159] sm:$0xff]
      %v267 = vld [vmem:[%s165 + $0x169] sm:$0xff]
      %v268 = vld [vmem:[%s165 + $0x171] sm:$0xff]
      %301 = vrot.lane.b32.xlu0 %v237, 4
      %v302 = vpop.permute.xlu0 %301
      %303 = vrot.lane.b32.xlu0 %v238, 4
      %v304 = vpop.permute.xlu0 %303
      %305 = vrot.lane.b32.xlu0 %v239, 4
      %v306 = vpop.permute.xlu0 %305
      %307 = vrot.lane.b32.xlu0 %v240, 4
      %v308 = vpop.permute.xlu0 %307
      %309 = vrot.lane.b32.xlu0 %v241, 4
      %v310 = vpop.permute.xlu0 %309
      %311 = vrot.lane.b32.xlu0 %v242, 4
      %v312 = vpop.permute.xlu0 %311
      %313 = vrot.lane.b32.xlu0 %v243, 4
      %v314 = vpop.permute.xlu0 %313
      %315 = vrot.lane.b32.xlu0 %v244, 4
      %v316 = vpop.permute.xlu0 %315
      %317 = vrot.lane.b32.xlu0 %v245, 4
      %v318 = vpop.permute.xlu0 %317
      %319 = vrot.lane.b32.xlu0 %v246, 4
      %v320 = vpop.permute.xlu0 %319
      %321 = vrot.lane.b32.xlu0 %v247, 4
      %v322 = vpop.permute.xlu0 %321
      %323 = vrot.lane.b32.xlu0 %v248, 4
      %v324 = vpop.permute.xlu0 %323
      %325 = vrot.lane.b32.xlu0 %v249, 4
      %v326 = vpop.permute.xlu0 %325
      %327 = vrot.lane.b32.xlu0 %v250, 4
      %v328 = vpop.permute.xlu0 %327
      %329 = vrot.lane.b32.xlu0 %v251, 4
      %v330 = vpop.permute.xlu0 %329
      %331 = vrot.lane.b32.xlu0 %v252, 4
      %v332 = vpop.permute.xlu0 %331
      %333 = vrot.lane.b32.xlu0 %v253, 4
      %v334 = vpop.permute.xlu0 %333
      %335 = vrot.lane.b32.xlu0 %v254, 4
      %v336 = vpop.permute.xlu0 %335
      %337 = vrot.lane.b32.xlu0 %v255, 4
      %v338 = vpop.permute.xlu0 %337
      %339 = vrot.lane.b32.xlu0 %v256, 4
      %v340 = vpop.permute.xlu0 %339
      %341 = vrot.lane.b32.xlu0 %v257, 4
      %v342 = vpop.permute.xlu0 %341
      %343 = vrot.lane.b32.xlu0 %v258, 4
      %v344 = vpop.permute.xlu0 %343
      %345 = vrot.lane.b32.xlu0 %v259, 4
      %v346 = vpop.permute.xlu0 %345
      %347 = vrot.lane.b32.xlu0 %v260, 4
      %v348 = vpop.permute.xlu0 %347
      %349 = vrot.lane.b32.xlu0 %v261, 4
      %v350 = vpop.permute.xlu0 %349
      %351 = vrot.lane.b32.xlu0 %v262, 4
      %v352 = vpop.permute.xlu0 %351
      %353 = vrot.lane.b32.xlu0 %v263, 4
      %v354 = vpop.permute.xlu0 %353
      %355 = vrot.lane.b32.xlu0 %v264, 4
      %v356 = vpop.permute.xlu0 %355
      %357 = vrot.lane.b32.xlu0 %v265, 4
      %v358 = vpop.permute.xlu0 %357
      %359 = vrot.lane.b32.xlu0 %v266, 4
      %v360 = vpop.permute.xlu0 %359
      %361 = vrot.lane.b32.xlu0 %v267, 4
      %v362 = vpop.permute.xlu0 %361
      %363 = vrot.lane.b32.xlu0 %v268, 4
      %v364 = vpop.permute.xlu0 %363
      %vm397 = vcmask 64544
      %398 = vst.msk [vmem:[#allocation2] sm:$0xff] %vm397, %v302
      %399 = vst.msk [vmem:[#allocation2 + $0x8] sm:$0xff] %vm397, %v304
      %400 = vst.msk [vmem:[#allocation2 + $0x10] sm:$0xff] %vm397, %v306
      %401 = vst.msk [vmem:[#allocation2 + $0x18] sm:$0xff] %vm397, %v308
      %402 = vst.msk [vmem:[#allocation2 + $0x20] sm:$0xff] %vm397, %v310
      %403 = vst.msk [vmem:[#allocation2 + $0x28] sm:$0xff] %vm397, %v312
      %404 = vst.msk [vmem:[#allocation2 + $0x30] sm:$0xff] %vm397, %v314
      %405 = vst.msk [vmem:[#allocation2 + $0x38] sm:$0xff] %vm397, %v316
      %406 = vst.msk [vmem:[#allocation2 + $0x40] sm:$0xff] %vm397, %v318
      %407 = vst.msk [vmem:[#allocation2 + $0x48] sm:$0xff] %vm397, %v320
      %408 = vst.msk [vmem:[#allocation2 + $0x50] sm:$0xff] %vm397, %v322
      %409 = vst.msk [vmem:[#allocation2 + $0x58] sm:$0xff] %vm397, %v324
      %410 = vst.msk [vmem:[#allocation2 + $0x60] sm:$0xff] %vm397, %v326
      %411 = vst.msk [vmem:[#allocation2 + $0x68] sm:$0xff] %vm397, %v328
      %412 = vst.msk [vmem:[#allocation2 + $0x70] sm:$0xff] %vm397, %v330
      %413 = vst.msk [vmem:[#allocation2 + $0x78] sm:$0xff] %vm397, %v332
      %414 = vst.msk [vmem:[#allocation2 + $0x80] sm:$0xff] %vm397, %v334
      %415 = vst.msk [vmem:[#allocation2 + $0x88] sm:$0xff] %vm397, %v336
      %416 = vst.msk [vmem:[#allocation2 + $0x90] sm:$0xff] %vm397, %v338
      %417 = vst.msk [vmem:[#allocation2 + $0x98] sm:$0xff] %vm397, %v340
      %418 = vst.msk [vmem:[#allocation2 + $0xa0] sm:$0xff] %vm397, %v342
      %419 = vst.msk [vmem:[#allocation2 + $0xa8] sm:$0xff] %vm397, %v344
      %420 = vst.msk [vmem:[#allocation2 + $0xb0] sm:$0xff] %vm397, %v346
      %421 = vst.msk [vmem:[#allocation2 + $0xb8] sm:$0xff] %vm397, %v348
      %422 = vst.msk [vmem:[#allocation2 + $0xc0] sm:$0xff] %vm397, %v350
      %423 = vst.msk [vmem:[#allocation2 + $0xc8] sm:$0xff] %vm397, %v352
      %424 = vst.msk [vmem:[#allocation2 + $0xd0] sm:$0xff] %vm397, %v354
      %425 = vst.msk [vmem:[#allocation2 + $0xd8] sm:$0xff] %vm397, %v356
      %426 = vst.msk [vmem:[#allocation2 + $0xe0] sm:$0xff] %vm397, %v358
      %427 = vst.msk [vmem:[#allocation2 + $0xe8] sm:$0xff] %vm397, %v360
      %428 = vst.msk [vmem:[#allocation2 + $0xf0] sm:$0xff] %vm397, %v362
      %429 = vst.msk [vmem:[#allocation2 + $0xf8] sm:$0xff] %vm397, %v364
      %v430 = vld [vmem:[%s165 + $0x2] sm:$0xff]
      %v431 = vld [vmem:[%s165 + $0xa] sm:$0xff]
      %v432 = vld [vmem:[%s165 + $0x1a] sm:$0xff]
      %v433 = vld [vmem:[%s165 + $0x22] sm:$0xff]
      %v434 = vld [vmem:[%s165 + $0x32] sm:$0xff]
      %v435 = vld [vmem:[%s165 + $0x3a] sm:$0xff]
      %v436 = vld [vmem:[%s165 + $0x4a] sm:$0xff]
      %v437 = vld [vmem:[%s165 + $0x52] sm:$0xff]
      %v438 = vld [vmem:[%s165 + $0x62] sm:$0xff]
      %v439 = vld [vmem:[%s165 + $0x6a] sm:$0xff]
      %v440 = vld [vmem:[%s165 + $0x7a] sm:$0xff]
      %v441 = vld [vmem:[%s165 + $0x82] sm:$0xff]
      %v442 = vld [vmem:[%s165 + $0x92] sm:$0xff]
      %v443 = vld [vmem:[%s165 + $0x9a] sm:$0xff]
      %v444 = vld [vmem:[%s165 + $0xaa] sm:$0xff]
      %v445 = vld [vmem:[%s165 + $0xb2] sm:$0xff]
      %v446 = vld [vmem:[%s165 + $0xc2] sm:$0xff]
      %v447 = vld [vmem:[%s165 + $0xca] sm:$0xff]
      %v448 = vld [vmem:[%s165 + $0xda] sm:$0xff]
      %v449 = vld [vmem:[%s165 + $0xe2] sm:$0xff]
      %v450 = vld [vmem:[%s165 + $0xf2] sm:$0xff]
      %v451 = vld [vmem:[%s165 + $0xfa] sm:$0xff]
      %v452 = vld [vmem:[%s165 + $0x10a] sm:$0xff]
      %v453 = vld [vmem:[%s165 + $0x112] sm:$0xff]
      %v454 = vld [vmem:[%s165 + $0x122] sm:$0xff]
      %v455 = vld [vmem:[%s165 + $0x12a] sm:$0xff]
      %v456 = vld [vmem:[%s165 + $0x13a] sm:$0xff]
      %v457 = vld [vmem:[%s165 + $0x142] sm:$0xff]
      %v458 = vld [vmem:[%s165 + $0x152] sm:$0xff]
      %v459 = vld [vmem:[%s165 + $0x15a] sm:$0xff]
      %v460 = vld [vmem:[%s165 + $0x16a] sm:$0xff]
      %v461 = vld [vmem:[%s165 + $0x172] sm:$0xff]
      %494 = vrot.lane.b32.xlu0 %v430, 8
      %v495 = vpop.permute.xlu0 %494
      %496 = vrot.lane.b32.xlu0 %v431, 8
      %v497 = vpop.permute.xlu0 %496
      %498 = vrot.lane.b32.xlu0 %v432, 8
      %v499 = vpop.permute.xlu0 %498
      %500 = vrot.lane.b32.xlu0 %v433, 8
      %v501 = vpop.permute.xlu0 %500
      %502 = vrot.lane.b32.xlu0 %v434, 8
      %v503 = vpop.permute.xlu0 %502
      %504 = vrot.lane.b32.xlu0 %v435, 8
      %v505 = vpop.permute.xlu0 %504
      %506 = vrot.lane.b32.xlu0 %v436, 8
      %v507 = vpop.permute.xlu0 %506
      %508 = vrot.lane.b32.xlu0 %v437, 8
      %v509 = vpop.permute.xlu0 %508
      %510 = vrot.lane.b32.xlu0 %v438, 8
      %v511 = vpop.permute.xlu0 %510
      %512 = vrot.lane.b32.xlu0 %v439, 8
      %v513 = vpop.permute.xlu0 %512
      %514 = vrot.lane.b32.xlu0 %v440, 8
      %v515 = vpop.permute.xlu0 %514
      %516 = vrot.lane.b32.xlu0 %v441, 8
      %v517 = vpop.permute.xlu0 %516
      %518 = vrot.lane.b32.xlu0 %v442, 8
      %v519 = vpop.permute.xlu0 %518
      %520 = vrot.lane.b32.xlu0 %v443, 8
      %v521 = vpop.permute.xlu0 %520
      %522 = vrot.lane.b32.xlu0 %v444, 8
      %v523 = vpop.permute.xlu0 %522
      %524 = vrot.lane.b32.xlu0 %v445, 8
      %v525 = vpop.permute.xlu0 %524
      %526 = vrot.lane.b32.xlu0 %v446, 8
      %v527 = vpop.permute.xlu0 %526
      %528 = vrot.lane.b32.xlu0 %v447, 8
      %v529 = vpop.permute.xlu0 %528
      %530 = vrot.lane.b32.xlu0 %v448, 8
      %v531 = vpop.permute.xlu0 %530
      %532 = vrot.lane.b32.xlu0 %v449, 8
      %v533 = vpop.permute.xlu0 %532
      %534 = vrot.lane.b32.xlu0 %v450, 8
      %v535 = vpop.permute.xlu0 %534
      %536 = vrot.lane.b32.xlu0 %v451, 8
      %v537 = vpop.permute.xlu0 %536
      %538 = vrot.lane.b32.xlu0 %v452, 8
      %v539 = vpop.permute.xlu0 %538
      %540 = vrot.lane.b32.xlu0 %v453, 8
      %v541 = vpop.permute.xlu0 %540
      %542 = vrot.lane.b32.xlu0 %v454, 8
      %v543 = vpop.permute.xlu0 %542
      %544 = vrot.lane.b32.xlu0 %v455, 8
      %v545 = vpop.permute.xlu0 %544
      %546 = vrot.lane.b32.xlu0 %v456, 8
      %v547 = vpop.permute.xlu0 %546
      %548 = vrot.lane.b32.xlu0 %v457, 8
      %v549 = vpop.permute.xlu0 %548
      %550 = vrot.lane.b32.xlu0 %v458, 8
      %v551 = vpop.permute.xlu0 %550
      %552 = vrot.lane.b32.xlu0 %v459, 8
      %v553 = vpop.permute.xlu0 %552
      %554 = vrot.lane.b32.xlu0 %v460, 8
      %v555 = vpop.permute.xlu0 %554
      %556 = vrot.lane.b32.xlu0 %v461, 8
      %v557 = vpop.permute.xlu0 %556
      %vm590 = vcmask 97344
      %591 = vst.msk [vmem:[#allocation2] sm:$0xff] %vm590, %v495
      %592 = vst.msk [vmem:[#allocation2 + $0x8] sm:$0xff] %vm590, %v497
      %593 = vst.msk [vmem:[#allocation2 + $0x10] sm:$0xff] %vm590, %v499
      %594 = vst.msk [vmem:[#allocation2 + $0x18] sm:$0xff] %vm590, %v501
      %595 = vst.msk [vmem:[#allocation2 + $0x20] sm:$0xff] %vm590, %v503
      %596 = vst.msk [vmem:[#allocation2 + $0x28] sm:$0xff] %vm590, %v505
      %597 = vst.msk [vmem:[#allocation2 + $0x30] sm:$0xff] %vm590, %v507
      %598 = vst.msk [vmem:[#allocation2 + $0x38] sm:$0xff] %vm590, %v509
      %599 = vst.msk [vmem:[#allocation2 + $0x40] sm:$0xff] %vm590, %v511
      %600 = vst.msk [vmem:[#allocation2 + $0x48] sm:$0xff] %vm590, %v513
      %601 = vst.msk [vmem:[#allocation2 + $0x50] sm:$0xff] %vm590, %v515
      %602 = vst.msk [vmem:[#allocation2 + $0x58] sm:$0xff] %vm590, %v517
      %603 = vst.msk [vmem:[#allocation2 + $0x60] sm:$0xff] %vm590, %v519
      %604 = vst.msk [vmem:[#allocation2 + $0x68] sm:$0xff] %vm590, %v521
      %605 = vst.msk [vmem:[#allocation2 + $0x70] sm:$0xff] %vm590, %v523
      %606 = vst.msk [vmem:[#allocation2 + $0x78] sm:$0xff] %vm590, %v525
      %607 = vst.msk [vmem:[#allocation2 + $0x80] sm:$0xff] %vm590, %v527
      %608 = vst.msk [vmem:[#allocation2 + $0x88] sm:$0xff] %vm590, %v529
      %609 = vst.msk [vmem:[#allocation2 + $0x90] sm:$0xff] %vm590, %v531
      %610 = vst.msk [vmem:[#allocation2 + $0x98] sm:$0xff] %vm590, %v533
      %611 = vst.msk [vmem:[#allocation2 + $0xa0] sm:$0xff] %vm590, %v535
      %612 = vst.msk [vmem:[#allocation2 + $0xa8] sm:$0xff] %vm590, %v537
      %613 = vst.msk [vmem:[#allocation2 + $0xb0] sm:$0xff] %vm590, %v539
      %614 = vst.msk [vmem:[#allocation2 + $0xb8] sm:$0xff] %vm590, %v541
      %615 = vst.msk [vmem:[#allocation2 + $0xc0] sm:$0xff] %vm590, %v543
      %616 = vst.msk [vmem:[#allocation2 + $0xc8] sm:$0xff] %vm590, %v545
      %617 = vst.msk [vmem:[#allocation2 + $0xd0] sm:$0xff] %vm590, %v547
      %618 = vst.msk [vmem:[#allocation2 + $0xd8] sm:$0xff] %vm590, %v549
      %619 = vst.msk [vmem:[#allocation2 + $0xe0] sm:$0xff] %vm590, %v551
      %620 = vst.msk [vmem:[#allocation2 + $0xe8] sm:$0xff] %vm590, %v553
      %621 = vst.msk [vmem:[#allocation2 + $0xf0] sm:$0xff] %vm590, %v555
      %622 = vst.msk [vmem:[#allocation2 + $0xf8] sm:$0xff] %vm590, %v557
      %v623 = vld [vmem:[%s165 + $0x3] sm:$0xff]
      %v624 = vld [vmem:[%s165 + $0xb] sm:$0xff]
      %v625 = vld [vmem:[%s165 + $0x1b] sm:$0xff]
      %v626 = vld [vmem:[%s165 + $0x23] sm:$0xff]
      %v627 = vld [vmem:[%s165 + $0x33] sm:$0xff]
      %v628 = vld [vmem:[%s165 + $0x3b] sm:$0xff]
      %v629 = vld [vmem:[%s165 + $0x4b] sm:$0xff]
      %v630 = vld [vmem:[%s165 + $0x53] sm:$0xff]
      %v631 = vld [vmem:[%s165 + $0x63] sm:$0xff]
      %v632 = vld [vmem:[%s165 + $0x6b] sm:$0xff]
      %v633 = vld [vmem:[%s165 + $0x7b] sm:$0xff]
      %v634 = vld [vmem:[%s165 + $0x83] sm:$0xff]
      %v635 = vld [vmem:[%s165 + $0x93] sm:$0xff]
      %v636 = vld [vmem:[%s165 + $0x9b] sm:$0xff]
      %v637 = vld [vmem:[%s165 + $0xab] sm:$0xff]
      %v638 = vld [vmem:[%s165 + $0xb3] sm:$0xff]
      %v639 = vld [vmem:[%s165 + $0xc3] sm:$0xff]
      %v640 = vld [vmem:[%s165 + $0xcb] sm:$0xff]
      %v641 = vld [vmem:[%s165 + $0xdb] sm:$0xff]
      %v642 = vld [vmem:[%s165 + $0xe3] sm:$0xff]
      %v643 = vld [vmem:[%s165 + $0xf3] sm:$0xff]
      %v644 = vld [vmem:[%s165 + $0xfb] sm:$0xff]
      %v645 = vld [vmem:[%s165 + $0x10b] sm:$0xff]
      %v646 = vld [vmem:[%s165 + $0x113] sm:$0xff]
      %v647 = vld [vmem:[%s165 + $0x123] sm:$0xff]
      %v648 = vld [vmem:[%s165 + $0x12b] sm:$0xff]
      %v649 = vld [vmem:[%s165 + $0x13b] sm:$0xff]
      %v650 = vld [vmem:[%s165 + $0x143] sm:$0xff]
      %v651 = vld [vmem:[%s165 + $0x153] sm:$0xff]
      %v652 = vld [vmem:[%s165 + $0x15b] sm:$0xff]
      %v653 = vld [vmem:[%s165 + $0x16b] sm:$0xff]
      %v654 = vld [vmem:[%s165 + $0x173] sm:$0xff]
      %687 = vrot.lane.b32.xlu0 %v623, 12
      %v688 = vpop.permute.xlu0 %687
      %689 = vrot.lane.b32.xlu0 %v624, 12
      %v690 = vpop.permute.xlu0 %689
      %691 = vrot.lane.b32.xlu0 %v625, 12
      %v692 = vpop.permute.xlu0 %691
      %693 = vrot.lane.b32.xlu0 %v626, 12
      %v694 = vpop.permute.xlu0 %693
      %695 = vrot.lane.b32.xlu0 %v627, 12
      %v696 = vpop.permute.xlu0 %695
      %697 = vrot.lane.b32.xlu0 %v628, 12
      %v698 = vpop.permute.xlu0 %697
      %699 = vrot.lane.b32.xlu0 %v629, 12
      %v700 = vpop.permute.xlu0 %699
      %701 = vrot.lane.b32.xlu0 %v630, 12
      %v702 = vpop.permute.xlu0 %701
      %703 = vrot.lane.b32.xlu0 %v631, 12
      %v704 = vpop.permute.xlu0 %703
      %705 = vrot.lane.b32.xlu0 %v632, 12
      %v706 = vpop.permute.xlu0 %705
      %707 = vrot.lane.b32.xlu0 %v633, 12
      %v708 = vpop.permute.xlu0 %707
      %709 = vrot.lane.b32.xlu0 %v634, 12
      %v710 = vpop.permute.xlu0 %709
      %711 = vrot.lane.b32.xlu0 %v635, 12
      %v712 = vpop.permute.xlu0 %711
      %713 = vrot.lane.b32.xlu0 %v636, 12
      %v714 = vpop.permute.xlu0 %713
      %715 = vrot.lane.b32.xlu0 %v637, 12
      %v716 = vpop.permute.xlu0 %715
      %717 = vrot.lane.b32.xlu0 %v638, 12
      %v718 = vpop.permute.xlu0 %717
      %719 = vrot.lane.b32.xlu0 %v639, 12
      %v720 = vpop.permute.xlu0 %719
      %721 = vrot.lane.b32.xlu0 %v640, 12
      %v722 = vpop.permute.xlu0 %721
      %723 = vrot.lane.b32.xlu0 %v641, 12
      %v724 = vpop.permute.xlu0 %723
      %725 = vrot.lane.b32.xlu0 %v642, 12
      %v726 = vpop.permute.xlu0 %725
      %727 = vrot.lane.b32.xlu0 %v643, 12
      %v728 = vpop.permute.xlu0 %727
      %729 = vrot.lane.b32.xlu0 %v644, 12
      %v730 = vpop.permute.xlu0 %729
      %731 = vrot.lane.b32.xlu0 %v645, 12
      %v732 = vpop.permute.xlu0 %731
      %733 = vrot.lane.b32.xlu0 %v646, 12
      %v734 = vpop.permute.xlu0 %733
      %735 = vrot.lane.b32.xlu0 %v647, 12
      %v736 = vpop.permute.xlu0 %735
      %737 = vrot.lane.b32.xlu0 %v648, 12
      %v738 = vpop.permute.xlu0 %737
      %739 = vrot.lane.b32.xlu0 %v649, 12
      %v740 = vpop.permute.xlu0 %739
      %741 = vrot.lane.b32.xlu0 %v650, 12
      %v742 = vpop.permute.xlu0 %741
      %743 = vrot.lane.b32.xlu0 %v651, 12
      %v744 = vpop.permute.xlu0 %743
      %745 = vrot.lane.b32.xlu0 %v652, 12
      %v746 = vpop.permute.xlu0 %745
      %747 = vrot.lane.b32.xlu0 %v653, 12
      %v748 = vpop.permute.xlu0 %747
      %749 = vrot.lane.b32.xlu0 %v654, 12
      %v750 = vpop.permute.xlu0 %749
      %vm783 = vcmask 130144
      %784 = vst.msk [vmem:[#allocation2] sm:$0xff] %vm783, %v688
      %785 = vst.msk [vmem:[#allocation2 + $0x8] sm:$0xff] %vm783, %v690
      %786 = vst.msk [vmem:[#allocation2 + $0x10] sm:$0xff] %vm783, %v692
      %787 = vst.msk [vmem:[#allocation2 + $0x18] sm:$0xff] %vm783, %v694
      %788 = vst.msk [vmem:[#allocation2 + $0x20] sm:$0xff] %vm783, %v696
      %789 = vst.msk [vmem:[#allocation2 + $0x28] sm:$0xff] %vm783, %v698
      %790 = vst.msk [vmem:[#allocation2 + $0x30] sm:$0xff] %vm783, %v700
      %791 = vst.msk [vmem:[#allocation2 + $0x38] sm:$0xff] %vm783, %v702
      %792 = vst.msk [vmem:[#allocation2 + $0x40] sm:$0xff] %vm783, %v704
      %793 = vst.msk [vmem:[#allocation2 + $0x48] sm:$0xff] %vm783, %v706
      %794 = vst.msk [vmem:[#allocation2 + $0x50] sm:$0xff] %vm783, %v708
      %795 = vst.msk [vmem:[#allocation2 + $0x58] sm:$0xff] %vm783, %v710
      %796 = vst.msk [vmem:[#allocation2 + $0x60] sm:$0xff] %vm783, %v712
      %797 = vst.msk [vmem:[#allocation2 + $0x68] sm:$0xff] %vm783, %v714
      %798 = vst.msk [vmem:[#allocation2 + $0x70] sm:$0xff] %vm783, %v716
      %799 = vst.msk [vmem:[#allocation2 + $0x78] sm:$0xff] %vm783, %v718
      %800 = vst.msk [vmem:[#allocation2 + $0x80] sm:$0xff] %vm783, %v720
      %801 = vst.msk [vmem:[#allocation2 + $0x88] sm:$0xff] %vm783, %v722
      %802 = vst.msk [vmem:[#allocation2 + $0x90] sm:$0xff] %vm783, %v724
      %803 = vst.msk [vmem:[#allocation2 + $0x98] sm:$0xff] %vm783, %v726
      %804 = vst.msk [vmem:[#allocation2 + $0xa0] sm:$0xff] %vm783, %v728
      %805 = vst.msk [vmem:[#allocation2 + $0xa8] sm:$0xff] %vm783, %v730
      %806 = vst.msk [vmem:[#allocation2 + $0xb0] sm:$0xff] %vm783, %v732
      %807 = vst.msk [vmem:[#allocation2 + $0xb8] sm:$0xff] %vm783, %v734
      %808 = vst.msk [vmem:[#allocation2 + $0xc0] sm:$0xff] %vm783, %v736
      %809 = vst.msk [vmem:[#allocation2 + $0xc8] sm:$0xff] %vm783, %v738
      %810 = vst.msk [vmem:[#allocation2 + $0xd0] sm:$0xff] %vm783, %v740
      %811 = vst.msk [vmem:[#allocation2 + $0xd8] sm:$0xff] %vm783, %v742
      %812 = vst.msk [vmem:[#allocation2 + $0xe0] sm:$0xff] %vm783, %v744
      %813 = vst.msk [vmem:[#allocation2 + $0xe8] sm:$0xff] %vm783, %v746
      %814 = vst.msk [vmem:[#allocation2 + $0xf0] sm:$0xff] %vm783, %v748
      %815 = vst.msk [vmem:[#allocation2 + $0xf8] sm:$0xff] %vm783, %v750
      %v816 = vld [vmem:[%s165 + $0x4] sm:$0xff]
      %v817 = vld [vmem:[%s165 + $0xc] sm:$0xff]
      %v818 = vld [vmem:[%s165 + $0x1c] sm:$0xff]
      %v819 = vld [vmem:[%s165 + $0x24] sm:$0xff]
      %v820 = vld [vmem:[%s165 + $0x34] sm:$0xff]
      %v821 = vld [vmem:[%s165 + $0x3c] sm:$0xff]
      %v822 = vld [vmem:[%s165 + $0x4c] sm:$0xff]
      %v823 = vld [vmem:[%s165 + $0x54] sm:$0xff]
      %v824 = vld [vmem:[%s165 + $0x64] sm:$0xff]
      %v825 = vld [vmem:[%s165 + $0x6c] sm:$0xff]
      %v826 = vld [vmem:[%s165 + $0x7c] sm:$0xff]
      %v827 = vld [vmem:[%s165 + $0x84] sm:$0xff]
      %v828 = vld [vmem:[%s165 + $0x94] sm:$0xff]
      %v829 = vld [vmem:[%s165 + $0x9c] sm:$0xff]
      %v830 = vld [vmem:[%s165 + $0xac] sm:$0xff]
      %v831 = vld [vmem:[%s165 + $0xb4] sm:$0xff]
      %v832 = vld [vmem:[%s165 + $0xc4] sm:$0xff]
      %v833 = vld [vmem:[%s165 + $0xcc] sm:$0xff]
      %v834 = vld [vmem:[%s165 + $0xdc] sm:$0xff]
      %v835 = vld [vmem:[%s165 + $0xe4] sm:$0xff]
      %v836 = vld [vmem:[%s165 + $0xf4] sm:$0xff]
      %v837 = vld [vmem:[%s165 + $0xfc] sm:$0xff]
      %v838 = vld [vmem:[%s165 + $0x10c] sm:$0xff]
      %v839 = vld [vmem:[%s165 + $0x114] sm:$0xff]
      %v840 = vld [vmem:[%s165 + $0x124] sm:$0xff]
      %v841 = vld [vmem:[%s165 + $0x12c] sm:$0xff]
      %v842 = vld [vmem:[%s165 + $0x13c] sm:$0xff]
      %v843 = vld [vmem:[%s165 + $0x144] sm:$0xff]
      %v844 = vld [vmem:[%s165 + $0x154] sm:$0xff]
      %v845 = vld [vmem:[%s165 + $0x15c] sm:$0xff]
      %v846 = vld [vmem:[%s165 + $0x16c] sm:$0xff]
      %v847 = vld [vmem:[%s165 + $0x174] sm:$0xff]
      %880 = vrot.lane.b32.xlu0 %v816, 16
      %v881 = vpop.permute.xlu0 %880
      %882 = vrot.lane.b32.xlu0 %v817, 16
      %v883 = vpop.permute.xlu0 %882
      %884 = vrot.lane.b32.xlu0 %v818, 16
      %v885 = vpop.permute.xlu0 %884
      %886 = vrot.lane.b32.xlu0 %v819, 16
      %v887 = vpop.permute.xlu0 %886
      %888 = vrot.lane.b32.xlu0 %v820, 16
      %v889 = vpop.permute.xlu0 %888
      %890 = vrot.lane.b32.xlu0 %v821, 16
      %v891 = vpop.permute.xlu0 %890
      %892 = vrot.lane.b32.xlu0 %v822, 16
      %v893 = vpop.permute.xlu0 %892
      %894 = vrot.lane.b32.xlu0 %v823, 16
      %v895 = vpop.permute.xlu0 %894
      %896 = vrot.lane.b32.xlu0 %v824, 16
      %v897 = vpop.permute.xlu0 %896
      %898 = vrot.lane.b32.xlu0 %v825, 16
      %v899 = vpop.permute.xlu0 %898
      %900 = vrot.lane.b32.xlu0 %v826, 16
      %v901 = vpop.permute.xlu0 %900
      %902 = vrot.lane.b32.xlu0 %v827, 16
      %v903 = vpop.permute.xlu0 %902
      %904 = vrot.lane.b32.xlu0 %v828, 16
      %v905 = vpop.permute.xlu0 %904
      %906 = vrot.lane.b32.xlu0 %v829, 16
      %v907 = vpop.permute.xlu0 %906
      %908 = vrot.lane.b32.xlu0 %v830, 16
      %v909 = vpop.permute.xlu0 %908
      %910 = vrot.lane.b32.xlu0 %v831, 16
      %v911 = vpop.permute.xlu0 %910
      %912 = vrot.lane.b32.xlu0 %v832, 16
      %v913 = vpop.permute.xlu0 %912
      %914 = vrot.lane.b32.xlu0 %v833, 16
      %v915 = vpop.permute.xlu0 %914
      %916 = vrot.lane.b32.xlu0 %v834, 16
      %v917 = vpop.permute.xlu0 %916
      %918 = vrot.lane.b32.xlu0 %v835, 16
      %v919 = vpop.permute.xlu0 %918
      %920 = vrot.lane.b32.xlu0 %v836, 16
      %v921 = vpop.permute.xlu0 %920
      %922 = vrot.lane.b32.xlu0 %v837, 16
      %v923 = vpop.permute.xlu0 %922
      %924 = vrot.lane.b32.xlu0 %v838, 16
      %v925 = vpop.permute.xlu0 %924
      %926 = vrot.lane.b32.xlu0 %v839, 16
      %v927 = vpop.permute.xlu0 %926
      %928 = vrot.lane.b32.xlu0 %v840, 16
      %v929 = vpop.permute.xlu0 %928
      %930 = vrot.lane.b32.xlu0 %v841, 16
      %v931 = vpop.permute.xlu0 %930
      %932 = vrot.lane.b32.xlu0 %v842, 16
      %v933 = vpop.permute.xlu0 %932
      %934 = vrot.lane.b32.xlu0 %v843, 16
      %v935 = vpop.permute.xlu0 %934
      %936 = vrot.lane.b32.xlu0 %v844, 16
      %v937 = vpop.permute.xlu0 %936
      %938 = vrot.lane.b32.xlu0 %v845, 16
      %v939 = vpop.permute.xlu0 %938
      %940 = vrot.lane.b32.xlu0 %v846, 16
      %v941 = vpop.permute.xlu0 %940
      %942 = vrot.lane.b32.xlu0 %v847, 16
      %v943 = vpop.permute.xlu0 %942
      %vm976 = vcmask 162944
      %977 = vst.msk [vmem:[#allocation2] sm:$0xff] %vm976, %v881
      %978 = vst.msk [vmem:[#allocation2 + $0x8] sm:$0xff] %vm976, %v883
      %979 = vst.msk [vmem:[#allocation2 + $0x10] sm:$0xff] %vm976, %v885
      %980 = vst.msk [vmem:[#allocation2 + $0x18] sm:$0xff] %vm976, %v887
      %981 = vst.msk [vmem:[#allocation2 + $0x20] sm:$0xff] %vm976, %v889
      %982 = vst.msk [vmem:[#allocation2 + $0x28] sm:$0xff] %vm976, %v891
      %983 = vst.msk [vmem:[#allocation2 + $0x30] sm:$0xff] %vm976, %v893
      %984 = vst.msk [vmem:[#allocation2 + $0x38] sm:$0xff] %vm976, %v895
      %985 = vst.msk [vmem:[#allocation2 + $0x40] sm:$0xff] %vm976, %v897
      %986 = vst.msk [vmem:[#allocation2 + $0x48] sm:$0xff] %vm976, %v899
      %987 = vst.msk [vmem:[#allocation2 + $0x50] sm:$0xff] %vm976, %v901
      %988 = vst.msk [vmem:[#allocation2 + $0x58] sm:$0xff] %vm976, %v903
      %989 = vst.msk [vmem:[#allocation2 + $0x60] sm:$0xff] %vm976, %v905
      %990 = vst.msk [vmem:[#allocation2 + $0x68] sm:$0xff] %vm976, %v907
      %991 = vst.msk [vmem:[#allocation2 + $0x70] sm:$0xff] %vm976, %v909
      %992 = vst.msk [vmem:[#allocation2 + $0x78] sm:$0xff] %vm976, %v911
      %993 = vst.msk [vmem:[#allocation2 + $0x80] sm:$0xff] %vm976, %v913
      %994 = vst.msk [vmem:[#allocation2 + $0x88] sm:$0xff] %vm976, %v915
      %995 = vst.msk [vmem:[#allocation2 + $0x90] sm:$0xff] %vm976, %v917
      %996 = vst.msk [vmem:[#allocation2 + $0x98] sm:$0xff] %vm976, %v919
      %997 = vst.msk [vmem:[#allocation2 + $0xa0] sm:$0xff] %vm976, %v921
      %998 = vst.msk [vmem:[#allocation2 + $0xa8] sm:$0xff] %vm976, %v923
      %999 = vst.msk [vmem:[#allocation2 + $0xb0] sm:$0xff] %vm976, %v925
      %1000 = vst.msk [vmem:[#allocation2 + $0xb8] sm:$0xff] %vm976, %v927
      %1001 = vst.msk [vmem:[#allocation2 + $0xc0] sm:$0xff] %vm976, %v929
      %1002 = vst.msk [vmem:[#allocation2 + $0xc8] sm:$0xff] %vm976, %v931
      %1003 = vst.msk [vmem:[#allocation2 + $0xd0] sm:$0xff] %vm976, %v933
      %1004 = vst.msk [vmem:[#allocation2 + $0xd8] sm:$0xff] %vm976, %v935
      %1005 = vst.msk [vmem:[#allocation2 + $0xe0] sm:$0xff] %vm976, %v937
      %1006 = vst.msk [vmem:[#allocation2 + $0xe8] sm:$0xff] %vm976, %v939
      %1007 = vst.msk [vmem:[#allocation2 + $0xf0] sm:$0xff] %vm976, %v941
      %1008 = vst.msk [vmem:[#allocation2 + $0xf8] sm:$0xff] %vm976, %v943
      %s1009 = scalar_lea.vmem %s165, 24
      %v1010 = vld [vmem:[%s1009] sm:$0xff]
      %v1011 = vld [vmem:[%s1009 + $0x8] sm:$0xff]
      %v1012 = vld [vmem:[%s1009 + $0x18] sm:$0xff]
      %v1013 = vld [vmem:[%s1009 + $0x20] sm:$0xff]
      %v1014 = vld [vmem:[%s1009 + $0x30] sm:$0xff]
      %v1015 = vld [vmem:[%s1009 + $0x38] sm:$0xff]
      %v1016 = vld [vmem:[%s1009 + $0x48] sm:$0xff]
      %v1017 = vld [vmem:[%s1009 + $0x50] sm:$0xff]
      %v1018 = vld [vmem:[%s1009 + $0x60] sm:$0xff]
      %v1019 = vld [vmem:[%s1009 + $0x68] sm:$0xff]
      %v1020 = vld [vmem:[%s1009 + $0x78] sm:$0xff]
      %v1021 = vld [vmem:[%s1009 + $0x80] sm:$0xff]
      %v1022 = vld [vmem:[%s1009 + $0x90] sm:$0xff]
      %v1023 = vld [vmem:[%s1009 + $0x98] sm:$0xff]
      %v1024 = vld [vmem:[%s1009 + $0xa8] sm:$0xff]
      %v1025 = vld [vmem:[%s1009 + $0xb0] sm:$0xff]
      %v1026 = vld [vmem:[%s1009 + $0xc0] sm:$0xff]
      %v1027 = vld [vmem:[%s1009 + $0xc8] sm:$0xff]
      %v1028 = vld [vmem:[%s1009 + $0xd8] sm:$0xff]
      %v1029 = vld [vmem:[%s1009 + $0xe0] sm:$0xff]
      %v1030 = vld [vmem:[%s1009 + $0xf0] sm:$0xff]
      %v1031 = vld [vmem:[%s1009 + $0xf8] sm:$0xff]
      %v1032 = vld [vmem:[%s1009 + $0x108] sm:$0xff]
      %v1033 = vld [vmem:[%s1009 + $0x110] sm:$0xff]
      %v1034 = vld [vmem:[%s1009 + $0x120] sm:$0xff]
      %v1035 = vld [vmem:[%s1009 + $0x128] sm:$0xff]
      %v1036 = vld [vmem:[%s1009 + $0x138] sm:$0xff]
      %v1037 = vld [vmem:[%s1009 + $0x140] sm:$0xff]
      %v1038 = vld [vmem:[%s1009 + $0x150] sm:$0xff]
      %v1039 = vld [vmem:[%s1009 + $0x158] sm:$0xff]
      %v1040 = vld [vmem:[%s1009 + $0x168] sm:$0xff]
      %v1041 = vld [vmem:[%s1009 + $0x170] sm:$0xff]
      %1074 = vrot.lane.b32.xlu0 %v1010, 20
      %v1075 = vpop.permute.xlu0 %1074
      %1076 = vrot.lane.b32.xlu0 %v1011, 20
      %v1077 = vpop.permute.xlu0 %1076
      %1078 = vrot.lane.b32.xlu0 %v1012, 20
      %v1079 = vpop.permute.xlu0 %1078
      %1080 = vrot.lane.b32.xlu0 %v1013, 20
      %v1081 = vpop.permute.xlu0 %1080
      %1082 = vrot.lane.b32.xlu0 %v1014, 20
      %v1083 = vpop.permute.xlu0 %1082
      %1084 = vrot.lane.b32.xlu0 %v1015, 20
      %v1085 = vpop.permute.xlu0 %1084
      %1086 = vrot.lane.b32.xlu0 %v1016, 20
      %v1087 = vpop.permute.xlu0 %1086
      %1088 = vrot.lane.b32.xlu0 %v1017, 20
      %v1089 = vpop.permute.xlu0 %1088
      %1090 = vrot.lane.b32.xlu0 %v1018, 20
      %v1091 = vpop.permute.xlu0 %1090
      %1092 = vrot.lane.b32.xlu0 %v1019, 20
      %v1093 = vpop.permute.xlu0 %1092
      %1094 = vrot.lane.b32.xlu0 %v1020, 20
      %v1095 = vpop.permute.xlu0 %1094
      %1096 = vrot.lane.b32.xlu0 %v1021, 20
      %v1097 = vpop.permute.xlu0 %1096
      %1098 = vrot.lane.b32.xlu0 %v1022, 20
      %v1099 = vpop.permute.xlu0 %1098
      %1100 = vrot.lane.b32.xlu0 %v1023, 20
      %v1101 = vpop.permute.xlu0 %1100
      %1102 = vrot.lane.b32.xlu0 %v1024, 20
      %v1103 = vpop.permute.xlu0 %1102
      %1104 = vrot.lane.b32.xlu0 %v1025, 20
      %v1105 = vpop.permute.xlu0 %1104
      %1106 = vrot.lane.b32.xlu0 %v1026, 20
      %v1107 = vpop.permute.xlu0 %1106
      %1108 = vrot.lane.b32.xlu0 %v1027, 20
      %v1109 = vpop.permute.xlu0 %1108
      %1110 = vrot.lane.b32.xlu0 %v1028, 20
      %v1111 = vpop.permute.xlu0 %1110
      %1112 = vrot.lane.b32.xlu0 %v1029, 20
      %v1113 = vpop.permute.xlu0 %1112
      %1114 = vrot.lane.b32.xlu0 %v1030, 20
      %v1115 = vpop.permute.xlu0 %1114
      %1116 = vrot.lane.b32.xlu0 %v1031, 20
      %v1117 = vpop.permute.xlu0 %1116
      %1118 = vrot.lane.b32.xlu0 %v1032, 20
      %v1119 = vpop.permute.xlu0 %1118
      %1120 = vrot.lane.b32.xlu0 %v1033, 20
      %v1121 = vpop.permute.xlu0 %1120
      %1122 = vrot.lane.b32.xlu0 %v1034, 20
      %v1123 = vpop.permute.xlu0 %1122
      %1124 = vrot.lane.b32.xlu0 %v1035, 20
      %v1125 = vpop.permute.xlu0 %1124
      %1126 = vrot.lane.b32.xlu0 %v1036, 20
      %v1127 = vpop.permute.xlu0 %1126
      %1128 = vrot.lane.b32.xlu0 %v1037, 20
      %v1129 = vpop.permute.xlu0 %1128
      %1130 = vrot.lane.b32.xlu0 %v1038, 20
      %v1131 = vpop.permute.xlu0 %1130
      %1132 = vrot.lane.b32.xlu0 %v1039, 20
      %v1133 = vpop.permute.xlu0 %1132
      %1134 = vrot.lane.b32.xlu0 %v1040, 20
      %v1135 = vpop.permute.xlu0 %1134
      %1136 = vrot.lane.b32.xlu0 %v1041, 20
      %v1137 = vpop.permute.xlu0 %1136
      %vm1170 = vcmask 195744
      %1171 = vst.msk [vmem:[#allocation2] sm:$0xff] %vm1170, %v1075
      %1172 = vst.msk [vmem:[#allocation2 + $0x8] sm:$0xff] %vm1170, %v1077
      %1173 = vst.msk [vmem:[#allocation2 + $0x10] sm:$0xff] %vm1170, %v1079
      %1174 = vst.msk [vmem:[#allocation2 + $0x18] sm:$0xff] %vm1170, %v1081
      %1175 = vst.msk [vmem:[#allocation2 + $0x20] sm:$0xff] %vm1170, %v1083
      %1176 = vst.msk [vmem:[#allocation2 + $0x28] sm:$0xff] %vm1170, %v1085
      %1177 = vst.msk [vmem:[#allocation2 + $0x30] sm:$0xff] %vm1170, %v1087
      %1178 = vst.msk [vmem:[#allocation2 + $0x38] sm:$0xff] %vm1170, %v1089
      %1179 = vst.msk [vmem:[#allocation2 + $0x40] sm:$0xff] %vm1170, %v1091
      %1180 = vst.msk [vmem:[#allocation2 + $0x48] sm:$0xff] %vm1170, %v1093
      %1181 = vst.msk [vmem:[#allocation2 + $0x50] sm:$0xff] %vm1170, %v1095
      %1182 = vst.msk [vmem:[#allocation2 + $0x58] sm:$0xff] %vm1170, %v1097
      %1183 = vst.msk [vmem:[#allocation2 + $0x60] sm:$0xff] %vm1170, %v1099
      %1184 = vst.msk [vmem:[#allocation2 + $0x68] sm:$0xff] %vm1170, %v1101
      %1185 = vst.msk [vmem:[#allocation2 + $0x70] sm:$0xff] %vm1170, %v1103
      %1186 = vst.msk [vmem:[#allocation2 + $0x78] sm:$0xff] %vm1170, %v1105
      %1187 = vst.msk [vmem:[#allocation2 + $0x80] sm:$0xff] %vm1170, %v1107
      %1188 = vst.msk [vmem:[#allocation2 + $0x88] sm:$0xff] %vm1170, %v1109
      %1189 = vst.msk [vmem:[#allocation2 + $0x90] sm:$0xff] %vm1170, %v1111
      %1190 = vst.msk [vmem:[#allocation2 + $0x98] sm:$0xff] %vm1170, %v1113
      %1191 = vst.msk [vmem:[#allocation2 + $0xa0] sm:$0xff] %vm1170, %v1115
      %1192 = vst.msk [vmem:[#allocation2 + $0xa8] sm:$0xff] %vm1170, %v1117
      %1193 = vst.msk [vmem:[#allocation2 + $0xb0] sm:$0xff] %vm1170, %v1119
      %1194 = vst.msk [vmem:[#allocation2 + $0xb8] sm:$0xff] %vm1170, %v1121
      %1195 = vst.msk [vmem:[#allocation2 + $0xc0] sm:$0xff] %vm1170, %v1123
      %1196 = vst.msk [vmem:[#allocation2 + $0xc8] sm:$0xff] %vm1170, %v1125
      %1197 = vst.msk [vmem:[#allocation2 + $0xd0] sm:$0xff] %vm1170, %v1127
      %1198 = vst.msk [vmem:[#allocation2 + $0xd8] sm:$0xff] %vm1170, %v1129
      %1199 = vst.msk [vmem:[#allocation2 + $0xe0] sm:$0xff] %vm1170, %v1131
      %1200 = vst.msk [vmem:[#allocation2 + $0xe8] sm:$0xff] %vm1170, %v1133
      %1201 = vst.msk [vmem:[#allocation2 + $0xf0] sm:$0xff] %vm1170, %v1135
      %1202 = vst.msk [vmem:[#allocation2 + $0xf8] sm:$0xff] %vm1170, %v1137
      %v1203 = vld [vmem:[%s1009 + $0x1] sm:$0xff]
      %v1204 = vld [vmem:[%s1009 + $0x9] sm:$0xff]
      %v1205 = vld [vmem:[%s1009 + $0x19] sm:$0xff]
      %v1206 = vld [vmem:[%s1009 + $0x21] sm:$0xff]
      %v1207 = vld [vmem:[%s1009 + $0x31] sm:$0xff]
      %v1208 = vld [vmem:[%s1009 + $0x39] sm:$0xff]
      %v1209 = vld [vmem:[%s1009 + $0x49] sm:$0xff]
      %v1210 = vld [vmem:[%s1009 + $0x51] sm:$0xff]
      %v1211 = vld [vmem:[%s1009 + $0x61] sm:$0xff]
      %v1212 = vld [vmem:[%s1009 + $0x69] sm:$0xff]
      %v1213 = vld [vmem:[%s1009 + $0x79] sm:$0xff]
      %v1214 = vld [vmem:[%s1009 + $0x81] sm:$0xff]
      %v1215 = vld [vmem:[%s1009 + $0x91] sm:$0xff]
      %v1216 = vld [vmem:[%s1009 + $0x99] sm:$0xff]
      %v1217 = vld [vmem:[%s1009 + $0xa9] sm:$0xff]
      %v1218 = vld [vmem:[%s1009 + $0xb1] sm:$0xff]
      %v1219 = vld [vmem:[%s1009 + $0xc1] sm:$0xff]
      %v1220 = vld [vmem:[%s1009 + $0xc9] sm:$0xff]
      %v1221 = vld [vmem:[%s1009 + $0xd9] sm:$0xff]
      %v1222 = vld [vmem:[%s1009 + $0xe1] sm:$0xff]
      %v1223 = vld [vmem:[%s1009 + $0xf1] sm:$0xff]
      %v1224 = vld [vmem:[%s1009 + $0xf9] sm:$0xff]
      %v1225 = vld [vmem:[%s1009 + $0x109] sm:$0xff]
      %v1226 = vld [vmem:[%s1009 + $0x111] sm:$0xff]
      %v1227 = vld [vmem:[%s1009 + $0x121] sm:$0xff]
      %v1228 = vld [vmem:[%s1009 + $0x129] sm:$0xff]
      %v1229 = vld [vmem:[%s1009 + $0x139] sm:$0xff]
      %v1230 = vld [vmem:[%s1009 + $0x141] sm:$0xff]
      %v1231 = vld [vmem:[%s1009 + $0x151] sm:$0xff]
      %v1232 = vld [vmem:[%s1009 + $0x159] sm:$0xff]
      %v1233 = vld [vmem:[%s1009 + $0x169] sm:$0xff]
      %v1234 = vld [vmem:[%s1009 + $0x171] sm:$0xff]
      %1267 = vrot.lane.b32.xlu0 %v1203, 24
      %v1268 = vpop.permute.xlu0 %1267
      %1269 = vrot.lane.b32.xlu0 %v1204, 24
      %v1270 = vpop.permute.xlu0 %1269
      %1271 = vrot.lane.b32.xlu0 %v1205, 24
      %v1272 = vpop.permute.xlu0 %1271
      %1273 = vrot.lane.b32.xlu0 %v1206, 24
      %v1274 = vpop.permute.xlu0 %1273
      %1275 = vrot.lane.b32.xlu0 %v1207, 24
      %v1276 = vpop.permute.xlu0 %1275
      %1277 = vrot.lane.b32.xlu0 %v1208, 24
      %v1278 = vpop.permute.xlu0 %1277
      %1279 = vrot.lane.b32.xlu0 %v1209, 24
      %v1280 = vpop.permute.xlu0 %1279
      %1281 = vrot.lane.b32.xlu0 %v1210, 24
      %v1282 = vpop.permute.xlu0 %1281
      %1283 = vrot.lane.b32.xlu0 %v1211, 24
      %v1284 = vpop.permute.xlu0 %1283
      %1285 = vrot.lane.b32.xlu0 %v1212, 24
      %v1286 = vpop.permute.xlu0 %1285
      %1287 = vrot.lane.b32.xlu0 %v1213, 24
      %v1288 = vpop.permute.xlu0 %1287
      %1289 = vrot.lane.b32.xlu0 %v1214, 24
      %v1290 = vpop.permute.xlu0 %1289
      %1291 = vrot.lane.b32.xlu0 %v1215, 24
      %v1292 = vpop.permute.xlu0 %1291
      %1293 = vrot.lane.b32.xlu0 %v1216, 24
      %v1294 = vpop.permute.xlu0 %1293
      %1295 = vrot.lane.b32.xlu0 %v1217, 24
      %v1296 = vpop.permute.xlu0 %1295
      %1297 = vrot.lane.b32.xlu0 %v1218, 24
      %v1298 = vpop.permute.xlu0 %1297
      %1299 = vrot.lane.b32.xlu0 %v1219, 24
      %v1300 = vpop.permute.xlu0 %1299
      %1301 = vrot.lane.b32.xlu0 %v1220, 24
      %v1302 = vpop.permute.xlu0 %1301
      %1303 = vrot.lane.b32.xlu0 %v1221, 24
      %v1304 = vpop.permute.xlu0 %1303
      %1305 = vrot.lane.b32.xlu0 %v1222, 24
      %v1306 = vpop.permute.xlu0 %1305
      %1307 = vrot.lane.b32.xlu0 %v1223, 24
      %v1308 = vpop.permute.xlu0 %1307
      %1309 = vrot.lane.b32.xlu0 %v1224, 24
      %v1310 = vpop.permute.xlu0 %1309
      %1311 = vrot.lane.b32.xlu0 %v1225, 24
      %v1312 = vpop.permute.xlu0 %1311
      %1313 = vrot.lane.b32.xlu0 %v1226, 24
      %v1314 = vpop.permute.xlu0 %1313
      %1315 = vrot.lane.b32.xlu0 %v1227, 24
      %v1316 = vpop.permute.xlu0 %1315
      %1317 = vrot.lane.b32.xlu0 %v1228, 24
      %v1318 = vpop.permute.xlu0 %1317
      %1319 = vrot.lane.b32.xlu0 %v1229, 24
      %v1320 = vpop.permute.xlu0 %1319
      %1321 = vrot.lane.b32.xlu0 %v1230, 24
      %v1322 = vpop.permute.xlu0 %1321
      %1323 = vrot.lane.b32.xlu0 %v1231, 24
      %v1324 = vpop.permute.xlu0 %1323
      %1325 = vrot.lane.b32.xlu0 %v1232, 24
      %v1326 = vpop.permute.xlu0 %1325
      %1327 = vrot.lane.b32.xlu0 %v1233, 24
      %v1328 = vpop.permute.xlu0 %1327
      %1329 = vrot.lane.b32.xlu0 %v1234, 24
      %v1330 = vpop.permute.xlu0 %1329
      %vm1363 = vcmask 228544
      %1364 = vst.msk [vmem:[#allocation2] sm:$0xff] %vm1363, %v1268
      %1365 = vst.msk [vmem:[#allocation2 + $0x8] sm:$0xff] %vm1363, %v1270
      %1366 = vst.msk [vmem:[#allocation2 + $0x10] sm:$0xff] %vm1363, %v1272
      %1367 = vst.msk [vmem:[#allocation2 + $0x18] sm:$0xff] %vm1363, %v1274
      %1368 = vst.msk [vmem:[#allocation2 + $0x20] sm:$0xff] %vm1363, %v1276
      %1369 = vst.msk [vmem:[#allocation2 + $0x28] sm:$0xff] %vm1363, %v1278
      %1370 = vst.msk [vmem:[#allocation2 + $0x30] sm:$0xff] %vm1363, %v1280
      %1371 = vst.msk [vmem:[#allocation2 + $0x38] sm:$0xff] %vm1363, %v1282
      %1372 = vst.msk [vmem:[#allocation2 + $0x40] sm:$0xff] %vm1363, %v1284
      %1373 = vst.msk [vmem:[#allocation2 + $0x48] sm:$0xff] %vm1363, %v1286
      %1374 = vst.msk [vmem:[#allocation2 + $0x50] sm:$0xff] %vm1363, %v1288
      %1375 = vst.msk [vmem:[#allocation2 + $0x58] sm:$0xff] %vm1363, %v1290
      %1376 = vst.msk [vmem:[#allocation2 + $0x60] sm:$0xff] %vm1363, %v1292
      %1377 = vst.msk [vmem:[#allocation2 + $0x68] sm:$0xff] %vm1363, %v1294
      %1378 = vst.msk [vmem:[#allocation2 + $0x70] sm:$0xff] %vm1363, %v1296
      %1379 = vst.msk [vmem:[#allocation2 + $0x78] sm:$0xff] %vm1363, %v1298
      %1380 = vst.msk [vmem:[#allocation2 + $0x80] sm:$0xff] %vm1363, %v1300
      %1381 = vst.msk [vmem:[#allocation2 + $0x88] sm:$0xff] %vm1363, %v1302
      %1382 = vst.msk [vmem:[#allocation2 + $0x90] sm:$0xff] %vm1363, %v1304
      %1383 = vst.msk [vmem:[#allocation2 + $0x98] sm:$0xff] %vm1363, %v1306
      %1384 = vst.msk [vmem:[#allocation2 + $0xa0] sm:$0xff] %vm1363, %v1308
      %1385 = vst.msk [vmem:[#allocation2 + $0xa8] sm:$0xff] %vm1363, %v1310
      %1386 = vst.msk [vmem:[#allocation2 + $0xb0] sm:$0xff] %vm1363, %v1312
      %1387 = vst.msk [vmem:[#allocation2 + $0xb8] sm:$0xff] %vm1363, %v1314
      %1388 = vst.msk [vmem:[#allocation2 + $0xc0] sm:$0xff] %vm1363, %v1316
      %1389 = vst.msk [vmem:[#allocation2 + $0xc8] sm:$0xff] %vm1363, %v1318
      %1390 = vst.msk [vmem:[#allocation2 + $0xd0] sm:$0xff] %vm1363, %v1320
      %1391 = vst.msk [vmem:[#allocation2 + $0xd8] sm:$0xff] %vm1363, %v1322
      %1392 = vst.msk [vmem:[#allocation2 + $0xe0] sm:$0xff] %vm1363, %v1324
      %1393 = vst.msk [vmem:[#allocation2 + $0xe8] sm:$0xff] %vm1363, %v1326
      %1394 = vst.msk [vmem:[#allocation2 + $0xf0] sm:$0xff] %vm1363, %v1328
      %1395 = vst.msk [vmem:[#allocation2 + $0xf8] sm:$0xff] %vm1363, %v1330
      %v1396 = vld [vmem:[%s1009 + $0x2] sm:$0xff]
      %v1397 = vld [vmem:[%s1009 + $0xa] sm:$0xff]
      %v1398 = vld [vmem:[%s1009 + $0x1a] sm:$0xff]
      %v1399 = vld [vmem:[%s1009 + $0x22] sm:$0xff]
      %v1400 = vld [vmem:[%s1009 + $0x32] sm:$0xff]
      %v1401 = vld [vmem:[%s1009 + $0x3a] sm:$0xff]
      %v1402 = vld [vmem:[%s1009 + $0x4a] sm:$0xff]
      %v1403 = vld [vmem:[%s1009 + $0x52] sm:$0xff]
      %v1404 = vld [vmem:[%s1009 + $0x62] sm:$0xff]
      %v1405 = vld [vmem:[%s1009 + $0x6a] sm:$0xff]
      %v1406 = vld [vmem:[%s1009 + $0x7a] sm:$0xff]
      %v1407 = vld [vmem:[%s1009 + $0x82] sm:$0xff]
      %v1408 = vld [vmem:[%s1009 + $0x92] sm:$0xff]
      %v1409 = vld [vmem:[%s1009 + $0x9a] sm:$0xff]
      %v1410 = vld [vmem:[%s1009 + $0xaa] sm:$0xff]
      %v1411 = vld [vmem:[%s1009 + $0xb2] sm:$0xff]
      %v1412 = vld [vmem:[%s1009 + $0xc2] sm:$0xff]
      %v1413 = vld [vmem:[%s1009 + $0xca] sm:$0xff]
      %v1414 = vld [vmem:[%s1009 + $0xda] sm:$0xff]
      %v1415 = vld [vmem:[%s1009 + $0xe2] sm:$0xff]
      %v1416 = vld [vmem:[%s1009 + $0xf2] sm:$0xff]
      %v1417 = vld [vmem:[%s1009 + $0xfa] sm:$0xff]
      %v1418 = vld [vmem:[%s1009 + $0x10a] sm:$0xff]
      %v1419 = vld [vmem:[%s1009 + $0x112] sm:$0xff]
      %v1420 = vld [vmem:[%s1009 + $0x122] sm:$0xff]
      %v1421 = vld [vmem:[%s1009 + $0x12a] sm:$0xff]
      %v1422 = vld [vmem:[%s1009 + $0x13a] sm:$0xff]
      %v1423 = vld [vmem:[%s1009 + $0x142] sm:$0xff]
      %v1424 = vld [vmem:[%s1009 + $0x152] sm:$0xff]
      %v1425 = vld [vmem:[%s1009 + $0x15a] sm:$0xff]
      %v1426 = vld [vmem:[%s1009 + $0x16a] sm:$0xff]
      %v1427 = vld [vmem:[%s1009 + $0x172] sm:$0xff]
      %1460 = vrot.lane.b32.xlu0 %v1396, 28
      %v1461 = vpop.permute.xlu0 %1460
      %1462 = vrot.lane.b32.xlu0 %v1397, 28
      %v1463 = vpop.permute.xlu0 %1462
      %1464 = vrot.lane.b32.xlu0 %v1398, 28
      %v1465 = vpop.permute.xlu0 %1464
      %1466 = vrot.lane.b32.xlu0 %v1399, 28
      %v1467 = vpop.permute.xlu0 %1466
      %1468 = vrot.lane.b32.xlu0 %v1400, 28
      %v1469 = vpop.permute.xlu0 %1468
      %1470 = vrot.lane.b32.xlu0 %v1401, 28
      %v1471 = vpop.permute.xlu0 %1470
      %1472 = vrot.lane.b32.xlu0 %v1402, 28
      %v1473 = vpop.permute.xlu0 %1472
      %1474 = vrot.lane.b32.xlu0 %v1403, 28
      %v1475 = vpop.permute.xlu0 %1474
      %1476 = vrot.lane.b32.xlu0 %v1404, 28
      %v1477 = vpop.permute.xlu0 %1476
      %1478 = vrot.lane.b32.xlu0 %v1405, 28
      %v1479 = vpop.permute.xlu0 %1478
      %1480 = vrot.lane.b32.xlu0 %v1406, 28
      %v1481 = vpop.permute.xlu0 %1480
      %1482 = vrot.lane.b32.xlu0 %v1407, 28
      %v1483 = vpop.permute.xlu0 %1482
      %1484 = vrot.lane.b32.xlu0 %v1408, 28
      %v1485 = vpop.permute.xlu0 %1484
      %1486 = vrot.lane.b32.xlu0 %v1409, 28
      %v1487 = vpop.permute.xlu0 %1486
      %1488 = vrot.lane.b32.xlu0 %v1410, 28
      %v1489 = vpop.permute.xlu0 %1488
      %1490 = vrot.lane.b32.xlu0 %v1411, 28
      %v1491 = vpop.permute.xlu0 %1490
      %1492 = vrot.lane.b32.xlu0 %v1412, 28
      %v1493 = vpop.permute.xlu0 %1492
      %1494 = vrot.lane.b32.xlu0 %v1413, 28
      %v1495 = vpop.permute.xlu0 %1494
      %1496 = vrot.lane.b32.xlu0 %v1414, 28
      %v1497 = vpop.permute.xlu0 %1496
      %1498 = vrot.lane.b32.xlu0 %v1415, 28
      %v1499 = vpop.permute.xlu0 %1498
      %1500 = vrot.lane.b32.xlu0 %v1416, 28
      %v1501 = vpop.permute.xlu0 %1500
      %1502 = vrot.lane.b32.xlu0 %v1417, 28
      %v1503 = vpop.permute.xlu0 %1502
      %1504 = vrot.lane.b32.xlu0 %v1418, 28
      %v1505 = vpop.permute.xlu0 %1504
      %1506 = vrot.lane.b32.xlu0 %v1419, 28
      %v1507 = vpop.permute.xlu0 %1506
      %1508 = vrot.lane.b32.xlu0 %v1420, 28
      %v1509 = vpop.permute.xlu0 %1508
      %1510 = vrot.lane.b32.xlu0 %v1421, 28
      %v1511 = vpop.permute.xlu0 %1510
      %1512 = vrot.lane.b32.xlu0 %v1422, 28
      %v1513 = vpop.permute.xlu0 %1512
      %1514 = vrot.lane.b32.xlu0 %v1423, 28
      %v1515 = vpop.permute.xlu0 %1514
      %1516 = vrot.lane.b32.xlu0 %v1424, 28
      %v1517 = vpop.permute.xlu0 %1516
      %1518 = vrot.lane.b32.xlu0 %v1425, 28
      %v1519 = vpop.permute.xlu0 %1518
      %1520 = vrot.lane.b32.xlu0 %v1426, 28
      %v1521 = vpop.permute.xlu0 %1520
      %1522 = vrot.lane.b32.xlu0 %v1427, 28
      %v1523 = vpop.permute.xlu0 %1522
      %vm1556 = vcmask 261344
      %1557 = vst.msk [vmem:[#allocation2] sm:$0xff] %vm1556, %v1461
      %1558 = vst.msk [vmem:[#allocation2 + $0x8] sm:$0xff] %vm1556, %v1463
      %1559 = vst.msk [vmem:[#allocation2 + $0x10] sm:$0xff] %vm1556, %v1465
      %1560 = vst.msk [vmem:[#allocation2 + $0x18] sm:$0xff] %vm1556, %v1467
      %1561 = vst.msk [vmem:[#allocation2 + $0x20] sm:$0xff] %vm1556, %v1469
      %1562 = vst.msk [vmem:[#allocation2 + $0x28] sm:$0xff] %vm1556, %v1471
      %1563 = vst.msk [vmem:[#allocation2 + $0x30] sm:$0xff] %vm1556, %v1473
      %1564 = vst.msk [vmem:[#allocation2 + $0x38] sm:$0xff] %vm1556, %v1475
      %1565 = vst.msk [vmem:[#allocation2 + $0x40] sm:$0xff] %vm1556, %v1477
      %1566 = vst.msk [vmem:[#allocation2 + $0x48] sm:$0xff] %vm1556, %v1479
      %1567 = vst.msk [vmem:[#allocation2 + $0x50] sm:$0xff] %vm1556, %v1481
      %1568 = vst.msk [vmem:[#allocation2 + $0x58] sm:$0xff] %vm1556, %v1483
      %1569 = vst.msk [vmem:[#allocation2 + $0x60] sm:$0xff] %vm1556, %v1485
      %1570 = vst.msk [vmem:[#allocation2 + $0x68] sm:$0xff] %vm1556, %v1487
      %1571 = vst.msk [vmem:[#allocation2 + $0x70] sm:$0xff] %vm1556, %v1489
      %1572 = vst.msk [vmem:[#allocation2 + $0x78] sm:$0xff] %vm1556, %v1491
      %1573 = vst.msk [vmem:[#allocation2 + $0x80] sm:$0xff] %vm1556, %v1493
      %1574 = vst.msk [vmem:[#allocation2 + $0x88] sm:$0xff] %vm1556, %v1495
      %1575 = vst.msk [vmem:[#allocation2 + $0x90] sm:$0xff] %vm1556, %v1497
      %1576 = vst.msk [vmem:[#allocation2 + $0x98] sm:$0xff] %vm1556, %v1499
      %1577 = vst.msk [vmem:[#allocation2 + $0xa0] sm:$0xff] %vm1556, %v1501
      %1578 = vst.msk [vmem:[#allocation2 + $0xa8] sm:$0xff] %vm1556, %v1503
      %1579 = vst.msk [vmem:[#allocation2 + $0xb0] sm:$0xff] %vm1556, %v1505
      %1580 = vst.msk [vmem:[#allocation2 + $0xb8] sm:$0xff] %vm1556, %v1507
      %1581 = vst.msk [vmem:[#allocation2 + $0xc0] sm:$0xff] %vm1556, %v1509
      %1582 = vst.msk [vmem:[#allocation2 + $0xc8] sm:$0xff] %vm1556, %v1511
      %1583 = vst.msk [vmem:[#allocation2 + $0xd0] sm:$0xff] %vm1556, %v1513
      %1584 = vst.msk [vmem:[#allocation2 + $0xd8] sm:$0xff] %vm1556, %v1515
      %1585 = vst.msk [vmem:[#allocation2 + $0xe0] sm:$0xff] %vm1556, %v1517
      %1586 = vst.msk [vmem:[#allocation2 + $0xe8] sm:$0xff] %vm1556, %v1519
      %1587 = vst.msk [vmem:[#allocation2 + $0xf0] sm:$0xff] %vm1556, %v1521
      %1588 = vst.msk [vmem:[#allocation2 + $0xf8] sm:$0xff] %vm1556, %v1523
      %v1589 = vld [vmem:[%s1009 + $0x3] sm:$0xff]
      %v1590 = vld [vmem:[%s1009 + $0xb] sm:$0xff]
      %v1591 = vld [vmem:[%s1009 + $0x1b] sm:$0xff]
      %v1592 = vld [vmem:[%s1009 + $0x23] sm:$0xff]
      %v1593 = vld [vmem:[%s1009 + $0x33] sm:$0xff]
      %v1594 = vld [vmem:[%s1009 + $0x3b] sm:$0xff]
      %v1595 = vld [vmem:[%s1009 + $0x4b] sm:$0xff]
      %v1596 = vld [vmem:[%s1009 + $0x53] sm:$0xff]
      %v1597 = vld [vmem:[%s1009 + $0x63] sm:$0xff]
      %v1598 = vld [vmem:[%s1009 + $0x6b] sm:$0xff]
      %v1599 = vld [vmem:[%s1009 + $0x7b] sm:$0xff]
      %v1600 = vld [vmem:[%s1009 + $0x83] sm:$0xff]
      %v1601 = vld [vmem:[%s1009 + $0x93] sm:$0xff]
      %v1602 = vld [vmem:[%s1009 + $0x9b] sm:$0xff]
      %v1603 = vld [vmem:[%s1009 + $0xab] sm:$0xff]
      %v1604 = vld [vmem:[%s1009 + $0xb3] sm:$0xff]
      %v1605 = vld [vmem:[%s1009 + $0xc3] sm:$0xff]
      %v1606 = vld [vmem:[%s1009 + $0xcb] sm:$0xff]
      %v1607 = vld [vmem:[%s1009 + $0xdb] sm:$0xff]
      %v1608 = vld [vmem:[%s1009 + $0xe3] sm:$0xff]
      %v1609 = vld [vmem:[%s1009 + $0xf3] sm:$0xff]
      %v1610 = vld [vmem:[%s1009 + $0xfb] sm:$0xff]
      %v1611 = vld [vmem:[%s1009 + $0x10b] sm:$0xff]
      %v1612 = vld [vmem:[%s1009 + $0x113] sm:$0xff]
      %v1613 = vld [vmem:[%s1009 + $0x123] sm:$0xff]
      %v1614 = vld [vmem:[%s1009 + $0x12b] sm:$0xff]
      %v1615 = vld [vmem:[%s1009 + $0x13b] sm:$0xff]
      %v1616 = vld [vmem:[%s1009 + $0x143] sm:$0xff]
      %v1617 = vld [vmem:[%s1009 + $0x153] sm:$0xff]
      %v1618 = vld [vmem:[%s1009 + $0x15b] sm:$0xff]
      %v1619 = vld [vmem:[%s1009 + $0x16b] sm:$0xff]
      %v1620 = vld [vmem:[%s1009 + $0x173] sm:$0xff]
      %1653 = vrot.lane.b32.xlu0 %v1589, 32
      %v1654 = vpop.permute.xlu0 %1653
      %1655 = vrot.lane.b32.xlu0 %v1590, 32
      %v1656 = vpop.permute.xlu0 %1655
      %1657 = vrot.lane.b32.xlu0 %v1591, 32
      %v1658 = vpop.permute.xlu0 %1657
      %1659 = vrot.lane.b32.xlu0 %v1592, 32
      %v1660 = vpop.permute.xlu0 %1659
      %1661 = vrot.lane.b32.xlu0 %v1593, 32
      %v1662 = vpop.permute.xlu0 %1661
      %1663 = vrot.lane.b32.xlu0 %v1594, 32
      %v1664 = vpop.permute.xlu0 %1663
      %1665 = vrot.lane.b32.xlu0 %v1595, 32
      %v1666 = vpop.permute.xlu0 %1665
      %1667 = vrot.lane.b32.xlu0 %v1596, 32
      %v1668 = vpop.permute.xlu0 %1667
      %1669 = vrot.lane.b32.xlu0 %v1597, 32
      %v1670 = vpop.permute.xlu0 %1669
      %1671 = vrot.lane.b32.xlu0 %v1598, 32
      %v1672 = vpop.permute.xlu0 %1671
      %1673 = vrot.lane.b32.xlu0 %v1599, 32
      %v1674 = vpop.permute.xlu0 %1673
      %1675 = vrot.lane.b32.xlu0 %v1600, 32
      %v1676 = vpop.permute.xlu0 %1675
      %1677 = vrot.lane.b32.xlu0 %v1601, 32
      %v1678 = vpop.permute.xlu0 %1677
      %1679 = vrot.lane.b32.xlu0 %v1602, 32
      %v1680 = vpop.permute.xlu0 %1679
      %1681 = vrot.lane.b32.xlu0 %v1603, 32
      %v1682 = vpop.permute.xlu0 %1681
      %1683 = vrot.lane.b32.xlu0 %v1604, 32
      %v1684 = vpop.permute.xlu0 %1683
      %1685 = vrot.lane.b32.xlu0 %v1605, 32
      %v1686 = vpop.permute.xlu0 %1685
      %1687 = vrot.lane.b32.xlu0 %v1606, 32
      %v1688 = vpop.permute.xlu0 %1687
      %1689 = vrot.lane.b32.xlu0 %v1607, 32
      %v1690 = vpop.permute.xlu0 %1689
      %1691 = vrot.lane.b32.xlu0 %v1608, 32
      %v1692 = vpop.permute.xlu0 %1691
      %1693 = vrot.lane.b32.xlu0 %v1609, 32
      %v1694 = vpop.permute.xlu0 %1693
      %1695 = vrot.lane.b32.xlu0 %v1610, 32
      %v1696 = vpop.permute.xlu0 %1695
      %1697 = vrot.lane.b32.xlu0 %v1611, 32
      %v1698 = vpop.permute.xlu0 %1697
      %1699 = vrot.lane.b32.xlu0 %v1612, 32
      %v1700 = vpop.permute.xlu0 %1699
      %1701 = vrot.lane.b32.xlu0 %v1613, 32
      %v1702 = vpop.permute.xlu0 %1701
      %1703 = vrot.lane.b32.xlu0 %v1614, 32
      %v1704 = vpop.permute.xlu0 %1703
      %1705 = vrot.lane.b32.xlu0 %v1615, 32
      %v1706 = vpop.permute.xlu0 %1705
      %1707 = vrot.lane.b32.xlu0 %v1616, 32
      %v1708 = vpop.permute.xlu0 %1707
      %1709 = vrot.lane.b32.xlu0 %v1617, 32
      %v1710 = vpop.permute.xlu0 %1709
      %1711 = vrot.lane.b32.xlu0 %v1618, 32
      %v1712 = vpop.permute.xlu0 %1711
      %1713 = vrot.lane.b32.xlu0 %v1619, 32
      %v1714 = vpop.permute.xlu0 %1713
      %1715 = vrot.lane.b32.xlu0 %v1620, 32
      %v1716 = vpop.permute.xlu0 %1715
      %vm1749 = vcmask 294144
      %1750 = vst.msk [vmem:[#allocation2] sm:$0xff] %vm1749, %v1654
      %1751 = vst.msk [vmem:[#allocation2 + $0x8] sm:$0xff] %vm1749, %v1656
      %1752 = vst.msk [vmem:[#allocation2 + $0x10] sm:$0xff] %vm1749, %v1658
      %1753 = vst.msk [vmem:[#allocation2 + $0x18] sm:$0xff] %vm1749, %v1660
      %1754 = vst.msk [vmem:[#allocation2 + $0x20] sm:$0xff] %vm1749, %v1662
      %1755 = vst.msk [vmem:[#allocation2 + $0x28] sm:$0xff] %vm1749, %v1664
      %1756 = vst.msk [vmem:[#allocation2 + $0x30] sm:$0xff] %vm1749, %v1666
      %1757 = vst.msk [vmem:[#allocation2 + $0x38] sm:$0xff] %vm1749, %v1668
      %1758 = vst.msk [vmem:[#allocation2 + $0x40] sm:$0xff] %vm1749, %v1670
      %1759 = vst.msk [vmem:[#allocation2 + $0x48] sm:$0xff] %vm1749, %v1672
      %1760 = vst.msk [vmem:[#allocation2 + $0x50] sm:$0xff] %vm1749, %v1674
      %1761 = vst.msk [vmem:[#allocation2 + $0x58] sm:$0xff] %vm1749, %v1676
      %1762 = vst.msk [vmem:[#allocation2 + $0x60] sm:$0xff] %vm1749, %v1678
      %1763 = vst.msk [vmem:[#allocation2 + $0x68] sm:$0xff] %vm1749, %v1680
      %1764 = vst.msk [vmem:[#allocation2 + $0x70] sm:$0xff] %vm1749, %v1682
      %1765 = vst.msk [vmem:[#allocation2 + $0x78] sm:$0xff] %vm1749, %v1684
      %1766 = vst.msk [vmem:[#allocation2 + $0x80] sm:$0xff] %vm1749, %v1686
      %1767 = vst.msk [vmem:[#allocation2 + $0x88] sm:$0xff] %vm1749, %v1688
      %1768 = vst.msk [vmem:[#allocation2 + $0x90] sm:$0xff] %vm1749, %v1690
      %1769 = vst.msk [vmem:[#allocation2 + $0x98] sm:$0xff] %vm1749, %v1692
      %1770 = vst.msk [vmem:[#allocation2 + $0xa0] sm:$0xff] %vm1749, %v1694
      %1771 = vst.msk [vmem:[#allocation2 + $0xa8] sm:$0xff] %vm1749, %v1696
      %1772 = vst.msk [vmem:[#allocation2 + $0xb0] sm:$0xff] %vm1749, %v1698
      %1773 = vst.msk [vmem:[#allocation2 + $0xb8] sm:$0xff] %vm1749, %v1700
      %1774 = vst.msk [vmem:[#allocation2 + $0xc0] sm:$0xff] %vm1749, %v1702
      %1775 = vst.msk [vmem:[#allocation2 + $0xc8] sm:$0xff] %vm1749, %v1704
      %1776 = vst.msk [vmem:[#allocation2 + $0xd0] sm:$0xff] %vm1749, %v1706
      %1777 = vst.msk [vmem:[#allocation2 + $0xd8] sm:$0xff] %vm1749, %v1708
      %1778 = vst.msk [vmem:[#allocation2 + $0xe0] sm:$0xff] %vm1749, %v1710
      %1779 = vst.msk [vmem:[#allocation2 + $0xe8] sm:$0xff] %vm1749, %v1712
      %1780 = vst.msk [vmem:[#allocation2 + $0xf0] sm:$0xff] %vm1749, %v1714
      %1781 = vst.msk [vmem:[#allocation2 + $0xf8] sm:$0xff] %vm1749, %v1716
      %v1782 = vld [vmem:[%s1009 + $0x4] sm:$0xff]
      %v1783 = vld [vmem:[%s1009 + $0xc] sm:$0xff]
      %v1784 = vld [vmem:[%s1009 + $0x1c] sm:$0xff]
      %v1785 = vld [vmem:[%s1009 + $0x24] sm:$0xff]
      %v1786 = vld [vmem:[%s1009 + $0x34] sm:$0xff]
      %v1787 = vld [vmem:[%s1009 + $0x3c] sm:$0xff]
      %v1788 = vld [vmem:[%s1009 + $0x4c] sm:$0xff]
      %v1789 = vld [vmem:[%s1009 + $0x54] sm:$0xff]
      %v1790 = vld [vmem:[%s1009 + $0x64] sm:$0xff]
      %v1791 = vld [vmem:[%s1009 + $0x6c] sm:$0xff]
      %v1792 = vld [vmem:[%s1009 + $0x7c] sm:$0xff]
      %v1793 = vld [vmem:[%s1009 + $0x84] sm:$0xff]
      %v1794 = vld [vmem:[%s1009 + $0x94] sm:$0xff]
      %v1795 = vld [vmem:[%s1009 + $0x9c] sm:$0xff]
      %v1796 = vld [vmem:[%s1009 + $0xac] sm:$0xff]
      %v1797 = vld [vmem:[%s1009 + $0xb4] sm:$0xff]
      %v1798 = vld [vmem:[%s1009 + $0xc4] sm:$0xff]
      %v1799 = vld [vmem:[%s1009 + $0xcc] sm:$0xff]
      %v1800 = vld [vmem:[%s1009 + $0xdc] sm:$0xff]
      %v1801 = vld [vmem:[%s1009 + $0xe4] sm:$0xff]
      %v1802 = vld [vmem:[%s1009 + $0xf4] sm:$0xff]
      %v1803 = vld [vmem:[%s1009 + $0xfc] sm:$0xff]
      %v1804 = vld [vmem:[%s1009 + $0x10c] sm:$0xff]
      %v1805 = vld [vmem:[%s1009 + $0x114] sm:$0xff]
      %v1806 = vld [vmem:[%s1009 + $0x124] sm:$0xff]
      %v1807 = vld [vmem:[%s1009 + $0x12c] sm:$0xff]
      %v1808 = vld [vmem:[%s1009 + $0x13c] sm:$0xff]
      %v1809 = vld [vmem:[%s1009 + $0x144] sm:$0xff]
      %v1810 = vld [vmem:[%s1009 + $0x154] sm:$0xff]
      %v1811 = vld [vmem:[%s1009 + $0x15c] sm:$0xff]
      %v1812 = vld [vmem:[%s1009 + $0x16c] sm:$0xff]
      %v1813 = vld [vmem:[%s1009 + $0x174] sm:$0xff]
      %1846 = vrot.lane.b32.xlu0 %v1782, 36
      %v1847 = vpop.permute.xlu0 %1846
      %1848 = vrot.lane.b32.xlu0 %v1783, 36
      %v1849 = vpop.permute.xlu0 %1848
      %1850 = vrot.lane.b32.xlu0 %v1784, 36
      %v1851 = vpop.permute.xlu0 %1850
      %1852 = vrot.lane.b32.xlu0 %v1785, 36
      %v1853 = vpop.permute.xlu0 %1852
      %1854 = vrot.lane.b32.xlu0 %v1786, 36
      %v1855 = vpop.permute.xlu0 %1854
      %1856 = vrot.lane.b32.xlu0 %v1787, 36
      %v1857 = vpop.permute.xlu0 %1856
      %1858 = vrot.lane.b32.xlu0 %v1788, 36
      %v1859 = vpop.permute.xlu0 %1858
      %1860 = vrot.lane.b32.xlu0 %v1789, 36
      %v1861 = vpop.permute.xlu0 %1860
      %1862 = vrot.lane.b32.xlu0 %v1790, 36
      %v1863 = vpop.permute.xlu0 %1862
      %1864 = vrot.lane.b32.xlu0 %v1791, 36
      %v1865 = vpop.permute.xlu0 %1864
      %1866 = vrot.lane.b32.xlu0 %v1792, 36
      %v1867 = vpop.permute.xlu0 %1866
      %1868 = vrot.lane.b32.xlu0 %v1793, 36
      %v1869 = vpop.permute.xlu0 %1868
      %1870 = vrot.lane.b32.xlu0 %v1794, 36
      %v1871 = vpop.permute.xlu0 %1870
      %1872 = vrot.lane.b32.xlu0 %v1795, 36
      %v1873 = vpop.permute.xlu0 %1872
      %1874 = vrot.lane.b32.xlu0 %v1796, 36
      %v1875 = vpop.permute.xlu0 %1874
      %1876 = vrot.lane.b32.xlu0 %v1797, 36
      %v1877 = vpop.permute.xlu0 %1876
      %1878 = vrot.lane.b32.xlu0 %v1798, 36
      %v1879 = vpop.permute.xlu0 %1878
      %1880 = vrot.lane.b32.xlu0 %v1799, 36
      %v1881 = vpop.permute.xlu0 %1880
      %1882 = vrot.lane.b32.xlu0 %v1800, 36
      %v1883 = vpop.permute.xlu0 %1882
      %1884 = vrot.lane.b32.xlu0 %v1801, 36
      %v1885 = vpop.permute.xlu0 %1884
      %1886 = vrot.lane.b32.xlu0 %v1802, 36
      %v1887 = vpop.permute.xlu0 %1886
      %1888 = vrot.lane.b32.xlu0 %v1803, 36
      %v1889 = vpop.permute.xlu0 %1888
      %1890 = vrot.lane.b32.xlu0 %v1804, 36
      %v1891 = vpop.permute.xlu0 %1890
      %1892 = vrot.lane.b32.xlu0 %v1805, 36
      %v1893 = vpop.permute.xlu0 %1892
      %1894 = vrot.lane.b32.xlu0 %v1806, 36
      %v1895 = vpop.permute.xlu0 %1894
      %1896 = vrot.lane.b32.xlu0 %v1807, 36
      %v1897 = vpop.permute.xlu0 %1896
      %1898 = vrot.lane.b32.xlu0 %v1808, 36
      %v1899 = vpop.permute.xlu0 %1898
      %1900 = vrot.lane.b32.xlu0 %v1809, 36
      %v1901 = vpop.permute.xlu0 %1900
      %1902 = vrot.lane.b32.xlu0 %v1810, 36
      %v1903 = vpop.permute.xlu0 %1902
      %1904 = vrot.lane.b32.xlu0 %v1811, 36
      %v1905 = vpop.permute.xlu0 %1904
      %1906 = vrot.lane.b32.xlu0 %v1812, 36
      %v1907 = vpop.permute.xlu0 %1906
      %1908 = vrot.lane.b32.xlu0 %v1813, 36
      %v1909 = vpop.permute.xlu0 %1908
      %vm1942 = vcmask 326944
      %1943 = vst.msk [vmem:[#allocation2] sm:$0xff] %vm1942, %v1847
      %1944 = vst.msk [vmem:[#allocation2 + $0x8] sm:$0xff] %vm1942, %v1849
      %1945 = vst.msk [vmem:[#allocation2 + $0x10] sm:$0xff] %vm1942, %v1851
      %1946 = vst.msk [vmem:[#allocation2 + $0x18] sm:$0xff] %vm1942, %v1853
      %1947 = vst.msk [vmem:[#allocation2 + $0x20] sm:$0xff] %vm1942, %v1855
      %1948 = vst.msk [vmem:[#allocation2 + $0x28] sm:$0xff] %vm1942, %v1857
      %1949 = vst.msk [vmem:[#allocation2 + $0x30] sm:$0xff] %vm1942, %v1859
      %1950 = vst.msk [vmem:[#allocation2 + $0x38] sm:$0xff] %vm1942, %v1861
      %1951 = vst.msk [vmem:[#allocation2 + $0x40] sm:$0xff] %vm1942, %v1863
      %1952 = vst.msk [vmem:[#allocation2 + $0x48] sm:$0xff] %vm1942, %v1865
      %1953 = vst.msk [vmem:[#allocation2 + $0x50] sm:$0xff] %vm1942, %v1867
      %1954 = vst.msk [vmem:[#allocation2 + $0x58] sm:$0xff] %vm1942, %v1869
      %1955 = vst.msk [vmem:[#allocation2 + $0x60] sm:$0xff] %vm1942, %v1871
      %1956 = vst.msk [vmem:[#allocation2 + $0x68] sm:$0xff] %vm1942, %v1873
      %1957 = vst.msk [vmem:[#allocation2 + $0x70] sm:$0xff] %vm1942, %v1875
      %1958 = vst.msk [vmem:[#allocation2 + $0x78] sm:$0xff] %vm1942, %v1877
      %1959 = vst.msk [vmem:[#allocation2 + $0x80] sm:$0xff] %vm1942, %v1879
      %1960 = vst.msk [vmem:[#allocation2 + $0x88] sm:$0xff] %vm1942, %v1881
      %1961 = vst.msk [vmem:[#allocation2 + $0x90] sm:$0xff] %vm1942, %v1883
      %1962 = vst.msk [vmem:[#allocation2 + $0x98] sm:$0xff] %vm1942, %v1885
      %1963 = vst.msk [vmem:[#allocation2 + $0xa0] sm:$0xff] %vm1942, %v1887
      %1964 = vst.msk [vmem:[#allocation2 + $0xa8] sm:$0xff] %vm1942, %v1889
      %1965 = vst.msk [vmem:[#allocation2 + $0xb0] sm:$0xff] %vm1942, %v1891
      %1966 = vst.msk [vmem:[#allocation2 + $0xb8] sm:$0xff] %vm1942, %v1893
      %1967 = vst.msk [vmem:[#allocation2 + $0xc0] sm:$0xff] %vm1942, %v1895
      %1968 = vst.msk [vmem:[#allocation2 + $0xc8] sm:$0xff] %vm1942, %v1897
      %1969 = vst.msk [vmem:[#allocation2 + $0xd0] sm:$0xff] %vm1942, %v1899
      %1970 = vst.msk [vmem:[#allocation2 + $0xd8] sm:$0xff] %vm1942, %v1901
      %1971 = vst.msk [vmem:[#allocation2 + $0xe0] sm:$0xff] %vm1942, %v1903
      %1972 = vst.msk [vmem:[#allocation2 + $0xe8] sm:$0xff] %vm1942, %v1905
      %1973 = vst.msk [vmem:[#allocation2 + $0xf0] sm:$0xff] %vm1942, %v1907
      %1974 = vst.msk [vmem:[#allocation2 + $0xf8] sm:$0xff] %vm1942, %v1909
      %s1975 = scalar_lea.vmem %s165, 48
      %v1976 = vld [vmem:[%s1975] sm:$0xff]
      %v1977 = vld [vmem:[%s1975 + $0x8] sm:$0xff]
      %v1978 = vld [vmem:[%s1975 + $0x18] sm:$0xff]
      %v1979 = vld [vmem:[%s1975 + $0x20] sm:$0xff]
      %v1980 = vld [vmem:[%s1975 + $0x30] sm:$0xff]
      %v1981 = vld [vmem:[%s1975 + $0x38] sm:$0xff]
      %v1982 = vld [vmem:[%s1975 + $0x48] sm:$0xff]
      %v1983 = vld [vmem:[%s1975 + $0x50] sm:$0xff]
      %v1984 = vld [vmem:[%s1975 + $0x60] sm:$0xff]
      %v1985 = vld [vmem:[%s1975 + $0x68] sm:$0xff]
      %v1986 = vld [vmem:[%s1975 + $0x78] sm:$0xff]
      %v1987 = vld [vmem:[%s1975 + $0x80] sm:$0xff]
      %v1988 = vld [vmem:[%s1975 + $0x90] sm:$0xff]
      %v1989 = vld [vmem:[%s1975 + $0x98] sm:$0xff]
      %v1990 = vld [vmem:[%s1975 + $0xa8] sm:$0xff]
      %v1991 = vld [vmem:[%s1975 + $0xb0] sm:$0xff]
      %v1992 = vld [vmem:[%s1975 + $0xc0] sm:$0xff]
      %v1993 = vld [vmem:[%s1975 + $0xc8] sm:$0xff]
      %v1994 = vld [vmem:[%s1975 + $0xd8] sm:$0xff]
      %v1995 = vld [vmem:[%s1975 + $0xe0] sm:$0xff]
      %v1996 = vld [vmem:[%s1975 + $0xf0] sm:$0xff]
      %v1997 = vld [vmem:[%s1975 + $0xf8] sm:$0xff]
      %v1998 = vld [vmem:[%s1975 + $0x108] sm:$0xff]
      %v1999 = vld [vmem:[%s1975 + $0x110] sm:$0xff]
      %v2000 = vld [vmem:[%s1975 + $0x120] sm:$0xff]
      %v2001 = vld [vmem:[%s1975 + $0x128] sm:$0xff]
      %v2002 = vld [vmem:[%s1975 + $0x138] sm:$0xff]
      %v2003 = vld [vmem:[%s1975 + $0x140] sm:$0xff]
      %v2004 = vld [vmem:[%s1975 + $0x150] sm:$0xff]
      %v2005 = vld [vmem:[%s1975 + $0x158] sm:$0xff]
      %v2006 = vld [vmem:[%s1975 + $0x168] sm:$0xff]
      %v2007 = vld [vmem:[%s1975 + $0x170] sm:$0xff]
      %2040 = vrot.lane.b32.xlu0 %v1976, 40
      %v2041 = vpop.permute.xlu0 %2040
      %2042 = vrot.lane.b32.xlu0 %v1977, 40
      %v2043 = vpop.permute.xlu0 %2042
      %2044 = vrot.lane.b32.xlu0 %v1978, 40
      %v2045 = vpop.permute.xlu0 %2044
      %2046 = vrot.lane.b32.xlu0 %v1979, 40
      %v2047 = vpop.permute.xlu0 %2046
      %2048 = vrot.lane.b32.xlu0 %v1980, 40
      %v2049 = vpop.permute.xlu0 %2048
      %2050 = vrot.lane.b32.xlu0 %v1981, 40
      %v2051 = vpop.permute.xlu0 %2050
      %2052 = vrot.lane.b32.xlu0 %v1982, 40
      %v2053 = vpop.permute.xlu0 %2052
      %2054 = vrot.lane.b32.xlu0 %v1983, 40
      %v2055 = vpop.permute.xlu0 %2054
      %2056 = vrot.lane.b32.xlu0 %v1984, 40
      %v2057 = vpop.permute.xlu0 %2056
      %2058 = vrot.lane.b32.xlu0 %v1985, 40
      %v2059 = vpop.permute.xlu0 %2058
      %2060 = vrot.lane.b32.xlu0 %v1986, 40
      %v2061 = vpop.permute.xlu0 %2060
      %2062 = vrot.lane.b32.xlu0 %v1987, 40
      %v2063 = vpop.permute.xlu0 %2062
      %2064 = vrot.lane.b32.xlu0 %v1988, 40
      %v2065 = vpop.permute.xlu0 %2064
      %2066 = vrot.lane.b32.xlu0 %v1989, 40
      %v2067 = vpop.permute.xlu0 %2066
      %2068 = vrot.lane.b32.xlu0 %v1990, 40
      %v2069 = vpop.permute.xlu0 %2068
      %2070 = vrot.lane.b32.xlu0 %v1991, 40
      %v2071 = vpop.permute.xlu0 %2070
      %2072 = vrot.lane.b32.xlu0 %v1992, 40
      %v2073 = vpop.permute.xlu0 %2072
      %2074 = vrot.lane.b32.xlu0 %v1993, 40
      %v2075 = vpop.permute.xlu0 %2074
      %2076 = vrot.lane.b32.xlu0 %v1994, 40
      %v2077 = vpop.permute.xlu0 %2076
      %2078 = vrot.lane.b32.xlu0 %v1995, 40
      %v2079 = vpop.permute.xlu0 %2078
      %2080 = vrot.lane.b32.xlu0 %v1996, 40
      %v2081 = vpop.permute.xlu0 %2080
      %2082 = vrot.lane.b32.xlu0 %v1997, 40
      %v2083 = vpop.permute.xlu0 %2082
      %2084 = vrot.lane.b32.xlu0 %v1998, 40
      %v2085 = vpop.permute.xlu0 %2084
      %2086 = vrot.lane.b32.xlu0 %v1999, 40
      %v2087 = vpop.permute.xlu0 %2086
      %2088 = vrot.lane.b32.xlu0 %v2000, 40
      %v2089 = vpop.permute.xlu0 %2088
      %2090 = vrot.lane.b32.xlu0 %v2001, 40
      %v2091 = vpop.permute.xlu0 %2090
      %2092 = vrot.lane.b32.xlu0 %v2002, 40
      %v2093 = vpop.permute.xlu0 %2092
      %2094 = vrot.lane.b32.xlu0 %v2003, 40
      %v2095 = vpop.permute.xlu0 %2094
      %2096 = vrot.lane.b32.xlu0 %v2004, 40
      %v2097 = vpop.permute.xlu0 %2096
      %2098 = vrot.lane.b32.xlu0 %v2005, 40
      %v2099 = vpop.permute.xlu0 %2098
      %2100 = vrot.lane.b32.xlu0 %v2006, 40
      %v2101 = vpop.permute.xlu0 %2100
      %2102 = vrot.lane.b32.xlu0 %v2007, 40
      %v2103 = vpop.permute.xlu0 %2102
      %vm2136 = vcmask 359744
      %2137 = vst.msk [vmem:[#allocation2] sm:$0xff] %vm2136, %v2041
      %2138 = vst.msk [vmem:[#allocation2 + $0x8] sm:$0xff] %vm2136, %v2043
      %2139 = vst.msk [vmem:[#allocation2 + $0x10] sm:$0xff] %vm2136, %v2045
      %2140 = vst.msk [vmem:[#allocation2 + $0x18] sm:$0xff] %vm2136, %v2047
      %2141 = vst.msk [vmem:[#allocation2 + $0x20] sm:$0xff] %vm2136, %v2049
      %2142 = vst.msk [vmem:[#allocation2 + $0x28] sm:$0xff] %vm2136, %v2051
      %2143 = vst.msk [vmem:[#allocation2 + $0x30] sm:$0xff] %vm2136, %v2053
      %2144 = vst.msk [vmem:[#allocation2 + $0x38] sm:$0xff] %vm2136, %v2055
      %2145 = vst.msk [vmem:[#allocation2 + $0x40] sm:$0xff] %vm2136, %v2057
      %2146 = vst.msk [vmem:[#allocation2 + $0x48] sm:$0xff] %vm2136, %v2059
      %2147 = vst.msk [vmem:[#allocation2 + $0x50] sm:$0xff] %vm2136, %v2061
      %2148 = vst.msk [vmem:[#allocation2 + $0x58] sm:$0xff] %vm2136, %v2063
      %2149 = vst.msk [vmem:[#allocation2 + $0x60] sm:$0xff] %vm2136, %v2065
      %2150 = vst.msk [vmem:[#allocation2 + $0x68] sm:$0xff] %vm2136, %v2067
      %2151 = vst.msk [vmem:[#allocation2 + $0x70] sm:$0xff] %vm2136, %v2069
      %2152 = vst.msk [vmem:[#allocation2 + $0x78] sm:$0xff] %vm2136, %v2071
      %2153 = vst.msk [vmem:[#allocation2 + $0x80] sm:$0xff] %vm2136, %v2073
      %2154 = vst.msk [vmem:[#allocation2 + $0x88] sm:$0xff] %vm2136, %v2075
      %2155 = vst.msk [vmem:[#allocation2 + $0x90] sm:$0xff] %vm2136, %v2077
      %2156 = vst.msk [vmem:[#allocation2 + $0x98] sm:$0xff] %vm2136, %v2079
      %2157 = vst.msk [vmem:[#allocation2 + $0xa0] sm:$0xff] %vm2136, %v2081
      %2158 = vst.msk [vmem:[#allocation2 + $0xa8] sm:$0xff] %vm2136, %v2083
      %2159 = vst.msk [vmem:[#allocation2 + $0xb0] sm:$0xff] %vm2136, %v2085
      %2160 = vst.msk [vmem:[#allocation2 + $0xb8] sm:$0xff] %vm2136, %v2087
      %2161 = vst.msk [vmem:[#allocation2 + $0xc0] sm:$0xff] %vm2136, %v2089
      %2162 = vst.msk [vmem:[#allocation2 + $0xc8] sm:$0xff] %vm2136, %v2091
      %2163 = vst.msk [vmem:[#allocation2 + $0xd0] sm:$0xff] %vm2136, %v2093
      %2164 = vst.msk [vmem:[#allocation2 + $0xd8] sm:$0xff] %vm2136, %v2095
      %2165 = vst.msk [vmem:[#allocation2 + $0xe0] sm:$0xff] %vm2136, %v2097
      %2166 = vst.msk [vmem:[#allocation2 + $0xe8] sm:$0xff] %vm2136, %v2099
      %2167 = vst.msk [vmem:[#allocation2 + $0xf0] sm:$0xff] %vm2136, %v2101
      %2168 = vst.msk [vmem:[#allocation2 + $0xf8] sm:$0xff] %vm2136, %v2103
      %v2169 = vld [vmem:[%s1975 + $0x1] sm:$0xff]
      %v2170 = vld [vmem:[%s1975 + $0x9] sm:$0xff]
      %v2171 = vld [vmem:[%s1975 + $0x19] sm:$0xff]
      %v2172 = vld [vmem:[%s1975 + $0x21] sm:$0xff]
      %v2173 = vld [vmem:[%s1975 + $0x31] sm:$0xff]
      %v2174 = vld [vmem:[%s1975 + $0x39] sm:$0xff]
      %v2175 = vld [vmem:[%s1975 + $0x49] sm:$0xff]
      %v2176 = vld [vmem:[%s1975 + $0x51] sm:$0xff]
      %v2177 = vld [vmem:[%s1975 + $0x61] sm:$0xff]
      %v2178 = vld [vmem:[%s1975 + $0x69] sm:$0xff]
      %v2179 = vld [vmem:[%s1975 + $0x79] sm:$0xff]
      %v2180 = vld [vmem:[%s1975 + $0x81] sm:$0xff]
      %v2181 = vld [vmem:[%s1975 + $0x91] sm:$0xff]
      %v2182 = vld [vmem:[%s1975 + $0x99] sm:$0xff]
      %v2183 = vld [vmem:[%s1975 + $0xa9] sm:$0xff]
      %v2184 = vld [vmem:[%s1975 + $0xb1] sm:$0xff]
      %v2185 = vld [vmem:[%s1975 + $0xc1] sm:$0xff]
      %v2186 = vld [vmem:[%s1975 + $0xc9] sm:$0xff]
      %v2187 = vld [vmem:[%s1975 + $0xd9] sm:$0xff]
      %v2188 = vld [vmem:[%s1975 + $0xe1] sm:$0xff]
      %v2189 = vld [vmem:[%s1975 + $0xf1] sm:$0xff]
      %v2190 = vld [vmem:[%s1975 + $0xf9] sm:$0xff]
      %v2191 = vld [vmem:[%s1975 + $0x109] sm:$0xff]
      %v2192 = vld [vmem:[%s1975 + $0x111] sm:$0xff]
      %v2193 = vld [vmem:[%s1975 + $0x121] sm:$0xff]
      %v2194 = vld [vmem:[%s1975 + $0x129] sm:$0xff]
      %v2195 = vld [vmem:[%s1975 + $0x139] sm:$0xff]
      %v2196 = vld [vmem:[%s1975 + $0x141] sm:$0xff]
      %v2197 = vld [vmem:[%s1975 + $0x151] sm:$0xff]
      %v2198 = vld [vmem:[%s1975 + $0x159] sm:$0xff]
      %v2199 = vld [vmem:[%s1975 + $0x169] sm:$0xff]
      %v2200 = vld [vmem:[%s1975 + $0x171] sm:$0xff]
      %2233 = vrot.lane.b32.xlu0 %v2169, 44
      %v2234 = vpop.permute.xlu0 %2233
      %2235 = vrot.lane.b32.xlu0 %v2170, 44
      %v2236 = vpop.permute.xlu0 %2235
      %2237 = vrot.lane.b32.xlu0 %v2171, 44
      %v2238 = vpop.permute.xlu0 %2237
      %2239 = vrot.lane.b32.xlu0 %v2172, 44
      %v2240 = vpop.permute.xlu0 %2239
      %2241 = vrot.lane.b32.xlu0 %v2173, 44
      %v2242 = vpop.permute.xlu0 %2241
      %2243 = vrot.lane.b32.xlu0 %v2174, 44
      %v2244 = vpop.permute.xlu0 %2243
      %2245 = vrot.lane.b32.xlu0 %v2175, 44
      %v2246 = vpop.permute.xlu0 %2245
      %2247 = vrot.lane.b32.xlu0 %v2176, 44
      %v2248 = vpop.permute.xlu0 %2247
      %2249 = vrot.lane.b32.xlu0 %v2177, 44
      %v2250 = vpop.permute.xlu0 %2249
      %2251 = vrot.lane.b32.xlu0 %v2178, 44
      %v2252 = vpop.permute.xlu0 %2251
      %2253 = vrot.lane.b32.xlu0 %v2179, 44
      %v2254 = vpop.permute.xlu0 %2253
      %2255 = vrot.lane.b32.xlu0 %v2180, 44
      %v2256 = vpop.permute.xlu0 %2255
      %2257 = vrot.lane.b32.xlu0 %v2181, 44
      %v2258 = vpop.permute.xlu0 %2257
      %2259 = vrot.lane.b32.xlu0 %v2182, 44
      %v2260 = vpop.permute.xlu0 %2259
      %2261 = vrot.lane.b32.xlu0 %v2183, 44
      %v2262 = vpop.permute.xlu0 %2261
      %2263 = vrot.lane.b32.xlu0 %v2184, 44
      %v2264 = vpop.permute.xlu0 %2263
      %2265 = vrot.lane.b32.xlu0 %v2185, 44
      %v2266 = vpop.permute.xlu0 %2265
      %2267 = vrot.lane.b32.xlu0 %v2186, 44
      %v2268 = vpop.permute.xlu0 %2267
      %2269 = vrot.lane.b32.xlu0 %v2187, 44
      %v2270 = vpop.permute.xlu0 %2269
      %2271 = vrot.lane.b32.xlu0 %v2188, 44
      %v2272 = vpop.permute.xlu0 %2271
      %2273 = vrot.lane.b32.xlu0 %v2189, 44
      %v2274 = vpop.permute.xlu0 %2273
      %2275 = vrot.lane.b32.xlu0 %v2190, 44
      %v2276 = vpop.permute.xlu0 %2275
      %2277 = vrot.lane.b32.xlu0 %v2191, 44
      %v2278 = vpop.permute.xlu0 %2277
      %2279 = vrot.lane.b32.xlu0 %v2192, 44
      %v2280 = vpop.permute.xlu0 %2279
      %2281 = vrot.lane.b32.xlu0 %v2193, 44
      %v2282 = vpop.permute.xlu0 %2281
      %2283 = vrot.lane.b32.xlu0 %v2194, 44
      %v2284 = vpop.permute.xlu0 %2283
      %2285 = vrot.lane.b32.xlu0 %v2195, 44
      %v2286 = vpop.permute.xlu0 %2285
      %2287 = vrot.lane.b32.xlu0 %v2196, 44
      %v2288 = vpop.permute.xlu0 %2287
      %2289 = vrot.lane.b32.xlu0 %v2197, 44
      %v2290 = vpop.permute.xlu0 %2289
      %2291 = vrot.lane.b32.xlu0 %v2198, 44
      %v2292 = vpop.permute.xlu0 %2291
      %2293 = vrot.lane.b32.xlu0 %v2199, 44
      %v2294 = vpop.permute.xlu0 %2293
      %2295 = vrot.lane.b32.xlu0 %v2200, 44
      %v2296 = vpop.permute.xlu0 %2295
      %vm2329 = vcmask 392544
      %2330 = vst.msk [vmem:[#allocation2] sm:$0xff] %vm2329, %v2234
      %2331 = vst.msk [vmem:[#allocation2 + $0x8] sm:$0xff] %vm2329, %v2236
      %2332 = vst.msk [vmem:[#allocation2 + $0x10] sm:$0xff] %vm2329, %v2238
      %2333 = vst.msk [vmem:[#allocation2 + $0x18] sm:$0xff] %vm2329, %v2240
      %2334 = vst.msk [vmem:[#allocation2 + $0x20] sm:$0xff] %vm2329, %v2242
      %2335 = vst.msk [vmem:[#allocation2 + $0x28] sm:$0xff] %vm2329, %v2244
      %2336 = vst.msk [vmem:[#allocation2 + $0x30] sm:$0xff] %vm2329, %v2246
      %2337 = vst.msk [vmem:[#allocation2 + $0x38] sm:$0xff] %vm2329, %v2248
      %2338 = vst.msk [vmem:[#allocation2 + $0x40] sm:$0xff] %vm2329, %v2250
      %2339 = vst.msk [vmem:[#allocation2 + $0x48] sm:$0xff] %vm2329, %v2252
      %2340 = vst.msk [vmem:[#allocation2 + $0x50] sm:$0xff] %vm2329, %v2254
      %2341 = vst.msk [vmem:[#allocation2 + $0x58] sm:$0xff] %vm2329, %v2256
      %2342 = vst.msk [vmem:[#allocation2 + $0x60] sm:$0xff] %vm2329, %v2258
      %2343 = vst.msk [vmem:[#allocation2 + $0x68] sm:$0xff] %vm2329, %v2260
      %2344 = vst.msk [vmem:[#allocation2 + $0x70] sm:$0xff] %vm2329, %v2262
      %2345 = vst.msk [vmem:[#allocation2 + $0x78] sm:$0xff] %vm2329, %v2264
      %2346 = vst.msk [vmem:[#allocation2 + $0x80] sm:$0xff] %vm2329, %v2266
      %2347 = vst.msk [vmem:[#allocation2 + $0x88] sm:$0xff] %vm2329, %v2268
      %2348 = vst.msk [vmem:[#allocation2 + $0x90] sm:$0xff] %vm2329, %v2270
      %2349 = vst.msk [vmem:[#allocation2 + $0x98] sm:$0xff] %vm2329, %v2272
      %2350 = vst.msk [vmem:[#allocation2 + $0xa0] sm:$0xff] %vm2329, %v2274
      %2351 = vst.msk [vmem:[#allocation2 + $0xa8] sm:$0xff] %vm2329, %v2276
      %2352 = vst.msk [vmem:[#allocation2 + $0xb0] sm:$0xff] %vm2329, %v2278
      %2353 = vst.msk [vmem:[#allocation2 + $0xb8] sm:$0xff] %vm2329, %v2280
      %2354 = vst.msk [vmem:[#allocation2 + $0xc0] sm:$0xff] %vm2329, %v2282
      %2355 = vst.msk [vmem:[#allocation2 + $0xc8] sm:$0xff] %vm2329, %v2284
      %2356 = vst.msk [vmem:[#allocation2 + $0xd0] sm:$0xff] %vm2329, %v2286
      %2357 = vst.msk [vmem:[#allocation2 + $0xd8] sm:$0xff] %vm2329, %v2288
      %2358 = vst.msk [vmem:[#allocation2 + $0xe0] sm:$0xff] %vm2329, %v2290
      %2359 = vst.msk [vmem:[#allocation2 + $0xe8] sm:$0xff] %vm2329, %v2292
      %2360 = vst.msk [vmem:[#allocation2 + $0xf0] sm:$0xff] %vm2329, %v2294
      %2361 = vst.msk [vmem:[#allocation2 + $0xf8] sm:$0xff] %vm2329, %v2296
      %v2362 = vld [vmem:[%s1975 + $0x2] sm:$0xff]
      %v2363 = vld [vmem:[%s1975 + $0xa] sm:$0xff]
      %v2364 = vld [vmem:[%s1975 + $0x1a] sm:$0xff]
      %v2365 = vld [vmem:[%s1975 + $0x22] sm:$0xff]
      %v2366 = vld [vmem:[%s1975 + $0x32] sm:$0xff]
      %v2367 = vld [vmem:[%s1975 + $0x3a] sm:$0xff]
      %v2368 = vld [vmem:[%s1975 + $0x4a] sm:$0xff]
      %v2369 = vld [vmem:[%s1975 + $0x52] sm:$0xff]
      %v2370 = vld [vmem:[%s1975 + $0x62] sm:$0xff]
      %v2371 = vld [vmem:[%s1975 + $0x6a] sm:$0xff]
      %v2372 = vld [vmem:[%s1975 + $0x7a] sm:$0xff]
      %v2373 = vld [vmem:[%s1975 + $0x82] sm:$0xff]
      %v2374 = vld [vmem:[%s1975 + $0x92] sm:$0xff]
      %v2375 = vld [vmem:[%s1975 + $0x9a] sm:$0xff]
      %v2376 = vld [vmem:[%s1975 + $0xaa] sm:$0xff]
      %v2377 = vld [vmem:[%s1975 + $0xb2] sm:$0xff]
      %v2378 = vld [vmem:[%s1975 + $0xc2] sm:$0xff]
      %v2379 = vld [vmem:[%s1975 + $0xca] sm:$0xff]
      %v2380 = vld [vmem:[%s1975 + $0xda] sm:$0xff]
      %v2381 = vld [vmem:[%s1975 + $0xe2] sm:$0xff]
      %v2382 = vld [vmem:[%s1975 + $0xf2] sm:$0xff]
      %v2383 = vld [vmem:[%s1975 + $0xfa] sm:$0xff]
      %v2384 = vld [vmem:[%s1975 + $0x10a] sm:$0xff]
      %v2385 = vld [vmem:[%s1975 + $0x112] sm:$0xff]
      %v2386 = vld [vmem:[%s1975 + $0x122] sm:$0xff]
      %v2387 = vld [vmem:[%s1975 + $0x12a] sm:$0xff]
      %v2388 = vld [vmem:[%s1975 + $0x13a] sm:$0xff]
      %v2389 = vld [vmem:[%s1975 + $0x142] sm:$0xff]
      %v2390 = vld [vmem:[%s1975 + $0x152] sm:$0xff]
      %v2391 = vld [vmem:[%s1975 + $0x15a] sm:$0xff]
      %v2392 = vld [vmem:[%s1975 + $0x16a] sm:$0xff]
      %v2393 = vld [vmem:[%s1975 + $0x172] sm:$0xff]
      %2426 = vrot.lane.b32.xlu0 %v2362, 48
      %v2427 = vpop.permute.xlu0 %2426
      %2428 = vrot.lane.b32.xlu0 %v2363, 48
      %v2429 = vpop.permute.xlu0 %2428
      %2430 = vrot.lane.b32.xlu0 %v2364, 48
      %v2431 = vpop.permute.xlu0 %2430
      %2432 = vrot.lane.b32.xlu0 %v2365, 48
      %v2433 = vpop.permute.xlu0 %2432
      %2434 = vrot.lane.b32.xlu0 %v2366, 48
      %v2435 = vpop.permute.xlu0 %2434
      %2436 = vrot.lane.b32.xlu0 %v2367, 48
      %v2437 = vpop.permute.xlu0 %2436
      %2438 = vrot.lane.b32.xlu0 %v2368, 48
      %v2439 = vpop.permute.xlu0 %2438
      %2440 = vrot.lane.b32.xlu0 %v2369, 48
      %v2441 = vpop.permute.xlu0 %2440
      %2442 = vrot.lane.b32.xlu0 %v2370, 48
      %v2443 = vpop.permute.xlu0 %2442
      %2444 = vrot.lane.b32.xlu0 %v2371, 48
      %v2445 = vpop.permute.xlu0 %2444
      %2446 = vrot.lane.b32.xlu0 %v2372, 48
      %v2447 = vpop.permute.xlu0 %2446
      %2448 = vrot.lane.b32.xlu0 %v2373, 48
      %v2449 = vpop.permute.xlu0 %2448
      %2450 = vrot.lane.b32.xlu0 %v2374, 48
      %v2451 = vpop.permute.xlu0 %2450
      %2452 = vrot.lane.b32.xlu0 %v2375, 48
      %v2453 = vpop.permute.xlu0 %2452
      %2454 = vrot.lane.b32.xlu0 %v2376, 48
      %v2455 = vpop.permute.xlu0 %2454
      %2456 = vrot.lane.b32.xlu0 %v2377, 48
      %v2457 = vpop.permute.xlu0 %2456
      %2458 = vrot.lane.b32.xlu0 %v2378, 48
      %v2459 = vpop.permute.xlu0 %2458
      %2460 = vrot.lane.b32.xlu0 %v2379, 48
      %v2461 = vpop.permute.xlu0 %2460
      %2462 = vrot.lane.b32.xlu0 %v2380, 48
      %v2463 = vpop.permute.xlu0 %2462
      %2464 = vrot.lane.b32.xlu0 %v2381, 48
      %v2465 = vpop.permute.xlu0 %2464
      %2466 = vrot.lane.b32.xlu0 %v2382, 48
      %v2467 = vpop.permute.xlu0 %2466
      %2468 = vrot.lane.b32.xlu0 %v2383, 48
      %v2469 = vpop.permute.xlu0 %2468
      %2470 = vrot.lane.b32.xlu0 %v2384, 48
      %v2471 = vpop.permute.xlu0 %2470
      %2472 = vrot.lane.b32.xlu0 %v2385, 48
      %v2473 = vpop.permute.xlu0 %2472
      %2474 = vrot.lane.b32.xlu0 %v2386, 48
      %v2475 = vpop.permute.xlu0 %2474
      %2476 = vrot.lane.b32.xlu0 %v2387, 48
      %v2477 = vpop.permute.xlu0 %2476
      %2478 = vrot.lane.b32.xlu0 %v2388, 48
      %v2479 = vpop.permute.xlu0 %2478
      %2480 = vrot.lane.b32.xlu0 %v2389, 48
      %v2481 = vpop.permute.xlu0 %2480
      %2482 = vrot.lane.b32.xlu0 %v2390, 48
      %v2483 = vpop.permute.xlu0 %2482
      %2484 = vrot.lane.b32.xlu0 %v2391, 48
      %v2485 = vpop.permute.xlu0 %2484
      %2486 = vrot.lane.b32.xlu0 %v2392, 48
      %v2487 = vpop.permute.xlu0 %2486
      %2488 = vrot.lane.b32.xlu0 %v2393, 48
      %v2489 = vpop.permute.xlu0 %2488
      %vm2522 = vcmask 425344
      %2523 = vst.msk [vmem:[#allocation2] sm:$0xff] %vm2522, %v2427
      %2524 = vst.msk [vmem:[#allocation2 + $0x8] sm:$0xff] %vm2522, %v2429
      %2525 = vst.msk [vmem:[#allocation2 + $0x10] sm:$0xff] %vm2522, %v2431
      %2526 = vst.msk [vmem:[#allocation2 + $0x18] sm:$0xff] %vm2522, %v2433
      %2527 = vst.msk [vmem:[#allocation2 + $0x20] sm:$0xff] %vm2522, %v2435
      %2528 = vst.msk [vmem:[#allocation2 + $0x28] sm:$0xff] %vm2522, %v2437
      %2529 = vst.msk [vmem:[#allocation2 + $0x30] sm:$0xff] %vm2522, %v2439
      %2530 = vst.msk [vmem:[#allocation2 + $0x38] sm:$0xff] %vm2522, %v2441
      %2531 = vst.msk [vmem:[#allocation2 + $0x40] sm:$0xff] %vm2522, %v2443
      %2532 = vst.msk [vmem:[#allocation2 + $0x48] sm:$0xff] %vm2522, %v2445
      %2533 = vst.msk [vmem:[#allocation2 + $0x50] sm:$0xff] %vm2522, %v2447
      %2534 = vst.msk [vmem:[#allocation2 + $0x58] sm:$0xff] %vm2522, %v2449
      %2535 = vst.msk [vmem:[#allocation2 + $0x60] sm:$0xff] %vm2522, %v2451
      %2536 = vst.msk [vmem:[#allocation2 + $0x68] sm:$0xff] %vm2522, %v2453
      %2537 = vst.msk [vmem:[#allocation2 + $0x70] sm:$0xff] %vm2522, %v2455
      %2538 = vst.msk [vmem:[#allocation2 + $0x78] sm:$0xff] %vm2522, %v2457
      %2539 = vst.msk [vmem:[#allocation2 + $0x80] sm:$0xff] %vm2522, %v2459
      %2540 = vst.msk [vmem:[#allocation2 + $0x88] sm:$0xff] %vm2522, %v2461
      %2541 = vst.msk [vmem:[#allocation2 + $0x90] sm:$0xff] %vm2522, %v2463
      %2542 = vst.msk [vmem:[#allocation2 + $0x98] sm:$0xff] %vm2522, %v2465
      %2543 = vst.msk [vmem:[#allocation2 + $0xa0] sm:$0xff] %vm2522, %v2467
      %2544 = vst.msk [vmem:[#allocation2 + $0xa8] sm:$0xff] %vm2522, %v2469
      %2545 = vst.msk [vmem:[#allocation2 + $0xb0] sm:$0xff] %vm2522, %v2471
      %2546 = vst.msk [vmem:[#allocation2 + $0xb8] sm:$0xff] %vm2522, %v2473
      %2547 = vst.msk [vmem:[#allocation2 + $0xc0] sm:$0xff] %vm2522, %v2475
      %2548 = vst.msk [vmem:[#allocation2 + $0xc8] sm:$0xff] %vm2522, %v2477
      %2549 = vst.msk [vmem:[#allocation2 + $0xd0] sm:$0xff] %vm2522, %v2479
      %2550 = vst.msk [vmem:[#allocation2 + $0xd8] sm:$0xff] %vm2522, %v2481
      %2551 = vst.msk [vmem:[#allocation2 + $0xe0] sm:$0xff] %vm2522, %v2483
      %2552 = vst.msk [vmem:[#allocation2 + $0xe8] sm:$0xff] %vm2522, %v2485
      %2553 = vst.msk [vmem:[#allocation2 + $0xf0] sm:$0xff] %vm2522, %v2487
      %2554 = vst.msk [vmem:[#allocation2 + $0xf8] sm:$0xff] %vm2522, %v2489
      %v2555 = vld [vmem:[%s1975 + $0x3] sm:$0xff]
      %v2556 = vld [vmem:[%s1975 + $0xb] sm:$0xff]
      %v2557 = vld [vmem:[%s1975 + $0x1b] sm:$0xff]
      %v2558 = vld [vmem:[%s1975 + $0x23] sm:$0xff]
      %v2559 = vld [vmem:[%s1975 + $0x33] sm:$0xff]
      %v2560 = vld [vmem:[%s1975 + $0x3b] sm:$0xff]
      %v2561 = vld [vmem:[%s1975 + $0x4b] sm:$0xff]
      %v2562 = vld [vmem:[%s1975 + $0x53] sm:$0xff]
      %v2563 = vld [vmem:[%s1975 + $0x63] sm:$0xff]
      %v2564 = vld [vmem:[%s1975 + $0x6b] sm:$0xff]
      %v2565 = vld [vmem:[%s1975 + $0x7b] sm:$0xff]
      %v2566 = vld [vmem:[%s1975 + $0x83] sm:$0xff]
      %v2567 = vld [vmem:[%s1975 + $0x93] sm:$0xff]
      %v2568 = vld [vmem:[%s1975 + $0x9b] sm:$0xff]
      %v2569 = vld [vmem:[%s1975 + $0xab] sm:$0xff]
      %v2570 = vld [vmem:[%s1975 + $0xb3] sm:$0xff]
      %v2571 = vld [vmem:[%s1975 + $0xc3] sm:$0xff]
      %v2572 = vld [vmem:[%s1975 + $0xcb] sm:$0xff]
      %v2573 = vld [vmem:[%s1975 + $0xdb] sm:$0xff]
      %v2574 = vld [vmem:[%s1975 + $0xe3] sm:$0xff]
      %v2575 = vld [vmem:[%s1975 + $0xf3] sm:$0xff]
      %v2576 = vld [vmem:[%s1975 + $0xfb] sm:$0xff]
      %v2577 = vld [vmem:[%s1975 + $0x10b] sm:$0xff]
      %v2578 = vld [vmem:[%s1975 + $0x113] sm:$0xff]
      %v2579 = vld [vmem:[%s1975 + $0x123] sm:$0xff]
      %v2580 = vld [vmem:[%s1975 + $0x12b] sm:$0xff]
      %v2581 = vld [vmem:[%s1975 + $0x13b] sm:$0xff]
      %v2582 = vld [vmem:[%s1975 + $0x143] sm:$0xff]
      %v2583 = vld [vmem:[%s1975 + $0x153] sm:$0xff]
      %v2584 = vld [vmem:[%s1975 + $0x15b] sm:$0xff]
      %v2585 = vld [vmem:[%s1975 + $0x16b] sm:$0xff]
      %v2586 = vld [vmem:[%s1975 + $0x173] sm:$0xff]
      %2619 = vrot.lane.b32.xlu0 %v2555, 52
      %v2620 = vpop.permute.xlu0 %2619
      %2621 = vrot.lane.b32.xlu0 %v2556, 52
      %v2622 = vpop.permute.xlu0 %2621
      %2623 = vrot.lane.b32.xlu0 %v2557, 52
      %v2624 = vpop.permute.xlu0 %2623
      %2625 = vrot.lane.b32.xlu0 %v2558, 52
      %v2626 = vpop.permute.xlu0 %2625
      %2627 = vrot.lane.b32.xlu0 %v2559, 52
      %v2628 = vpop.permute.xlu0 %2627
      %2629 = vrot.lane.b32.xlu0 %v2560, 52
      %v2630 = vpop.permute.xlu0 %2629
      %2631 = vrot.lane.b32.xlu0 %v2561, 52
      %v2632 = vpop.permute.xlu0 %2631
      %2633 = vrot.lane.b32.xlu0 %v2562, 52
      %v2634 = vpop.permute.xlu0 %2633
      %2635 = vrot.lane.b32.xlu0 %v2563, 52
      %v2636 = vpop.permute.xlu0 %2635
      %2637 = vrot.lane.b32.xlu0 %v2564, 52
      %v2638 = vpop.permute.xlu0 %2637
      %2639 = vrot.lane.b32.xlu0 %v2565, 52
      %v2640 = vpop.permute.xlu0 %2639
      %2641 = vrot.lane.b32.xlu0 %v2566, 52
      %v2642 = vpop.permute.xlu0 %2641
      %2643 = vrot.lane.b32.xlu0 %v2567, 52
      %v2644 = vpop.permute.xlu0 %2643
      %2645 = vrot.lane.b32.xlu0 %v2568, 52
      %v2646 = vpop.permute.xlu0 %2645
      %2647 = vrot.lane.b32.xlu0 %v2569, 52
      %v2648 = vpop.permute.xlu0 %2647
      %2649 = vrot.lane.b32.xlu0 %v2570, 52
      %v2650 = vpop.permute.xlu0 %2649
      %2651 = vrot.lane.b32.xlu0 %v2571, 52
      %v2652 = vpop.permute.xlu0 %2651
      %2653 = vrot.lane.b32.xlu0 %v2572, 52
      %v2654 = vpop.permute.xlu0 %2653
      %2655 = vrot.lane.b32.xlu0 %v2573, 52
      %v2656 = vpop.permute.xlu0 %2655
      %2657 = vrot.lane.b32.xlu0 %v2574, 52
      %v2658 = vpop.permute.xlu0 %2657
      %2659 = vrot.lane.b32.xlu0 %v2575, 52
      %v2660 = vpop.permute.xlu0 %2659
      %2661 = vrot.lane.b32.xlu0 %v2576, 52
      %v2662 = vpop.permute.xlu0 %2661
      %2663 = vrot.lane.b32.xlu0 %v2577, 52
      %v2664 = vpop.permute.xlu0 %2663
      %2665 = vrot.lane.b32.xlu0 %v2578, 52
      %v2666 = vpop.permute.xlu0 %2665
      %2667 = vrot.lane.b32.xlu0 %v2579, 52
      %v2668 = vpop.permute.xlu0 %2667
      %2669 = vrot.lane.b32.xlu0 %v2580, 52
      %v2670 = vpop.permute.xlu0 %2669
      %2671 = vrot.lane.b32.xlu0 %v2581, 52
      %v2672 = vpop.permute.xlu0 %2671
      %2673 = vrot.lane.b32.xlu0 %v2582, 52
      %v2674 = vpop.permute.xlu0 %2673
      %2675 = vrot.lane.b32.xlu0 %v2583, 52
      %v2676 = vpop.permute.xlu0 %2675
      %2677 = vrot.lane.b32.xlu0 %v2584, 52
      %v2678 = vpop.permute.xlu0 %2677
      %2679 = vrot.lane.b32.xlu0 %v2585, 52
      %v2680 = vpop.permute.xlu0 %2679
      %2681 = vrot.lane.b32.xlu0 %v2586, 52
      %v2682 = vpop.permute.xlu0 %2681
      %vm2715 = vcmask 458144
      %2716 = vst.msk [vmem:[#allocation2] sm:$0xff] %vm2715, %v2620
      %2717 = vst.msk [vmem:[#allocation2 + $0x8] sm:$0xff] %vm2715, %v2622
      %2718 = vst.msk [vmem:[#allocation2 + $0x10] sm:$0xff] %vm2715, %v2624
      %2719 = vst.msk [vmem:[#allocation2 + $0x18] sm:$0xff] %vm2715, %v2626
      %2720 = vst.msk [vmem:[#allocation2 + $0x20] sm:$0xff] %vm2715, %v2628
      %2721 = vst.msk [vmem:[#allocation2 + $0x28] sm:$0xff] %vm2715, %v2630
      %2722 = vst.msk [vmem:[#allocation2 + $0x30] sm:$0xff] %vm2715, %v2632
      %2723 = vst.msk [vmem:[#allocation2 + $0x38] sm:$0xff] %vm2715, %v2634
      %2724 = vst.msk [vmem:[#allocation2 + $0x40] sm:$0xff] %vm2715, %v2636
      %2725 = vst.msk [vmem:[#allocation2 + $0x48] sm:$0xff] %vm2715, %v2638
      %2726 = vst.msk [vmem:[#allocation2 + $0x50] sm:$0xff] %vm2715, %v2640
      %2727 = vst.msk [vmem:[#allocation2 + $0x58] sm:$0xff] %vm2715, %v2642
      %2728 = vst.msk [vmem:[#allocation2 + $0x60] sm:$0xff] %vm2715, %v2644
      %2729 = vst.msk [vmem:[#allocation2 + $0x68] sm:$0xff] %vm2715, %v2646
      %2730 = vst.msk [vmem:[#allocation2 + $0x70] sm:$0xff] %vm2715, %v2648
      %2731 = vst.msk [vmem:[#allocation2 + $0x78] sm:$0xff] %vm2715, %v2650
      %2732 = vst.msk [vmem:[#allocation2 + $0x80] sm:$0xff] %vm2715, %v2652
      %2733 = vst.msk [vmem:[#allocation2 + $0x88] sm:$0xff] %vm2715, %v2654
      %2734 = vst.msk [vmem:[#allocation2 + $0x90] sm:$0xff] %vm2715, %v2656
      %2735 = vst.msk [vmem:[#allocation2 + $0x98] sm:$0xff] %vm2715, %v2658
      %2736 = vst.msk [vmem:[#allocation2 + $0xa0] sm:$0xff] %vm2715, %v2660
      %2737 = vst.msk [vmem:[#allocation2 + $0xa8] sm:$0xff] %vm2715, %v2662
      %2738 = vst.msk [vmem:[#allocation2 + $0xb0] sm:$0xff] %vm2715, %v2664
      %2739 = vst.msk [vmem:[#allocation2 + $0xb8] sm:$0xff] %vm2715, %v2666
      %2740 = vst.msk [vmem:[#allocation2 + $0xc0] sm:$0xff] %vm2715, %v2668
      %2741 = vst.msk [vmem:[#allocation2 + $0xc8] sm:$0xff] %vm2715, %v2670
      %2742 = vst.msk [vmem:[#allocation2 + $0xd0] sm:$0xff] %vm2715, %v2672
      %2743 = vst.msk [vmem:[#allocation2 + $0xd8] sm:$0xff] %vm2715, %v2674
      %2744 = vst.msk [vmem:[#allocation2 + $0xe0] sm:$0xff] %vm2715, %v2676
      %2745 = vst.msk [vmem:[#allocation2 + $0xe8] sm:$0xff] %vm2715, %v2678
      %2746 = vst.msk [vmem:[#allocation2 + $0xf0] sm:$0xff] %vm2715, %v2680
      %2747 = vst.msk [vmem:[#allocation2 + $0xf8] sm:$0xff] %vm2715, %v2682
      %v2748 = vld [vmem:[%s1975 + $0x4] sm:$0xff]
      %v2749 = vld [vmem:[%s1975 + $0xc] sm:$0xff]
      %v2750 = vld [vmem:[%s1975 + $0x1c] sm:$0xff]
      %v2751 = vld [vmem:[%s1975 + $0x24] sm:$0xff]
      %v2752 = vld [vmem:[%s1975 + $0x34] sm:$0xff]
      %v2753 = vld [vmem:[%s1975 + $0x3c] sm:$0xff]
      %v2754 = vld [vmem:[%s1975 + $0x4c] sm:$0xff]
      %v2755 = vld [vmem:[%s1975 + $0x54] sm:$0xff]
      %v2756 = vld [vmem:[%s1975 + $0x64] sm:$0xff]
      %v2757 = vld [vmem:[%s1975 + $0x6c] sm:$0xff]
      %v2758 = vld [vmem:[%s1975 + $0x7c] sm:$0xff]
      %v2759 = vld [vmem:[%s1975 + $0x84] sm:$0xff]
      %v2760 = vld [vmem:[%s1975 + $0x94] sm:$0xff]
      %v2761 = vld [vmem:[%s1975 + $0x9c] sm:$0xff]
      %v2762 = vld [vmem:[%s1975 + $0xac] sm:$0xff]
      %v2763 = vld [vmem:[%s1975 + $0xb4] sm:$0xff]
      %v2764 = vld [vmem:[%s1975 + $0xc4] sm:$0xff]
      %v2765 = vld [vmem:[%s1975 + $0xcc] sm:$0xff]
      %v2766 = vld [vmem:[%s1975 + $0xdc] sm:$0xff]
      %v2767 = vld [vmem:[%s1975 + $0xe4] sm:$0xff]
      %v2768 = vld [vmem:[%s1975 + $0xf4] sm:$0xff]
      %v2769 = vld [vmem:[%s1975 + $0xfc] sm:$0xff]
      %v2770 = vld [vmem:[%s1975 + $0x10c] sm:$0xff]
      %v2771 = vld [vmem:[%s1975 + $0x114] sm:$0xff]
      %v2772 = vld [vmem:[%s1975 + $0x124] sm:$0xff]
      %v2773 = vld [vmem:[%s1975 + $0x12c] sm:$0xff]
      %v2774 = vld [vmem:[%s1975 + $0x13c] sm:$0xff]
      %v2775 = vld [vmem:[%s1975 + $0x144] sm:$0xff]
      %v2776 = vld [vmem:[%s1975 + $0x154] sm:$0xff]
      %v2777 = vld [vmem:[%s1975 + $0x15c] sm:$0xff]
      %v2778 = vld [vmem:[%s1975 + $0x16c] sm:$0xff]
      %v2779 = vld [vmem:[%s1975 + $0x174] sm:$0xff]
      %2812 = vrot.lane.b32.xlu0 %v2748, 56
      %v2813 = vpop.permute.xlu0 %2812
      %2814 = vrot.lane.b32.xlu0 %v2749, 56
      %v2815 = vpop.permute.xlu0 %2814
      %2816 = vrot.lane.b32.xlu0 %v2750, 56
      %v2817 = vpop.permute.xlu0 %2816
      %2818 = vrot.lane.b32.xlu0 %v2751, 56
      %v2819 = vpop.permute.xlu0 %2818
      %2820 = vrot.lane.b32.xlu0 %v2752, 56
      %v2821 = vpop.permute.xlu0 %2820
      %2822 = vrot.lane.b32.xlu0 %v2753, 56
      %v2823 = vpop.permute.xlu0 %2822
      %2824 = vrot.lane.b32.xlu0 %v2754, 56
      %v2825 = vpop.permute.xlu0 %2824
      %2826 = vrot.lane.b32.xlu0 %v2755, 56
      %v2827 = vpop.permute.xlu0 %2826
      %2828 = vrot.lane.b32.xlu0 %v2756, 56
      %v2829 = vpop.permute.xlu0 %2828
      %2830 = vrot.lane.b32.xlu0 %v2757, 56
      %v2831 = vpop.permute.xlu0 %2830
      %2832 = vrot.lane.b32.xlu0 %v2758, 56
      %v2833 = vpop.permute.xlu0 %2832
      %2834 = vrot.lane.b32.xlu0 %v2759, 56
      %v2835 = vpop.permute.xlu0 %2834
      %2836 = vrot.lane.b32.xlu0 %v2760, 56
      %v2837 = vpop.permute.xlu0 %2836
      %2838 = vrot.lane.b32.xlu0 %v2761, 56
      %v2839 = vpop.permute.xlu0 %2838
      %2840 = vrot.lane.b32.xlu0 %v2762, 56
      %v2841 = vpop.permute.xlu0 %2840
      %2842 = vrot.lane.b32.xlu0 %v2763, 56
      %v2843 = vpop.permute.xlu0 %2842
      %2844 = vrot.lane.b32.xlu0 %v2764, 56
      %v2845 = vpop.permute.xlu0 %2844
      %2846 = vrot.lane.b32.xlu0 %v2765, 56
      %v2847 = vpop.permute.xlu0 %2846
      %2848 = vrot.lane.b32.xlu0 %v2766, 56
      %v2849 = vpop.permute.xlu0 %2848
      %2850 = vrot.lane.b32.xlu0 %v2767, 56
      %v2851 = vpop.permute.xlu0 %2850
      %2852 = vrot.lane.b32.xlu0 %v2768, 56
      %v2853 = vpop.permute.xlu0 %2852
      %2854 = vrot.lane.b32.xlu0 %v2769, 56
      %v2855 = vpop.permute.xlu0 %2854
      %2856 = vrot.lane.b32.xlu0 %v2770, 56
      %v2857 = vpop.permute.xlu0 %2856
      %2858 = vrot.lane.b32.xlu0 %v2771, 56
      %v2859 = vpop.permute.xlu0 %2858
      %2860 = vrot.lane.b32.xlu0 %v2772, 56
      %v2861 = vpop.permute.xlu0 %2860
      %2862 = vrot.lane.b32.xlu0 %v2773, 56
      %v2863 = vpop.permute.xlu0 %2862
      %2864 = vrot.lane.b32.xlu0 %v2774, 56
      %v2865 = vpop.permute.xlu0 %2864
      %2866 = vrot.lane.b32.xlu0 %v2775, 56
      %v2867 = vpop.permute.xlu0 %2866
      %2868 = vrot.lane.b32.xlu0 %v2776, 56
      %v2869 = vpop.permute.xlu0 %2868
      %2870 = vrot.lane.b32.xlu0 %v2777, 56
      %v2871 = vpop.permute.xlu0 %2870
      %2872 = vrot.lane.b32.xlu0 %v2778, 56
      %v2873 = vpop.permute.xlu0 %2872
      %2874 = vrot.lane.b32.xlu0 %v2779, 56
      %v2875 = vpop.permute.xlu0 %2874
      %vm2908 = vcmask 490944
      %2909 = vst.msk [vmem:[#allocation2] sm:$0xff] %vm2908, %v2813
      %2910 = vst.msk [vmem:[#allocation2 + $0x8] sm:$0xff] %vm2908, %v2815
      %2911 = vst.msk [vmem:[#allocation2 + $0x10] sm:$0xff] %vm2908, %v2817
      %2912 = vst.msk [vmem:[#allocation2 + $0x18] sm:$0xff] %vm2908, %v2819
      %2913 = vst.msk [vmem:[#allocation2 + $0x20] sm:$0xff] %vm2908, %v2821
      %2914 = vst.msk [vmem:[#allocation2 + $0x28] sm:$0xff] %vm2908, %v2823
      %2915 = vst.msk [vmem:[#allocation2 + $0x30] sm:$0xff] %vm2908, %v2825
      %2916 = vst.msk [vmem:[#allocation2 + $0x38] sm:$0xff] %vm2908, %v2827
      %2917 = vst.msk [vmem:[#allocation2 + $0x40] sm:$0xff] %vm2908, %v2829
      %2918 = vst.msk [vmem:[#allocation2 + $0x48] sm:$0xff] %vm2908, %v2831
      %2919 = vst.msk [vmem:[#allocation2 + $0x50] sm:$0xff] %vm2908, %v2833
      %2920 = vst.msk [vmem:[#allocation2 + $0x58] sm:$0xff] %vm2908, %v2835
      %2921 = vst.msk [vmem:[#allocation2 + $0x60] sm:$0xff] %vm2908, %v2837
      %2922 = vst.msk [vmem:[#allocation2 + $0x68] sm:$0xff] %vm2908, %v2839
      %2923 = vst.msk [vmem:[#allocation2 + $0x70] sm:$0xff] %vm2908, %v2841
      %2924 = vst.msk [vmem:[#allocation2 + $0x78] sm:$0xff] %vm2908, %v2843
      %2925 = vst.msk [vmem:[#allocation2 + $0x80] sm:$0xff] %vm2908, %v2845
      %2926 = vst.msk [vmem:[#allocation2 + $0x88] sm:$0xff] %vm2908, %v2847
      %2927 = vst.msk [vmem:[#allocation2 + $0x90] sm:$0xff] %vm2908, %v2849
      %2928 = vst.msk [vmem:[#allocation2 + $0x98] sm:$0xff] %vm2908, %v2851
      %2929 = vst.msk [vmem:[#allocation2 + $0xa0] sm:$0xff] %vm2908, %v2853
      %2930 = vst.msk [vmem:[#allocation2 + $0xa8] sm:$0xff] %vm2908, %v2855
      %2931 = vst.msk [vmem:[#allocation2 + $0xb0] sm:$0xff] %vm2908, %v2857
      %2932 = vst.msk [vmem:[#allocation2 + $0xb8] sm:$0xff] %vm2908, %v2859
      %2933 = vst.msk [vmem:[#allocation2 + $0xc0] sm:$0xff] %vm2908, %v2861
      %2934 = vst.msk [vmem:[#allocation2 + $0xc8] sm:$0xff] %vm2908, %v2863
      %2935 = vst.msk [vmem:[#allocation2 + $0xd0] sm:$0xff] %vm2908, %v2865
      %2936 = vst.msk [vmem:[#allocation2 + $0xd8] sm:$0xff] %vm2908, %v2867
      %2937 = vst.msk [vmem:[#allocation2 + $0xe0] sm:$0xff] %vm2908, %v2869
      %2938 = vst.msk [vmem:[#allocation2 + $0xe8] sm:$0xff] %vm2908, %v2871
      %2939 = vst.msk [vmem:[#allocation2 + $0xf0] sm:$0xff] %vm2908, %v2873
      %2940 = vst.msk [vmem:[#allocation2 + $0xf8] sm:$0xff] %vm2908, %v2875
      %s2941 = scalar_lea.vmem %s165, 72
      %v2942 = vld [vmem:[%s2941] sm:$0xff]
      %v2943 = vld [vmem:[%s2941 + $0x8] sm:$0xff]
      %v2944 = vld [vmem:[%s2941 + $0x18] sm:$0xff]
      %v2945 = vld [vmem:[%s2941 + $0x20] sm:$0xff]
      %v2946 = vld [vmem:[%s2941 + $0x30] sm:$0xff]
      %v2947 = vld [vmem:[%s2941 + $0x38] sm:$0xff]
      %v2948 = vld [vmem:[%s2941 + $0x48] sm:$0xff]
      %v2949 = vld [vmem:[%s2941 + $0x50] sm:$0xff]
      %v2950 = vld [vmem:[%s2941 + $0x60] sm:$0xff]
      %v2951 = vld [vmem:[%s2941 + $0x68] sm:$0xff]
      %v2952 = vld [vmem:[%s2941 + $0x78] sm:$0xff]
      %v2953 = vld [vmem:[%s2941 + $0x80] sm:$0xff]
      %v2954 = vld [vmem:[%s2941 + $0x90] sm:$0xff]
      %v2955 = vld [vmem:[%s2941 + $0x98] sm:$0xff]
      %v2956 = vld [vmem:[%s2941 + $0xa8] sm:$0xff]
      %v2957 = vld [vmem:[%s2941 + $0xb0] sm:$0xff]
      %v2958 = vld [vmem:[%s2941 + $0xc0] sm:$0xff]
      %v2959 = vld [vmem:[%s2941 + $0xc8] sm:$0xff]
      %v2960 = vld [vmem:[%s2941 + $0xd8] sm:$0xff]
      %v2961 = vld [vmem:[%s2941 + $0xe0] sm:$0xff]
      %v2962 = vld [vmem:[%s2941 + $0xf0] sm:$0xff]
      %v2963 = vld [vmem:[%s2941 + $0xf8] sm:$0xff]
      %v2964 = vld [vmem:[%s2941 + $0x108] sm:$0xff]
      %v2965 = vld [vmem:[%s2941 + $0x110] sm:$0xff]
      %v2966 = vld [vmem:[%s2941 + $0x120] sm:$0xff]
      %v2967 = vld [vmem:[%s2941 + $0x128] sm:$0xff]
      %v2968 = vld [vmem:[%s2941 + $0x138] sm:$0xff]
      %v2969 = vld [vmem:[%s2941 + $0x140] sm:$0xff]
      %v2970 = vld [vmem:[%s2941 + $0x150] sm:$0xff]
      %v2971 = vld [vmem:[%s2941 + $0x158] sm:$0xff]
      %v2972 = vld [vmem:[%s2941 + $0x168] sm:$0xff]
      %v2973 = vld [vmem:[%s2941 + $0x170] sm:$0xff]
      %3006 = vrot.lane.b32.xlu0 %v2942, 60
      %v3007 = vpop.permute.xlu0 %3006
      %3008 = vrot.lane.b32.xlu0 %v2943, 60
      %v3009 = vpop.permute.xlu0 %3008
      %3010 = vrot.lane.b32.xlu0 %v2944, 60
      %v3011 = vpop.permute.xlu0 %3010
      %3012 = vrot.lane.b32.xlu0 %v2945, 60
      %v3013 = vpop.permute.xlu0 %3012
      %3014 = vrot.lane.b32.xlu0 %v2946, 60
      %v3015 = vpop.permute.xlu0 %3014
      %3016 = vrot.lane.b32.xlu0 %v2947, 60
      %v3017 = vpop.permute.xlu0 %3016
      %3018 = vrot.lane.b32.xlu0 %v2948, 60
      %v3019 = vpop.permute.xlu0 %3018
      %3020 = vrot.lane.b32.xlu0 %v2949, 60
      %v3021 = vpop.permute.xlu0 %3020
      %3022 = vrot.lane.b32.xlu0 %v2950, 60
      %v3023 = vpop.permute.xlu0 %3022
      %3024 = vrot.lane.b32.xlu0 %v2951, 60
      %v3025 = vpop.permute.xlu0 %3024
      %3026 = vrot.lane.b32.xlu0 %v2952, 60
      %v3027 = vpop.permute.xlu0 %3026
      %3028 = vrot.lane.b32.xlu0 %v2953, 60
      %v3029 = vpop.permute.xlu0 %3028
      %3030 = vrot.lane.b32.xlu0 %v2954, 60
      %v3031 = vpop.permute.xlu0 %3030
      %3032 = vrot.lane.b32.xlu0 %v2955, 60
      %v3033 = vpop.permute.xlu0 %3032
      %3034 = vrot.lane.b32.xlu0 %v2956, 60
      %v3035 = vpop.permute.xlu0 %3034
      %3036 = vrot.lane.b32.xlu0 %v2957, 60
      %v3037 = vpop.permute.xlu0 %3036
      %3038 = vrot.lane.b32.xlu0 %v2958, 60
      %v3039 = vpop.permute.xlu0 %3038
      %3040 = vrot.lane.b32.xlu0 %v2959, 60
      %v3041 = vpop.permute.xlu0 %3040
      %3042 = vrot.lane.b32.xlu0 %v2960, 60
      %v3043 = vpop.permute.xlu0 %3042
      %3044 = vrot.lane.b32.xlu0 %v2961, 60
      %v3045 = vpop.permute.xlu0 %3044
      %3046 = vrot.lane.b32.xlu0 %v2962, 60
      %v3047 = vpop.permute.xlu0 %3046
      %3048 = vrot.lane.b32.xlu0 %v2963, 60
      %v3049 = vpop.permute.xlu0 %3048
      %3050 = vrot.lane.b32.xlu0 %v2964, 60
      %v3051 = vpop.permute.xlu0 %3050
      %3052 = vrot.lane.b32.xlu0 %v2965, 60
      %v3053 = vpop.permute.xlu0 %3052
      %3054 = vrot.lane.b32.xlu0 %v2966, 60
      %v3055 = vpop.permute.xlu0 %3054
      %3056 = vrot.lane.b32.xlu0 %v2967, 60
      %v3057 = vpop.permute.xlu0 %3056
      %3058 = vrot.lane.b32.xlu0 %v2968, 60
      %v3059 = vpop.permute.xlu0 %3058
      %3060 = vrot.lane.b32.xlu0 %v2969, 60
      %v3061 = vpop.permute.xlu0 %3060
      %3062 = vrot.lane.b32.xlu0 %v2970, 60
      %v3063 = vpop.permute.xlu0 %3062
      %3064 = vrot.lane.b32.xlu0 %v2971, 60
      %v3065 = vpop.permute.xlu0 %3064
      %3066 = vrot.lane.b32.xlu0 %v2972, 60
      %v3067 = vpop.permute.xlu0 %3066
      %3068 = vrot.lane.b32.xlu0 %v2973, 60
      %v3069 = vpop.permute.xlu0 %3068
      %vm3102 = vcmask 523744
      %3103 = vst.msk [vmem:[#allocation2] sm:$0xff] %vm3102, %v3007
      %3104 = vst.msk [vmem:[#allocation2 + $0x8] sm:$0xff] %vm3102, %v3009
      %3105 = vst.msk [vmem:[#allocation2 + $0x10] sm:$0xff] %vm3102, %v3011
      %3106 = vst.msk [vmem:[#allocation2 + $0x18] sm:$0xff] %vm3102, %v3013
      %3107 = vst.msk [vmem:[#allocation2 + $0x20] sm:$0xff] %vm3102, %v3015
      %3108 = vst.msk [vmem:[#allocation2 + $0x28] sm:$0xff] %vm3102, %v3017
      %3109 = vst.msk [vmem:[#allocation2 + $0x30] sm:$0xff] %vm3102, %v3019
      %3110 = vst.msk [vmem:[#allocation2 + $0x38] sm:$0xff] %vm3102, %v3021
      %3111 = vst.msk [vmem:[#allocation2 + $0x40] sm:$0xff] %vm3102, %v3023
      %3112 = vst.msk [vmem:[#allocation2 + $0x48] sm:$0xff] %vm3102, %v3025
      %3113 = vst.msk [vmem:[#allocation2 + $0x50] sm:$0xff] %vm3102, %v3027
      %3114 = vst.msk [vmem:[#allocation2 + $0x58] sm:$0xff] %vm3102, %v3029
      %3115 = vst.msk [vmem:[#allocation2 + $0x60] sm:$0xff] %vm3102, %v3031
      %3116 = vst.msk [vmem:[#allocation2 + $0x68] sm:$0xff] %vm3102, %v3033
      %3117 = vst.msk [vmem:[#allocation2 + $0x70] sm:$0xff] %vm3102, %v3035
      %3118 = vst.msk [vmem:[#allocation2 + $0x78] sm:$0xff] %vm3102, %v3037
      %3119 = vst.msk [vmem:[#allocation2 + $0x80] sm:$0xff] %vm3102, %v3039
      %3120 = vst.msk [vmem:[#allocation2 + $0x88] sm:$0xff] %vm3102, %v3041
      %3121 = vst.msk [vmem:[#allocation2 + $0x90] sm:$0xff] %vm3102, %v3043
      %3122 = vst.msk [vmem:[#allocation2 + $0x98] sm:$0xff] %vm3102, %v3045
      %3123 = vst.msk [vmem:[#allocation2 + $0xa0] sm:$0xff] %vm3102, %v3047
      %3124 = vst.msk [vmem:[#allocation2 + $0xa8] sm:$0xff] %vm3102, %v3049
      %3125 = vst.msk [vmem:[#allocation2 + $0xb0] sm:$0xff] %vm3102, %v3051
      %3126 = vst.msk [vmem:[#allocation2 + $0xb8] sm:$0xff] %vm3102, %v3053
      %3127 = vst.msk [vmem:[#allocation2 + $0xc0] sm:$0xff] %vm3102, %v3055
      %3128 = vst.msk [vmem:[#allocation2 + $0xc8] sm:$0xff] %vm3102, %v3057
      %3129 = vst.msk [vmem:[#allocation2 + $0xd0] sm:$0xff] %vm3102, %v3059
      %3130 = vst.msk [vmem:[#allocation2 + $0xd8] sm:$0xff] %vm3102, %v3061
      %3131 = vst.msk [vmem:[#allocation2 + $0xe0] sm:$0xff] %vm3102, %v3063
      %3132 = vst.msk [vmem:[#allocation2 + $0xe8] sm:$0xff] %vm3102, %v3065
      %3133 = vst.msk [vmem:[#allocation2 + $0xf0] sm:$0xff] %vm3102, %v3067
      %3134 = vst.msk [vmem:[#allocation2 + $0xf8] sm:$0xff] %vm3102, %v3069
      %v3135 = vld [vmem:[%s2941 + $0x1] sm:$0xff]
      %v3136 = vld [vmem:[%s2941 + $0x9] sm:$0xff]
      %v3137 = vld [vmem:[%s2941 + $0x19] sm:$0xff]
      %v3138 = vld [vmem:[%s2941 + $0x21] sm:$0xff]
      %v3139 = vld [vmem:[%s2941 + $0x31] sm:$0xff]
      %v3140 = vld [vmem:[%s2941 + $0x39] sm:$0xff]
      %v3141 = vld [vmem:[%s2941 + $0x49] sm:$0xff]
      %v3142 = vld [vmem:[%s2941 + $0x51] sm:$0xff]
      %v3143 = vld [vmem:[%s2941 + $0x61] sm:$0xff]
      %v3144 = vld [vmem:[%s2941 + $0x69] sm:$0xff]
      %v3145 = vld [vmem:[%s2941 + $0x79] sm:$0xff]
      %v3146 = vld [vmem:[%s2941 + $0x81] sm:$0xff]
      %v3147 = vld [vmem:[%s2941 + $0x91] sm:$0xff]
      %v3148 = vld [vmem:[%s2941 + $0x99] sm:$0xff]
      %v3149 = vld [vmem:[%s2941 + $0xa9] sm:$0xff]
      %v3150 = vld [vmem:[%s2941 + $0xb1] sm:$0xff]
      %v3151 = vld [vmem:[%s2941 + $0xc1] sm:$0xff]
      %v3152 = vld [vmem:[%s2941 + $0xc9] sm:$0xff]
      %v3153 = vld [vmem:[%s2941 + $0xd9] sm:$0xff]
      %v3154 = vld [vmem:[%s2941 + $0xe1] sm:$0xff]
      %v3155 = vld [vmem:[%s2941 + $0xf1] sm:$0xff]
      %v3156 = vld [vmem:[%s2941 + $0xf9] sm:$0xff]
      %v3157 = vld [vmem:[%s2941 + $0x109] sm:$0xff]
      %v3158 = vld [vmem:[%s2941 + $0x111] sm:$0xff]
      %v3159 = vld [vmem:[%s2941 + $0x121] sm:$0xff]
      %v3160 = vld [vmem:[%s2941 + $0x129] sm:$0xff]
      %v3161 = vld [vmem:[%s2941 + $0x139] sm:$0xff]
      %v3162 = vld [vmem:[%s2941 + $0x141] sm:$0xff]
      %v3163 = vld [vmem:[%s2941 + $0x151] sm:$0xff]
      %v3164 = vld [vmem:[%s2941 + $0x159] sm:$0xff]
      %v3165 = vld [vmem:[%s2941 + $0x169] sm:$0xff]
      %v3166 = vld [vmem:[%s2941 + $0x171] sm:$0xff]
      %3199 = vrot.lane.b32.xlu0 %v3135, 64
      %v3200 = vpop.permute.xlu0 %3199
      %3201 = vrot.lane.b32.xlu0 %v3136, 64
      %v3202 = vpop.permute.xlu0 %3201
      %3203 = vrot.lane.b32.xlu0 %v3137, 64
      %v3204 = vpop.permute.xlu0 %3203
      %3205 = vrot.lane.b32.xlu0 %v3138, 64
      %v3206 = vpop.permute.xlu0 %3205
      %3207 = vrot.lane.b32.xlu0 %v3139, 64
      %v3208 = vpop.permute.xlu0 %3207
      %3209 = vrot.lane.b32.xlu0 %v3140, 64
      %v3210 = vpop.permute.xlu0 %3209
      %3211 = vrot.lane.b32.xlu0 %v3141, 64
      %v3212 = vpop.permute.xlu0 %3211
      %3213 = vrot.lane.b32.xlu0 %v3142, 64
      %v3214 = vpop.permute.xlu0 %3213
      %3215 = vrot.lane.b32.xlu0 %v3143, 64
      %v3216 = vpop.permute.xlu0 %3215
      %3217 = vrot.lane.b32.xlu0 %v3144, 64
      %v3218 = vpop.permute.xlu0 %3217
      %3219 = vrot.lane.b32.xlu0 %v3145, 64
      %v3220 = vpop.permute.xlu0 %3219
      %3221 = vrot.lane.b32.xlu0 %v3146, 64
      %v3222 = vpop.permute.xlu0 %3221
      %3223 = vrot.lane.b32.xlu0 %v3147, 64
      %v3224 = vpop.permute.xlu0 %3223
      %3225 = vrot.lane.b32.xlu0 %v3148, 64
      %v3226 = vpop.permute.xlu0 %3225
      %3227 = vrot.lane.b32.xlu0 %v3149, 64
      %v3228 = vpop.permute.xlu0 %3227
      %3229 = vrot.lane.b32.xlu0 %v3150, 64
      %v3230 = vpop.permute.xlu0 %3229
      %3231 = vrot.lane.b32.xlu0 %v3151, 64
      %v3232 = vpop.permute.xlu0 %3231
      %3233 = vrot.lane.b32.xlu0 %v3152, 64
      %v3234 = vpop.permute.xlu0 %3233
      %3235 = vrot.lane.b32.xlu0 %v3153, 64
      %v3236 = vpop.permute.xlu0 %3235
      %3237 = vrot.lane.b32.xlu0 %v3154, 64
      %v3238 = vpop.permute.xlu0 %3237
      %3239 = vrot.lane.b32.xlu0 %v3155, 64
      %v3240 = vpop.permute.xlu0 %3239
      %3241 = vrot.lane.b32.xlu0 %v3156, 64
      %v3242 = vpop.permute.xlu0 %3241
      %3243 = vrot.lane.b32.xlu0 %v3157, 64
      %v3244 = vpop.permute.xlu0 %3243
      %3245 = vrot.lane.b32.xlu0 %v3158, 64
      %v3246 = vpop.permute.xlu0 %3245
      %3247 = vrot.lane.b32.xlu0 %v3159, 64
      %v3248 = vpop.permute.xlu0 %3247
      %3249 = vrot.lane.b32.xlu0 %v3160, 64
      %v3250 = vpop.permute.xlu0 %3249
      %3251 = vrot.lane.b32.xlu0 %v3161, 64
      %v3252 = vpop.permute.xlu0 %3251
      %3253 = vrot.lane.b32.xlu0 %v3162, 64
      %v3254 = vpop.permute.xlu0 %3253
      %3255 = vrot.lane.b32.xlu0 %v3163, 64
      %v3256 = vpop.permute.xlu0 %3255
      %3257 = vrot.lane.b32.xlu0 %v3164, 64
      %v3258 = vpop.permute.xlu0 %3257
      %3259 = vrot.lane.b32.xlu0 %v3165, 64
      %v3260 = vpop.permute.xlu0 %3259
      %3261 = vrot.lane.b32.xlu0 %v3166, 64
      %v3262 = vpop.permute.xlu0 %3261
      %vm3295 = vcmask 556544
      %3296 = vst.msk [vmem:[#allocation2] sm:$0xff] %vm3295, %v3200
      %3297 = vst.msk [vmem:[#allocation2 + $0x8] sm:$0xff] %vm3295, %v3202
      %3298 = vst.msk [vmem:[#allocation2 + $0x10] sm:$0xff] %vm3295, %v3204
      %3299 = vst.msk [vmem:[#allocation2 + $0x18] sm:$0xff] %vm3295, %v3206
      %3300 = vst.msk [vmem:[#allocation2 + $0x20] sm:$0xff] %vm3295, %v3208
      %3301 = vst.msk [vmem:[#allocation2 + $0x28] sm:$0xff] %vm3295, %v3210
      %3302 = vst.msk [vmem:[#allocation2 + $0x30] sm:$0xff] %vm3295, %v3212
      %3303 = vst.msk [vmem:[#allocation2 + $0x38] sm:$0xff] %vm3295, %v3214
      %3304 = vst.msk [vmem:[#allocation2 + $0x40] sm:$0xff] %vm3295, %v3216
      %3305 = vst.msk [vmem:[#allocation2 + $0x48] sm:$0xff] %vm3295, %v3218
      %3306 = vst.msk [vmem:[#allocation2 + $0x50] sm:$0xff] %vm3295, %v3220
      %3307 = vst.msk [vmem:[#allocation2 + $0x58] sm:$0xff] %vm3295, %v3222
      %3308 = vst.msk [vmem:[#allocation2 + $0x60] sm:$0xff] %vm3295, %v3224
      %3309 = vst.msk [vmem:[#allocation2 + $0x68] sm:$0xff] %vm3295, %v3226
      %3310 = vst.msk [vmem:[#allocation2 + $0x70] sm:$0xff] %vm3295, %v3228
      %3311 = vst.msk [vmem:[#allocation2 + $0x78] sm:$0xff] %vm3295, %v3230
      %3312 = vst.msk [vmem:[#allocation2 + $0x80] sm:$0xff] %vm3295, %v3232
      %3313 = vst.msk [vmem:[#allocation2 + $0x88] sm:$0xff] %vm3295, %v3234
      %3314 = vst.msk [vmem:[#allocation2 + $0x90] sm:$0xff] %vm3295, %v3236
      %3315 = vst.msk [vmem:[#allocation2 + $0x98] sm:$0xff] %vm3295, %v3238
      %3316 = vst.msk [vmem:[#allocation2 + $0xa0] sm:$0xff] %vm3295, %v3240
      %3317 = vst.msk [vmem:[#allocation2 + $0xa8] sm:$0xff] %vm3295, %v3242
      %3318 = vst.msk [vmem:[#allocation2 + $0xb0] sm:$0xff] %vm3295, %v3244
      %3319 = vst.msk [vmem:[#allocation2 + $0xb8] sm:$0xff] %vm3295, %v3246
      %3320 = vst.msk [vmem:[#allocation2 + $0xc0] sm:$0xff] %vm3295, %v3248
      %3321 = vst.msk [vmem:[#allocation2 + $0xc8] sm:$0xff] %vm3295, %v3250
      %3322 = vst.msk [vmem:[#allocation2 + $0xd0] sm:$0xff] %vm3295, %v3252
      %3323 = vst.msk [vmem:[#allocation2 + $0xd8] sm:$0xff] %vm3295, %v3254
      %3324 = vst.msk [vmem:[#allocation2 + $0xe0] sm:$0xff] %vm3295, %v3256
      %3325 = vst.msk [vmem:[#allocation2 + $0xe8] sm:$0xff] %vm3295, %v3258
      %3326 = vst.msk [vmem:[#allocation2 + $0xf0] sm:$0xff] %vm3295, %v3260
      %3327 = vst.msk [vmem:[#allocation2 + $0xf8] sm:$0xff] %vm3295, %v3262
      %v3328 = vld [vmem:[%s2941 + $0x2] sm:$0xff]
      %v3329 = vld [vmem:[%s2941 + $0xa] sm:$0xff]
      %v3330 = vld [vmem:[%s2941 + $0x1a] sm:$0xff]
      %v3331 = vld [vmem:[%s2941 + $0x22] sm:$0xff]
      %v3332 = vld [vmem:[%s2941 + $0x32] sm:$0xff]
      %v3333 = vld [vmem:[%s2941 + $0x3a] sm:$0xff]
      %v3334 = vld [vmem:[%s2941 + $0x4a] sm:$0xff]
      %v3335 = vld [vmem:[%s2941 + $0x52] sm:$0xff]
      %v3336 = vld [vmem:[%s2941 + $0x62] sm:$0xff]
      %v3337 = vld [vmem:[%s2941 + $0x6a] sm:$0xff]
      %v3338 = vld [vmem:[%s2941 + $0x7a] sm:$0xff]
      %v3339 = vld [vmem:[%s2941 + $0x82] sm:$0xff]
      %v3340 = vld [vmem:[%s2941 + $0x92] sm:$0xff]
      %v3341 = vld [vmem:[%s2941 + $0x9a] sm:$0xff]
      %v3342 = vld [vmem:[%s2941 + $0xaa] sm:$0xff]
      %v3343 = vld [vmem:[%s2941 + $0xb2] sm:$0xff]
      %v3344 = vld [vmem:[%s2941 + $0xc2] sm:$0xff]
      %v3345 = vld [vmem:[%s2941 + $0xca] sm:$0xff]
      %v3346 = vld [vmem:[%s2941 + $0xda] sm:$0xff]
      %v3347 = vld [vmem:[%s2941 + $0xe2] sm:$0xff]
      %v3348 = vld [vmem:[%s2941 + $0xf2] sm:$0xff]
      %v3349 = vld [vmem:[%s2941 + $0xfa] sm:$0xff]
      %v3350 = vld [vmem:[%s2941 + $0x10a] sm:$0xff]
      %v3351 = vld [vmem:[%s2941 + $0x112] sm:$0xff]
      %v3352 = vld [vmem:[%s2941 + $0x122] sm:$0xff]
      %v3353 = vld [vmem:[%s2941 + $0x12a] sm:$0xff]
      %v3354 = vld [vmem:[%s2941 + $0x13a] sm:$0xff]
      %v3355 = vld [vmem:[%s2941 + $0x142] sm:$0xff]
      %v3356 = vld [vmem:[%s2941 + $0x152] sm:$0xff]
      %v3357 = vld [vmem:[%s2941 + $0x15a] sm:$0xff]
      %v3358 = vld [vmem:[%s2941 + $0x16a] sm:$0xff]
      %v3359 = vld [vmem:[%s2941 + $0x172] sm:$0xff]
      %3392 = vrot.lane.b32.xlu0 %v3328, 68
      %v3393 = vpop.permute.xlu0 %3392
      %3394 = vrot.lane.b32.xlu0 %v3329, 68
      %v3395 = vpop.permute.xlu0 %3394
      %3396 = vrot.lane.b32.xlu0 %v3330, 68
      %v3397 = vpop.permute.xlu0 %3396
      %3398 = vrot.lane.b32.xlu0 %v3331, 68
      %v3399 = vpop.permute.xlu0 %3398
      %3400 = vrot.lane.b32.xlu0 %v3332, 68
      %v3401 = vpop.permute.xlu0 %3400
      %3402 = vrot.lane.b32.xlu0 %v3333, 68
      %v3403 = vpop.permute.xlu0 %3402
      %3404 = vrot.lane.b32.xlu0 %v3334, 68
      %v3405 = vpop.permute.xlu0 %3404
      %3406 = vrot.lane.b32.xlu0 %v3335, 68
      %v3407 = vpop.permute.xlu0 %3406
      %3408 = vrot.lane.b32.xlu0 %v3336, 68
      %v3409 = vpop.permute.xlu0 %3408
      %3410 = vrot.lane.b32.xlu0 %v3337, 68
      %v3411 = vpop.permute.xlu0 %3410
      %3412 = vrot.lane.b32.xlu0 %v3338, 68
      %v3413 = vpop.permute.xlu0 %3412
      %3414 = vrot.lane.b32.xlu0 %v3339, 68
      %v3415 = vpop.permute.xlu0 %3414
      %3416 = vrot.lane.b32.xlu0 %v3340, 68
      %v3417 = vpop.permute.xlu0 %3416
      %3418 = vrot.lane.b32.xlu0 %v3341, 68
      %v3419 = vpop.permute.xlu0 %3418
      %3420 = vrot.lane.b32.xlu0 %v3342, 68
      %v3421 = vpop.permute.xlu0 %3420
      %3422 = vrot.lane.b32.xlu0 %v3343, 68
      %v3423 = vpop.permute.xlu0 %3422
      %3424 = vrot.lane.b32.xlu0 %v3344, 68
      %v3425 = vpop.permute.xlu0 %3424
      %3426 = vrot.lane.b32.xlu0 %v3345, 68
      %v3427 = vpop.permute.xlu0 %3426
      %3428 = vrot.lane.b32.xlu0 %v3346, 68
      %v3429 = vpop.permute.xlu0 %3428
      %3430 = vrot.lane.b32.xlu0 %v3347, 68
      %v3431 = vpop.permute.xlu0 %3430
      %3432 = vrot.lane.b32.xlu0 %v3348, 68
      %v3433 = vpop.permute.xlu0 %3432
      %3434 = vrot.lane.b32.xlu0 %v3349, 68
      %v3435 = vpop.permute.xlu0 %3434
      %3436 = vrot.lane.b32.xlu0 %v3350, 68
      %v3437 = vpop.permute.xlu0 %3436
      %3438 = vrot.lane.b32.xlu0 %v3351, 68
      %v3439 = vpop.permute.xlu0 %3438
      %3440 = vrot.lane.b32.xlu0 %v3352, 68
      %v3441 = vpop.permute.xlu0 %3440
      %3442 = vrot.lane.b32.xlu0 %v3353, 68
      %v3443 = vpop.permute.xlu0 %3442
      %3444 = vrot.lane.b32.xlu0 %v3354, 68
      %v3445 = vpop.permute.xlu0 %3444
      %3446 = vrot.lane.b32.xlu0 %v3355, 68
      %v3447 = vpop.permute.xlu0 %3446
      %3448 = vrot.lane.b32.xlu0 %v3356, 68
      %v3449 = vpop.permute.xlu0 %3448
      %3450 = vrot.lane.b32.xlu0 %v3357, 68
      %v3451 = vpop.permute.xlu0 %3450
      %3452 = vrot.lane.b32.xlu0 %v3358, 68
      %v3453 = vpop.permute.xlu0 %3452
      %3454 = vrot.lane.b32.xlu0 %v3359, 68
      %v3455 = vpop.permute.xlu0 %3454
      %vm3488 = vcmask 589344
      %3489 = vst.msk [vmem:[#allocation2] sm:$0xff] %vm3488, %v3393
      %3490 = vst.msk [vmem:[#allocation2 + $0x8] sm:$0xff] %vm3488, %v3395
      %3491 = vst.msk [vmem:[#allocation2 + $0x10] sm:$0xff] %vm3488, %v3397
      %3492 = vst.msk [vmem:[#allocation2 + $0x18] sm:$0xff] %vm3488, %v3399
      %3493 = vst.msk [vmem:[#allocation2 + $0x20] sm:$0xff] %vm3488, %v3401
      %3494 = vst.msk [vmem:[#allocation2 + $0x28] sm:$0xff] %vm3488, %v3403
      %3495 = vst.msk [vmem:[#allocation2 + $0x30] sm:$0xff] %vm3488, %v3405
      %3496 = vst.msk [vmem:[#allocation2 + $0x38] sm:$0xff] %vm3488, %v3407
      %3497 = vst.msk [vmem:[#allocation2 + $0x40] sm:$0xff] %vm3488, %v3409
      %3498 = vst.msk [vmem:[#allocation2 + $0x48] sm:$0xff] %vm3488, %v3411
      %3499 = vst.msk [vmem:[#allocation2 + $0x50] sm:$0xff] %vm3488, %v3413
      %3500 = vst.msk [vmem:[#allocation2 + $0x58] sm:$0xff] %vm3488, %v3415
      %3501 = vst.msk [vmem:[#allocation2 + $0x60] sm:$0xff] %vm3488, %v3417
      %3502 = vst.msk [vmem:[#allocation2 + $0x68] sm:$0xff] %vm3488, %v3419
      %3503 = vst.msk [vmem:[#allocation2 + $0x70] sm:$0xff] %vm3488, %v3421
      %3504 = vst.msk [vmem:[#allocation2 + $0x78] sm:$0xff] %vm3488, %v3423
      %3505 = vst.msk [vmem:[#allocation2 + $0x80] sm:$0xff] %vm3488, %v3425
      %3506 = vst.msk [vmem:[#allocation2 + $0x88] sm:$0xff] %vm3488, %v3427
      %3507 = vst.msk [vmem:[#allocation2 + $0x90] sm:$0xff] %vm3488, %v3429
      %3508 = vst.msk [vmem:[#allocation2 + $0x98] sm:$0xff] %vm3488, %v3431
      %3509 = vst.msk [vmem:[#allocation2 + $0xa0] sm:$0xff] %vm3488, %v3433
      %3510 = vst.msk [vmem:[#allocation2 + $0xa8] sm:$0xff] %vm3488, %v3435
      %3511 = vst.msk [vmem:[#allocation2 + $0xb0] sm:$0xff] %vm3488, %v3437
      %3512 = vst.msk [vmem:[#allocation2 + $0xb8] sm:$0xff] %vm3488, %v3439
      %3513 = vst.msk [vmem:[#allocation2 + $0xc0] sm:$0xff] %vm3488, %v3441
      %3514 = vst.msk [vmem:[#allocation2 + $0xc8] sm:$0xff] %vm3488, %v3443
      %3515 = vst.msk [vmem:[#allocation2 + $0xd0] sm:$0xff] %vm3488, %v3445
      %3516 = vst.msk [vmem:[#allocation2 + $0xd8] sm:$0xff] %vm3488, %v3447
      %3517 = vst.msk [vmem:[#allocation2 + $0xe0] sm:$0xff] %vm3488, %v3449
      %3518 = vst.msk [vmem:[#allocation2 + $0xe8] sm:$0xff] %vm3488, %v3451
      %3519 = vst.msk [vmem:[#allocation2 + $0xf0] sm:$0xff] %vm3488, %v3453
      %3520 = vst.msk [vmem:[#allocation2 + $0xf8] sm:$0xff] %vm3488, %v3455
      %v3521 = vld [vmem:[%s2941 + $0x3] sm:$0xff]
      %v3522 = vld [vmem:[%s2941 + $0xb] sm:$0xff]
      %v3523 = vld [vmem:[%s2941 + $0x1b] sm:$0xff]
      %v3524 = vld [vmem:[%s2941 + $0x23] sm:$0xff]
      %v3525 = vld [vmem:[%s2941 + $0x33] sm:$0xff]
      %v3526 = vld [vmem:[%s2941 + $0x3b] sm:$0xff]
      %v3527 = vld [vmem:[%s2941 + $0x4b] sm:$0xff]
      %v3528 = vld [vmem:[%s2941 + $0x53] sm:$0xff]
      %v3529 = vld [vmem:[%s2941 + $0x63] sm:$0xff]
      %v3530 = vld [vmem:[%s2941 + $0x6b] sm:$0xff]
      %v3531 = vld [vmem:[%s2941 + $0x7b] sm:$0xff]
      %v3532 = vld [vmem:[%s2941 + $0x83] sm:$0xff]
      %v3533 = vld [vmem:[%s2941 + $0x93] sm:$0xff]
      %v3534 = vld [vmem:[%s2941 + $0x9b] sm:$0xff]
      %v3535 = vld [vmem:[%s2941 + $0xab] sm:$0xff]
      %v3536 = vld [vmem:[%s2941 + $0xb3] sm:$0xff]
      %v3537 = vld [vmem:[%s2941 + $0xc3] sm:$0xff]
      %v3538 = vld [vmem:[%s2941 + $0xcb] sm:$0xff]
      %v3539 = vld [vmem:[%s2941 + $0xdb] sm:$0xff]
      %v3540 = vld [vmem:[%s2941 + $0xe3] sm:$0xff]
      %v3541 = vld [vmem:[%s2941 + $0xf3] sm:$0xff]
      %v3542 = vld [vmem:[%s2941 + $0xfb] sm:$0xff]
      %v3543 = vld [vmem:[%s2941 + $0x10b] sm:$0xff]
      %v3544 = vld [vmem:[%s2941 + $0x113] sm:$0xff]
      %v3545 = vld [vmem:[%s2941 + $0x123] sm:$0xff]
      %v3546 = vld [vmem:[%s2941 + $0x12b] sm:$0xff]
      %v3547 = vld [vmem:[%s2941 + $0x13b] sm:$0xff]
      %v3548 = vld [vmem:[%s2941 + $0x143] sm:$0xff]
      %v3549 = vld [vmem:[%s2941 + $0x153] sm:$0xff]
      %v3550 = vld [vmem:[%s2941 + $0x15b] sm:$0xff]
      %v3551 = vld [vmem:[%s2941 + $0x16b] sm:$0xff]
      %v3552 = vld [vmem:[%s2941 + $0x173] sm:$0xff]
      %3585 = vrot.lane.b32.xlu0 %v3521, 72
      %v3586 = vpop.permute.xlu0 %3585
      %3587 = vrot.lane.b32.xlu0 %v3522, 72
      %v3588 = vpop.permute.xlu0 %3587
      %3589 = vrot.lane.b32.xlu0 %v3523, 72
      %v3590 = vpop.permute.xlu0 %3589
      %3591 = vrot.lane.b32.xlu0 %v3524, 72
      %v3592 = vpop.permute.xlu0 %3591
      %3593 = vrot.lane.b32.xlu0 %v3525, 72
      %v3594 = vpop.permute.xlu0 %3593
      %3595 = vrot.lane.b32.xlu0 %v3526, 72
      %v3596 = vpop.permute.xlu0 %3595
      %3597 = vrot.lane.b32.xlu0 %v3527, 72
      %v3598 = vpop.permute.xlu0 %3597
      %3599 = vrot.lane.b32.xlu0 %v3528, 72
      %v3600 = vpop.permute.xlu0 %3599
      %3601 = vrot.lane.b32.xlu0 %v3529, 72
      %v3602 = vpop.permute.xlu0 %3601
      %3603 = vrot.lane.b32.xlu0 %v3530, 72
      %v3604 = vpop.permute.xlu0 %3603
      %3605 = vrot.lane.b32.xlu0 %v3531, 72
      %v3606 = vpop.permute.xlu0 %3605
      %3607 = vrot.lane.b32.xlu0 %v3532, 72
      %v3608 = vpop.permute.xlu0 %3607
      %3609 = vrot.lane.b32.xlu0 %v3533, 72
      %v3610 = vpop.permute.xlu0 %3609
      %3611 = vrot.lane.b32.xlu0 %v3534, 72
      %v3612 = vpop.permute.xlu0 %3611
      %3613 = vrot.lane.b32.xlu0 %v3535, 72
      %v3614 = vpop.permute.xlu0 %3613
      %3615 = vrot.lane.b32.xlu0 %v3536, 72
      %v3616 = vpop.permute.xlu0 %3615
      %3617 = vrot.lane.b32.xlu0 %v3537, 72
      %v3618 = vpop.permute.xlu0 %3617
      %3619 = vrot.lane.b32.xlu0 %v3538, 72
      %v3620 = vpop.permute.xlu0 %3619
      %3621 = vrot.lane.b32.xlu0 %v3539, 72
      %v3622 = vpop.permute.xlu0 %3621
      %3623 = vrot.lane.b32.xlu0 %v3540, 72
      %v3624 = vpop.permute.xlu0 %3623
      %3625 = vrot.lane.b32.xlu0 %v3541, 72
      %v3626 = vpop.permute.xlu0 %3625
      %3627 = vrot.lane.b32.xlu0 %v3542, 72
      %v3628 = vpop.permute.xlu0 %3627
      %3629 = vrot.lane.b32.xlu0 %v3543, 72
      %v3630 = vpop.permute.xlu0 %3629
      %3631 = vrot.lane.b32.xlu0 %v3544, 72
      %v3632 = vpop.permute.xlu0 %3631
      %3633 = vrot.lane.b32.xlu0 %v3545, 72
      %v3634 = vpop.permute.xlu0 %3633
      %3635 = vrot.lane.b32.xlu0 %v3546, 72
      %v3636 = vpop.permute.xlu0 %3635
      %3637 = vrot.lane.b32.xlu0 %v3547, 72
      %v3638 = vpop.permute.xlu0 %3637
      %3639 = vrot.lane.b32.xlu0 %v3548, 72
      %v3640 = vpop.permute.xlu0 %3639
      %3641 = vrot.lane.b32.xlu0 %v3549, 72
      %v3642 = vpop.permute.xlu0 %3641
      %3643 = vrot.lane.b32.xlu0 %v3550, 72
      %v3644 = vpop.permute.xlu0 %3643
      %3645 = vrot.lane.b32.xlu0 %v3551, 72
      %v3646 = vpop.permute.xlu0 %3645
      %3647 = vrot.lane.b32.xlu0 %v3552, 72
      %v3648 = vpop.permute.xlu0 %3647
      %vm3681 = vcmask 622144
      %3682 = vst.msk [vmem:[#allocation2] sm:$0xff] %vm3681, %v3586
      %3683 = vst.msk [vmem:[#allocation2 + $0x8] sm:$0xff] %vm3681, %v3588
      %3684 = vst.msk [vmem:[#allocation2 + $0x10] sm:$0xff] %vm3681, %v3590
      %3685 = vst.msk [vmem:[#allocation2 + $0x18] sm:$0xff] %vm3681, %v3592
      %3686 = vst.msk [vmem:[#allocation2 + $0x20] sm:$0xff] %vm3681, %v3594
      %3687 = vst.msk [vmem:[#allocation2 + $0x28] sm:$0xff] %vm3681, %v3596
      %3688 = vst.msk [vmem:[#allocation2 + $0x30] sm:$0xff] %vm3681, %v3598
      %3689 = vst.msk [vmem:[#allocation2 + $0x38] sm:$0xff] %vm3681, %v3600
      %3690 = vst.msk [vmem:[#allocation2 + $0x40] sm:$0xff] %vm3681, %v3602
      %3691 = vst.msk [vmem:[#allocation2 + $0x48] sm:$0xff] %vm3681, %v3604
      %3692 = vst.msk [vmem:[#allocation2 + $0x50] sm:$0xff] %vm3681, %v3606
      %3693 = vst.msk [vmem:[#allocation2 + $0x58] sm:$0xff] %vm3681, %v3608
      %3694 = vst.msk [vmem:[#allocation2 + $0x60] sm:$0xff] %vm3681, %v3610
      %3695 = vst.msk [vmem:[#allocation2 + $0x68] sm:$0xff] %vm3681, %v3612
      %3696 = vst.msk [vmem:[#allocation2 + $0x70] sm:$0xff] %vm3681, %v3614
      %3697 = vst.msk [vmem:[#allocation2 + $0x78] sm:$0xff] %vm3681, %v3616
      %3698 = vst.msk [vmem:[#allocation2 + $0x80] sm:$0xff] %vm3681, %v3618
      %3699 = vst.msk [vmem:[#allocation2 + $0x88] sm:$0xff] %vm3681, %v3620
      %3700 = vst.msk [vmem:[#allocation2 + $0x90] sm:$0xff] %vm3681, %v3622
      %3701 = vst.msk [vmem:[#allocation2 + $0x98] sm:$0xff] %vm3681, %v3624
      %3702 = vst.msk [vmem:[#allocation2 + $0xa0] sm:$0xff] %vm3681, %v3626
      %3703 = vst.msk [vmem:[#allocation2 + $0xa8] sm:$0xff] %vm3681, %v3628
      %3704 = vst.msk [vmem:[#allocation2 + $0xb0] sm:$0xff] %vm3681, %v3630
      %3705 = vst.msk [vmem:[#allocation2 + $0xb8] sm:$0xff] %vm3681, %v3632
      %3706 = vst.msk [vmem:[#allocation2 + $0xc0] sm:$0xff] %vm3681, %v3634
      %3707 = vst.msk [vmem:[#allocation2 + $0xc8] sm:$0xff] %vm3681, %v3636
      %3708 = vst.msk [vmem:[#allocation2 + $0xd0] sm:$0xff] %vm3681, %v3638
      %3709 = vst.msk [vmem:[#allocation2 + $0xd8] sm:$0xff] %vm3681, %v3640
      %3710 = vst.msk [vmem:[#allocation2 + $0xe0] sm:$0xff] %vm3681, %v3642
      %3711 = vst.msk [vmem:[#allocation2 + $0xe8] sm:$0xff] %vm3681, %v3644
      %3712 = vst.msk [vmem:[#allocation2 + $0xf0] sm:$0xff] %vm3681, %v3646
      %3713 = vst.msk [vmem:[#allocation2 + $0xf8] sm:$0xff] %vm3681, %v3648
      %v3714 = vld [vmem:[%s2941 + $0x4] sm:$0xff]
      %v3715 = vld [vmem:[%s2941 + $0xc] sm:$0xff]
      %v3716 = vld [vmem:[%s2941 + $0x1c] sm:$0xff]
      %v3717 = vld [vmem:[%s2941 + $0x24] sm:$0xff]
      %v3718 = vld [vmem:[%s2941 + $0x34] sm:$0xff]
      %v3719 = vld [vmem:[%s2941 + $0x3c] sm:$0xff]
      %v3720 = vld [vmem:[%s2941 + $0x4c] sm:$0xff]
      %v3721 = vld [vmem:[%s2941 + $0x54] sm:$0xff]
      %v3722 = vld [vmem:[%s2941 + $0x64] sm:$0xff]
      %v3723 = vld [vmem:[%s2941 + $0x6c] sm:$0xff]
      %v3724 = vld [vmem:[%s2941 + $0x7c] sm:$0xff]
      %v3725 = vld [vmem:[%s2941 + $0x84] sm:$0xff]
      %v3726 = vld [vmem:[%s2941 + $0x94] sm:$0xff]
      %v3727 = vld [vmem:[%s2941 + $0x9c] sm:$0xff]
      %v3728 = vld [vmem:[%s2941 + $0xac] sm:$0xff]
      %v3729 = vld [vmem:[%s2941 + $0xb4] sm:$0xff]
      %v3730 = vld [vmem:[%s2941 + $0xc4] sm:$0xff]
      %v3731 = vld [vmem:[%s2941 + $0xcc] sm:$0xff]
      %v3732 = vld [vmem:[%s2941 + $0xdc] sm:$0xff]
      %v3733 = vld [vmem:[%s2941 + $0xe4] sm:$0xff]
      %v3734 = vld [vmem:[%s2941 + $0xf4] sm:$0xff]
      %v3735 = vld [vmem:[%s2941 + $0xfc] sm:$0xff]
      %v3736 = vld [vmem:[%s2941 + $0x10c] sm:$0xff]
      %v3737 = vld [vmem:[%s2941 + $0x114] sm:$0xff]
      %v3738 = vld [vmem:[%s2941 + $0x124] sm:$0xff]
      %v3739 = vld [vmem:[%s2941 + $0x12c] sm:$0xff]
      %v3740 = vld [vmem:[%s2941 + $0x13c] sm:$0xff]
      %v3741 = vld [vmem:[%s2941 + $0x144] sm:$0xff]
      %v3742 = vld [vmem:[%s2941 + $0x154] sm:$0xff]
      %v3743 = vld [vmem:[%s2941 + $0x15c] sm:$0xff]
      %v3744 = vld [vmem:[%s2941 + $0x16c] sm:$0xff]
      %v3745 = vld [vmem:[%s2941 + $0x174] sm:$0xff]
      %3778 = vrot.lane.b32.xlu0 %v3714, 76
      %v3779 = vpop.permute.xlu0 %3778
      %3780 = vrot.lane.b32.xlu0 %v3715, 76
      %v3781 = vpop.permute.xlu0 %3780
      %3782 = vrot.lane.b32.xlu0 %v3716, 76
      %v3783 = vpop.permute.xlu0 %3782
      %3784 = vrot.lane.b32.xlu0 %v3717, 76
      %v3785 = vpop.permute.xlu0 %3784
      %3786 = vrot.lane.b32.xlu0 %v3718, 76
      %v3787 = vpop.permute.xlu0 %3786
      %3788 = vrot.lane.b32.xlu0 %v3719, 76
      %v3789 = vpop.permute.xlu0 %3788
      %3790 = vrot.lane.b32.xlu0 %v3720, 76
      %v3791 = vpop.permute.xlu0 %3790
      %3792 = vrot.lane.b32.xlu0 %v3721, 76
      %v3793 = vpop.permute.xlu0 %3792
      %3794 = vrot.lane.b32.xlu0 %v3722, 76
      %v3795 = vpop.permute.xlu0 %3794
      %3796 = vrot.lane.b32.xlu0 %v3723, 76
      %v3797 = vpop.permute.xlu0 %3796
      %3798 = vrot.lane.b32.xlu0 %v3724, 76
      %v3799 = vpop.permute.xlu0 %3798
      %3800 = vrot.lane.b32.xlu0 %v3725, 76
      %v3801 = vpop.permute.xlu0 %3800
      %3802 = vrot.lane.b32.xlu0 %v3726, 76
      %v3803 = vpop.permute.xlu0 %3802
      %3804 = vrot.lane.b32.xlu0 %v3727, 76
      %v3805 = vpop.permute.xlu0 %3804
      %3806 = vrot.lane.b32.xlu0 %v3728, 76
      %v3807 = vpop.permute.xlu0 %3806
      %3808 = vrot.lane.b32.xlu0 %v3729, 76
      %v3809 = vpop.permute.xlu0 %3808
      %3810 = vrot.lane.b32.xlu0 %v3730, 76
      %v3811 = vpop.permute.xlu0 %3810
      %3812 = vrot.lane.b32.xlu0 %v3731, 76
      %v3813 = vpop.permute.xlu0 %3812
      %3814 = vrot.lane.b32.xlu0 %v3732, 76
      %v3815 = vpop.permute.xlu0 %3814
      %3816 = vrot.lane.b32.xlu0 %v3733, 76
      %v3817 = vpop.permute.xlu0 %3816
      %3818 = vrot.lane.b32.xlu0 %v3734, 76
      %v3819 = vpop.permute.xlu0 %3818
      %3820 = vrot.lane.b32.xlu0 %v3735, 76
      %v3821 = vpop.permute.xlu0 %3820
      %3822 = vrot.lane.b32.xlu0 %v3736, 76
      %v3823 = vpop.permute.xlu0 %3822
      %3824 = vrot.lane.b32.xlu0 %v3737, 76
      %v3825 = vpop.permute.xlu0 %3824
      %3826 = vrot.lane.b32.xlu0 %v3738, 76
      %v3827 = vpop.permute.xlu0 %3826
      %3828 = vrot.lane.b32.xlu0 %v3739, 76
      %v3829 = vpop.permute.xlu0 %3828
      %3830 = vrot.lane.b32.xlu0 %v3740, 76
      %v3831 = vpop.permute.xlu0 %3830
      %3832 = vrot.lane.b32.xlu0 %v3741, 76
      %v3833 = vpop.permute.xlu0 %3832
      %3834 = vrot.lane.b32.xlu0 %v3742, 76
      %v3835 = vpop.permute.xlu0 %3834
      %3836 = vrot.lane.b32.xlu0 %v3743, 76
      %v3837 = vpop.permute.xlu0 %3836
      %3838 = vrot.lane.b32.xlu0 %v3744, 76
      %v3839 = vpop.permute.xlu0 %3838
      %3840 = vrot.lane.b32.xlu0 %v3745, 76
      %v3841 = vpop.permute.xlu0 %3840
      %vm3874 = vcmask 654944
      %3875 = vst.msk [vmem:[#allocation2] sm:$0xff] %vm3874, %v3779
      %3876 = vst.msk [vmem:[#allocation2 + $0x8] sm:$0xff] %vm3874, %v3781
      %3877 = vst.msk [vmem:[#allocation2 + $0x10] sm:$0xff] %vm3874, %v3783
      %3878 = vst.msk [vmem:[#allocation2 + $0x18] sm:$0xff] %vm3874, %v3785
      %3879 = vst.msk [vmem:[#allocation2 + $0x20] sm:$0xff] %vm3874, %v3787
      %3880 = vst.msk [vmem:[#allocation2 + $0x28] sm:$0xff] %vm3874, %v3789
      %3881 = vst.msk [vmem:[#allocation2 + $0x30] sm:$0xff] %vm3874, %v3791
      %3882 = vst.msk [vmem:[#allocation2 + $0x38] sm:$0xff] %vm3874, %v3793
      %3883 = vst.msk [vmem:[#allocation2 + $0x40] sm:$0xff] %vm3874, %v3795
      %3884 = vst.msk [vmem:[#allocation2 + $0x48] sm:$0xff] %vm3874, %v3797
      %3885 = vst.msk [vmem:[#allocation2 + $0x50] sm:$0xff] %vm3874, %v3799
      %3886 = vst.msk [vmem:[#allocation2 + $0x58] sm:$0xff] %vm3874, %v3801
      %3887 = vst.msk [vmem:[#allocation2 + $0x60] sm:$0xff] %vm3874, %v3803
      %3888 = vst.msk [vmem:[#allocation2 + $0x68] sm:$0xff] %vm3874, %v3805
      %3889 = vst.msk [vmem:[#allocation2 + $0x70] sm:$0xff] %vm3874, %v3807
      %3890 = vst.msk [vmem:[#allocation2 + $0x78] sm:$0xff] %vm3874, %v3809
      %3891 = vst.msk [vmem:[#allocation2 + $0x80] sm:$0xff] %vm3874, %v3811
      %3892 = vst.msk [vmem:[#allocation2 + $0x88] sm:$0xff] %vm3874, %v3813
      %3893 = vst.msk [vmem:[#allocation2 + $0x90] sm:$0xff] %vm3874, %v3815
      %3894 = vst.msk [vmem:[#allocation2 + $0x98] sm:$0xff] %vm3874, %v3817
      %3895 = vst.msk [vmem:[#allocation2 + $0xa0] sm:$0xff] %vm3874, %v3819
      %3896 = vst.msk [vmem:[#allocation2 + $0xa8] sm:$0xff] %vm3874, %v3821
      %3897 = vst.msk [vmem:[#allocation2 + $0xb0] sm:$0xff] %vm3874, %v3823
      %3898 = vst.msk [vmem:[#allocation2 + $0xb8] sm:$0xff] %vm3874, %v3825
      %3899 = vst.msk [vmem:[#allocation2 + $0xc0] sm:$0xff] %vm3874, %v3827
      %3900 = vst.msk [vmem:[#allocation2 + $0xc8] sm:$0xff] %vm3874, %v3829
      %3901 = vst.msk [vmem:[#allocation2 + $0xd0] sm:$0xff] %vm3874, %v3831
      %3902 = vst.msk [vmem:[#allocation2 + $0xd8] sm:$0xff] %vm3874, %v3833
      %3903 = vst.msk [vmem:[#allocation2 + $0xe0] sm:$0xff] %vm3874, %v3835
      %3904 = vst.msk [vmem:[#allocation2 + $0xe8] sm:$0xff] %vm3874, %v3837
      %3905 = vst.msk [vmem:[#allocation2 + $0xf0] sm:$0xff] %vm3874, %v3839
      %3906 = vst.msk [vmem:[#allocation2 + $0xf8] sm:$0xff] %vm3874, %v3841
      %s3907 = scalar_lea.vmem %s165, 96
      %v3908 = vld [vmem:[%s3907] sm:$0xff]
      %v3909 = vld [vmem:[%s3907 + $0x8] sm:$0xff]
      %v3910 = vld [vmem:[%s3907 + $0x18] sm:$0xff]
      %v3911 = vld [vmem:[%s3907 + $0x20] sm:$0xff]
      %v3912 = vld [vmem:[%s3907 + $0x30] sm:$0xff]
      %v3913 = vld [vmem:[%s3907 + $0x38] sm:$0xff]
      %v3914 = vld [vmem:[%s3907 + $0x48] sm:$0xff]
      %v3915 = vld [vmem:[%s3907 + $0x50] sm:$0xff]
      %v3916 = vld [vmem:[%s3907 + $0x60] sm:$0xff]
      %v3917 = vld [vmem:[%s3907 + $0x68] sm:$0xff]
      %v3918 = vld [vmem:[%s3907 + $0x78] sm:$0xff]
      %v3919 = vld [vmem:[%s3907 + $0x80] sm:$0xff]
      %v3920 = vld [vmem:[%s3907 + $0x90] sm:$0xff]
      %v3921 = vld [vmem:[%s3907 + $0x98] sm:$0xff]
      %v3922 = vld [vmem:[%s3907 + $0xa8] sm:$0xff]
      %v3923 = vld [vmem:[%s3907 + $0xb0] sm:$0xff]
      %v3924 = vld [vmem:[%s3907 + $0xc0] sm:$0xff]
      %v3925 = vld [vmem:[%s3907 + $0xc8] sm:$0xff]
      %v3926 = vld [vmem:[%s3907 + $0xd8] sm:$0xff]
      %v3927 = vld [vmem:[%s3907 + $0xe0] sm:$0xff]
      %v3928 = vld [vmem:[%s3907 + $0xf0] sm:$0xff]
      %v3929 = vld [vmem:[%s3907 + $0xf8] sm:$0xff]
      %v3930 = vld [vmem:[%s3907 + $0x108] sm:$0xff]
      %v3931 = vld [vmem:[%s3907 + $0x110] sm:$0xff]
      %v3932 = vld [vmem:[%s3907 + $0x120] sm:$0xff]
      %v3933 = vld [vmem:[%s3907 + $0x128] sm:$0xff]
      %v3934 = vld [vmem:[%s3907 + $0x138] sm:$0xff]
      %v3935 = vld [vmem:[%s3907 + $0x140] sm:$0xff]
      %v3936 = vld [vmem:[%s3907 + $0x150] sm:$0xff]
      %v3937 = vld [vmem:[%s3907 + $0x158] sm:$0xff]
      %v3938 = vld [vmem:[%s3907 + $0x168] sm:$0xff]
      %v3939 = vld [vmem:[%s3907 + $0x170] sm:$0xff]
      %3972 = vrot.lane.b32.xlu0 %v3908, 80
      %v3973 = vpop.permute.xlu0 %3972
      %3974 = vrot.lane.b32.xlu0 %v3909, 80
      %v3975 = vpop.permute.xlu0 %3974
      %3976 = vrot.lane.b32.xlu0 %v3910, 80
      %v3977 = vpop.permute.xlu0 %3976
      %3978 = vrot.lane.b32.xlu0 %v3911, 80
      %v3979 = vpop.permute.xlu0 %3978
      %3980 = vrot.lane.b32.xlu0 %v3912, 80
      %v3981 = vpop.permute.xlu0 %3980
      %3982 = vrot.lane.b32.xlu0 %v3913, 80
      %v3983 = vpop.permute.xlu0 %3982
      %3984 = vrot.lane.b32.xlu0 %v3914, 80
      %v3985 = vpop.permute.xlu0 %3984
      %3986 = vrot.lane.b32.xlu0 %v3915, 80
      %v3987 = vpop.permute.xlu0 %3986
      %3988 = vrot.lane.b32.xlu0 %v3916, 80
      %v3989 = vpop.permute.xlu0 %3988
      %3990 = vrot.lane.b32.xlu0 %v3917, 80
      %v3991 = vpop.permute.xlu0 %3990
      %3992 = vrot.lane.b32.xlu0 %v3918, 80
      %v3993 = vpop.permute.xlu0 %3992
      %3994 = vrot.lane.b32.xlu0 %v3919, 80
      %v3995 = vpop.permute.xlu0 %3994
      %3996 = vrot.lane.b32.xlu0 %v3920, 80
      %v3997 = vpop.permute.xlu0 %3996
      %3998 = vrot.lane.b32.xlu0 %v3921, 80
      %v3999 = vpop.permute.xlu0 %3998
      %4000 = vrot.lane.b32.xlu0 %v3922, 80
      %v4001 = vpop.permute.xlu0 %4000
      %4002 = vrot.lane.b32.xlu0 %v3923, 80
      %v4003 = vpop.permute.xlu0 %4002
      %4004 = vrot.lane.b32.xlu0 %v3924, 80
      %v4005 = vpop.permute.xlu0 %4004
      %4006 = vrot.lane.b32.xlu0 %v3925, 80
      %v4007 = vpop.permute.xlu0 %4006
      %4008 = vrot.lane.b32.xlu0 %v3926, 80
      %v4009 = vpop.permute.xlu0 %4008
      %4010 = vrot.lane.b32.xlu0 %v3927, 80
      %v4011 = vpop.permute.xlu0 %4010
      %4012 = vrot.lane.b32.xlu0 %v3928, 80
      %v4013 = vpop.permute.xlu0 %4012
      %4014 = vrot.lane.b32.xlu0 %v3929, 80
      %v4015 = vpop.permute.xlu0 %4014
      %4016 = vrot.lane.b32.xlu0 %v3930, 80
      %v4017 = vpop.permute.xlu0 %4016
      %4018 = vrot.lane.b32.xlu0 %v3931, 80
      %v4019 = vpop.permute.xlu0 %4018
      %4020 = vrot.lane.b32.xlu0 %v3932, 80
      %v4021 = vpop.permute.xlu0 %4020
      %4022 = vrot.lane.b32.xlu0 %v3933, 80
      %v4023 = vpop.permute.xlu0 %4022
      %4024 = vrot.lane.b32.xlu0 %v3934, 80
      %v4025 = vpop.permute.xlu0 %4024
      %4026 = vrot.lane.b32.xlu0 %v3935, 80
      %v4027 = vpop.permute.xlu0 %4026
      %4028 = vrot.lane.b32.xlu0 %v3936, 80
      %v4029 = vpop.permute.xlu0 %4028
      %4030 = vrot.lane.b32.xlu0 %v3937, 80
      %v4031 = vpop.permute.xlu0 %4030
      %4032 = vrot.lane.b32.xlu0 %v3938, 80
      %v4033 = vpop.permute.xlu0 %4032
      %4034 = vrot.lane.b32.xlu0 %v3939, 80
      %v4035 = vpop.permute.xlu0 %4034
      %vm4068 = vcmask 687744
      %4069 = vst.msk [vmem:[#allocation2] sm:$0xff] %vm4068, %v3973
      %4070 = vst.msk [vmem:[#allocation2 + $0x8] sm:$0xff] %vm4068, %v3975
      %4071 = vst.msk [vmem:[#allocation2 + $0x10] sm:$0xff] %vm4068, %v3977
      %4072 = vst.msk [vmem:[#allocation2 + $0x18] sm:$0xff] %vm4068, %v3979
      %4073 = vst.msk [vmem:[#allocation2 + $0x20] sm:$0xff] %vm4068, %v3981
      %4074 = vst.msk [vmem:[#allocation2 + $0x28] sm:$0xff] %vm4068, %v3983
      %4075 = vst.msk [vmem:[#allocation2 + $0x30] sm:$0xff] %vm4068, %v3985
      %4076 = vst.msk [vmem:[#allocation2 + $0x38] sm:$0xff] %vm4068, %v3987
      %4077 = vst.msk [vmem:[#allocation2 + $0x40] sm:$0xff] %vm4068, %v3989
      %4078 = vst.msk [vmem:[#allocation2 + $0x48] sm:$0xff] %vm4068, %v3991
      %4079 = vst.msk [vmem:[#allocation2 + $0x50] sm:$0xff] %vm4068, %v3993
      %4080 = vst.msk [vmem:[#allocation2 + $0x58] sm:$0xff] %vm4068, %v3995
      %4081 = vst.msk [vmem:[#allocation2 + $0x60] sm:$0xff] %vm4068, %v3997
      %4082 = vst.msk [vmem:[#allocation2 + $0x68] sm:$0xff] %vm4068, %v3999
      %4083 = vst.msk [vmem:[#allocation2 + $0x70] sm:$0xff] %vm4068, %v4001
      %4084 = vst.msk [vmem:[#allocation2 + $0x78] sm:$0xff] %vm4068, %v4003
      %4085 = vst.msk [vmem:[#allocation2 + $0x80] sm:$0xff] %vm4068, %v4005
      %4086 = vst.msk [vmem:[#allocation2 + $0x88] sm:$0xff] %vm4068, %v4007
      %4087 = vst.msk [vmem:[#allocation2 + $0x90] sm:$0xff] %vm4068, %v4009
      %4088 = vst.msk [vmem:[#allocation2 + $0x98] sm:$0xff] %vm4068, %v4011
      %4089 = vst.msk [vmem:[#allocation2 + $0xa0] sm:$0xff] %vm4068, %v4013
      %4090 = vst.msk [vmem:[#allocation2 + $0xa8] sm:$0xff] %vm4068, %v4015
      %4091 = vst.msk [vmem:[#allocation2 + $0xb0] sm:$0xff] %vm4068, %v4017
      %4092 = vst.msk [vmem:[#allocation2 + $0xb8] sm:$0xff] %vm4068, %v4019
      %4093 = vst.msk [vmem:[#allocation2 + $0xc0] sm:$0xff] %vm4068, %v4021
      %4094 = vst.msk [vmem:[#allocation2 + $0xc8] sm:$0xff] %vm4068, %v4023
      %4095 = vst.msk [vmem:[#allocation2 + $0xd0] sm:$0xff] %vm4068, %v4025
      %4096 = vst.msk [vmem:[#allocation2 + $0xd8] sm:$0xff] %vm4068, %v4027
      %4097 = vst.msk [vmem:[#allocation2 + $0xe0] sm:$0xff] %vm4068, %v4029
      %4098 = vst.msk [vmem:[#allocation2 + $0xe8] sm:$0xff] %vm4068, %v4031
      %4099 = vst.msk [vmem:[#allocation2 + $0xf0] sm:$0xff] %vm4068, %v4033
      %4100 = vst.msk [vmem:[#allocation2 + $0xf8] sm:$0xff] %vm4068, %v4035
      %v4101 = vld [vmem:[%s3907 + $0x1] sm:$0xff]
      %v4102 = vld [vmem:[%s3907 + $0x9] sm:$0xff]
      %v4103 = vld [vmem:[%s3907 + $0x19] sm:$0xff]
      %v4104 = vld [vmem:[%s3907 + $0x21] sm:$0xff]
      %v4105 = vld [vmem:[%s3907 + $0x31] sm:$0xff]
      %v4106 = vld [vmem:[%s3907 + $0x39] sm:$0xff]
      %v4107 = vld [vmem:[%s3907 + $0x49] sm:$0xff]
      %v4108 = vld [vmem:[%s3907 + $0x51] sm:$0xff]
      %v4109 = vld [vmem:[%s3907 + $0x61] sm:$0xff]
      %v4110 = vld [vmem:[%s3907 + $0x69] sm:$0xff]
      %v4111 = vld [vmem:[%s3907 + $0x79] sm:$0xff]
      %v4112 = vld [vmem:[%s3907 + $0x81] sm:$0xff]
      %v4113 = vld [vmem:[%s3907 + $0x91] sm:$0xff]
      %v4114 = vld [vmem:[%s3907 + $0x99] sm:$0xff]
      %v4115 = vld [vmem:[%s3907 + $0xa9] sm:$0xff]
      %v4116 = vld [vmem:[%s3907 + $0xb1] sm:$0xff]
      %v4117 = vld [vmem:[%s3907 + $0xc1] sm:$0xff]
      %v4118 = vld [vmem:[%s3907 + $0xc9] sm:$0xff]
      %v4119 = vld [vmem:[%s3907 + $0xd9] sm:$0xff]
      %v4120 = vld [vmem:[%s3907 + $0xe1] sm:$0xff]
      %v4121 = vld [vmem:[%s3907 + $0xf1] sm:$0xff]
      %v4122 = vld [vmem:[%s3907 + $0xf9] sm:$0xff]
      %v4123 = vld [vmem:[%s3907 + $0x109] sm:$0xff]
      %v4124 = vld [vmem:[%s3907 + $0x111] sm:$0xff]
      %v4125 = vld [vmem:[%s3907 + $0x121] sm:$0xff]
      %v4126 = vld [vmem:[%s3907 + $0x129] sm:$0xff]
      %v4127 = vld [vmem:[%s3907 + $0x139] sm:$0xff]
      %v4128 = vld [vmem:[%s3907 + $0x141] sm:$0xff]
      %v4129 = vld [vmem:[%s3907 + $0x151] sm:$0xff]
      %v4130 = vld [vmem:[%s3907 + $0x159] sm:$0xff]
      %v4131 = vld [vmem:[%s3907 + $0x169] sm:$0xff]
      %v4132 = vld [vmem:[%s3907 + $0x171] sm:$0xff]
      %4165 = vrot.lane.b32.xlu0 %v4101, 84
      %v4166 = vpop.permute.xlu0 %4165
      %4167 = vrot.lane.b32.xlu0 %v4102, 84
      %v4168 = vpop.permute.xlu0 %4167
      %4169 = vrot.lane.b32.xlu0 %v4103, 84
      %v4170 = vpop.permute.xlu0 %4169
      %4171 = vrot.lane.b32.xlu0 %v4104, 84
      %v4172 = vpop.permute.xlu0 %4171
      %4173 = vrot.lane.b32.xlu0 %v4105, 84
      %v4174 = vpop.permute.xlu0 %4173
      %4175 = vrot.lane.b32.xlu0 %v4106, 84
      %v4176 = vpop.permute.xlu0 %4175
      %4177 = vrot.lane.b32.xlu0 %v4107, 84
      %v4178 = vpop.permute.xlu0 %4177
      %4179 = vrot.lane.b32.xlu0 %v4108, 84
      %v4180 = vpop.permute.xlu0 %4179
      %4181 = vrot.lane.b32.xlu0 %v4109, 84
      %v4182 = vpop.permute.xlu0 %4181
      %4183 = vrot.lane.b32.xlu0 %v4110, 84
      %v4184 = vpop.permute.xlu0 %4183
      %4185 = vrot.lane.b32.xlu0 %v4111, 84
      %v4186 = vpop.permute.xlu0 %4185
      %4187 = vrot.lane.b32.xlu0 %v4112, 84
      %v4188 = vpop.permute.xlu0 %4187
      %4189 = vrot.lane.b32.xlu0 %v4113, 84
      %v4190 = vpop.permute.xlu0 %4189
      %4191 = vrot.lane.b32.xlu0 %v4114, 84
      %v4192 = vpop.permute.xlu0 %4191
      %4193 = vrot.lane.b32.xlu0 %v4115, 84
      %v4194 = vpop.permute.xlu0 %4193
      %4195 = vrot.lane.b32.xlu0 %v4116, 84
      %v4196 = vpop.permute.xlu0 %4195
      %4197 = vrot.lane.b32.xlu0 %v4117, 84
      %v4198 = vpop.permute.xlu0 %4197
      %4199 = vrot.lane.b32.xlu0 %v4118, 84
      %v4200 = vpop.permute.xlu0 %4199
      %4201 = vrot.lane.b32.xlu0 %v4119, 84
      %v4202 = vpop.permute.xlu0 %4201
      %4203 = vrot.lane.b32.xlu0 %v4120, 84
      %v4204 = vpop.permute.xlu0 %4203
      %4205 = vrot.lane.b32.xlu0 %v4121, 84
      %v4206 = vpop.permute.xlu0 %4205
      %4207 = vrot.lane.b32.xlu0 %v4122, 84
      %v4208 = vpop.permute.xlu0 %4207
      %4209 = vrot.lane.b32.xlu0 %v4123, 84
      %v4210 = vpop.permute.xlu0 %4209
      %4211 = vrot.lane.b32.xlu0 %v4124, 84
      %v4212 = vpop.permute.xlu0 %4211
      %4213 = vrot.lane.b32.xlu0 %v4125, 84
      %v4214 = vpop.permute.xlu0 %4213
      %4215 = vrot.lane.b32.xlu0 %v4126, 84
      %v4216 = vpop.permute.xlu0 %4215
      %4217 = vrot.lane.b32.xlu0 %v4127, 84
      %v4218 = vpop.permute.xlu0 %4217
      %4219 = vrot.lane.b32.xlu0 %v4128, 84
      %v4220 = vpop.permute.xlu0 %4219
      %4221 = vrot.lane.b32.xlu0 %v4129, 84
      %v4222 = vpop.permute.xlu0 %4221
      %4223 = vrot.lane.b32.xlu0 %v4130, 84
      %v4224 = vpop.permute.xlu0 %4223
      %4225 = vrot.lane.b32.xlu0 %v4131, 84
      %v4226 = vpop.permute.xlu0 %4225
      %4227 = vrot.lane.b32.xlu0 %v4132, 84
      %v4228 = vpop.permute.xlu0 %4227
      %vm4261 = vcmask 720544
      %4262 = vst.msk [vmem:[#allocation2] sm:$0xff] %vm4261, %v4166
      %4263 = vst.msk [vmem:[#allocation2 + $0x8] sm:$0xff] %vm4261, %v4168
      %4264 = vst.msk [vmem:[#allocation2 + $0x10] sm:$0xff] %vm4261, %v4170
      %4265 = vst.msk [vmem:[#allocation2 + $0x18] sm:$0xff] %vm4261, %v4172
      %4266 = vst.msk [vmem:[#allocation2 + $0x20] sm:$0xff] %vm4261, %v4174
      %4267 = vst.msk [vmem:[#allocation2 + $0x28] sm:$0xff] %vm4261, %v4176
      %4268 = vst.msk [vmem:[#allocation2 + $0x30] sm:$0xff] %vm4261, %v4178
      %4269 = vst.msk [vmem:[#allocation2 + $0x38] sm:$0xff] %vm4261, %v4180
      %4270 = vst.msk [vmem:[#allocation2 + $0x40] sm:$0xff] %vm4261, %v4182
      %4271 = vst.msk [vmem:[#allocation2 + $0x48] sm:$0xff] %vm4261, %v4184
      %4272 = vst.msk [vmem:[#allocation2 + $0x50] sm:$0xff] %vm4261, %v4186
      %4273 = vst.msk [vmem:[#allocation2 + $0x58] sm:$0xff] %vm4261, %v4188
      %4274 = vst.msk [vmem:[#allocation2 + $0x60] sm:$0xff] %vm4261, %v4190
      %4275 = vst.msk [vmem:[#allocation2 + $0x68] sm:$0xff] %vm4261, %v4192
      %4276 = vst.msk [vmem:[#allocation2 + $0x70] sm:$0xff] %vm4261, %v4194
      %4277 = vst.msk [vmem:[#allocation2 + $0x78] sm:$0xff] %vm4261, %v4196
      %4278 = vst.msk [vmem:[#allocation2 + $0x80] sm:$0xff] %vm4261, %v4198
      %4279 = vst.msk [vmem:[#allocation2 + $0x88] sm:$0xff] %vm4261, %v4200
      %4280 = vst.msk [vmem:[#allocation2 + $0x90] sm:$0xff] %vm4261, %v4202
      %4281 = vst.msk [vmem:[#allocation2 + $0x98] sm:$0xff] %vm4261, %v4204
      %4282 = vst.msk [vmem:[#allocation2 + $0xa0] sm:$0xff] %vm4261, %v4206
      %4283 = vst.msk [vmem:[#allocation2 + $0xa8] sm:$0xff] %vm4261, %v4208
      %4284 = vst.msk [vmem:[#allocation2 + $0xb0] sm:$0xff] %vm4261, %v4210
      %4285 = vst.msk [vmem:[#allocation2 + $0xb8] sm:$0xff] %vm4261, %v4212
      %4286 = vst.msk [vmem:[#allocation2 + $0xc0] sm:$0xff] %vm4261, %v4214
      %4287 = vst.msk [vmem:[#allocation2 + $0xc8] sm:$0xff] %vm4261, %v4216
      %4288 = vst.msk [vmem:[#allocation2 + $0xd0] sm:$0xff] %vm4261, %v4218
      %4289 = vst.msk [vmem:[#allocation2 + $0xd8] sm:$0xff] %vm4261, %v4220
      %4290 = vst.msk [vmem:[#allocation2 + $0xe0] sm:$0xff] %vm4261, %v4222
      %4291 = vst.msk [vmem:[#allocation2 + $0xe8] sm:$0xff] %vm4261, %v4224
      %4292 = vst.msk [vmem:[#allocation2 + $0xf0] sm:$0xff] %vm4261, %v4226
      %4293 = vst.msk [vmem:[#allocation2 + $0xf8] sm:$0xff] %vm4261, %v4228
      %v4294 = vld [vmem:[%s3907 + $0x2] sm:$0xff]
      %v4295 = vld [vmem:[%s3907 + $0xa] sm:$0xff]
      %v4296 = vld [vmem:[%s3907 + $0x1a] sm:$0xff]
      %v4297 = vld [vmem:[%s3907 + $0x22] sm:$0xff]
      %v4298 = vld [vmem:[%s3907 + $0x32] sm:$0xff]
      %v4299 = vld [vmem:[%s3907 + $0x3a] sm:$0xff]
      %v4300 = vld [vmem:[%s3907 + $0x4a] sm:$0xff]
      %v4301 = vld [vmem:[%s3907 + $0x52] sm:$0xff]
      %v4302 = vld [vmem:[%s3907 + $0x62] sm:$0xff]
      %v4303 = vld [vmem:[%s3907 + $0x6a] sm:$0xff]
      %v4304 = vld [vmem:[%s3907 + $0x7a] sm:$0xff]
      %v4305 = vld [vmem:[%s3907 + $0x82] sm:$0xff]
      %v4306 = vld [vmem:[%s3907 + $0x92] sm:$0xff]
      %v4307 = vld [vmem:[%s3907 + $0x9a] sm:$0xff]
      %v4308 = vld [vmem:[%s3907 + $0xaa] sm:$0xff]
      %v4309 = vld [vmem:[%s3907 + $0xb2] sm:$0xff]
      %v4310 = vld [vmem:[%s3907 + $0xc2] sm:$0xff]
      %v4311 = vld [vmem:[%s3907 + $0xca] sm:$0xff]
      %v4312 = vld [vmem:[%s3907 + $0xda] sm:$0xff]
      %v4313 = vld [vmem:[%s3907 + $0xe2] sm:$0xff]
      %v4314 = vld [vmem:[%s3907 + $0xf2] sm:$0xff]
      %v4315 = vld [vmem:[%s3907 + $0xfa] sm:$0xff]
      %v4316 = vld [vmem:[%s3907 + $0x10a] sm:$0xff]
      %v4317 = vld [vmem:[%s3907 + $0x112] sm:$0xff]
      %v4318 = vld [vmem:[%s3907 + $0x122] sm:$0xff]
      %v4319 = vld [vmem:[%s3907 + $0x12a] sm:$0xff]
      %v4320 = vld [vmem:[%s3907 + $0x13a] sm:$0xff]
      %v4321 = vld [vmem:[%s3907 + $0x142] sm:$0xff]
      %v4322 = vld [vmem:[%s3907 + $0x152] sm:$0xff]
      %v4323 = vld [vmem:[%s3907 + $0x15a] sm:$0xff]
      %v4324 = vld [vmem:[%s3907 + $0x16a] sm:$0xff]
      %v4325 = vld [vmem:[%s3907 + $0x172] sm:$0xff]
      %4358 = vrot.lane.b32.xlu0 %v4294, 88
      %v4359 = vpop.permute.xlu0 %4358
      %4360 = vrot.lane.b32.xlu0 %v4295, 88
      %v4361 = vpop.permute.xlu0 %4360
      %4362 = vrot.lane.b32.xlu0 %v4296, 88
      %v4363 = vpop.permute.xlu0 %4362
      %4364 = vrot.lane.b32.xlu0 %v4297, 88
      %v4365 = vpop.permute.xlu0 %4364
      %4366 = vrot.lane.b32.xlu0 %v4298, 88
      %v4367 = vpop.permute.xlu0 %4366
      %4368 = vrot.lane.b32.xlu0 %v4299, 88
      %v4369 = vpop.permute.xlu0 %4368
      %4370 = vrot.lane.b32.xlu0 %v4300, 88
      %v4371 = vpop.permute.xlu0 %4370
      %4372 = vrot.lane.b32.xlu0 %v4301, 88
      %v4373 = vpop.permute.xlu0 %4372
      %4374 = vrot.lane.b32.xlu0 %v4302, 88
      %v4375 = vpop.permute.xlu0 %4374
      %4376 = vrot.lane.b32.xlu0 %v4303, 88
      %v4377 = vpop.permute.xlu0 %4376
      %4378 = vrot.lane.b32.xlu0 %v4304, 88
      %v4379 = vpop.permute.xlu0 %4378
      %4380 = vrot.lane.b32.xlu0 %v4305, 88
      %v4381 = vpop.permute.xlu0 %4380
      %4382 = vrot.lane.b32.xlu0 %v4306, 88
      %v4383 = vpop.permute.xlu0 %4382
      %4384 = vrot.lane.b32.xlu0 %v4307, 88
      %v4385 = vpop.permute.xlu0 %4384
      %4386 = vrot.lane.b32.xlu0 %v4308, 88
      %v4387 = vpop.permute.xlu0 %4386
      %4388 = vrot.lane.b32.xlu0 %v4309, 88
      %v4389 = vpop.permute.xlu0 %4388
      %4390 = vrot.lane.b32.xlu0 %v4310, 88
      %v4391 = vpop.permute.xlu0 %4390
      %4392 = vrot.lane.b32.xlu0 %v4311, 88
      %v4393 = vpop.permute.xlu0 %4392
      %4394 = vrot.lane.b32.xlu0 %v4312, 88
      %v4395 = vpop.permute.xlu0 %4394
      %4396 = vrot.lane.b32.xlu0 %v4313, 88
      %v4397 = vpop.permute.xlu0 %4396
      %4398 = vrot.lane.b32.xlu0 %v4314, 88
      %v4399 = vpop.permute.xlu0 %4398
      %4400 = vrot.lane.b32.xlu0 %v4315, 88
      %v4401 = vpop.permute.xlu0 %4400
      %4402 = vrot.lane.b32.xlu0 %v4316, 88
      %v4403 = vpop.permute.xlu0 %4402
      %4404 = vrot.lane.b32.xlu0 %v4317, 88
      %v4405 = vpop.permute.xlu0 %4404
      %4406 = vrot.lane.b32.xlu0 %v4318, 88
      %v4407 = vpop.permute.xlu0 %4406
      %4408 = vrot.lane.b32.xlu0 %v4319, 88
      %v4409 = vpop.permute.xlu0 %4408
      %4410 = vrot.lane.b32.xlu0 %v4320, 88
      %v4411 = vpop.permute.xlu0 %4410
      %4412 = vrot.lane.b32.xlu0 %v4321, 88
      %v4413 = vpop.permute.xlu0 %4412
      %4414 = vrot.lane.b32.xlu0 %v4322, 88
      %v4415 = vpop.permute.xlu0 %4414
      %4416 = vrot.lane.b32.xlu0 %v4323, 88
      %v4417 = vpop.permute.xlu0 %4416
      %4418 = vrot.lane.b32.xlu0 %v4324, 88
      %v4419 = vpop.permute.xlu0 %4418
      %4420 = vrot.lane.b32.xlu0 %v4325, 88
      %v4421 = vpop.permute.xlu0 %4420
      %vm4454 = vcmask 753344
      %4455 = vst.msk [vmem:[#allocation2] sm:$0xff] %vm4454, %v4359
      %4456 = vst.msk [vmem:[#allocation2 + $0x8] sm:$0xff] %vm4454, %v4361
      %4457 = vst.msk [vmem:[#allocation2 + $0x10] sm:$0xff] %vm4454, %v4363
      %4458 = vst.msk [vmem:[#allocation2 + $0x18] sm:$0xff] %vm4454, %v4365
      %4459 = vst.msk [vmem:[#allocation2 + $0x20] sm:$0xff] %vm4454, %v4367
      %4460 = vst.msk [vmem:[#allocation2 + $0x28] sm:$0xff] %vm4454, %v4369
      %4461 = vst.msk [vmem:[#allocation2 + $0x30] sm:$0xff] %vm4454, %v4371
      %4462 = vst.msk [vmem:[#allocation2 + $0x38] sm:$0xff] %vm4454, %v4373
      %4463 = vst.msk [vmem:[#allocation2 + $0x40] sm:$0xff] %vm4454, %v4375
      %4464 = vst.msk [vmem:[#allocation2 + $0x48] sm:$0xff] %vm4454, %v4377
      %4465 = vst.msk [vmem:[#allocation2 + $0x50] sm:$0xff] %vm4454, %v4379
      %4466 = vst.msk [vmem:[#allocation2 + $0x58] sm:$0xff] %vm4454, %v4381
      %4467 = vst.msk [vmem:[#allocation2 + $0x60] sm:$0xff] %vm4454, %v4383
      %4468 = vst.msk [vmem:[#allocation2 + $0x68] sm:$0xff] %vm4454, %v4385
      %4469 = vst.msk [vmem:[#allocation2 + $0x70] sm:$0xff] %vm4454, %v4387
      %4470 = vst.msk [vmem:[#allocation2 + $0x78] sm:$0xff] %vm4454, %v4389
      %4471 = vst.msk [vmem:[#allocation2 + $0x80] sm:$0xff] %vm4454, %v4391
      %4472 = vst.msk [vmem:[#allocation2 + $0x88] sm:$0xff] %vm4454, %v4393
      %4473 = vst.msk [vmem:[#allocation2 + $0x90] sm:$0xff] %vm4454, %v4395
      %4474 = vst.msk [vmem:[#allocation2 + $0x98] sm:$0xff] %vm4454, %v4397
      %4475 = vst.msk [vmem:[#allocation2 + $0xa0] sm:$0xff] %vm4454, %v4399
      %4476 = vst.msk [vmem:[#allocation2 + $0xa8] sm:$0xff] %vm4454, %v4401
      %4477 = vst.msk [vmem:[#allocation2 + $0xb0] sm:$0xff] %vm4454, %v4403
      %4478 = vst.msk [vmem:[#allocation2 + $0xb8] sm:$0xff] %vm4454, %v4405
      %4479 = vst.msk [vmem:[#allocation2 + $0xc0] sm:$0xff] %vm4454, %v4407
      %4480 = vst.msk [vmem:[#allocation2 + $0xc8] sm:$0xff] %vm4454, %v4409
      %4481 = vst.msk [vmem:[#allocation2 + $0xd0] sm:$0xff] %vm4454, %v4411
      %4482 = vst.msk [vmem:[#allocation2 + $0xd8] sm:$0xff] %vm4454, %v4413
      %4483 = vst.msk [vmem:[#allocation2 + $0xe0] sm:$0xff] %vm4454, %v4415
      %4484 = vst.msk [vmem:[#allocation2 + $0xe8] sm:$0xff] %vm4454, %v4417
      %4485 = vst.msk [vmem:[#allocation2 + $0xf0] sm:$0xff] %vm4454, %v4419
      %4486 = vst.msk [vmem:[#allocation2 + $0xf8] sm:$0xff] %vm4454, %v4421
      %v4487 = vld [vmem:[%s3907 + $0x3] sm:$0xff]
      %v4488 = vld [vmem:[%s3907 + $0xb] sm:$0xff]
      %v4489 = vld [vmem:[%s3907 + $0x1b] sm:$0xff]
      %v4490 = vld [vmem:[%s3907 + $0x23] sm:$0xff]
      %v4491 = vld [vmem:[%s3907 + $0x33] sm:$0xff]
      %v4492 = vld [vmem:[%s3907 + $0x3b] sm:$0xff]
      %v4493 = vld [vmem:[%s3907 + $0x4b] sm:$0xff]
      %v4494 = vld [vmem:[%s3907 + $0x53] sm:$0xff]
      %v4495 = vld [vmem:[%s3907 + $0x63] sm:$0xff]
      %v4496 = vld [vmem:[%s3907 + $0x6b] sm:$0xff]
      %v4497 = vld [vmem:[%s3907 + $0x7b] sm:$0xff]
      %v4498 = vld [vmem:[%s3907 + $0x83] sm:$0xff]
      %v4499 = vld [vmem:[%s3907 + $0x93] sm:$0xff]
      %v4500 = vld [vmem:[%s3907 + $0x9b] sm:$0xff]
      %v4501 = vld [vmem:[%s3907 + $0xab] sm:$0xff]
      %v4502 = vld [vmem:[%s3907 + $0xb3] sm:$0xff]
      %v4503 = vld [vmem:[%s3907 + $0xc3] sm:$0xff]
      %v4504 = vld [vmem:[%s3907 + $0xcb] sm:$0xff]
      %v4505 = vld [vmem:[%s3907 + $0xdb] sm:$0xff]
      %v4506 = vld [vmem:[%s3907 + $0xe3] sm:$0xff]
      %v4507 = vld [vmem:[%s3907 + $0xf3] sm:$0xff]
      %v4508 = vld [vmem:[%s3907 + $0xfb] sm:$0xff]
      %v4509 = vld [vmem:[%s3907 + $0x10b] sm:$0xff]
      %v4510 = vld [vmem:[%s3907 + $0x113] sm:$0xff]
      %v4511 = vld [vmem:[%s3907 + $0x123] sm:$0xff]
      %v4512 = vld [vmem:[%s3907 + $0x12b] sm:$0xff]
      %v4513 = vld [vmem:[%s3907 + $0x13b] sm:$0xff]
      %v4514 = vld [vmem:[%s3907 + $0x143] sm:$0xff]
      %v4515 = vld [vmem:[%s3907 + $0x153] sm:$0xff]
      %v4516 = vld [vmem:[%s3907 + $0x15b] sm:$0xff]
      %v4517 = vld [vmem:[%s3907 + $0x16b] sm:$0xff]
      %v4518 = vld [vmem:[%s3907 + $0x173] sm:$0xff]
      %4551 = vrot.lane.b32.xlu0 %v4487, 92
      %v4552 = vpop.permute.xlu0 %4551
      %4553 = vrot.lane.b32.xlu0 %v4488, 92
      %v4554 = vpop.permute.xlu0 %4553
      %4555 = vrot.lane.b32.xlu0 %v4489, 92
      %v4556 = vpop.permute.xlu0 %4555
      %4557 = vrot.lane.b32.xlu0 %v4490, 92
      %v4558 = vpop.permute.xlu0 %4557
      %4559 = vrot.lane.b32.xlu0 %v4491, 92
      %v4560 = vpop.permute.xlu0 %4559
      %4561 = vrot.lane.b32.xlu0 %v4492, 92
      %v4562 = vpop.permute.xlu0 %4561
      %4563 = vrot.lane.b32.xlu0 %v4493, 92
      %v4564 = vpop.permute.xlu0 %4563
      %4565 = vrot.lane.b32.xlu0 %v4494, 92
      %v4566 = vpop.permute.xlu0 %4565
      %4567 = vrot.lane.b32.xlu0 %v4495, 92
      %v4568 = vpop.permute.xlu0 %4567
      %4569 = vrot.lane.b32.xlu0 %v4496, 92
      %v4570 = vpop.permute.xlu0 %4569
      %4571 = vrot.lane.b32.xlu0 %v4497, 92
      %v4572 = vpop.permute.xlu0 %4571
      %4573 = vrot.lane.b32.xlu0 %v4498, 92
      %v4574 = vpop.permute.xlu0 %4573
      %4575 = vrot.lane.b32.xlu0 %v4499, 92
      %v4576 = vpop.permute.xlu0 %4575
      %4577 = vrot.lane.b32.xlu0 %v4500, 92
      %v4578 = vpop.permute.xlu0 %4577
      %4579 = vrot.lane.b32.xlu0 %v4501, 92
      %v4580 = vpop.permute.xlu0 %4579
      %4581 = vrot.lane.b32.xlu0 %v4502, 92
      %v4582 = vpop.permute.xlu0 %4581
      %4583 = vrot.lane.b32.xlu0 %v4503, 92
      %v4584 = vpop.permute.xlu0 %4583
      %4585 = vrot.lane.b32.xlu0 %v4504, 92
      %v4586 = vpop.permute.xlu0 %4585
      %4587 = vrot.lane.b32.xlu0 %v4505, 92
      %v4588 = vpop.permute.xlu0 %4587
      %4589 = vrot.lane.b32.xlu0 %v4506, 92
      %v4590 = vpop.permute.xlu0 %4589
      %4591 = vrot.lane.b32.xlu0 %v4507, 92
      %v4592 = vpop.permute.xlu0 %4591
      %4593 = vrot.lane.b32.xlu0 %v4508, 92
      %v4594 = vpop.permute.xlu0 %4593
      %4595 = vrot.lane.b32.xlu0 %v4509, 92
      %v4596 = vpop.permute.xlu0 %4595
      %4597 = vrot.lane.b32.xlu0 %v4510, 92
      %v4598 = vpop.permute.xlu0 %4597
      %4599 = vrot.lane.b32.xlu0 %v4511, 92
      %v4600 = vpop.permute.xlu0 %4599
      %4601 = vrot.lane.b32.xlu0 %v4512, 92
      %v4602 = vpop.permute.xlu0 %4601
      %4603 = vrot.lane.b32.xlu0 %v4513, 92
      %v4604 = vpop.permute.xlu0 %4603
      %4605 = vrot.lane.b32.xlu0 %v4514, 92
      %v4606 = vpop.permute.xlu0 %4605
      %4607 = vrot.lane.b32.xlu0 %v4515, 92
      %v4608 = vpop.permute.xlu0 %4607
      %4609 = vrot.lane.b32.xlu0 %v4516, 92
      %v4610 = vpop.permute.xlu0 %4609
      %4611 = vrot.lane.b32.xlu0 %v4517, 92
      %v4612 = vpop.permute.xlu0 %4611
      %4613 = vrot.lane.b32.xlu0 %v4518, 92
      %v4614 = vpop.permute.xlu0 %4613
      %vm4647 = vcmask 786144
      %4648 = vst.msk [vmem:[#allocation2] sm:$0xff] %vm4647, %v4552
      %4649 = vst.msk [vmem:[#allocation2 + $0x8] sm:$0xff] %vm4647, %v4554
      %4650 = vst.msk [vmem:[#allocation2 + $0x10] sm:$0xff] %vm4647, %v4556
      %4651 = vst.msk [vmem:[#allocation2 + $0x18] sm:$0xff] %vm4647, %v4558
      %4652 = vst.msk [vmem:[#allocation2 + $0x20] sm:$0xff] %vm4647, %v4560
      %4653 = vst.msk [vmem:[#allocation2 + $0x28] sm:$0xff] %vm4647, %v4562
      %4654 = vst.msk [vmem:[#allocation2 + $0x30] sm:$0xff] %vm4647, %v4564
      %4655 = vst.msk [vmem:[#allocation2 + $0x38] sm:$0xff] %vm4647, %v4566
      %4656 = vst.msk [vmem:[#allocation2 + $0x40] sm:$0xff] %vm4647, %v4568
      %4657 = vst.msk [vmem:[#allocation2 + $0x48] sm:$0xff] %vm4647, %v4570
      %4658 = vst.msk [vmem:[#allocation2 + $0x50] sm:$0xff] %vm4647, %v4572
      %4659 = vst.msk [vmem:[#allocation2 + $0x58] sm:$0xff] %vm4647, %v4574
      %4660 = vst.msk [vmem:[#allocation2 + $0x60] sm:$0xff] %vm4647, %v4576
      %4661 = vst.msk [vmem:[#allocation2 + $0x68] sm:$0xff] %vm4647, %v4578
      %4662 = vst.msk [vmem:[#allocation2 + $0x70] sm:$0xff] %vm4647, %v4580
      %4663 = vst.msk [vmem:[#allocation2 + $0x78] sm:$0xff] %vm4647, %v4582
      %4664 = vst.msk [vmem:[#allocation2 + $0x80] sm:$0xff] %vm4647, %v4584
      %4665 = vst.msk [vmem:[#allocation2 + $0x88] sm:$0xff] %vm4647, %v4586
      %4666 = vst.msk [vmem:[#allocation2 + $0x90] sm:$0xff] %vm4647, %v4588
      %4667 = vst.msk [vmem:[#allocation2 + $0x98] sm:$0xff] %vm4647, %v4590
      %4668 = vst.msk [vmem:[#allocation2 + $0xa0] sm:$0xff] %vm4647, %v4592
      %4669 = vst.msk [vmem:[#allocation2 + $0xa8] sm:$0xff] %vm4647, %v4594
      %4670 = vst.msk [vmem:[#allocation2 + $0xb0] sm:$0xff] %vm4647, %v4596
      %4671 = vst.msk [vmem:[#allocation2 + $0xb8] sm:$0xff] %vm4647, %v4598
      %4672 = vst.msk [vmem:[#allocation2 + $0xc0] sm:$0xff] %vm4647, %v4600
      %4673 = vst.msk [vmem:[#allocation2 + $0xc8] sm:$0xff] %vm4647, %v4602
      %4674 = vst.msk [vmem:[#allocation2 + $0xd0] sm:$0xff] %vm4647, %v4604
      %4675 = vst.msk [vmem:[#allocation2 + $0xd8] sm:$0xff] %vm4647, %v4606
      %4676 = vst.msk [vmem:[#allocation2 + $0xe0] sm:$0xff] %vm4647, %v4608
      %4677 = vst.msk [vmem:[#allocation2 + $0xe8] sm:$0xff] %vm4647, %v4610
      %4678 = vst.msk [vmem:[#allocation2 + $0xf0] sm:$0xff] %vm4647, %v4612
      %4679 = vst.msk [vmem:[#allocation2 + $0xf8] sm:$0xff] %vm4647, %v4614
      %v4680 = vld [vmem:[%s3907 + $0x4] sm:$0xff]
      %v4681 = vld [vmem:[%s3907 + $0xc] sm:$0xff]
      %v4682 = vld [vmem:[%s3907 + $0x1c] sm:$0xff]
      %v4683 = vld [vmem:[%s3907 + $0x24] sm:$0xff]
      %v4684 = vld [vmem:[%s3907 + $0x34] sm:$0xff]
      %v4685 = vld [vmem:[%s3907 + $0x3c] sm:$0xff]
      %v4686 = vld [vmem:[%s3907 + $0x4c] sm:$0xff]
      %v4687 = vld [vmem:[%s3907 + $0x54] sm:$0xff]
      %v4688 = vld [vmem:[%s3907 + $0x64] sm:$0xff]
      %v4689 = vld [vmem:[%s3907 + $0x6c] sm:$0xff]
      %v4690 = vld [vmem:[%s3907 + $0x7c] sm:$0xff]
      %v4691 = vld [vmem:[%s3907 + $0x84] sm:$0xff]
      %v4692 = vld [vmem:[%s3907 + $0x94] sm:$0xff]
      %v4693 = vld [vmem:[%s3907 + $0x9c] sm:$0xff]
      %v4694 = vld [vmem:[%s3907 + $0xac] sm:$0xff]
      %v4695 = vld [vmem:[%s3907 + $0xb4] sm:$0xff]
      %v4696 = vld [vmem:[%s3907 + $0xc4] sm:$0xff]
      %v4697 = vld [vmem:[%s3907 + $0xcc] sm:$0xff]
      %v4698 = vld [vmem:[%s3907 + $0xdc] sm:$0xff]
      %v4699 = vld [vmem:[%s3907 + $0xe4] sm:$0xff]
      %v4700 = vld [vmem:[%s3907 + $0xf4] sm:$0xff]
      %v4701 = vld [vmem:[%s3907 + $0xfc] sm:$0xff]
      %v4702 = vld [vmem:[%s3907 + $0x10c] sm:$0xff]
      %v4703 = vld [vmem:[%s3907 + $0x114] sm:$0xff]
      %v4704 = vld [vmem:[%s3907 + $0x124] sm:$0xff]
      %v4705 = vld [vmem:[%s3907 + $0x12c] sm:$0xff]
      %v4706 = vld [vmem:[%s3907 + $0x13c] sm:$0xff]
      %v4707 = vld [vmem:[%s3907 + $0x144] sm:$0xff]
      %v4708 = vld [vmem:[%s3907 + $0x154] sm:$0xff]
      %v4709 = vld [vmem:[%s3907 + $0x15c] sm:$0xff]
      %v4710 = vld [vmem:[%s3907 + $0x16c] sm:$0xff]
      %v4711 = vld [vmem:[%s3907 + $0x174] sm:$0xff]
      %4744 = vrot.lane.b32.xlu0 %v4680, 96
      %v4745 = vpop.permute.xlu0 %4744
      %4746 = vrot.lane.b32.xlu0 %v4681, 96
      %v4747 = vpop.permute.xlu0 %4746
      %4748 = vrot.lane.b32.xlu0 %v4682, 96
      %v4749 = vpop.permute.xlu0 %4748
      %4750 = vrot.lane.b32.xlu0 %v4683, 96
      %v4751 = vpop.permute.xlu0 %4750
      %4752 = vrot.lane.b32.xlu0 %v4684, 96
      %v4753 = vpop.permute.xlu0 %4752
      %4754 = vrot.lane.b32.xlu0 %v4685, 96
      %v4755 = vpop.permute.xlu0 %4754
      %4756 = vrot.lane.b32.xlu0 %v4686, 96
      %v4757 = vpop.permute.xlu0 %4756
      %4758 = vrot.lane.b32.xlu0 %v4687, 96
      %v4759 = vpop.permute.xlu0 %4758
      %4760 = vrot.lane.b32.xlu0 %v4688, 96
      %v4761 = vpop.permute.xlu0 %4760
      %4762 = vrot.lane.b32.xlu0 %v4689, 96
      %v4763 = vpop.permute.xlu0 %4762
      %4764 = vrot.lane.b32.xlu0 %v4690, 96
      %v4765 = vpop.permute.xlu0 %4764
      %4766 = vrot.lane.b32.xlu0 %v4691, 96
      %v4767 = vpop.permute.xlu0 %4766
      %4768 = vrot.lane.b32.xlu0 %v4692, 96
      %v4769 = vpop.permute.xlu0 %4768
      %4770 = vrot.lane.b32.xlu0 %v4693, 96
      %v4771 = vpop.permute.xlu0 %4770
      %4772 = vrot.lane.b32.xlu0 %v4694, 96
      %v4773 = vpop.permute.xlu0 %4772
      %4774 = vrot.lane.b32.xlu0 %v4695, 96
      %v4775 = vpop.permute.xlu0 %4774
      %4776 = vrot.lane.b32.xlu0 %v4696, 96
      %v4777 = vpop.permute.xlu0 %4776
      %4778 = vrot.lane.b32.xlu0 %v4697, 96
      %v4779 = vpop.permute.xlu0 %4778
      %4780 = vrot.lane.b32.xlu0 %v4698, 96
      %v4781 = vpop.permute.xlu0 %4780
      %4782 = vrot.lane.b32.xlu0 %v4699, 96
      %v4783 = vpop.permute.xlu0 %4782
      %4784 = vrot.lane.b32.xlu0 %v4700, 96
      %v4785 = vpop.permute.xlu0 %4784
      %4786 = vrot.lane.b32.xlu0 %v4701, 96
      %v4787 = vpop.permute.xlu0 %4786
      %4788 = vrot.lane.b32.xlu0 %v4702, 96
      %v4789 = vpop.permute.xlu0 %4788
      %4790 = vrot.lane.b32.xlu0 %v4703, 96
      %v4791 = vpop.permute.xlu0 %4790
      %4792 = vrot.lane.b32.xlu0 %v4704, 96
      %v4793 = vpop.permute.xlu0 %4792
      %4794 = vrot.lane.b32.xlu0 %v4705, 96
      %v4795 = vpop.permute.xlu0 %4794
      %4796 = vrot.lane.b32.xlu0 %v4706, 96
      %v4797 = vpop.permute.xlu0 %4796
      %4798 = vrot.lane.b32.xlu0 %v4707, 96
      %v4799 = vpop.permute.xlu0 %4798
      %4800 = vrot.lane.b32.xlu0 %v4708, 96
      %v4801 = vpop.permute.xlu0 %4800
      %4802 = vrot.lane.b32.xlu0 %v4709, 96
      %v4803 = vpop.permute.xlu0 %4802
      %4804 = vrot.lane.b32.xlu0 %v4710, 96
      %v4805 = vpop.permute.xlu0 %4804
      %4806 = vrot.lane.b32.xlu0 %v4711, 96
      %v4807 = vpop.permute.xlu0 %4806
      %vm4840 = vcmask 818944
      %4841 = vst.msk [vmem:[#allocation2] sm:$0xff] %vm4840, %v4745
      %4842 = vst.msk [vmem:[#allocation2 + $0x8] sm:$0xff] %vm4840, %v4747
      %4843 = vst.msk [vmem:[#allocation2 + $0x10] sm:$0xff] %vm4840, %v4749
      %4844 = vst.msk [vmem:[#allocation2 + $0x18] sm:$0xff] %vm4840, %v4751
      %4845 = vst.msk [vmem:[#allocation2 + $0x20] sm:$0xff] %vm4840, %v4753
      %4846 = vst.msk [vmem:[#allocation2 + $0x28] sm:$0xff] %vm4840, %v4755
      %4847 = vst.msk [vmem:[#allocation2 + $0x30] sm:$0xff] %vm4840, %v4757
      %4848 = vst.msk [vmem:[#allocation2 + $0x38] sm:$0xff] %vm4840, %v4759
      %4849 = vst.msk [vmem:[#allocation2 + $0x40] sm:$0xff] %vm4840, %v4761
      %4850 = vst.msk [vmem:[#allocation2 + $0x48] sm:$0xff] %vm4840, %v4763
      %4851 = vst.msk [vmem:[#allocation2 + $0x50] sm:$0xff] %vm4840, %v4765
      %4852 = vst.msk [vmem:[#allocation2 + $0x58] sm:$0xff] %vm4840, %v4767
      %4853 = vst.msk [vmem:[#allocation2 + $0x60] sm:$0xff] %vm4840, %v4769
      %4854 = vst.msk [vmem:[#allocation2 + $0x68] sm:$0xff] %vm4840, %v4771
      %4855 = vst.msk [vmem:[#allocation2 + $0x70] sm:$0xff] %vm4840, %v4773
      %4856 = vst.msk [vmem:[#allocation2 + $0x78] sm:$0xff] %vm4840, %v4775
      %4857 = vst.msk [vmem:[#allocation2 + $0x80] sm:$0xff] %vm4840, %v4777
      %4858 = vst.msk [vmem:[#allocation2 + $0x88] sm:$0xff] %vm4840, %v4779
      %4859 = vst.msk [vmem:[#allocation2 + $0x90] sm:$0xff] %vm4840, %v4781
      %4860 = vst.msk [vmem:[#allocation2 + $0x98] sm:$0xff] %vm4840, %v4783
      %4861 = vst.msk [vmem:[#allocation2 + $0xa0] sm:$0xff] %vm4840, %v4785
      %4862 = vst.msk [vmem:[#allocation2 + $0xa8] sm:$0xff] %vm4840, %v4787
      %4863 = vst.msk [vmem:[#allocation2 + $0xb0] sm:$0xff] %vm4840, %v4789
      %4864 = vst.msk [vmem:[#allocation2 + $0xb8] sm:$0xff] %vm4840, %v4791
      %4865 = vst.msk [vmem:[#allocation2 + $0xc0] sm:$0xff] %vm4840, %v4793
      %4866 = vst.msk [vmem:[#allocation2 + $0xc8] sm:$0xff] %vm4840, %v4795
      %4867 = vst.msk [vmem:[#allocation2 + $0xd0] sm:$0xff] %vm4840, %v4797
      %4868 = vst.msk [vmem:[#allocation2 + $0xd8] sm:$0xff] %vm4840, %v4799
      %4869 = vst.msk [vmem:[#allocation2 + $0xe0] sm:$0xff] %vm4840, %v4801
      %4870 = vst.msk [vmem:[#allocation2 + $0xe8] sm:$0xff] %vm4840, %v4803
      %4871 = vst.msk [vmem:[#allocation2 + $0xf0] sm:$0xff] %vm4840, %v4805
      %4872 = vst.msk [vmem:[#allocation2 + $0xf8] sm:$0xff] %vm4840, %v4807
      %v4873 = vld [vmem:[#allocation2] sm:$0xff]
      %v4874 = vld [vmem:[#allocation2 + $0x8] sm:$0xff]
      %v4875 = vld [vmem:[#allocation2 + $0x10] sm:$0xff]
      %v4876 = vld [vmem:[#allocation2 + $0x18] sm:$0xff]
      %v4877 = vld [vmem:[#allocation2 + $0x20] sm:$0xff]
      %v4878 = vld [vmem:[#allocation2 + $0x28] sm:$0xff]
      %v4879 = vld [vmem:[#allocation2 + $0x30] sm:$0xff]
      %v4880 = vld [vmem:[#allocation2 + $0x38] sm:$0xff]
      %v4881 = vld [vmem:[#allocation2 + $0x40] sm:$0xff]
      %v4882 = vld [vmem:[#allocation2 + $0x48] sm:$0xff]
      %v4883 = vld [vmem:[#allocation2 + $0x50] sm:$0xff]
      %v4884 = vld [vmem:[#allocation2 + $0x58] sm:$0xff]
      %v4885 = vld [vmem:[#allocation2 + $0x60] sm:$0xff]
      %v4886 = vld [vmem:[#allocation2 + $0x68] sm:$0xff]
      %v4887 = vld [vmem:[#allocation2 + $0x70] sm:$0xff]
      %v4888 = vld [vmem:[#allocation2 + $0x78] sm:$0xff]
      %v4889 = vld [vmem:[#allocation2 + $0x80] sm:$0xff]
      %v4890 = vld [vmem:[#allocation2 + $0x88] sm:$0xff]
      %v4891 = vld [vmem:[#allocation2 + $0x90] sm:$0xff]
      %v4892 = vld [vmem:[#allocation2 + $0x98] sm:$0xff]
      %v4893 = vld [vmem:[#allocation2 + $0xa0] sm:$0xff]
      %v4894 = vld [vmem:[#allocation2 + $0xa8] sm:$0xff]
      %v4895 = vld [vmem:[#allocation2 + $0xb0] sm:$0xff]
      %v4896 = vld [vmem:[#allocation2 + $0xb8] sm:$0xff]
      %v4897 = vld [vmem:[#allocation2 + $0xc0] sm:$0xff]
      %v4898 = vld [vmem:[#allocation2 + $0xc8] sm:$0xff]
      %v4899 = vld [vmem:[#allocation2 + $0xd0] sm:$0xff]
      %v4900 = vld [vmem:[#allocation2 + $0xd8] sm:$0xff]
      %v4901 = vld [vmem:[#allocation2 + $0xe0] sm:$0xff]
      %v4902 = vld [vmem:[#allocation2 + $0xe8] sm:$0xff]
      %v4903 = vld [vmem:[#allocation2 + $0xf0] sm:$0xff]
      %v4904 = vld [vmem:[#allocation2 + $0xf8] sm:$0xff]
      %v4905 = vpack.c.bf16 %v4874, %v4873
      %v4906 = vpack.c.bf16 %v4876, %v4875
      %v4907 = vpack.c.bf16 %v4878, %v4877
      %v4908 = vpack.c.bf16 %v4880, %v4879
      %v4909 = vpack.c.bf16 %v4882, %v4881
      %v4910 = vpack.c.bf16 %v4884, %v4883
      %v4911 = vpack.c.bf16 %v4886, %v4885
      %v4912 = vpack.c.bf16 %v4888, %v4887
      %v4913 = vpack.c.bf16 %v4890, %v4889
      %v4914 = vpack.c.bf16 %v4892, %v4891
      %v4915 = vpack.c.bf16 %v4894, %v4893
      %v4916 = vpack.c.bf16 %v4896, %v4895
      %v4917 = vpack.c.bf16 %v4898, %v4897
      %v4918 = vpack.c.bf16 %v4900, %v4899
      %v4919 = vpack.c.bf16 %v4902, %v4901
      %v4920 = vpack.c.bf16 %v4904, %v4903
      %v4921 = vld [vmem:[%s1] sm:$0xf]
      %v4922 = vld [vmem:[%s1 + $0x4] sm:$0xf]
      %v4923 = vld [vmem:[%s1 + $0x8] sm:$0xf]
      %v4924 = vld [vmem:[%s1 + $0xc] sm:$0xf]
      %v4925 = vld [vmem:[%s1 + $0x10] sm:$0xf]
      %v4926 = vld [vmem:[%s1 + $0x14] sm:$0xf]
      %v4927 = vld [vmem:[%s1 + $0x18] sm:$0xf]
      %v4928 = vld [vmem:[%s1 + $0x1c] sm:$0xf]
      %v4929 = vld [vmem:[%s1 + $0x20] sm:$0xf]
      %v4930 = vld [vmem:[%s1 + $0x24] sm:$0xf]
      %v4931 = vld [vmem:[%s1 + $0x28] sm:$0xf]
      %v4932 = vld [vmem:[%s1 + $0x2c] sm:$0xf]
      %v4933 = vld [vmem:[%s1 + $0x30] sm:$0x3]
      %v4934 = vld [vmem:[%s2] sm:$0x1]
      %v4936 = vlaneseq
      %v4937 = vshrl.u32 %v4936, 7
      %v4938 = vsub.s32 0, %v4937
      %v4939 = vrot.slane %v4934, %v4938
      %v4954 = vunpack.c.l.b16 %v4921
      %v4955 = vunpack.c.l.b16 %v4922
      %v4956 = vunpack.c.l.b16 %v4923
      %v4957 = vunpack.c.l.b16 %v4924
      %v4958 = vunpack.c.l.b16 %v4925
      %v4959 = vunpack.c.l.b16 %v4926
      %v4960 = vunpack.c.l.b16 %v4927
      %v4961 = vunpack.c.l.b16 %v4928
      %v4962 = vunpack.c.l.b16 %v4929
      %v4963 = vunpack.c.l.b16 %v4930
      %v4964 = vunpack.c.l.b16 %v4931
      %v4965 = vunpack.c.l.b16 %v4932
      %v4966 = vunpack.c.l.b16 %v4933
      %v4967 = vpack.c.b16 %v4955, %v4954
      %v4968 = vpack.c.b16 %v4957, %v4956
      %v4969 = vpack.c.b16 %v4959, %v4958
      %v4970 = vpack.c.b16 %v4961, %v4960
      %v4971 = vpack.c.b16 %v4963, %v4962
      %v4972 = vpack.c.b16 %v4965, %v4964
      %v4973 = vpack.c.b16 %v4966, %v4966
      %vm4980 = vcmask 818176
      %v4982 = vsel %vm4980, %v4905, 0
      %v4985 = vsel %vm4980, %v4906, 0
      %v4988 = vsel %vm4980, %v4907, 0
      %v4991 = vsel %vm4980, %v4908, 0
      %v4994 = vsel %vm4980, %v4909, 0
      %v4997 = vsel %vm4980, %v4910, 0
      %v5000 = vsel %vm4980, %v4911, 0
      %v5003 = vsel %vm4980, %v4912, 0
      %v5006 = vsel %vm4980, %v4913, 0
      %v5009 = vsel %vm4980, %v4914, 0
      %v5012 = vsel %vm4980, %v4915, 0
      %v5015 = vsel %vm4980, %v4916, 0
      %v5018 = vsel %vm4980, %v4917, 0
      %v5021 = vsel %vm4980, %v4918, 0
      %v5024 = vsel %vm4980, %v4919, 0
      %v5027 = vsel %vm4980, %v4920, 0
      %vm5029 = vcmask 1041408
      %v5031 = vsel %vm5029, %v4973, 0
      %5033 = vmatprep.subr.bf16.mxu0 0
      %5034 = vmatpush1.bf16.msra.mxu0 %v4967
      %5035 = vmatprep.subr.bf16.mxu0 0
      %5036 = vmatpush1.bf16.msra.mxu0 %v4968
      %5037 = vmatprep.subr.bf16.mxu0 0
      %5038 = vmatpush1.bf16.msra.mxu0 %v4969
      %5039 = vmatprep.subr.bf16.mxu0 0
      %5040 = vmatpush1.bf16.msra.mxu0 %v4970
      %5041 = vmatprep.subr.bf16.mxu0 0
      %5042 = vmatpush1.bf16.msra.mxu0 %v4971
      %5043 = vmatprep.subr.bf16.mxu0 0
      %5044 = vmatpush1.bf16.msra.mxu0 %v4972
      %5045 = vmatprep.subr.bf16.mxu0 0
      %5046 = vmatpush1.bf16.msra.mxu0 %v5031
      %5047 = vmatprep.subr.bf16.mxu0 0
      %5048 = vmatpush1.bf16.msra.mxu0 0
      %5049 = vmatprep.subr.bf16.mxu0 0
      %5050 = vmatpush1.bf16.msra.mxu0 0
      %5051 = vmatprep.subr.bf16.mxu0 0
      %5052 = vmatpush1.bf16.msra.mxu0 0
      %5053 = vmatprep.subr.bf16.mxu0 0
      %5054 = vmatpush1.bf16.msra.mxu0 0
      %5055 = vmatprep.subr.bf16.mxu0 0
      %5056 = vmatpush1.bf16.msra.mxu0 0
      %5057 = vmatprep.subr.bf16.mxu0 0
      %5058 = vmatpush1.bf16.msra.mxu0 0
      %5059 = vmatprep.subr.bf16.mxu0 0
      %5060 = vmatpush1.bf16.msra.mxu0 0
      %5061 = vmatprep.subr.bf16.mxu0 0
      %5062 = vmatpush1.bf16.msra.mxu0 0
      %5063 = vmatprep.subr.bf16.mxu0 0
      %5064 = vmatpush1.bf16.msra.mxu0 0
      %5065 = vmatprep.mubr.bf16.mxu0 0
      %5066 = vmatmul.mubr.bf16.gmra.mrb[0].mxu0 %v4982
      %v5067 = vpop.f32.mrb[0].mxu0
      %v5068 = vadd.f32 %v4939, %v5067
      %v5069 = vpop.f32.mrb[0].mxu0
      %v5070 = vpop.f32.mrb[0].mxu0
      %v5071 = vadd.f32 %v4939, %v5070
      %v5072 = vpop.f32.mrb[0].mxu0
      %5073 = vmatprep.mubr.bf16.mxu0 0
      %5074 = vmatmul.mubr.bf16.gmra.mrb[0].mxu0 %v4985
      %v5075 = vpop.f32.mrb[0].mxu0
      %v5076 = vadd.f32 %v4939, %v5075
      %v5077 = vpop.f32.mrb[0].mxu0
      %v5078 = vpop.f32.mrb[0].mxu0
      %v5079 = vadd.f32 %v4939, %v5078
      %v5080 = vpop.f32.mrb[0].mxu0
      %5081 = vmatprep.mubr.bf16.mxu0 0
      %5082 = vmatmul.mubr.bf16.gmra.mrb[0].mxu0 %v4988
      %v5083 = vpop.f32.mrb[0].mxu0
      %v5084 = vadd.f32 %v4939, %v5083
      %v5085 = vpop.f32.mrb[0].mxu0
      %v5086 = vpop.f32.mrb[0].mxu0
      %v5087 = vadd.f32 %v4939, %v5086
      %v5088 = vpop.f32.mrb[0].mxu0
      %5089 = vmatprep.mubr.bf16.mxu0 0
      %5090 = vmatmul.mubr.bf16.gmra.mrb[0].mxu0 %v4991
      %v5091 = vpop.f32.mrb[0].mxu0
      %v5092 = vadd.f32 %v4939, %v5091
      %v5093 = vpop.f32.mrb[0].mxu0
      %v5094 = vpop.f32.mrb[0].mxu0
      %v5095 = vadd.f32 %v4939, %v5094
      %v5096 = vpop.f32.mrb[0].mxu0
      %5097 = vmatprep.mubr.bf16.mxu0 0
      %5098 = vmatmul.mubr.bf16.gmra.mrb[0].mxu0 %v4994
      %v5099 = vpop.f32.mrb[0].mxu0
      %v5100 = vadd.f32 %v4939, %v5099
      %v5101 = vpop.f32.mrb[0].mxu0
      %v5102 = vpop.f32.mrb[0].mxu0
      %v5103 = vadd.f32 %v4939, %v5102
      %v5104 = vpop.f32.mrb[0].mxu0
      %5105 = vmatprep.mubr.bf16.mxu0 0
      %5106 = vmatmul.mubr.bf16.gmra.mrb[0].mxu0 %v4997
      %v5107 = vpop.f32.mrb[0].mxu0
      %v5108 = vadd.f32 %v4939, %v5107
      %v5109 = vpop.f32.mrb[0].mxu0
      %v5110 = vpop.f32.mrb[0].mxu0
      %v5111 = vadd.f32 %v4939, %v5110
      %v5112 = vpop.f32.mrb[0].mxu0
      %5113 = vmatprep.mubr.bf16.mxu0 0
      %5114 = vmatmul.mubr.bf16.gmra.mrb[0].mxu0 %v5000
      %v5115 = vpop.f32.mrb[0].mxu0
      %v5116 = vadd.f32 %v4939, %v5115
      %v5117 = vpop.f32.mrb[0].mxu0
      %v5118 = vpop.f32.mrb[0].mxu0
      %v5119 = vadd.f32 %v4939, %v5118
      %v5120 = vpop.f32.mrb[0].mxu0
      %5121 = vmatprep.mubr.bf16.mxu0 0
      %5122 = vmatmul.mubr.bf16.gmra.mrb[0].mxu0 %v5003
      %v5123 = vpop.f32.mrb[0].mxu0
      %v5124 = vadd.f32 %v4939, %v5123
      %v5125 = vpop.f32.mrb[0].mxu0
      %v5126 = vpop.f32.mrb[0].mxu0
      %v5127 = vadd.f32 %v4939, %v5126
      %v5128 = vpop.f32.mrb[0].mxu0
      %5129 = vmatprep.mubr.bf16.mxu0 0
      %5130 = vmatmul.mubr.bf16.gmra.mrb[0].mxu0 %v5006
      %v5131 = vpop.f32.mrb[0].mxu0
      %v5132 = vadd.f32 %v4939, %v5131
      %v5133 = vpop.f32.mrb[0].mxu0
      %v5134 = vpop.f32.mrb[0].mxu0
      %v5135 = vadd.f32 %v4939, %v5134
      %v5136 = vpop.f32.mrb[0].mxu0
      %5137 = vmatprep.mubr.bf16.mxu0 0
      %5138 = vmatmul.mubr.bf16.gmra.mrb[0].mxu0 %v5009
      %v5139 = vpop.f32.mrb[0].mxu0
      %v5140 = vadd.f32 %v4939, %v5139
      %v5141 = vpop.f32.mrb[0].mxu0
      %v5142 = vpop.f32.mrb[0].mxu0
      %v5143 = vadd.f32 %v4939, %v5142
      %v5144 = vpop.f32.mrb[0].mxu0
      %5145 = vmatprep.mubr.bf16.mxu0 0
      %5146 = vmatmul.mubr.bf16.gmra.mrb[0].mxu0 %v5012
      %v5147 = vpop.f32.mrb[0].mxu0
      %v5148 = vadd.f32 %v4939, %v5147
      %v5149 = vpop.f32.mrb[0].mxu0
      %v5150 = vpop.f32.mrb[0].mxu0
      %v5151 = vadd.f32 %v4939, %v5150
      %v5152 = vpop.f32.mrb[0].mxu0
      %5153 = vmatprep.mubr.bf16.mxu0 0
      %5154 = vmatmul.mubr.bf16.gmra.mrb[0].mxu0 %v5015
      %v5155 = vpop.f32.mrb[0].mxu0
      %v5156 = vadd.f32 %v4939, %v5155
      %v5157 = vpop.f32.mrb[0].mxu0
      %v5158 = vpop.f32.mrb[0].mxu0
      %v5159 = vadd.f32 %v4939, %v5158
      %v5160 = vpop.f32.mrb[0].mxu0
      %5161 = vmatprep.mubr.bf16.mxu0 0
      %5162 = vmatmul.mubr.bf16.gmra.mrb[0].mxu0 %v5018
      %v5163 = vpop.f32.mrb[0].mxu0
      %v5164 = vadd.f32 %v4939, %v5163
      %v5165 = vpop.f32.mrb[0].mxu0
      %v5166 = vpop.f32.mrb[0].mxu0
      %v5167 = vadd.f32 %v4939, %v5166
      %v5168 = vpop.f32.mrb[0].mxu0
      %5169 = vmatprep.mubr.bf16.mxu0 0
      %5170 = vmatmul.mubr.bf16.gmra.mrb[0].mxu0 %v5021
      %v5171 = vpop.f32.mrb[0].mxu0
      %v5172 = vadd.f32 %v4939, %v5171
      %v5173 = vpop.f32.mrb[0].mxu0
      %v5174 = vpop.f32.mrb[0].mxu0
      %v5175 = vadd.f32 %v4939, %v5174
      %v5176 = vpop.f32.mrb[0].mxu0
      %5177 = vmatprep.mubr.bf16.mxu0 0
      %5178 = vmatmul.mubr.bf16.gmra.mrb[0].mxu0 %v5024
      %v5179 = vpop.f32.mrb[0].mxu0
      %v5180 = vadd.f32 %v4939, %v5179
      %v5181 = vpop.f32.mrb[0].mxu0
      %v5182 = vpop.f32.mrb[0].mxu0
      %v5183 = vadd.f32 %v4939, %v5182
      %v5184 = vpop.f32.mrb[0].mxu0
      %5185 = vmatprep.mubr.bf16.mxu0 0
      %5186 = vmatmul.mubr.bf16.gmra.mrb[0].mxu0 %v5027
      %v5187 = vpop.f32.mrb[0].mxu0
      %v5188 = vadd.f32 %v4939, %v5187
      %v5189 = vpop.f32.mrb[0].mxu0
      %v5190 = vpop.f32.mrb[0].mxu0
      %v5191 = vadd.f32 %v4939, %v5190
      %v5192 = vpop.f32.mrb[0].mxu0
      %5193 = vdwg.mxu0
      %v5194 = vmax.f32 %v5068, 0.0
      %v5195 = vmax.f32 %v5071, 0.0
      %v5196 = vmax.f32 %v5076, 0.0
      %v5197 = vmax.f32 %v5079, 0.0
      %v5198 = vmax.f32 %v5084, 0.0
      %v5199 = vmax.f32 %v5087, 0.0
      %v5200 = vmax.f32 %v5092, 0.0
      %v5201 = vmax.f32 %v5095, 0.0
      %v5202 = vmax.f32 %v5100, 0.0
      %v5203 = vmax.f32 %v5103, 0.0
      %v5204 = vmax.f32 %v5108, 0.0
      %v5205 = vmax.f32 %v5111, 0.0
      %v5206 = vmax.f32 %v5116, 0.0
      %v5207 = vmax.f32 %v5119, 0.0
      %v5208 = vmax.f32 %v5124, 0.0
      %v5209 = vmax.f32 %v5127, 0.0
      %v5210 = vmax.f32 %v5132, 0.0
      %v5211 = vmax.f32 %v5135, 0.0
      %v5212 = vmax.f32 %v5140, 0.0
      %v5213 = vmax.f32 %v5143, 0.0
      %v5214 = vmax.f32 %v5148, 0.0
      %v5215 = vmax.f32 %v5151, 0.0
      %v5216 = vmax.f32 %v5156, 0.0
      %v5217 = vmax.f32 %v5159, 0.0
      %v5218 = vmax.f32 %v5164, 0.0
      %v5219 = vmax.f32 %v5167, 0.0
      %v5220 = vmax.f32 %v5172, 0.0
      %v5221 = vmax.f32 %v5175, 0.0
      %v5222 = vmax.f32 %v5180, 0.0
      %v5223 = vmax.f32 %v5183, 0.0
      %v5224 = vmax.f32 %v5188, 0.0
      %v5225 = vmax.f32 %v5191, 0.0
      %vm5226 = vcmask 162816
      %5227 = vst.msk [vmem:[%s170] sm:$0xff] %vm5226, %v5194
      %5228 = vst.msk [vmem:[%s170 + $0x8] sm:$0xff] %vm5226, %v5195
      %5229 = vst.msk [vmem:[%s170 + $0x10] sm:$0xff] %vm5226, %v5196
      %5230 = vst.msk [vmem:[%s170 + $0x18] sm:$0xff] %vm5226, %v5197
      %5231 = vst.msk [vmem:[%s170 + $0x20] sm:$0xff] %vm5226, %v5198
      %5232 = vst.msk [vmem:[%s170 + $0x28] sm:$0xff] %vm5226, %v5199
      %5233 = vst.msk [vmem:[%s170 + $0x30] sm:$0xff] %vm5226, %v5200
      %5234 = vst.msk [vmem:[%s170 + $0x38] sm:$0xff] %vm5226, %v5201
      %5235 = vst.msk [vmem:[%s170 + $0x40] sm:$0xff] %vm5226, %v5202
      %5236 = vst.msk [vmem:[%s170 + $0x48] sm:$0xff] %vm5226, %v5203
      %5237 = vst.msk [vmem:[%s170 + $0x50] sm:$0xff] %vm5226, %v5204
      %5238 = vst.msk [vmem:[%s170 + $0x58] sm:$0xff] %vm5226, %v5205
      %5239 = vst.msk [vmem:[%s170 + $0x60] sm:$0xff] %vm5226, %v5206
      %5240 = vst.msk [vmem:[%s170 + $0x68] sm:$0xff] %vm5226, %v5207
      %5241 = vst.msk [vmem:[%s170 + $0x70] sm:$0xff] %vm5226, %v5208
      %5242 = vst.msk [vmem:[%s170 + $0x78] sm:$0xff] %vm5226, %v5209
      %5243 = vst.msk [vmem:[%s170 + $0x80] sm:$0xff] %vm5226, %v5210
      %5244 = vst.msk [vmem:[%s170 + $0x88] sm:$0xff] %vm5226, %v5211
      %5245 = vst.msk [vmem:[%s170 + $0x90] sm:$0xff] %vm5226, %v5212
      %5246 = vst.msk [vmem:[%s170 + $0x98] sm:$0xff] %vm5226, %v5213
      %5247 = vst.msk [vmem:[%s170 + $0xa0] sm:$0xff] %vm5226, %v5214
      %5248 = vst.msk [vmem:[%s170 + $0xa8] sm:$0xff] %vm5226, %v5215
      %5249 = vst.msk [vmem:[%s170 + $0xb0] sm:$0xff] %vm5226, %v5216
      %5250 = vst.msk [vmem:[%s170 + $0xb8] sm:$0xff] %vm5226, %v5217
      %5251 = vst.msk [vmem:[%s170 + $0xc0] sm:$0xff] %vm5226, %v5218
      %5252 = vst.msk [vmem:[%s170 + $0xc8] sm:$0xff] %vm5226, %v5219
      %5253 = vst.msk [vmem:[%s170 + $0xd0] sm:$0xff] %vm5226, %v5220
      %5254 = vst.msk [vmem:[%s170 + $0xd8] sm:$0xff] %vm5226, %v5221
      %5255 = vst.msk [vmem:[%s170 + $0xe0] sm:$0xff] %vm5226, %v5222
      %5256 = vst.msk [vmem:[%s170 + $0xe8] sm:$0xff] %vm5226, %v5223
      %5257 = vst.msk [vmem:[%s170 + $0xf0] sm:$0xff] %vm5226, %v5224
      %5258 = vst.msk [vmem:[%s170 + $0xf8] sm:$0xff] %vm5226, %v5225
      %v5259 = vlaneseq
      %v5260 = vshrl.u32 %v5259, 7
      %v5261 = vadd.s32 %v5260, 8
      %v5262 = vld [vmem:[%s1975 + $0x2] sm:$0xff]
      %v5263 = vld [vmem:[%s1975 + $0xa] sm:$0xff]
      %v5264 = vld [vmem:[%s1975 + $0x1a] sm:$0xff]
      %v5265 = vld [vmem:[%s1975 + $0x22] sm:$0xff]
      %v5266 = vld [vmem:[%s1975 + $0x32] sm:$0xff]
      %v5267 = vld [vmem:[%s1975 + $0x3a] sm:$0xff]
      %v5268 = vld [vmem:[%s1975 + $0x4a] sm:$0xff]
      %v5269 = vld [vmem:[%s1975 + $0x52] sm:$0xff]
      %v5270 = vld [vmem:[%s1975 + $0x62] sm:$0xff]
      %v5271 = vld [vmem:[%s1975 + $0x6a] sm:$0xff]
      %v5272 = vld [vmem:[%s1975 + $0x7a] sm:$0xff]
      %v5273 = vld [vmem:[%s1975 + $0x82] sm:$0xff]
      %v5274 = vld [vmem:[%s1975 + $0x92] sm:$0xff]
      %v5275 = vld [vmem:[%s1975 + $0x9a] sm:$0xff]
      %v5276 = vld [vmem:[%s1975 + $0xaa] sm:$0xff]
      %v5277 = vld [vmem:[%s1975 + $0xb2] sm:$0xff]
      %v5278 = vld [vmem:[%s1975 + $0xc2] sm:$0xff]
      %v5279 = vld [vmem:[%s1975 + $0xca] sm:$0xff]
      %v5280 = vld [vmem:[%s1975 + $0xda] sm:$0xff]
      %v5281 = vld [vmem:[%s1975 + $0xe2] sm:$0xff]
      %v5282 = vld [vmem:[%s1975 + $0xf2] sm:$0xff]
      %v5283 = vld [vmem:[%s1975 + $0xfa] sm:$0xff]
      %v5284 = vld [vmem:[%s1975 + $0x10a] sm:$0xff]
      %v5285 = vld [vmem:[%s1975 + $0x112] sm:$0xff]
      %v5286 = vld [vmem:[%s1975 + $0x122] sm:$0xff]
      %v5287 = vld [vmem:[%s1975 + $0x12a] sm:$0xff]
      %v5288 = vld [vmem:[%s1975 + $0x13a] sm:$0xff]
      %v5289 = vld [vmem:[%s1975 + $0x142] sm:$0xff]
      %v5290 = vld [vmem:[%s1975 + $0x152] sm:$0xff]
      %v5291 = vld [vmem:[%s1975 + $0x15a] sm:$0xff]
      %v5292 = vld [vmem:[%s1975 + $0x16a] sm:$0xff]
      %v5293 = vld [vmem:[%s1975 + $0x172] sm:$0xff]
      %v5294 = vld [vmem:[%s1009 + $0x1] sm:$0xff]
      %v5295 = vld [vmem:[%s1009 + $0x9] sm:$0xff]
      %v5296 = vld [vmem:[%s1009 + $0x19] sm:$0xff]
      %v5297 = vld [vmem:[%s1009 + $0x21] sm:$0xff]
      %v5298 = vld [vmem:[%s1009 + $0x31] sm:$0xff]
      %v5299 = vld [vmem:[%s1009 + $0x39] sm:$0xff]
      %v5300 = vld [vmem:[%s1009 + $0x49] sm:$0xff]
      %v5301 = vld [vmem:[%s1009 + $0x51] sm:$0xff]
      %v5302 = vld [vmem:[%s1009 + $0x61] sm:$0xff]
      %v5303 = vld [vmem:[%s1009 + $0x69] sm:$0xff]
      %v5304 = vld [vmem:[%s1009 + $0x79] sm:$0xff]
      %v5305 = vld [vmem:[%s1009 + $0x81] sm:$0xff]
      %v5306 = vld [vmem:[%s1009 + $0x91] sm:$0xff]
      %v5307 = vld [vmem:[%s1009 + $0x99] sm:$0xff]
      %v5308 = vld [vmem:[%s1009 + $0xa9] sm:$0xff]
      %v5309 = vld [vmem:[%s1009 + $0xb1] sm:$0xff]
      %v5310 = vld [vmem:[%s1009 + $0xc1] sm:$0xff]
      %v5311 = vld [vmem:[%s1009 + $0xc9] sm:$0xff]
      %v5312 = vld [vmem:[%s1009 + $0xd9] sm:$0xff]
      %v5313 = vld [vmem:[%s1009 + $0xe1] sm:$0xff]
      %v5314 = vld [vmem:[%s1009 + $0xf1] sm:$0xff]
      %v5315 = vld [vmem:[%s1009 + $0xf9] sm:$0xff]
      %v5316 = vld [vmem:[%s1009 + $0x109] sm:$0xff]
      %v5317 = vld [vmem:[%s1009 + $0x111] sm:$0xff]
      %v5318 = vld [vmem:[%s1009 + $0x121] sm:$0xff]
      %v5319 = vld [vmem:[%s1009 + $0x129] sm:$0xff]
      %v5320 = vld [vmem:[%s1009 + $0x139] sm:$0xff]
      %v5321 = vld [vmem:[%s1009 + $0x141] sm:$0xff]
      %v5322 = vld [vmem:[%s1009 + $0x151] sm:$0xff]
      %v5323 = vld [vmem:[%s1009 + $0x159] sm:$0xff]
      %v5324 = vld [vmem:[%s1009 + $0x169] sm:$0xff]
      %v5325 = vld [vmem:[%s1009 + $0x171] sm:$0xff]
      %vm5326 = vcmp.ge.s32.totalorder %v5260, 1
      %vm5327 = vcmp.ge.s32.totalorder %v5261, 1
      %vm5328 = vmand 0, %vm5326
      %vm5329 = vmand 0, %vm5327
      %vm5330 = vmand 1, %vm5326
      %vm5331 = vmand 1, %vm5327
      %v5332 = vsel %vm5328, 1, 0
      %v5333 = vsel %vm5329, 1, 0
      %v5334 = vsel %vm5330, 1, 0
      %v5335 = vsel %vm5331, 1, 0
      %vm5336 = vcmp.eq.s32.totalorder %v5332, 1
      %vm5337 = vcmp.eq.s32.totalorder %v5333, 1
      %vm5338 = vcmp.eq.s32.totalorder %v5334, 1
      %vm5339 = vcmp.eq.s32.totalorder %v5335, 1
      %v5340 = vsel %vm5336, %v5294, -inf
      %v5341 = vsel %vm5337, %v5295, -inf
      %v5342 = vsel %vm5338, %v5296, -inf
      %v5343 = vsel %vm5339, %v5297, -inf
      %v5344 = vsel %vm5338, %v5298, -inf
      %v5345 = vsel %vm5339, %v5299, -inf
      %v5346 = vsel %vm5338, %v5300, -inf
      %v5347 = vsel %vm5339, %v5301, -inf
      %v5348 = vsel %vm5338, %v5302, -inf
      %v5349 = vsel %vm5339, %v5303, -inf
      %v5350 = vsel %vm5338, %v5304, -inf
      %v5351 = vsel %vm5339, %v5305, -inf
      %v5352 = vsel %vm5338, %v5306, -inf
      %v5353 = vsel %vm5339, %v5307, -inf
      %v5354 = vsel %vm5338, %v5308, -inf
      %v5355 = vsel %vm5339, %v5309, -inf
      %v5356 = vsel %vm5338, %v5310, -inf
      %v5357 = vsel %vm5339, %v5311, -inf
      %v5358 = vsel %vm5338, %v5312, -inf
      %v5359 = vsel %vm5339, %v5313, -inf
      %v5360 = vsel %vm5338, %v5314, -inf
      %v5361 = vsel %vm5339, %v5315, -inf
      %v5362 = vsel %vm5338, %v5316, -inf
      %v5363 = vsel %vm5339, %v5317, -inf
      %v5364 = vsel %vm5338, %v5318, -inf
      %v5365 = vsel %vm5339, %v5319, -inf
      %v5366 = vsel %vm5338, %v5320, -inf
      %v5367 = vsel %vm5339, %v5321, -inf
      %v5368 = vsel %vm5338, %v5322, -inf
      %v5369 = vsel %vm5339, %v5323, -inf
      %v5370 = vsel %vm5338, %v5324, -inf
      %v5371 = vsel %vm5339, %v5325, -inf
      %v5372 = vmax.f32 %v5262, %v5340
      %v5373 = vmax.f32 %v5263, %v5341
      %v5374 = vmax.f32 %v5264, %v5342
      %v5375 = vmax.f32 %v5265, %v5343
      %v5376 = vmax.f32 %v5266, %v5344
      %v5377 = vmax.f32 %v5267, %v5345
      %v5378 = vmax.f32 %v5268, %v5346
      %v5379 = vmax.f32 %v5269, %v5347
      %v5380 = vmax.f32 %v5270, %v5348
      %v5381 = vmax.f32 %v5271, %v5349
      %v5382 = vmax.f32 %v5272, %v5350
      %v5383 = vmax.f32 %v5273, %v5351
      %v5384 = vmax.f32 %v5274, %v5352
      %v5385 = vmax.f32 %v5275, %v5353
      %v5386 = vmax.f32 %v5276, %v5354
      %v5387 = vmax.f32 %v5277, %v5355
      %v5388 = vmax.f32 %v5278, %v5356
      %v5389 = vmax.f32 %v5279, %v5357
      %v5390 = vmax.f32 %v5280, %v5358
      %v5391 = vmax.f32 %v5281, %v5359
      %v5392 = vmax.f32 %v5282, %v5360
      %v5393 = vmax.f32 %v5283, %v5361
      %v5394 = vmax.f32 %v5284, %v5362
      %v5395 = vmax.f32 %v5285, %v5363
      %v5396 = vmax.f32 %v5286, %v5364
      %v5397 = vmax.f32 %v5287, %v5365
      %v5398 = vmax.f32 %v5288, %v5366
      %v5399 = vmax.f32 %v5289, %v5367
      %v5400 = vmax.f32 %v5290, %v5368
      %v5401 = vmax.f32 %v5291, %v5369
      %v5402 = vmax.f32 %v5292, %v5370
      %v5403 = vmax.f32 %v5293, %v5371
      %v5404 = vld [vmem:[%s1009 + $0x2] sm:$0xff]
      %v5405 = vld [vmem:[%s1009 + $0xa] sm:$0xff]
      %v5406 = vld [vmem:[%s1009 + $0x1a] sm:$0xff]
      %v5407 = vld [vmem:[%s1009 + $0x22] sm:$0xff]
      %v5408 = vld [vmem:[%s1009 + $0x32] sm:$0xff]
      %v5409 = vld [vmem:[%s1009 + $0x3a] sm:$0xff]
      %v5410 = vld [vmem:[%s1009 + $0x4a] sm:$0xff]
      %v5411 = vld [vmem:[%s1009 + $0x52] sm:$0xff]
      %v5412 = vld [vmem:[%s1009 + $0x62] sm:$0xff]
      %v5413 = vld [vmem:[%s1009 + $0x6a] sm:$0xff]
      %v5414 = vld [vmem:[%s1009 + $0x7a] sm:$0xff]
      %v5415 = vld [vmem:[%s1009 + $0x82] sm:$0xff]
      %v5416 = vld [vmem:[%s1009 + $0x92] sm:$0xff]
      %v5417 = vld [vmem:[%s1009 + $0x9a] sm:$0xff]
      %v5418 = vld [vmem:[%s1009 + $0xaa] sm:$0xff]
      %v5419 = vld [vmem:[%s1009 + $0xb2] sm:$0xff]
      %v5420 = vld [vmem:[%s1009 + $0xc2] sm:$0xff]
      %v5421 = vld [vmem:[%s1009 + $0xca] sm:$0xff]
      %v5422 = vld [vmem:[%s1009 + $0xda] sm:$0xff]
      %v5423 = vld [vmem:[%s1009 + $0xe2] sm:$0xff]
      %v5424 = vld [vmem:[%s1009 + $0xf2] sm:$0xff]
      %v5425 = vld [vmem:[%s1009 + $0xfa] sm:$0xff]
      %v5426 = vld [vmem:[%s1009 + $0x10a] sm:$0xff]
      %v5427 = vld [vmem:[%s1009 + $0x112] sm:$0xff]
      %v5428 = vld [vmem:[%s1009 + $0x122] sm:$0xff]
      %v5429 = vld [vmem:[%s1009 + $0x12a] sm:$0xff]
      %v5430 = vld [vmem:[%s1009 + $0x13a] sm:$0xff]
      %v5431 = vld [vmem:[%s1009 + $0x142] sm:$0xff]
      %v5432 = vld [vmem:[%s1009 + $0x152] sm:$0xff]
      %v5433 = vld [vmem:[%s1009 + $0x15a] sm:$0xff]
      %v5434 = vld [vmem:[%s1009 + $0x16a] sm:$0xff]
      %v5435 = vld [vmem:[%s1009 + $0x172] sm:$0xff]
      %v5436 = vsel 0, %v5404, -inf
      %v5437 = vsel 0, %v5405, -inf
      %v5438 = vsel 1, %v5406, -inf
      %v5439 = vsel 1, %v5407, -inf
      %v5440 = vsel 1, %v5408, -inf
      %v5441 = vsel 1, %v5409, -inf
      %v5442 = vsel 1, %v5410, -inf
      %v5443 = vsel 1, %v5411, -inf
      %v5444 = vsel 1, %v5412, -inf
      %v5445 = vsel 1, %v5413, -inf
      %v5446 = vsel 1, %v5414, -inf
      %v5447 = vsel 1, %v5415, -inf
      %v5448 = vsel 1, %v5416, -inf
      %v5449 = vsel 1, %v5417, -inf
      %v5450 = vsel 1, %v5418, -inf
      %v5451 = vsel 1, %v5419, -inf
      %v5452 = vsel 1, %v5420, -inf
      %v5453 = vsel 1, %v5421, -inf
      %v5454 = vsel 1, %v5422, -inf
      %v5455 = vsel 1, %v5423, -inf
      %v5456 = vsel 1, %v5424, -inf
      %v5457 = vsel 1, %v5425, -inf
      %v5458 = vsel 1, %v5426, -inf
      %v5459 = vsel 1, %v5427, -inf
      %v5460 = vsel 1, %v5428, -inf
      %v5461 = vsel 1, %v5429, -inf
      %v5462 = vsel 1, %v5430, -inf
      %v5463 = vsel 1, %v5431, -inf
      %v5464 = vsel 1, %v5432, -inf
      %v5465 = vsel 1, %v5433, -inf
      %v5466 = vsel 1, %v5434, -inf
      %v5467 = vsel 1, %v5435, -inf
      %v5468 = vmax.f32 %v5372, %v5436
      %v5469 = vmax.f32 %v5373, %v5437
      %v5470 = vmax.f32 %v5374, %v5438
      %v5471 = vmax.f32 %v5375, %v5439
      %v5472 = vmax.f32 %v5376, %v5440
      %v5473 = vmax.f32 %v5377, %v5441
      %v5474 = vmax.f32 %v5378, %v5442
      %v5475 = vmax.f32 %v5379, %v5443
      %v5476 = vmax.f32 %v5380, %v5444
      %v5477 = vmax.f32 %v5381, %v5445
      %v5478 = vmax.f32 %v5382, %v5446
      %v5479 = vmax.f32 %v5383, %v5447
      %v5480 = vmax.f32 %v5384, %v5448
      %v5481 = vmax.f32 %v5385, %v5449
      %v5482 = vmax.f32 %v5386, %v5450
      %v5483 = vmax.f32 %v5387, %v5451
      %v5484 = vmax.f32 %v5388, %v5452
      %v5485 = vmax.f32 %v5389, %v5453
      %v5486 = vmax.f32 %v5390, %v5454
      %v5487 = vmax.f32 %v5391, %v5455
      %v5488 = vmax.f32 %v5392, %v5456
      %v5489 = vmax.f32 %v5393, %v5457
      %v5490 = vmax.f32 %v5394, %v5458
      %v5491 = vmax.f32 %v5395, %v5459
      %v5492 = vmax.f32 %v5396, %v5460
      %v5493 = vmax.f32 %v5397, %v5461
      %v5494 = vmax.f32 %v5398, %v5462
      %v5495 = vmax.f32 %v5399, %v5463
      %v5496 = vmax.f32 %v5400, %v5464
      %v5497 = vmax.f32 %v5401, %v5465
      %v5498 = vmax.f32 %v5402, %v5466
      %v5499 = vmax.f32 %v5403, %v5467
      %v5500 = vld [vmem:[%s1009 + $0x3] sm:$0xff]
      %v5501 = vld [vmem:[%s1009 + $0xb] sm:$0xff]
      %v5502 = vld [vmem:[%s1009 + $0x1b] sm:$0xff]
      %v5503 = vld [vmem:[%s1009 + $0x23] sm:$0xff]
      %v5504 = vld [vmem:[%s1009 + $0x33] sm:$0xff]
      %v5505 = vld [vmem:[%s1009 + $0x3b] sm:$0xff]
      %v5506 = vld [vmem:[%s1009 + $0x4b] sm:$0xff]
      %v5507 = vld [vmem:[%s1009 + $0x53] sm:$0xff]
      %v5508 = vld [vmem:[%s1009 + $0x63] sm:$0xff]
      %v5509 = vld [vmem:[%s1009 + $0x6b] sm:$0xff]
      %v5510 = vld [vmem:[%s1009 + $0x7b] sm:$0xff]
      %v5511 = vld [vmem:[%s1009 + $0x83] sm:$0xff]
      %v5512 = vld [vmem:[%s1009 + $0x93] sm:$0xff]
      %v5513 = vld [vmem:[%s1009 + $0x9b] sm:$0xff]
      %v5514 = vld [vmem:[%s1009 + $0xab] sm:$0xff]
      %v5515 = vld [vmem:[%s1009 + $0xb3] sm:$0xff]
      %v5516 = vld [vmem:[%s1009 + $0xc3] sm:$0xff]
      %v5517 = vld [vmem:[%s1009 + $0xcb] sm:$0xff]
      %v5518 = vld [vmem:[%s1009 + $0xdb] sm:$0xff]
      %v5519 = vld [vmem:[%s1009 + $0xe3] sm:$0xff]
      %v5520 = vld [vmem:[%s1009 + $0xf3] sm:$0xff]
      %v5521 = vld [vmem:[%s1009 + $0xfb] sm:$0xff]
      %v5522 = vld [vmem:[%s1009 + $0x10b] sm:$0xff]
      %v5523 = vld [vmem:[%s1009 + $0x113] sm:$0xff]
      %v5524 = vld [vmem:[%s1009 + $0x123] sm:$0xff]
      %v5525 = vld [vmem:[%s1009 + $0x12b] sm:$0xff]
      %v5526 = vld [vmem:[%s1009 + $0x13b] sm:$0xff]
      %v5527 = vld [vmem:[%s1009 + $0x143] sm:$0xff]
      %v5528 = vld [vmem:[%s1009 + $0x153] sm:$0xff]
      %v5529 = vld [vmem:[%s1009 + $0x15b] sm:$0xff]
      %v5530 = vld [vmem:[%s1009 + $0x16b] sm:$0xff]
      %v5531 = vld [vmem:[%s1009 + $0x173] sm:$0xff]
      %vm5532 = vcmp.lt.s32.totalorder %v5260, 15
      %vm5533 = vcmp.lt.s32.totalorder %v5261, 15
      %vm5534 = vmand 0, %vm5532
      %vm5535 = vmand 0, %vm5533
      %vm5536 = vmand 1, %vm5532
      %vm5537 = vmand 1, %vm5533
      %v5538 = vsel %vm5534, 1, 0
      %v5539 = vsel %vm5535, 1, 0
      %v5540 = vsel %vm5536, 1, 0
      %v5541 = vsel %vm5537, 1, 0
      %vm5542 = vcmp.eq.s32.totalorder %v5538, 1
      %vm5543 = vcmp.eq.s32.totalorder %v5539, 1
      %vm5544 = vcmp.eq.s32.totalorder %v5540, 1
      %vm5545 = vcmp.eq.s32.totalorder %v5541, 1
      %v5546 = vsel %vm5542, %v5500, -inf
      %v5547 = vsel %vm5543, %v5501, -inf
      %v5548 = vsel %vm5544, %v5502, -inf
      %v5549 = vsel %vm5545, %v5503, -inf
      %v5550 = vsel %vm5544, %v5504, -inf
      %v5551 = vsel %vm5545, %v5505, -inf
      %v5552 = vsel %vm5544, %v5506, -inf
      %v5553 = vsel %vm5545, %v5507, -inf
      %v5554 = vsel %vm5544, %v5508, -inf
      %v5555 = vsel %vm5545, %v5509, -inf
      %v5556 = vsel %vm5544, %v5510, -inf
      %v5557 = vsel %vm5545, %v5511, -inf
      %v5558 = vsel %vm5544, %v5512, -inf
      %v5559 = vsel %vm5545, %v5513, -inf
      %v5560 = vsel %vm5544, %v5514, -inf
      %v5561 = vsel %vm5545, %v5515, -inf
      %v5562 = vsel %vm5544, %v5516, -inf
      %v5563 = vsel %vm5545, %v5517, -inf
      %v5564 = vsel %vm5544, %v5518, -inf
      %v5565 = vsel %vm5545, %v5519, -inf
      %v5566 = vsel %vm5544, %v5520, -inf
      %v5567 = vsel %vm5545, %v5521, -inf
      %v5568 = vsel %vm5544, %v5522, -inf
      %v5569 = vsel %vm5545, %v5523, -inf
      %v5570 = vsel %vm5544, %v5524, -inf
      %v5571 = vsel %vm5545, %v5525, -inf
      %v5572 = vsel %vm5544, %v5526, -inf
      %v5573 = vsel %vm5545, %v5527, -inf
      %v5574 = vsel %vm5544, %v5528, -inf
      %v5575 = vsel %vm5545, %v5529, -inf
      %v5576 = vsel %vm5544, %v5530, -inf
      %v5577 = vsel %vm5545, %v5531, -inf
      %v5578 = vmax.f32 %v5468, %v5546
      %v5579 = vmax.f32 %v5469, %v5547
      %v5580 = vmax.f32 %v5470, %v5548
      %v5581 = vmax.f32 %v5471, %v5549
      %v5582 = vmax.f32 %v5472, %v5550
      %v5583 = vmax.f32 %v5473, %v5551
      %v5584 = vmax.f32 %v5474, %v5552
      %v5585 = vmax.f32 %v5475, %v5553
      %v5586 = vmax.f32 %v5476, %v5554
      %v5587 = vmax.f32 %v5477, %v5555
      %v5588 = vmax.f32 %v5478, %v5556
      %v5589 = vmax.f32 %v5479, %v5557
      %v5590 = vmax.f32 %v5480, %v5558
      %v5591 = vmax.f32 %v5481, %v5559
      %v5592 = vmax.f32 %v5482, %v5560
      %v5593 = vmax.f32 %v5483, %v5561
      %v5594 = vmax.f32 %v5484, %v5562
      %v5595 = vmax.f32 %v5485, %v5563
      %v5596 = vmax.f32 %v5486, %v5564
      %v5597 = vmax.f32 %v5487, %v5565
      %v5598 = vmax.f32 %v5488, %v5566
      %v5599 = vmax.f32 %v5489, %v5567
      %v5600 = vmax.f32 %v5490, %v5568
      %v5601 = vmax.f32 %v5491, %v5569
      %v5602 = vmax.f32 %v5492, %v5570
      %v5603 = vmax.f32 %v5493, %v5571
      %v5604 = vmax.f32 %v5494, %v5572
      %v5605 = vmax.f32 %v5495, %v5573
      %v5606 = vmax.f32 %v5496, %v5574
      %v5607 = vmax.f32 %v5497, %v5575
      %v5608 = vmax.f32 %v5498, %v5576
      %v5609 = vmax.f32 %v5499, %v5577
      %v5610 = vld [vmem:[%s1975 + $0x1] sm:$0xff]
      %v5611 = vld [vmem:[%s1975 + $0x9] sm:$0xff]
      %v5612 = vld [vmem:[%s1975 + $0x19] sm:$0xff]
      %v5613 = vld [vmem:[%s1975 + $0x21] sm:$0xff]
      %v5614 = vld [vmem:[%s1975 + $0x31] sm:$0xff]
      %v5615 = vld [vmem:[%s1975 + $0x39] sm:$0xff]
      %v5616 = vld [vmem:[%s1975 + $0x49] sm:$0xff]
      %v5617 = vld [vmem:[%s1975 + $0x51] sm:$0xff]
      %v5618 = vld [vmem:[%s1975 + $0x61] sm:$0xff]
      %v5619 = vld [vmem:[%s1975 + $0x69] sm:$0xff]
      %v5620 = vld [vmem:[%s1975 + $0x79] sm:$0xff]
      %v5621 = vld [vmem:[%s1975 + $0x81] sm:$0xff]
      %v5622 = vld [vmem:[%s1975 + $0x91] sm:$0xff]
      %v5623 = vld [vmem:[%s1975 + $0x99] sm:$0xff]
      %v5624 = vld [vmem:[%s1975 + $0xa9] sm:$0xff]
      %v5625 = vld [vmem:[%s1975 + $0xb1] sm:$0xff]
      %v5626 = vld [vmem:[%s1975 + $0xc1] sm:$0xff]
      %v5627 = vld [vmem:[%s1975 + $0xc9] sm:$0xff]
      %v5628 = vld [vmem:[%s1975 + $0xd9] sm:$0xff]
      %v5629 = vld [vmem:[%s1975 + $0xe1] sm:$0xff]
      %v5630 = vld [vmem:[%s1975 + $0xf1] sm:$0xff]
      %v5631 = vld [vmem:[%s1975 + $0xf9] sm:$0xff]
      %v5632 = vld [vmem:[%s1975 + $0x109] sm:$0xff]
      %v5633 = vld [vmem:[%s1975 + $0x111] sm:$0xff]
      %v5634 = vld [vmem:[%s1975 + $0x121] sm:$0xff]
      %v5635 = vld [vmem:[%s1975 + $0x129] sm:$0xff]
      %v5636 = vld [vmem:[%s1975 + $0x139] sm:$0xff]
      %v5637 = vld [vmem:[%s1975 + $0x141] sm:$0xff]
      %v5638 = vld [vmem:[%s1975 + $0x151] sm:$0xff]
      %v5639 = vld [vmem:[%s1975 + $0x159] sm:$0xff]
      %v5640 = vld [vmem:[%s1975 + $0x169] sm:$0xff]
      %v5641 = vld [vmem:[%s1975 + $0x171] sm:$0xff]
      %v5642 = vsel %vm5326, 1, 0
      %v5643 = vsel %vm5327, 1, 0
      %vm5644 = vcmp.eq.s32.totalorder %v5642, 1
      %vm5645 = vcmp.eq.s32.totalorder %v5643, 1
      %v5646 = vsel %vm5644, %v5610, -inf
      %v5647 = vsel %vm5645, %v5611, -inf
      %v5648 = vsel %vm5644, %v5612, -inf
      %v5649 = vsel %vm5645, %v5613, -inf
      %v5650 = vsel %vm5644, %v5614, -inf
      %v5651 = vsel %vm5645, %v5615, -inf
      %v5652 = vsel %vm5644, %v5616, -inf
      %v5653 = vsel %vm5645, %v5617, -inf
      %v5654 = vsel %vm5644, %v5618, -inf
      %v5655 = vsel %vm5645, %v5619, -inf
      %v5656 = vsel %vm5644, %v5620, -inf
      %v5657 = vsel %vm5645, %v5621, -inf
      %v5658 = vsel %vm5644, %v5622, -inf
      %v5659 = vsel %vm5645, %v5623, -inf
      %v5660 = vsel %vm5644, %v5624, -inf
      %v5661 = vsel %vm5645, %v5625, -inf
      %v5662 = vsel %vm5644, %v5626, -inf
      %v5663 = vsel %vm5645, %v5627, -inf
      %v5664 = vsel %vm5644, %v5628, -inf
      %v5665 = vsel %vm5645, %v5629, -inf
      %v5666 = vsel %vm5644, %v5630, -inf
      %v5667 = vsel %vm5645, %v5631, -inf
      %v5668 = vsel %vm5644, %v5632, -inf
      %v5669 = vsel %vm5645, %v5633, -inf
      %v5670 = vsel %vm5644, %v5634, -inf
      %v5671 = vsel %vm5645, %v5635, -inf
      %v5672 = vsel %vm5644, %v5636, -inf
      %v5673 = vsel %vm5645, %v5637, -inf
      %v5674 = vsel %vm5644, %v5638, -inf
      %v5675 = vsel %vm5645, %v5639, -inf
      %v5676 = vsel %vm5644, %v5640, -inf
      %v5677 = vsel %vm5645, %v5641, -inf
      %v5678 = vmax.f32 %v5578, %v5646
      %v5679 = vmax.f32 %v5579, %v5647
      %v5680 = vmax.f32 %v5580, %v5648
      %v5681 = vmax.f32 %v5581, %v5649
      %v5682 = vmax.f32 %v5582, %v5650
      %v5683 = vmax.f32 %v5583, %v5651
      %v5684 = vmax.f32 %v5584, %v5652
      %v5685 = vmax.f32 %v5585, %v5653
      %v5686 = vmax.f32 %v5586, %v5654
      %v5687 = vmax.f32 %v5587, %v5655
      %v5688 = vmax.f32 %v5588, %v5656
      %v5689 = vmax.f32 %v5589, %v5657
      %v5690 = vmax.f32 %v5590, %v5658
      %v5691 = vmax.f32 %v5591, %v5659
      %v5692 = vmax.f32 %v5592, %v5660
      %v5693 = vmax.f32 %v5593, %v5661
      %v5694 = vmax.f32 %v5594, %v5662
      %v5695 = vmax.f32 %v5595, %v5663
      %v5696 = vmax.f32 %v5596, %v5664
      %v5697 = vmax.f32 %v5597, %v5665
      %v5698 = vmax.f32 %v5598, %v5666
      %v5699 = vmax.f32 %v5599, %v5667
      %v5700 = vmax.f32 %v5600, %v5668
      %v5701 = vmax.f32 %v5601, %v5669
      %v5702 = vmax.f32 %v5602, %v5670
      %v5703 = vmax.f32 %v5603, %v5671
      %v5704 = vmax.f32 %v5604, %v5672
      %v5705 = vmax.f32 %v5605, %v5673
      %v5706 = vmax.f32 %v5606, %v5674
      %v5707 = vmax.f32 %v5607, %v5675
      %v5708 = vmax.f32 %v5608, %v5676
      %v5709 = vmax.f32 %v5609, %v5677
      %v5710 = vld [vmem:[%s1975 + $0x3] sm:$0xff]
      %v5711 = vld [vmem:[%s1975 + $0xb] sm:$0xff]
      %v5712 = vld [vmem:[%s1975 + $0x1b] sm:$0xff]
      %v5713 = vld [vmem:[%s1975 + $0x23] sm:$0xff]
      %v5714 = vld [vmem:[%s1975 + $0x33] sm:$0xff]
      %v5715 = vld [vmem:[%s1975 + $0x3b] sm:$0xff]
      %v5716 = vld [vmem:[%s1975 + $0x4b] sm:$0xff]
      %v5717 = vld [vmem:[%s1975 + $0x53] sm:$0xff]
      %v5718 = vld [vmem:[%s1975 + $0x63] sm:$0xff]
      %v5719 = vld [vmem:[%s1975 + $0x6b] sm:$0xff]
      %v5720 = vld [vmem:[%s1975 + $0x7b] sm:$0xff]
      %v5721 = vld [vmem:[%s1975 + $0x83] sm:$0xff]
      %v5722 = vld [vmem:[%s1975 + $0x93] sm:$0xff]
      %v5723 = vld [vmem:[%s1975 + $0x9b] sm:$0xff]
      %v5724 = vld [vmem:[%s1975 + $0xab] sm:$0xff]
      %v5725 = vld [vmem:[%s1975 + $0xb3] sm:$0xff]
      %v5726 = vld [vmem:[%s1975 + $0xc3] sm:$0xff]
      %v5727 = vld [vmem:[%s1975 + $0xcb] sm:$0xff]
      %v5728 = vld [vmem:[%s1975 + $0xdb] sm:$0xff]
      %v5729 = vld [vmem:[%s1975 + $0xe3] sm:$0xff]
      %v5730 = vld [vmem:[%s1975 + $0xf3] sm:$0xff]
      %v5731 = vld [vmem:[%s1975 + $0xfb] sm:$0xff]
      %v5732 = vld [vmem:[%s1975 + $0x10b] sm:$0xff]
      %v5733 = vld [vmem:[%s1975 + $0x113] sm:$0xff]
      %v5734 = vld [vmem:[%s1975 + $0x123] sm:$0xff]
      %v5735 = vld [vmem:[%s1975 + $0x12b] sm:$0xff]
      %v5736 = vld [vmem:[%s1975 + $0x13b] sm:$0xff]
      %v5737 = vld [vmem:[%s1975 + $0x143] sm:$0xff]
      %v5738 = vld [vmem:[%s1975 + $0x153] sm:$0xff]
      %v5739 = vld [vmem:[%s1975 + $0x15b] sm:$0xff]
      %v5740 = vld [vmem:[%s1975 + $0x16b] sm:$0xff]
      %v5741 = vld [vmem:[%s1975 + $0x173] sm:$0xff]
      %v5742 = vsel %vm5532, 1, 0
      %v5743 = vsel %vm5533, 1, 0
      %vm5744 = vcmp.eq.s32.totalorder %v5742, 1
      %vm5745 = vcmp.eq.s32.totalorder %v5743, 1
      %v5746 = vsel %vm5744, %v5710, -inf
      %v5747 = vsel %vm5745, %v5711, -inf
      %v5748 = vsel %vm5744, %v5712, -inf
      %v5749 = vsel %vm5745, %v5713, -inf
      %v5750 = vsel %vm5744, %v5714, -inf
      %v5751 = vsel %vm5745, %v5715, -inf
      %v5752 = vsel %vm5744, %v5716, -inf
      %v5753 = vsel %vm5745, %v5717, -inf
      %v5754 = vsel %vm5744, %v5718, -inf
      %v5755 = vsel %vm5745, %v5719, -inf
      %v5756 = vsel %vm5744, %v5720, -inf
      %v5757 = vsel %vm5745, %v5721, -inf
      %v5758 = vsel %vm5744, %v5722, -inf
      %v5759 = vsel %vm5745, %v5723, -inf
      %v5760 = vsel %vm5744, %v5724, -inf
      %v5761 = vsel %vm5745, %v5725, -inf
      %v5762 = vsel %vm5744, %v5726, -inf
      %v5763 = vsel %vm5745, %v5727, -inf
      %v5764 = vsel %vm5744, %v5728, -inf
      %v5765 = vsel %vm5745, %v5729, -inf
      %v5766 = vsel %vm5744, %v5730, -inf
      %v5767 = vsel %vm5745, %v5731, -inf
      %v5768 = vsel %vm5744, %v5732, -inf
      %v5769 = vsel %vm5745, %v5733, -inf
      %v5770 = vsel %vm5744, %v5734, -inf
      %v5771 = vsel %vm5745, %v5735, -inf
      %v5772 = vsel %vm5744, %v5736, -inf
      %v5773 = vsel %vm5745, %v5737, -inf
      %v5774 = vsel %vm5744, %v5738, -inf
      %v5775 = vsel %vm5745, %v5739, -inf
      %v5776 = vsel %vm5744, %v5740, -inf
      %v5777 = vsel %vm5745, %v5741, -inf
      %v5778 = vmax.f32 %v5678, %v5746
      %v5779 = vmax.f32 %v5679, %v5747
      %v5780 = vmax.f32 %v5680, %v5748
      %v5781 = vmax.f32 %v5681, %v5749
      %v5782 = vmax.f32 %v5682, %v5750
      %v5783 = vmax.f32 %v5683, %v5751
      %v5784 = vmax.f32 %v5684, %v5752
      %v5785 = vmax.f32 %v5685, %v5753
      %v5786 = vmax.f32 %v5686, %v5754
      %v5787 = vmax.f32 %v5687, %v5755
      %v5788 = vmax.f32 %v5688, %v5756
      %v5789 = vmax.f32 %v5689, %v5757
      %v5790 = vmax.f32 %v5690, %v5758
      %v5791 = vmax.f32 %v5691, %v5759
      %v5792 = vmax.f32 %v5692, %v5760
      %v5793 = vmax.f32 %v5693, %v5761
      %v5794 = vmax.f32 %v5694, %v5762
      %v5795 = vmax.f32 %v5695, %v5763
      %v5796 = vmax.f32 %v5696, %v5764
      %v5797 = vmax.f32 %v5697, %v5765
      %v5798 = vmax.f32 %v5698, %v5766
      %v5799 = vmax.f32 %v5699, %v5767
      %v5800 = vmax.f32 %v5700, %v5768
      %v5801 = vmax.f32 %v5701, %v5769
      %v5802 = vmax.f32 %v5702, %v5770
      %v5803 = vmax.f32 %v5703, %v5771
      %v5804 = vmax.f32 %v5704, %v5772
      %v5805 = vmax.f32 %v5705, %v5773
      %v5806 = vmax.f32 %v5706, %v5774
      %v5807 = vmax.f32 %v5707, %v5775
      %v5808 = vmax.f32 %v5708, %v5776
      %v5809 = vmax.f32 %v5709, %v5777
      %v5810 = vld [vmem:[%s2941 + $0x1] sm:$0xff]
      %v5811 = vld [vmem:[%s2941 + $0x9] sm:$0xff]
      %v5812 = vld [vmem:[%s2941 + $0x19] sm:$0xff]
      %v5813 = vld [vmem:[%s2941 + $0x21] sm:$0xff]
      %v5814 = vld [vmem:[%s2941 + $0x31] sm:$0xff]
      %v5815 = vld [vmem:[%s2941 + $0x39] sm:$0xff]
      %v5816 = vld [vmem:[%s2941 + $0x49] sm:$0xff]
      %v5817 = vld [vmem:[%s2941 + $0x51] sm:$0xff]
      %v5818 = vld [vmem:[%s2941 + $0x61] sm:$0xff]
      %v5819 = vld [vmem:[%s2941 + $0x69] sm:$0xff]
      %v5820 = vld [vmem:[%s2941 + $0x79] sm:$0xff]
      %v5821 = vld [vmem:[%s2941 + $0x81] sm:$0xff]
      %v5822 = vld [vmem:[%s2941 + $0x91] sm:$0xff]
      %v5823 = vld [vmem:[%s2941 + $0x99] sm:$0xff]
      %v5824 = vld [vmem:[%s2941 + $0xa9] sm:$0xff]
      %v5825 = vld [vmem:[%s2941 + $0xb1] sm:$0xff]
      %v5826 = vld [vmem:[%s2941 + $0xc1] sm:$0xff]
      %v5827 = vld [vmem:[%s2941 + $0xc9] sm:$0xff]
      %v5828 = vld [vmem:[%s2941 + $0xd9] sm:$0xff]
      %v5829 = vld [vmem:[%s2941 + $0xe1] sm:$0xff]
      %v5830 = vld [vmem:[%s2941 + $0xf1] sm:$0xff]
      %v5831 = vld [vmem:[%s2941 + $0xf9] sm:$0xff]
      %v5832 = vld [vmem:[%s2941 + $0x109] sm:$0xff]
      %v5833 = vld [vmem:[%s2941 + $0x111] sm:$0xff]
      %v5834 = vld [vmem:[%s2941 + $0x121] sm:$0xff]
      %v5835 = vld [vmem:[%s2941 + $0x129] sm:$0xff]
      %v5836 = vld [vmem:[%s2941 + $0x139] sm:$0xff]
      %v5837 = vld [vmem:[%s2941 + $0x141] sm:$0xff]
      %v5838 = vld [vmem:[%s2941 + $0x151] sm:$0xff]
      %v5839 = vld [vmem:[%s2941 + $0x159] sm:$0xff]
      %v5840 = vld [vmem:[%s2941 + $0x169] sm:$0xff]
      %v5841 = vld [vmem:[%s2941 + $0x171] sm:$0xff]
      %v5842 = vsel %vm5338, %v5810, -inf
      %v5843 = vsel %vm5339, %v5811, -inf
      %v5844 = vsel %vm5338, %v5812, -inf
      %v5845 = vsel %vm5339, %v5813, -inf
      %v5846 = vsel %vm5338, %v5814, -inf
      %v5847 = vsel %vm5339, %v5815, -inf
      %v5848 = vsel %vm5338, %v5816, -inf
      %v5849 = vsel %vm5339, %v5817, -inf
      %v5850 = vsel %vm5338, %v5818, -inf
      %v5851 = vsel %vm5339, %v5819, -inf
      %v5852 = vsel %vm5338, %v5820, -inf
      %v5853 = vsel %vm5339, %v5821, -inf
      %v5854 = vsel %vm5338, %v5822, -inf
      %v5855 = vsel %vm5339, %v5823, -inf
      %v5856 = vsel %vm5338, %v5824, -inf
      %v5857 = vsel %vm5339, %v5825, -inf
      %v5858 = vsel %vm5338, %v5826, -inf
      %v5859 = vsel %vm5339, %v5827, -inf
      %v5860 = vsel %vm5338, %v5828, -inf
      %v5861 = vsel %vm5339, %v5829, -inf
      %v5862 = vsel %vm5338, %v5830, -inf
      %v5863 = vsel %vm5339, %v5831, -inf
      %v5864 = vsel %vm5338, %v5832, -inf
      %v5865 = vsel %vm5339, %v5833, -inf
      %v5866 = vsel %vm5338, %v5834, -inf
      %v5867 = vsel %vm5339, %v5835, -inf
      %v5868 = vsel %vm5338, %v5836, -inf
      %v5869 = vsel %vm5339, %v5837, -inf
      %v5870 = vsel %vm5338, %v5838, -inf
      %v5871 = vsel %vm5339, %v5839, -inf
      %v5872 = vsel %vm5336, %v5840, -inf
      %v5873 = vsel %vm5337, %v5841, -inf
      %v5874 = vmax.f32 %v5778, %v5842
      %v5875 = vmax.f32 %v5779, %v5843
      %v5876 = vmax.f32 %v5780, %v5844
      %v5877 = vmax.f32 %v5781, %v5845
      %v5878 = vmax.f32 %v5782, %v5846
      %v5879 = vmax.f32 %v5783, %v5847
      %v5880 = vmax.f32 %v5784, %v5848
      %v5881 = vmax.f32 %v5785, %v5849
      %v5882 = vmax.f32 %v5786, %v5850
      %v5883 = vmax.f32 %v5787, %v5851
      %v5884 = vmax.f32 %v5788, %v5852
      %v5885 = vmax.f32 %v5789, %v5853
      %v5886 = vmax.f32 %v5790, %v5854
      %v5887 = vmax.f32 %v5791, %v5855
      %v5888 = vmax.f32 %v5792, %v5856
      %v5889 = vmax.f32 %v5793, %v5857
      %v5890 = vmax.f32 %v5794, %v5858
      %v5891 = vmax.f32 %v5795, %v5859
      %v5892 = vmax.f32 %v5796, %v5860
      %v5893 = vmax.f32 %v5797, %v5861
      %v5894 = vmax.f32 %v5798, %v5862
      %v5895 = vmax.f32 %v5799, %v5863
      %v5896 = vmax.f32 %v5800, %v5864
      %v5897 = vmax.f32 %v5801, %v5865
      %v5898 = vmax.f32 %v5802, %v5866
      %v5899 = vmax.f32 %v5803, %v5867
      %v5900 = vmax.f32 %v5804, %v5868
      %v5901 = vmax.f32 %v5805, %v5869
      %v5902 = vmax.f32 %v5806, %v5870
      %v5903 = vmax.f32 %v5807, %v5871
      %v5904 = vmax.f32 %v5808, %v5872
      %v5905 = vmax.f32 %v5809, %v5873
      %v5906 = vld [vmem:[%s2941 + $0x2] sm:$0xff]
      %v5907 = vld [vmem:[%s2941 + $0xa] sm:$0xff]
      %v5908 = vld [vmem:[%s2941 + $0x1a] sm:$0xff]
      %v5909 = vld [vmem:[%s2941 + $0x22] sm:$0xff]
      %v5910 = vld [vmem:[%s2941 + $0x32] sm:$0xff]
      %v5911 = vld [vmem:[%s2941 + $0x3a] sm:$0xff]
      %v5912 = vld [vmem:[%s2941 + $0x4a] sm:$0xff]
      %v5913 = vld [vmem:[%s2941 + $0x52] sm:$0xff]
      %v5914 = vld [vmem:[%s2941 + $0x62] sm:$0xff]
      %v5915 = vld [vmem:[%s2941 + $0x6a] sm:$0xff]
      %v5916 = vld [vmem:[%s2941 + $0x7a] sm:$0xff]
      %v5917 = vld [vmem:[%s2941 + $0x82] sm:$0xff]
      %v5918 = vld [vmem:[%s2941 + $0x92] sm:$0xff]
      %v5919 = vld [vmem:[%s2941 + $0x9a] sm:$0xff]
      %v5920 = vld [vmem:[%s2941 + $0xaa] sm:$0xff]
      %v5921 = vld [vmem:[%s2941 + $0xb2] sm:$0xff]
      %v5922 = vld [vmem:[%s2941 + $0xc2] sm:$0xff]
      %v5923 = vld [vmem:[%s2941 + $0xca] sm:$0xff]
      %v5924 = vld [vmem:[%s2941 + $0xda] sm:$0xff]
      %v5925 = vld [vmem:[%s2941 + $0xe2] sm:$0xff]
      %v5926 = vld [vmem:[%s2941 + $0xf2] sm:$0xff]
      %v5927 = vld [vmem:[%s2941 + $0xfa] sm:$0xff]
      %v5928 = vld [vmem:[%s2941 + $0x10a] sm:$0xff]
      %v5929 = vld [vmem:[%s2941 + $0x112] sm:$0xff]
      %v5930 = vld [vmem:[%s2941 + $0x122] sm:$0xff]
      %v5931 = vld [vmem:[%s2941 + $0x12a] sm:$0xff]
      %v5932 = vld [vmem:[%s2941 + $0x13a] sm:$0xff]
      %v5933 = vld [vmem:[%s2941 + $0x142] sm:$0xff]
      %v5934 = vld [vmem:[%s2941 + $0x152] sm:$0xff]
      %v5935 = vld [vmem:[%s2941 + $0x15a] sm:$0xff]
      %v5936 = vld [vmem:[%s2941 + $0x16a] sm:$0xff]
      %v5937 = vld [vmem:[%s2941 + $0x172] sm:$0xff]
      %v5938 = vsel 1, %v5906, -inf
      %v5939 = vsel 1, %v5907, -inf
      %v5940 = vsel 1, %v5908, -inf
      %v5941 = vsel 1, %v5909, -inf
      %v5942 = vsel 1, %v5910, -inf
      %v5943 = vsel 1, %v5911, -inf
      %v5944 = vsel 1, %v5912, -inf
      %v5945 = vsel 1, %v5913, -inf
      %v5946 = vsel 1, %v5914, -inf
      %v5947 = vsel 1, %v5915, -inf
      %v5948 = vsel 1, %v5916, -inf
      %v5949 = vsel 1, %v5917, -inf
      %v5950 = vsel 1, %v5918, -inf
      %v5951 = vsel 1, %v5919, -inf
      %v5952 = vsel 1, %v5920, -inf
      %v5953 = vsel 1, %v5921, -inf
      %v5954 = vsel 1, %v5922, -inf
      %v5955 = vsel 1, %v5923, -inf
      %v5956 = vsel 1, %v5924, -inf
      %v5957 = vsel 1, %v5925, -inf
      %v5958 = vsel 1, %v5926, -inf
      %v5959 = vsel 1, %v5927, -inf
      %v5960 = vsel 1, %v5928, -inf
      %v5961 = vsel 1, %v5929, -inf
      %v5962 = vsel 1, %v5930, -inf
      %v5963 = vsel 1, %v5931, -inf
      %v5964 = vsel 1, %v5932, -inf
      %v5965 = vsel 1, %v5933, -inf
      %v5966 = vsel 1, %v5934, -inf
      %v5967 = vsel 1, %v5935, -inf
      %v5968 = vsel 0, %v5936, -inf
      %v5969 = vsel 0, %v5937, -inf
      %v5970 = vmax.f32 %v5874, %v5938
      %v5971 = vmax.f32 %v5875, %v5939
      %v5972 = vmax.f32 %v5876, %v5940
      %v5973 = vmax.f32 %v5877, %v5941
      %v5974 = vmax.f32 %v5878, %v5942
      %v5975 = vmax.f32 %v5879, %v5943
      %v5976 = vmax.f32 %v5880, %v5944
      %v5977 = vmax.f32 %v5881, %v5945
      %v5978 = vmax.f32 %v5882, %v5946
      %v5979 = vmax.f32 %v5883, %v5947
      %v5980 = vmax.f32 %v5884, %v5948
      %v5981 = vmax.f32 %v5885, %v5949
      %v5982 = vmax.f32 %v5886, %v5950
      %v5983 = vmax.f32 %v5887, %v5951
      %v5984 = vmax.f32 %v5888, %v5952
      %v5985 = vmax.f32 %v5889, %v5953
      %v5986 = vmax.f32 %v5890, %v5954
      %v5987 = vmax.f32 %v5891, %v5955
      %v5988 = vmax.f32 %v5892, %v5956
      %v5989 = vmax.f32 %v5893, %v5957
      %v5990 = vmax.f32 %v5894, %v5958
      %v5991 = vmax.f32 %v5895, %v5959
      %v5992 = vmax.f32 %v5896, %v5960
      %v5993 = vmax.f32 %v5897, %v5961
      %v5994 = vmax.f32 %v5898, %v5962
      %v5995 = vmax.f32 %v5899, %v5963
      %v5996 = vmax.f32 %v5900, %v5964
      %v5997 = vmax.f32 %v5901, %v5965
      %v5998 = vmax.f32 %v5902, %v5966
      %v5999 = vmax.f32 %v5903, %v5967
      %v6000 = vmax.f32 %v5904, %v5968
      %v6001 = vmax.f32 %v5905, %v5969
      %v6002 = vld [vmem:[%s2941 + $0x3] sm:$0xff]
      %v6003 = vld [vmem:[%s2941 + $0xb] sm:$0xff]
      %v6004 = vld [vmem:[%s2941 + $0x1b] sm:$0xff]
      %v6005 = vld [vmem:[%s2941 + $0x23] sm:$0xff]
      %v6006 = vld [vmem:[%s2941 + $0x33] sm:$0xff]
      %v6007 = vld [vmem:[%s2941 + $0x3b] sm:$0xff]
      %v6008 = vld [vmem:[%s2941 + $0x4b] sm:$0xff]
      %v6009 = vld [vmem:[%s2941 + $0x53] sm:$0xff]
      %v6010 = vld [vmem:[%s2941 + $0x63] sm:$0xff]
      %v6011 = vld [vmem:[%s2941 + $0x6b] sm:$0xff]
      %v6012 = vld [vmem:[%s2941 + $0x7b] sm:$0xff]
      %v6013 = vld [vmem:[%s2941 + $0x83] sm:$0xff]
      %v6014 = vld [vmem:[%s2941 + $0x93] sm:$0xff]
      %v6015 = vld [vmem:[%s2941 + $0x9b] sm:$0xff]
      %v6016 = vld [vmem:[%s2941 + $0xab] sm:$0xff]
      %v6017 = vld [vmem:[%s2941 + $0xb3] sm:$0xff]
      %v6018 = vld [vmem:[%s2941 + $0xc3] sm:$0xff]
      %v6019 = vld [vmem:[%s2941 + $0xcb] sm:$0xff]
      %v6020 = vld [vmem:[%s2941 + $0xdb] sm:$0xff]
      %v6021 = vld [vmem:[%s2941 + $0xe3] sm:$0xff]
      %v6022 = vld [vmem:[%s2941 + $0xf3] sm:$0xff]
      %v6023 = vld [vmem:[%s2941 + $0xfb] sm:$0xff]
      %v6024 = vld [vmem:[%s2941 + $0x10b] sm:$0xff]
      %v6025 = vld [vmem:[%s2941 + $0x113] sm:$0xff]
      %v6026 = vld [vmem:[%s2941 + $0x123] sm:$0xff]
      %v6027 = vld [vmem:[%s2941 + $0x12b] sm:$0xff]
      %v6028 = vld [vmem:[%s2941 + $0x13b] sm:$0xff]
      %v6029 = vld [vmem:[%s2941 + $0x143] sm:$0xff]
      %v6030 = vld [vmem:[%s2941 + $0x153] sm:$0xff]
      %v6031 = vld [vmem:[%s2941 + $0x15b] sm:$0xff]
      %v6032 = vld [vmem:[%s2941 + $0x16b] sm:$0xff]
      %v6033 = vld [vmem:[%s2941 + $0x173] sm:$0xff]
      %v6034 = vsel %vm5544, %v6002, -inf
      %v6035 = vsel %vm5545, %v6003, -inf
      %v6036 = vsel %vm5544, %v6004, -inf
      %v6037 = vsel %vm5545, %v6005, -inf
      %v6038 = vsel %vm5544, %v6006, -inf
      %v6039 = vsel %vm5545, %v6007, -inf
      %v6040 = vsel %vm5544, %v6008, -inf
      %v6041 = vsel %vm5545, %v6009, -inf
      %v6042 = vsel %vm5544, %v6010, -inf
      %v6043 = vsel %vm5545, %v6011, -inf
      %v6044 = vsel %vm5544, %v6012, -inf
      %v6045 = vsel %vm5545, %v6013, -inf
      %v6046 = vsel %vm5544, %v6014, -inf
      %v6047 = vsel %vm5545, %v6015, -inf
      %v6048 = vsel %vm5544, %v6016, -inf
      %v6049 = vsel %vm5545, %v6017, -inf
      %v6050 = vsel %vm5544, %v6018, -inf
      %v6051 = vsel %vm5545, %v6019, -inf
      %v6052 = vsel %vm5544, %v6020, -inf
      %v6053 = vsel %vm5545, %v6021, -inf
      %v6054 = vsel %vm5544, %v6022, -inf
      %v6055 = vsel %vm5545, %v6023, -inf
      %v6056 = vsel %vm5544, %v6024, -inf
      %v6057 = vsel %vm5545, %v6025, -inf
      %v6058 = vsel %vm5544, %v6026, -inf
      %v6059 = vsel %vm5545, %v6027, -inf
      %v6060 = vsel %vm5544, %v6028, -inf
      %v6061 = vsel %vm5545, %v6029, -inf
      %v6062 = vsel %vm5544, %v6030, -inf
      %v6063 = vsel %vm5545, %v6031, -inf
      %v6064 = vsel %vm5542, %v6032, -inf
      %v6065 = vsel %vm5543, %v6033, -inf
      %v6066 = vmax.f32 %v5970, %v6034
      %v6067 = vmax.f32 %v5971, %v6035
      %v6068 = vmax.f32 %v5972, %v6036
      %v6069 = vmax.f32 %v5973, %v6037
      %v6070 = vmax.f32 %v5974, %v6038
      %v6071 = vmax.f32 %v5975, %v6039
      %v6072 = vmax.f32 %v5976, %v6040
      %v6073 = vmax.f32 %v5977, %v6041
      %v6074 = vmax.f32 %v5978, %v6042
      %v6075 = vmax.f32 %v5979, %v6043
      %v6076 = vmax.f32 %v5980, %v6044
      %v6077 = vmax.f32 %v5981, %v6045
      %v6078 = vmax.f32 %v5982, %v6046
      %v6079 = vmax.f32 %v5983, %v6047
      %v6080 = vmax.f32 %v5984, %v6048
      %v6081 = vmax.f32 %v5985, %v6049
      %v6082 = vmax.f32 %v5986, %v6050
      %v6083 = vmax.f32 %v5987, %v6051
      %v6084 = vmax.f32 %v5988, %v6052
      %v6085 = vmax.f32 %v5989, %v6053
      %v6086 = vmax.f32 %v5990, %v6054
      %v6087 = vmax.f32 %v5991, %v6055
      %v6088 = vmax.f32 %v5992, %v6056
      %v6089 = vmax.f32 %v5993, %v6057
      %v6090 = vmax.f32 %v5994, %v6058
      %v6091 = vmax.f32 %v5995, %v6059
      %v6092 = vmax.f32 %v5996, %v6060
      %v6093 = vmax.f32 %v5997, %v6061
      %v6094 = vmax.f32 %v5998, %v6062
      %v6095 = vmax.f32 %v5999, %v6063
      %v6096 = vmax.f32 %v6000, %v6064
      %v6097 = vmax.f32 %v6001, %v6065
      %6130 = vrot.lane.b32.xlu0 %v6066, 20
      %v6131 = vpop.permute.xlu0 %6130
      %6132 = vrot.lane.b32.xlu0 %v6067, 20
      %v6133 = vpop.permute.xlu0 %6132
      %6134 = vrot.lane.b32.xlu0 %v6068, 20
      %v6135 = vpop.permute.xlu0 %6134
      %6136 = vrot.lane.b32.xlu0 %v6069, 20
      %v6137 = vpop.permute.xlu0 %6136
      %6138 = vrot.lane.b32.xlu0 %v6070, 20
      %v6139 = vpop.permute.xlu0 %6138
      %6140 = vrot.lane.b32.xlu0 %v6071, 20
      %v6141 = vpop.permute.xlu0 %6140
      %6142 = vrot.lane.b32.xlu0 %v6072, 20
      %v6143 = vpop.permute.xlu0 %6142
      %6144 = vrot.lane.b32.xlu0 %v6073, 20
      %v6145 = vpop.permute.xlu0 %6144
      %6146 = vrot.lane.b32.xlu0 %v6074, 20
      %v6147 = vpop.permute.xlu0 %6146
      %6148 = vrot.lane.b32.xlu0 %v6075, 20
      %v6149 = vpop.permute.xlu0 %6148
      %6150 = vrot.lane.b32.xlu0 %v6076, 20
      %v6151 = vpop.permute.xlu0 %6150
      %6152 = vrot.lane.b32.xlu0 %v6077, 20
      %v6153 = vpop.permute.xlu0 %6152
      %6154 = vrot.lane.b32.xlu0 %v6078, 20
      %v6155 = vpop.permute.xlu0 %6154
      %6156 = vrot.lane.b32.xlu0 %v6079, 20
      %v6157 = vpop.permute.xlu0 %6156
      %6158 = vrot.lane.b32.xlu0 %v6080, 20
      %v6159 = vpop.permute.xlu0 %6158
      %6160 = vrot.lane.b32.xlu0 %v6081, 20
      %v6161 = vpop.permute.xlu0 %6160
      %6162 = vrot.lane.b32.xlu0 %v6082, 20
      %v6163 = vpop.permute.xlu0 %6162
      %6164 = vrot.lane.b32.xlu0 %v6083, 20
      %v6165 = vpop.permute.xlu0 %6164
      %6166 = vrot.lane.b32.xlu0 %v6084, 20
      %v6167 = vpop.permute.xlu0 %6166
      %6168 = vrot.lane.b32.xlu0 %v6085, 20
      %v6169 = vpop.permute.xlu0 %6168
      %6170 = vrot.lane.b32.xlu0 %v6086, 20
      %v6171 = vpop.permute.xlu0 %6170
      %6172 = vrot.lane.b32.xlu0 %v6087, 20
      %v6173 = vpop.permute.xlu0 %6172
      %6174 = vrot.lane.b32.xlu0 %v6088, 20
      %v6175 = vpop.permute.xlu0 %6174
      %6176 = vrot.lane.b32.xlu0 %v6089, 20
      %v6177 = vpop.permute.xlu0 %6176
      %6178 = vrot.lane.b32.xlu0 %v6090, 20
      %v6179 = vpop.permute.xlu0 %6178
      %6180 = vrot.lane.b32.xlu0 %v6091, 20
      %v6181 = vpop.permute.xlu0 %6180
      %6182 = vrot.lane.b32.xlu0 %v6092, 20
      %v6183 = vpop.permute.xlu0 %6182
      %6184 = vrot.lane.b32.xlu0 %v6093, 20
      %v6185 = vpop.permute.xlu0 %6184
      %6186 = vrot.lane.b32.xlu0 %v6094, 20
      %v6187 = vpop.permute.xlu0 %6186
      %6188 = vrot.lane.b32.xlu0 %v6095, 20
      %v6189 = vpop.permute.xlu0 %6188
      %6190 = vrot.lane.b32.xlu0 %v6096, 20
      %v6191 = vpop.permute.xlu0 %6190
      %6192 = vrot.lane.b32.xlu0 %v6097, 20
      %v6193 = vpop.permute.xlu0 %6192
      %6226 = vst.msk [vmem:[%s170] sm:$0xff] %vm1170, %v6131
      %6227 = vst.msk [vmem:[%s170 + $0x8] sm:$0xff] %vm1170, %v6133
      %6228 = vst.msk [vmem:[%s170 + $0x10] sm:$0xff] %vm1170, %v6135
      %6229 = vst.msk [vmem:[%s170 + $0x18] sm:$0xff] %vm1170, %v6137
      %6230 = vst.msk [vmem:[%s170 + $0x20] sm:$0xff] %vm1170, %v6139
      %6231 = vst.msk [vmem:[%s170 + $0x28] sm:$0xff] %vm1170, %v6141
      %6232 = vst.msk [vmem:[%s170 + $0x30] sm:$0xff] %vm1170, %v6143
      %6233 = vst.msk [vmem:[%s170 + $0x38] sm:$0xff] %vm1170, %v6145
      %6234 = vst.msk [vmem:[%s170 + $0x40] sm:$0xff] %vm1170, %v6147
      %6235 = vst.msk [vmem:[%s170 + $0x48] sm:$0xff] %vm1170, %v6149
      %6236 = vst.msk [vmem:[%s170 + $0x50] sm:$0xff] %vm1170, %v6151
      %6237 = vst.msk [vmem:[%s170 + $0x58] sm:$0xff] %vm1170, %v6153
      %6238 = vst.msk [vmem:[%s170 + $0x60] sm:$0xff] %vm1170, %v6155
      %6239 = vst.msk [vmem:[%s170 + $0x68] sm:$0xff] %vm1170, %v6157
      %6240 = vst.msk [vmem:[%s170 + $0x70] sm:$0xff] %vm1170, %v6159
      %6241 = vst.msk [vmem:[%s170 + $0x78] sm:$0xff] %vm1170, %v6161
      %6242 = vst.msk [vmem:[%s170 + $0x80] sm:$0xff] %vm1170, %v6163
      %6243 = vst.msk [vmem:[%s170 + $0x88] sm:$0xff] %vm1170, %v6165
      %6244 = vst.msk [vmem:[%s170 + $0x90] sm:$0xff] %vm1170, %v6167
      %6245 = vst.msk [vmem:[%s170 + $0x98] sm:$0xff] %vm1170, %v6169
      %6246 = vst.msk [vmem:[%s170 + $0xa0] sm:$0xff] %vm1170, %v6171
      %6247 = vst.msk [vmem:[%s170 + $0xa8] sm:$0xff] %vm1170, %v6173
      %6248 = vst.msk [vmem:[%s170 + $0xb0] sm:$0xff] %vm1170, %v6175
      %6249 = vst.msk [vmem:[%s170 + $0xb8] sm:$0xff] %vm1170, %v6177
      %6250 = vst.msk [vmem:[%s170 + $0xc0] sm:$0xff] %vm1170, %v6179
      %6251 = vst.msk [vmem:[%s170 + $0xc8] sm:$0xff] %vm1170, %v6181
      %6252 = vst.msk [vmem:[%s170 + $0xd0] sm:$0xff] %vm1170, %v6183
      %6253 = vst.msk [vmem:[%s170 + $0xd8] sm:$0xff] %vm1170, %v6185
      %6254 = vst.msk [vmem:[%s170 + $0xe0] sm:$0xff] %vm1170, %v6187
      %6255 = vst.msk [vmem:[%s170 + $0xe8] sm:$0xff] %vm1170, %v6189
      %6256 = vst.msk [vmem:[%s170 + $0xf0] sm:$0xff] %vm1170, %v6191
      %6257 = vst.msk [vmem:[%s170 + $0xf8] sm:$0xff] %vm1170, %v6193
      %p6258 = scmp.lt.s32.totalorder %s14, 1
      %s6259 = scalar_select %p6258, %s14, 1
      %s6260 = smul.addr %s6259, 32
      %s6261 = smul.addr %s6260, 8
      %s6262 = scalar_lea.vmem %s3, %s6261
      // Predicated region
      $region33: #{tpu_custom_call.1} parent=31 // pred_check
        %p6263 = pneg %p100
      $region34: #{tpu_custom_call.1} parent=31 // pred_check_branch
        %6265 = sbr.rel (%p6263) target = $region36
      $region35: #{tpu_custom_call.1} parent=31 // pred_region
        _
      $region36: #{tpu_custom_call.1} parent=31 // pred_fallthru
        _
    $region32: #{tpu_custom_call.1} parent=5 // pred_fallthru
      _
    %p6266 = scmp.le.s32.totalorder 2, %s9
    // Predicated region
    $region37: #{tpu_custom_call.1} parent=5 // pred_check
      %p6267 = pneg %p6266
    $region38: #{tpu_custom_call.1} parent=5 // pred_check_branch
      %6269 = sbr.rel (%p6267) target = $region40
    $region39: #{tpu_custom_call.1} parent=5 // pred_region
      %s6270 = ssub.s32 %s9, 2
      // Predicated region
      $region41: #{tpu_custom_call.1} parent=39 // pred_check
        %p6271 = pneg %p106
      $region42: #{tpu_custom_call.1} parent=39 // pred_check_branch
        %6273 = sbr.rel (%p6271) target = $region44
      $region43: #{tpu_custom_call.1} parent=39 // pred_region
        %p6274 = scmp.lt.s32.totalorder %s15, 1
        %s6275 = scalar_select %p6274, %s15, 1
        %s6276 = smul.addr %s6275, 32
        %s6277 = smul.addr %s6276, 8
        %s6278 = scalar_lea.vmem %s3, %s6277
      $region44: #{tpu_custom_call.1} parent=39 // pred_fallthru
        _
    $region40: #{tpu_custom_call.1} parent=5 // pred_fallthru
      _
  $region6: #{tpu_custom_call.1} parent=0 // loop_footer
    %s13 = sadd.s32 1, %s9
  $region7: #{tpu_custom_call.1} parent=0 // loop_footer_branch
    %8 = sbr.rel target = $region3
  $region8: #{tpu_custom_call.1} parent=0 // loop_exit
    _

</llo_original>
